<compile_context>
chip_gen: v7x
topology: tpu7x:2x2x1
jax: 0.10.0
libtpu: 0.0.40
codegen_flags: <defaults>
</compile_context>

<pallas_src>
import math

import jax
import jax.numpy as jnp
from jax.experimental import pallas as pl
from jax.experimental.pallas import tpu as pltpu

D_MODEL = 128       # d_model (module default)
N_HEAD = 4          # nhead   (module default)
N_LAYERS = 2        # num_layers (module default)
D_FF = 2048         # dim_feedforward (module default)
LN_EPS = 1e-5       # nn.LayerNorm default eps

FUSED_PARAM_ORDER = (
    "w_in", "b_in",
    "w_attn", "b_attn",
    "ln1_g", "ln1_b",
    "lin1_w", "lin1_b", "lin2_w", "lin2_b",
    "ln2_g", "ln2_b",
    "fln_g", "fln_b", "fc_w", "fc_b",
)


def _round_up(n, m):
    return ((n + m - 1) // m) * m


def _layer_norm(x, gamma, beta, eps=LN_EPS):
    mu = jnp.mean(x, axis=-1, keepdims=True)
    var = jnp.mean((x - mu) ** 2, axis=-1, keepdims=True)
    return (x - mu) * jax.lax.rsqrt(var + eps) * gamma + beta


def _imst_kernel(x_ref, w_in_ref, b_in_ref,
                 w_attn_ref, b_attn_ref,
                 ln1_g_ref, ln1_b_ref,
                 lin1_w_ref, lin1_b_ref, lin2_w_ref, lin2_b_ref,
                 ln2_g_ref, ln2_b_ref,
                 fln_g_ref, fln_b_ref, fc_w_ref, fc_b_ref,
                 o_ref):
    # input_proj: (tb, 128) bf16 @ (128, 128) bf16 -> f32 (K pre-padded to 128).
    h = jnp.dot(x_ref[...], w_in_ref[...],
                preferred_element_type=jnp.float32) + b_in_ref[...]

    for l in range(N_LAYERS):  # static (unrolled) loop over encoder layers
        # seq_len == 1  =>  softmax == 1  =>  attention == h @ (Wv @ Wout) + b_attn.
        attn = jnp.dot(h.astype(jnp.bfloat16), w_attn_ref[l],
                       preferred_element_type=jnp.float32) + b_attn_ref[l]
        # Post-norm residual blocks (norm_first=False default); dropout = identity.
        h = _layer_norm(h + attn, ln1_g_ref[l], ln1_b_ref[l])

        ff = jnp.dot(h.astype(jnp.bfloat16), lin1_w_ref[l],
                     preferred_element_type=jnp.float32) + lin1_b_ref[l]
        ff = jnp.maximum(ff, 0.0).astype(jnp.bfloat16)   # ReLU (default activation)
        ff = jnp.dot(ff, lin2_w_ref[l],
                     preferred_element_type=jnp.float32) + lin2_b_ref[l]
        h = _layer_norm(h + ff, ln2_g_ref[l], ln2_b_ref[l])

    # x.mean(dim=1) over a length-1 sequence is the identity.
    # fc = Sequential(LayerNorm, Dropout(0.2)=identity, Linear(d_model, 1))
    h = _layer_norm(h, fln_g_ref[...], fln_b_ref[...])
    # TODO(synk): output kept as a (tb, 1) column; a lane-dense (1, tb) store is a
    # possible micro-opt but the 4 B/row writeback is negligible here.
    y = jnp.sum(h * fc_w_ref[...], axis=-1, keepdims=True) + fc_b_ref[...]
    o_ref[...] = y.astype(o_ref.dtype)


def prepare_params(params, input_dim, d_model=D_MODEL):
    """Fold the seq-len-1 attention, pad input_proj to K%128==0, cast matmul weights to bf16."""
    # V third of the fused in-projection (Q/K thirds are dead for seq_len == 1).
    wv = params["qkv_w"][:, :, 2 * d_model:]            # (L, d_model, d_model)
    bv = params["qkv_b"][:, :, 2 * d_model:]            # (L, 1, d_model)
    w_attn = jnp.einsum("lij,ljk->lik", wv, params["out_w"])
    b_attn = jnp.einsum("lij,ljk->lik", bv, params["out_w"]) + params["out_b"]

    k_pad = max(_round_up(input_dim, 128), 128)
    w_in = jnp.pad(params["w_in"], ((0, k_pad - input_dim), (0, 0)))

    return dict(
        w_in=w_in.astype(jnp.bfloat16),
        b_in=params["b_in"],
        w_attn=w_attn.astype(jnp.bfloat16),
        b_attn=b_attn,
        ln1_g=params["ln1_g"], ln1_b=params["ln1_b"],
        lin1_w=params["lin1_w"].astype(jnp.bfloat16), lin1_b=params["lin1_b"],
        lin2_w=params["lin2_w"].astype(jnp.bfloat16), lin2_b=params["lin2_b"],
        ln2_g=params["ln2_g"], ln2_b=params["ln2_b"],
        fln_g=params["fln_g"], fln_b=params["fln_b"],
        fc_w=params["fc_w"], fc_b=params["fc_b"],
    )


def transformer_imst_forward(x, params, *, tb=256):
    """Fused forward pass. Returns shape (B,) like PyTorch's .squeeze()."""
    B, input_dim = x.shape
    tb = min(tb, B)
    assert B % tb == 0, "batch must be divisible by the batch tile"

    fused = prepare_params(params, input_dim)
    k_pad = fused["w_in"].shape[0]
    xp = jnp.pad(x, ((0, 0), (0, k_pad - input_dim))).astype(jnp.bfloat16)

    plist = [fused[name] for name in FUSED_PARAM_ORDER]

    def full_spec(arr):
        nd = arr.ndim
        return pl.BlockSpec(arr.shape, lambda i, _nd=nd: (0,) * _nd)

    in_specs = [pl.BlockSpec((tb, k_pad), lambda i: (i, 0))]
    in_specs += [full_spec(p) for p in plist]

    out = pl.pallas_call(
        _imst_kernel,
        out_shape=jax.ShapeDtypeStruct((B, 1), jnp.float32),
        grid_spec=pltpu.PrefetchScalarGridSpec(
            num_scalar_prefetch=0,
            grid=(B // tb,),
            in_specs=in_specs,
            out_specs=pl.BlockSpec((tb, 1), lambda i: (i, 0)),
        ),
        compiler_params=pltpu.CompilerParams(
            dimension_semantics=("parallel",),
            vmem_limit_bytes=48 * 1024 * 1024,   # explicit cap: safe on v5e/v6e/v7x
        ),
    )(xp, *plist)
    return out[:, 0]


def init_params(key, input_dim, d_model=D_MODEL, n_layers=N_LAYERS, d_ff=D_FF):
    """Deterministic synthetic parameters (PyTorch shapes, pre-transposed to [in,out])."""
    ks = jax.random.split(key, 12)

    def w(k, fan_in, shape):
        return jax.random.normal(k, shape, jnp.float32) / math.sqrt(fan_in)

    p = {}
    p["w_in"] = w(ks[0], input_dim, (input_dim, d_model))
    p["b_in"] = 0.01 * jax.random.normal(ks[1], (1, d_model), jnp.float32)

    p["qkv_w"] = w(ks[2], d_model, (n_layers, d_model, 3 * d_model))
    p["qkv_b"] = 0.01 * jax.random.normal(ks[3], (n_layers, 1, 3 * d_model), jnp.float32)
    p["out_w"] = w(ks[4], d_model, (n_layers, d_model, d_model))
    p["out_b"] = 0.01 * jax.random.normal(ks[5], (n_layers, 1, d_model), jnp.float32)

    p["ln1_g"] = jnp.ones((n_layers, 1, d_model), jnp.float32)
    p["ln1_b"] = jnp.zeros((n_layers, 1, d_model), jnp.float32)

    p["lin1_w"] = w(ks[6], d_model, (n_layers, d_model, d_ff))
    p["lin1_b"] = 0.01 * jax.random.normal(ks[7], (n_layers, 1, d_ff), jnp.float32)
    p["lin2_w"] = w(ks[8], d_ff, (n_layers, d_ff, d_model))
    p["lin2_b"] = 0.01 * jax.random.normal(ks[9], (n_layers, 1, d_model), jnp.float32)

    p["ln2_g"] = jnp.ones((n_layers, 1, d_model), jnp.float32)
    p["ln2_b"] = jnp.zeros((n_layers, 1, d_model), jnp.float32)

    p["fln_g"] = jnp.ones((1, d_model), jnp.float32)
    p["fln_b"] = jnp.zeros((1, d_model), jnp.float32)
    p["fc_w"] = w(ks[10], d_model, (1, d_model))   # stored as a row: Linear(d_model, 1)
    p["fc_b"] = 0.01 * jax.random.normal(ks[11], (1, 1), jnp.float32)
    return p


def ref_forward(x, p):
    """Pure-JAX f32 reference mirroring the PyTorch forward (eval mode, full QKV math)."""
    h = x @ p["w_in"] + p["b_in"]
    for l in range(N_LAYERS):
        qkv = h @ p["qkv_w"][l] + p["qkv_b"][l]
        v = qkv[:, 2 * D_MODEL:]
        attn = v @ p["out_w"][l] + p["out_b"][l]
        h = _layer_norm(h + attn, p["ln1_g"][l], p["ln1_b"][l])
        ff = jnp.maximum(h @ p["lin1_w"][l] + p["lin1_b"][l], 0.0)
        ff = ff @ p["lin2_w"][l] + p["lin2_b"][l]
        h = _layer_norm(h + ff, p["ln2_g"][l], p["ln2_b"][l])
    h = _layer_norm(h, p["fln_g"], p["fln_b"])
    return jnp.sum(h * p["fc_w"], axis=-1) + p["fc_b"][0, 0]


def ref_forward_fused(x, params):
    """Plain-JAX mirror of the exact folded/bf16 math the kernel runs (tight check)."""
    f = prepare_params(params, x.shape[1])
    xp = jnp.pad(x, ((0, 0), (0, f["w_in"].shape[0] - x.shape[1]))).astype(jnp.bfloat16)
    h = jnp.dot(xp, f["w_in"], preferred_element_type=jnp.float32) + f["b_in"]
    for l in range(N_LAYERS):
        attn = jnp.dot(h.astype(jnp.bfloat16), f["w_attn"][l],
                       preferred_element_type=jnp.float32) + f["b_attn"][l]
        h = _layer_norm(h + attn, f["ln1_g"][l], f["ln1_b"][l])
        ff = jnp.dot(h.astype(jnp.bfloat16), f["lin1_w"][l],
                     preferred_element_type=jnp.float32) + f["lin1_b"][l]
        ff = jnp.maximum(ff, 0.0).astype(jnp.bfloat16)
        ff = jnp.dot(ff, f["lin2_w"][l],
                     preferred_element_type=jnp.float32) + f["lin2_b"][l]
        h = _layer_norm(h + ff, f["ln2_g"][l], f["ln2_b"][l])
    h = _layer_norm(h, f["fln_g"], f["fln_b"])
    return jnp.sum(h * f["fc_w"], axis=-1) + f["fc_b"][0, 0]


if __name__ == "__main__":
    B = 256          # batch
    INPUT_DIM = 16   # input_dim
    TB = 128         # batch tile per grid step (grid=2 -> shards across v7x's 2 TCs)

    key = jax.random.PRNGKey(0)
    kx, kp = jax.random.split(key)
    x = jax.random.normal(kx, (B, INPUT_DIM), jnp.float32)
    params = init_params(kp, INPUT_DIM)

    y = transformer_imst_forward(x, params, tb=TB)
    y = jax.block_until_ready(y)
    assert y.shape == (B,), y.shape

    # (a) tight check: kernel vs plain-JAX mirror of the exact folded/bf16 math.
    y_fused = ref_forward_fused(x, params)
    if not jnp.allclose(y, y_fused, rtol=5e-3, atol=5e-3):
        err = jnp.max(jnp.abs(y - y_fused))
        raise AssertionError(f"kernel vs fused-ref mismatch, max abs err {err}")

    # (b) loose check: kernel vs full-f32 PyTorch-style math (bf16 weight drift allowed).
    y_ref = ref_forward(x, params)
    if not jnp.allclose(y, y_ref, rtol=5e-2, atol=5e-2):
        err = jnp.max(jnp.abs(y - y_ref))
        raise AssertionError(f"kernel vs f32-ref mismatch, max abs err {err}")

    print("KERNEL_OK")
</pallas_src>

<mosaic_0001>
module attributes {stable_mosaic.version = 11 : i64} {
  func.func @_imst_kernel(%arg0: i32, %arg1: memref<128x128xbf16, #tpu.memory_space<vmem>>, %arg2: memref<128x128xbf16, #tpu.memory_space<vmem>>, %arg3: memref<1x128xf32, #tpu.memory_space<vmem>>, %arg4: memref<2x128x128xbf16, #tpu.memory_space<vmem>>, %arg5: memref<2x1x128xf32, #tpu.memory_space<vmem>>, %arg6: memref<2x1x128xf32, #tpu.memory_space<vmem>>, %arg7: memref<2x1x128xf32, #tpu.memory_space<vmem>>, %arg8: memref<2x128x2048xbf16, #tpu.memory_space<vmem>>, %arg9: memref<2x1x2048xf32, #tpu.memory_space<vmem>>, %arg10: memref<2x2048x128xbf16, #tpu.memory_space<vmem>>, %arg11: memref<2x1x128xf32, #tpu.memory_space<vmem>>, %arg12: memref<2x1x128xf32, #tpu.memory_space<vmem>>, %arg13: memref<2x1x128xf32, #tpu.memory_space<vmem>>, %arg14: memref<1x128xf32, #tpu.memory_space<vmem>>, %arg15: memref<1x128xf32, #tpu.memory_space<vmem>>, %arg16: memref<1x128xf32, #tpu.memory_space<vmem>>, %arg17: memref<1x1xf32, #tpu.memory_space<vmem>>, %arg18: memref<128x1xf32, #tpu.memory_space<vmem>>) attributes {dimension_semantics = [#tpu.dimension_semantics<parallel>], iteration_bounds = array<i64: 2>, scalar_prefetch = 0 : i64, scratch_operands = 0 : i64, tpu.core_type = #tpu.core_type<tc>, window_params = [{transform_indices = @transform_0, window_bounds = array<i64: 128, 128>}, {pipeline_mode = #tpu.pipeline_mode<synchronous>, transform_indices = @transform_1, window_bounds = array<i64: 128, 128>}, {pipeline_mode = #tpu.pipeline_mode<synchronous>, transform_indices = @transform_2, window_bounds = array<i64: 1, 128>}, {pipeline_mode = #tpu.pipeline_mode<synchronous>, transform_indices = @transform_3, window_bounds = array<i64: 2, 128, 128>}, {pipeline_mode = #tpu.pipeline_mode<synchronous>, transform_indices = @transform_4, window_bounds = array<i64: 2, 1, 128>}, {pipeline_mode = #tpu.pipeline_mode<synchronous>, transform_indices = @transform_5, window_bounds = array<i64: 2, 1, 128>}, {pipeline_mode = #tpu.pipeline_mode<synchronous>, transform_indices = @transform_6, window_bounds = array<i64: 2, 1, 128>}, {pipeline_mode = #tpu.pipeline_mode<synchronous>, transform_indices = @transform_7, window_bounds = array<i64: 2, 128, 2048>}, {pipeline_mode = #tpu.pipeline_mode<synchronous>, transform_indices = @transform_8, window_bounds = array<i64: 2, 1, 2048>}, {pipeline_mode = #tpu.pipeline_mode<synchronous>, transform_indices = @transform_9, window_bounds = array<i64: 2, 2048, 128>}, {pipeline_mode = #tpu.pipeline_mode<synchronous>, transform_indices = @transform_10, window_bounds = array<i64: 2, 1, 128>}, {pipeline_mode = #tpu.pipeline_mode<synchronous>, transform_indices = @transform_11, window_bounds = array<i64: 2, 1, 128>}, {pipeline_mode = #tpu.pipeline_mode<synchronous>, transform_indices = @transform_12, window_bounds = array<i64: 2, 1, 128>}, {pipeline_mode = #tpu.pipeline_mode<synchronous>, transform_indices = @transform_13, window_bounds = array<i64: 1, 128>}, {pipeline_mode = #tpu.pipeline_mode<synchronous>, transform_indices = @transform_14, window_bounds = array<i64: 1, 128>}, {pipeline_mode = #tpu.pipeline_mode<synchronous>, transform_indices = @transform_15, window_bounds = array<i64: 1, 128>}, {pipeline_mode = #tpu.pipeline_mode<synchronous>, transform_indices = @transform_16, window_bounds = array<i64: 1, 1>}, {transform_indices = @transform_17, window_bounds = array<i64: 128, 1>}]} {
    %c0 = arith.constant 0 : index
    %c0_0 = arith.constant 0 : index
    %0 = vector.load %arg1[%c0, %c0_0] : memref<128x128xbf16, #tpu.memory_space<vmem>>, vector<128x128xbf16>
    %c0_1 = arith.constant 0 : index
    %c0_2 = arith.constant 0 : index
    %1 = vector.load %arg2[%c0_1, %c0_2] : memref<128x128xbf16, #tpu.memory_space<vmem>>, vector<128x128xbf16>
    %cst = arith.constant dense<0.000000e+00> : vector<128x128xf32>
    %2 = tpu.matmul %0, %1, %cst {dimension_numbers = #tpu.dot_dimension_numbers<[1], [0], [0], [1], [0, 0, 1, 1], [], []>} : vector<128x128xbf16>, vector<128x128xbf16>, vector<128x128xf32> -> vector<128x128xf32>
    %c0_3 = arith.constant 0 : index
    %c0_4 = arith.constant 0 : index
    %3 = vector.load %arg3[%c0_3, %c0_4] : memref<1x128xf32, #tpu.memory_space<vmem>>, vector<1x128xf32>
    %4 = vector.broadcast %3 : vector<1x128xf32> to vector<128x128xf32>
    %5 = arith.addf %2, %4 : vector<128x128xf32>
    %6 = arith.truncf %5 : vector<128x128xf32> to vector<128x128xbf16>
    %c0_5 = arith.constant 0 : index
    %c0_6 = arith.constant 0 : index
    %c0_7 = arith.constant 0 : index
    %7 = vector.load %arg4[%c0_5, %c0_6, %c0_7] : memref<2x128x128xbf16, #tpu.memory_space<vmem>>, vector<1x128x128xbf16>
    %8 = vector.shape_cast %7 : vector<1x128x128xbf16> to vector<128x128xbf16>
    %cst_8 = arith.constant dense<0.000000e+00> : vector<128x128xf32>
    %9 = tpu.matmul %6, %8, %cst_8 {dimension_numbers = #tpu.dot_dimension_numbers<[1], [0], [0], [1], [0, 0, 1, 1], [], []>} : vector<128x128xbf16>, vector<128x128xbf16>, vector<128x128xf32> -> vector<128x128xf32>
    %c0_9 = arith.constant 0 : index
    %c0_10 = arith.constant 0 : index
    %c0_11 = arith.constant 0 : index
    %10 = vector.load %arg5[%c0_9, %c0_10, %c0_11] : memref<2x1x128xf32, #tpu.memory_space<vmem>>, vector<1x1x128xf32>
    %11 = vector.shape_cast %10 : vector<1x1x128xf32> to vector<1x128xf32>
    %12 = vector.broadcast %11 : vector<1x128xf32> to vector<128x128xf32>
    %13 = arith.addf %9, %12 : vector<128x128xf32>
    %14 = arith.addf %5, %13 : vector<128x128xf32>
    %c0_12 = arith.constant 0 : index
    %c0_13 = arith.constant 0 : index
    %c0_14 = arith.constant 0 : index
    %15 = vector.load %arg6[%c0_12, %c0_13, %c0_14] : memref<2x1x128xf32, #tpu.memory_space<vmem>>, vector<1x1x128xf32>
    %16 = vector.shape_cast %15 : vector<1x1x128xf32> to vector<1x128xf32>
    %c0_15 = arith.constant 0 : index
    %c0_16 = arith.constant 0 : index
    %c0_17 = arith.constant 0 : index
    %17 = vector.load %arg7[%c0_15, %c0_16, %c0_17] : memref<2x1x128xf32, #tpu.memory_space<vmem>>, vector<1x1x128xf32>
    %18 = vector.shape_cast %17 : vector<1x1x128xf32> to vector<1x128xf32>
    %cst_18 = arith.constant dense<0.000000e+00> : vector<128xf32>
    %19 = vector.multi_reduction <add>, %14, %cst_18 [1] : vector<128x128xf32> to vector<128xf32>
    %20 = vector.shape_cast %19 : vector<128xf32> to vector<128x1xf32>
    %cst_19 = arith.constant 1.280000e+02 : f32
    %21 = vector.broadcast %cst_19 : f32 to vector<128x1xf32>
    %22 = arith.divf %20, %21 : vector<128x1xf32>
    %23 = vector.broadcast %22 : vector<128x1xf32> to vector<128x128xf32>
    %24 = arith.subf %14, %23 : vector<128x128xf32>
    %25 = arith.mulf %24, %24 : vector<128x128xf32>
    %cst_20 = arith.constant dense<0.000000e+00> : vector<128xf32>
    %26 = vector.multi_reduction <add>, %25, %cst_20 [1] : vector<128x128xf32> to vector<128xf32>
    %27 = vector.shape_cast %26 : vector<128xf32> to vector<128x1xf32>
    %cst_21 = arith.constant 1.280000e+02 : f32
    %28 = vector.broadcast %cst_21 : f32 to vector<128x1xf32>
    %29 = arith.divf %27, %28 : vector<128x1xf32>
    %30 = vector.broadcast %22 : vector<128x1xf32> to vector<128x128xf32>
    %31 = arith.subf %14, %30 : vector<128x128xf32>
    %cst_22 = arith.constant 9.99999974E-6 : f32
    %32 = vector.broadcast %cst_22 : f32 to vector<128x1xf32>
    %33 = arith.addf %29, %32 : vector<128x1xf32>
    %34 = math.rsqrt %33 : vector<128x1xf32>
    %35 = vector.broadcast %34 : vector<128x1xf32> to vector<128x128xf32>
    %36 = arith.mulf %31, %35 : vector<128x128xf32>
    %37 = vector.broadcast %16 : vector<1x128xf32> to vector<128x128xf32>
    %38 = arith.mulf %36, %37 : vector<128x128xf32>
    %39 = vector.broadcast %18 : vector<1x128xf32> to vector<128x128xf32>
    %40 = arith.addf %38, %39 : vector<128x128xf32>
    %41 = arith.truncf %40 : vector<128x128xf32> to vector<128x128xbf16>
    %c0_23 = arith.constant 0 : index
    %c0_24 = arith.constant 0 : index
    %c0_25 = arith.constant 0 : index
    %42 = vector.load %arg8[%c0_23, %c0_24, %c0_25] : memref<2x128x2048xbf16, #tpu.memory_space<vmem>>, vector<1x128x2048xbf16>
    %43 = vector.shape_cast %42 : vector<1x128x2048xbf16> to vector<128x2048xbf16>
    %cst_26 = arith.constant dense<0.000000e+00> : vector<128x2048xf32>
    %44 = tpu.matmul %41, %43, %cst_26 {dimension_numbers = #tpu.dot_dimension_numbers<[1], [0], [0], [1], [0, 0, 1, 1], [], []>} : vector<128x128xbf16>, vector<128x2048xbf16>, vector<128x2048xf32> -> vector<128x2048xf32>
    %c0_27 = arith.constant 0 : index
    %c0_28 = arith.constant 0 : index
    %c0_29 = arith.constant 0 : index
    %45 = vector.load %arg9[%c0_27, %c0_28, %c0_29] : memref<2x1x2048xf32, #tpu.memory_space<vmem>>, vector<1x1x2048xf32>
    %46 = vector.shape_cast %45 : vector<1x1x2048xf32> to vector<1x2048xf32>
    %47 = vector.broadcast %46 : vector<1x2048xf32> to vector<128x2048xf32>
    %48 = arith.addf %44, %47 : vector<128x2048xf32>
    %cst_30 = arith.constant 0.000000e+00 : f32
    %49 = vector.broadcast %cst_30 : f32 to vector<128x2048xf32>
    %50 = arith.maximumf %48, %49 : vector<128x2048xf32>
    %51 = arith.truncf %50 : vector<128x2048xf32> to vector<128x2048xbf16>
    %c0_31 = arith.constant 0 : index
    %c0_32 = arith.constant 0 : index
    %c0_33 = arith.constant 0 : index
    %52 = vector.load %arg10[%c0_31, %c0_32, %c0_33] : memref<2x2048x128xbf16, #tpu.memory_space<vmem>>, vector<1x2048x128xbf16>
    %53 = vector.shape_cast %52 : vector<1x2048x128xbf16> to vector<2048x128xbf16>
    %cst_34 = arith.constant dense<0.000000e+00> : vector<128x128xf32>
    %54 = tpu.matmul %51, %53, %cst_34 {dimension_numbers = #tpu.dot_dimension_numbers<[1], [0], [0], [1], [0, 0, 1, 1], [], []>} : vector<128x2048xbf16>, vector<2048x128xbf16>, vector<128x128xf32> -> vector<128x128xf32>
    %c0_35 = arith.constant 0 : index
    %c0_36 = arith.constant 0 : index
    %c0_37 = arith.constant 0 : index
    %55 = vector.load %arg11[%c0_35, %c0_36, %c0_37] : memref<2x1x128xf32, #tpu.memory_space<vmem>>, vector<1x1x128xf32>
    %56 = vector.shape_cast %55 : vector<1x1x128xf32> to vector<1x128xf32>
    %57 = vector.broadcast %56 : vector<1x128xf32> to vector<128x128xf32>
    %58 = arith.addf %54, %57 : vector<128x128xf32>
    %59 = arith.addf %40, %58 : vector<128x128xf32>
    %c0_38 = arith.constant 0 : index
    %c0_39 = arith.constant 0 : index
    %c0_40 = arith.constant 0 : index
    %60 = vector.load %arg12[%c0_38, %c0_39, %c0_40] : memref<2x1x128xf32, #tpu.memory_space<vmem>>, vector<1x1x128xf32>
    %61 = vector.shape_cast %60 : vector<1x1x128xf32> to vector<1x128xf32>
    %c0_41 = arith.constant 0 : index
    %c0_42 = arith.constant 0 : index
    %c0_43 = arith.constant 0 : index
    %62 = vector.load %arg13[%c0_41, %c0_42, %c0_43] : memref<2x1x128xf32, #tpu.memory_space<vmem>>, vector<1x1x128xf32>
    %63 = vector.shape_cast %62 : vector<1x1x128xf32> to vector<1x128xf32>
    %cst_44 = arith.constant dense<0.000000e+00> : vector<128xf32>
    %64 = vector.multi_reduction <add>, %59, %cst_44 [1] : vector<128x128xf32> to vector<128xf32>
    %65 = vector.shape_cast %64 : vector<128xf32> to vector<128x1xf32>
    %cst_45 = arith.constant 1.280000e+02 : f32
    %66 = vector.broadcast %cst_45 : f32 to vector<128x1xf32>
    %67 = arith.divf %65, %66 : vector<128x1xf32>
    %68 = vector.broadcast %67 : vector<128x1xf32> to vector<128x128xf32>
    %69 = arith.subf %59, %68 : vector<128x128xf32>
    %70 = arith.mulf %69, %69 : vector<128x128xf32>
    %cst_46 = arith.constant dense<0.000000e+00> : vector<128xf32>
    %71 = vector.multi_reduction <add>, %70, %cst_46 [1] : vector<128x128xf32> to vector<128xf32>
    %72 = vector.shape_cast %71 : vector<128xf32> to vector<128x1xf32>
    %cst_47 = arith.constant 1.280000e+02 : f32
    %73 = vector.broadcast %cst_47 : f32 to vector<128x1xf32>
    %74 = arith.divf %72, %73 : vector<128x1xf32>
    %75 = vector.broadcast %67 : vector<128x1xf32> to vector<128x128xf32>
    %76 = arith.subf %59, %75 : vector<128x128xf32>
    %cst_48 = arith.constant 9.99999974E-6 : f32
    %77 = vector.broadcast %cst_48 : f32 to vector<128x1xf32>
    %78 = arith.addf %74, %77 : vector<128x1xf32>
    %79 = math.rsqrt %78 : vector<128x1xf32>
    %80 = vector.broadcast %79 : vector<128x1xf32> to vector<128x128xf32>
    %81 = arith.mulf %76, %80 : vector<128x128xf32>
    %82 = vector.broadcast %61 : vector<1x128xf32> to vector<128x128xf32>
    %83 = arith.mulf %81, %82 : vector<128x128xf32>
    %84 = vector.broadcast %63 : vector<1x128xf32> to vector<128x128xf32>
    %85 = arith.addf %83, %84 : vector<128x128xf32>
    %86 = arith.truncf %85 : vector<128x128xf32> to vector<128x128xbf16>
    %c1 = arith.constant 1 : index
    %c0_49 = arith.constant 0 : index
    %c0_50 = arith.constant 0 : index
    %87 = vector.load %arg4[%c1, %c0_49, %c0_50] : memref<2x128x128xbf16, #tpu.memory_space<vmem>>, vector<1x128x128xbf16>
    %88 = vector.shape_cast %87 : vector<1x128x128xbf16> to vector<128x128xbf16>
    %cst_51 = arith.constant dense<0.000000e+00> : vector<128x128xf32>
    %89 = tpu.matmul %86, %88, %cst_51 {dimension_numbers = #tpu.dot_dimension_numbers<[1], [0], [0], [1], [0, 0, 1, 1], [], []>} : vector<128x128xbf16>, vector<128x128xbf16>, vector<128x128xf32> -> vector<128x128xf32>
    %c1_52 = arith.constant 1 : index
    %c0_53 = arith.constant 0 : index
    %c0_54 = arith.constant 0 : index
    %90 = vector.load %arg5[%c1_52, %c0_53, %c0_54] : memref<2x1x128xf32, #tpu.memory_space<vmem>>, vector<1x1x128xf32>
    %91 = vector.shape_cast %90 : vector<1x1x128xf32> to vector<1x128xf32>
    %92 = vector.broadcast %91 : vector<1x128xf32> to vector<128x128xf32>
    %93 = arith.addf %89, %92 : vector<128x128xf32>
    %94 = arith.addf %85, %93 : vector<128x128xf32>
    %c1_55 = arith.constant 1 : index
    %c0_56 = arith.constant 0 : index
    %c0_57 = arith.constant 0 : index
    %95 = vector.load %arg6[%c1_55, %c0_56, %c0_57] : memref<2x1x128xf32, #tpu.memory_space<vmem>>, vector<1x1x128xf32>
    %96 = vector.shape_cast %95 : vector<1x1x128xf32> to vector<1x128xf32>
    %c1_58 = arith.constant 1 : index
    %c0_59 = arith.constant 0 : index
    %c0_60 = arith.constant 0 : index
    %97 = vector.load %arg7[%c1_58, %c0_59, %c0_60] : memref<2x1x128xf32, #tpu.memory_space<vmem>>, vector<1x1x128xf32>
    %98 = vector.shape_cast %97 : vector<1x1x128xf32> to vector<1x128xf32>
    %cst_61 = arith.constant dense<0.000000e+00> : vector<128xf32>
    %99 = vector.multi_reduction <add>, %94, %cst_61 [1] : vector<128x128xf32> to vector<128xf32>
    %100 = vector.shape_cast %99 : vector<128xf32> to vector<128x1xf32>
    %cst_62 = arith.constant 1.280000e+02 : f32
    %101 = vector.broadcast %cst_62 : f32 to vector<128x1xf32>
    %102 = arith.divf %100, %101 : vector<128x1xf32>
    %103 = vector.broadcast %102 : vector<128x1xf32> to vector<128x128xf32>
    %104 = arith.subf %94, %103 : vector<128x128xf32>
    %105 = arith.mulf %104, %104 : vector<128x128xf32>
    %cst_63 = arith.constant dense<0.000000e+00> : vector<128xf32>
    %106 = vector.multi_reduction <add>, %105, %cst_63 [1] : vector<128x128xf32> to vector<128xf32>
    %107 = vector.shape_cast %106 : vector<128xf32> to vector<128x1xf32>
    %cst_64 = arith.constant 1.280000e+02 : f32
    %108 = vector.broadcast %cst_64 : f32 to vector<128x1xf32>
    %109 = arith.divf %107, %108 : vector<128x1xf32>
    %110 = vector.broadcast %102 : vector<128x1xf32> to vector<128x128xf32>
    %111 = arith.subf %94, %110 : vector<128x128xf32>
    %cst_65 = arith.constant 9.99999974E-6 : f32
    %112 = vector.broadcast %cst_65 : f32 to vector<128x1xf32>
    %113 = arith.addf %109, %112 : vector<128x1xf32>
    %114 = math.rsqrt %113 : vector<128x1xf32>
    %115 = vector.broadcast %114 : vector<128x1xf32> to vector<128x128xf32>
    %116 = arith.mulf %111, %115 : vector<128x128xf32>
    %117 = vector.broadcast %96 : vector<1x128xf32> to vector<128x128xf32>
    %118 = arith.mulf %116, %117 : vector<128x128xf32>
    %119 = vector.broadcast %98 : vector<1x128xf32> to vector<128x128xf32>
    %120 = arith.addf %118, %119 : vector<128x128xf32>
    %121 = arith.truncf %120 : vector<128x128xf32> to vector<128x128xbf16>
    %c1_66 = arith.constant 1 : index
    %c0_67 = arith.constant 0 : index
    %c0_68 = arith.constant 0 : index
    %122 = vector.load %arg8[%c1_66, %c0_67, %c0_68] : memref<2x128x2048xbf16, #tpu.memory_space<vmem>>, vector<1x128x2048xbf16>
    %123 = vector.shape_cast %122 : vector<1x128x2048xbf16> to vector<128x2048xbf16>
    %cst_69 = arith.constant dense<0.000000e+00> : vector<128x2048xf32>
    %124 = tpu.matmul %121, %123, %cst_69 {dimension_numbers = #tpu.dot_dimension_numbers<[1], [0], [0], [1], [0, 0, 1, 1], [], []>} : vector<128x128xbf16>, vector<128x2048xbf16>, vector<128x2048xf32> -> vector<128x2048xf32>
    %c1_70 = arith.constant 1 : index
    %c0_71 = arith.constant 0 : index
    %c0_72 = arith.constant 0 : index
    %125 = vector.load %arg9[%c1_70, %c0_71, %c0_72] : memref<2x1x2048xf32, #tpu.memory_space<vmem>>, vector<1x1x2048xf32>
    %126 = vector.shape_cast %125 : vector<1x1x2048xf32> to vector<1x2048xf32>
    %127 = vector.broadcast %126 : vector<1x2048xf32> to vector<128x2048xf32>
    %128 = arith.addf %124, %127 : vector<128x2048xf32>
    %cst_73 = arith.constant 0.000000e+00 : f32
    %129 = vector.broadcast %cst_73 : f32 to vector<128x2048xf32>
    %130 = arith.maximumf %128, %129 : vector<128x2048xf32>
    %131 = arith.truncf %130 : vector<128x2048xf32> to vector<128x2048xbf16>
    %c1_74 = arith.constant 1 : index
    %c0_75 = arith.constant 0 : index
    %c0_76 = arith.constant 0 : index
    %132 = vector.load %arg10[%c1_74, %c0_75, %c0_76] : memref<2x2048x128xbf16, #tpu.memory_space<vmem>>, vector<1x2048x128xbf16>
    %133 = vector.shape_cast %132 : vector<1x2048x128xbf16> to vector<2048x128xbf16>
    %cst_77 = arith.constant dense<0.000000e+00> : vector<128x128xf32>
    %134 = tpu.matmul %131, %133, %cst_77 {dimension_numbers = #tpu.dot_dimension_numbers<[1], [0], [0], [1], [0, 0, 1, 1], [], []>} : vector<128x2048xbf16>, vector<2048x128xbf16>, vector<128x128xf32> -> vector<128x128xf32>
    %c1_78 = arith.constant 1 : index
    %c0_79 = arith.constant 0 : index
    %c0_80 = arith.constant 0 : index
    %135 = vector.load %arg11[%c1_78, %c0_79, %c0_80] : memref<2x1x128xf32, #tpu.memory_space<vmem>>, vector<1x1x128xf32>
    %136 = vector.shape_cast %135 : vector<1x1x128xf32> to vector<1x128xf32>
    %137 = vector.broadcast %136 : vector<1x128xf32> to vector<128x128xf32>
    %138 = arith.addf %134, %137 : vector<128x128xf32>
    %139 = arith.addf %120, %138 : vector<128x128xf32>
    %c1_81 = arith.constant 1 : index
    %c0_82 = arith.constant 0 : index
    %c0_83 = arith.constant 0 : index
    %140 = vector.load %arg12[%c1_81, %c0_82, %c0_83] : memref<2x1x128xf32, #tpu.memory_space<vmem>>, vector<1x1x128xf32>
    %141 = vector.shape_cast %140 : vector<1x1x128xf32> to vector<1x128xf32>
    %c1_84 = arith.constant 1 : index
    %c0_85 = arith.constant 0 : index
    %c0_86 = arith.constant 0 : index
    %142 = vector.load %arg13[%c1_84, %c0_85, %c0_86] : memref<2x1x128xf32, #tpu.memory_space<vmem>>, vector<1x1x128xf32>
    %143 = vector.shape_cast %142 : vector<1x1x128xf32> to vector<1x128xf32>
    %cst_87 = arith.constant dense<0.000000e+00> : vector<128xf32>
    %144 = vector.multi_reduction <add>, %139, %cst_87 [1] : vector<128x128xf32> to vector<128xf32>
    %145 = vector.shape_cast %144 : vector<128xf32> to vector<128x1xf32>
    %cst_88 = arith.constant 1.280000e+02 : f32
    %146 = vector.broadcast %cst_88 : f32 to vector<128x1xf32>
    %147 = arith.divf %145, %146 : vector<128x1xf32>
    %148 = vector.broadcast %147 : vector<128x1xf32> to vector<128x128xf32>
    %149 = arith.subf %139, %148 : vector<128x128xf32>
    %150 = arith.mulf %149, %149 : vector<128x128xf32>
    %cst_89 = arith.constant dense<0.000000e+00> : vector<128xf32>
    %151 = vector.multi_reduction <add>, %150, %cst_89 [1] : vector<128x128xf32> to vector<128xf32>
    %152 = vector.shape_cast %151 : vector<128xf32> to vector<128x1xf32>
    %cst_90 = arith.constant 1.280000e+02 : f32
    %153 = vector.broadcast %cst_90 : f32 to vector<128x1xf32>
    %154 = arith.divf %152, %153 : vector<128x1xf32>
    %155 = vector.broadcast %147 : vector<128x1xf32> to vector<128x128xf32>
    %156 = arith.subf %139, %155 : vector<128x128xf32>
    %cst_91 = arith.constant 9.99999974E-6 : f32
    %157 = vector.broadcast %cst_91 : f32 to vector<128x1xf32>
    %158 = arith.addf %154, %157 : vector<128x1xf32>
    %159 = math.rsqrt %158 : vector<128x1xf32>
    %160 = vector.broadcast %159 : vector<128x1xf32> to vector<128x128xf32>
    %161 = arith.mulf %156, %160 : vector<128x128xf32>
    %162 = vector.broadcast %141 : vector<1x128xf32> to vector<128x128xf32>
    %163 = arith.mulf %161, %162 : vector<128x128xf32>
    %164 = vector.broadcast %143 : vector<1x128xf32> to vector<128x128xf32>
    %165 = arith.addf %163, %164 : vector<128x128xf32>
    %c0_92 = arith.constant 0 : index
    %c0_93 = arith.constant 0 : index
    %166 = vector.load %arg14[%c0_92, %c0_93] : memref<1x128xf32, #tpu.memory_space<vmem>>, vector<1x128xf32>
    %c0_94 = arith.constant 0 : index
    %c0_95 = arith.constant 0 : index
    %167 = vector.load %arg15[%c0_94, %c0_95] : memref<1x128xf32, #tpu.memory_space<vmem>>, vector<1x128xf32>
    %cst_96 = arith.constant dense<0.000000e+00> : vector<128xf32>
    %168 = vector.multi_reduction <add>, %165, %cst_96 [1] : vector<128x128xf32> to vector<128xf32>
    %169 = vector.shape_cast %168 : vector<128xf32> to vector<128x1xf32>
    %cst_97 = arith.constant 1.280000e+02 : f32
    %170 = vector.broadcast %cst_97 : f32 to vector<128x1xf32>
    %171 = arith.divf %169, %170 : vector<128x1xf32>
    %172 = vector.broadcast %171 : vector<128x1xf32> to vector<128x128xf32>
    %173 = arith.subf %165, %172 : vector<128x128xf32>
    %174 = arith.mulf %173, %173 : vector<128x128xf32>
    %cst_98 = arith.constant dense<0.000000e+00> : vector<128xf32>
    %175 = vector.multi_reduction <add>, %174, %cst_98 [1] : vector<128x128xf32> to vector<128xf32>
    %176 = vector.shape_cast %175 : vector<128xf32> to vector<128x1xf32>
    %cst_99 = arith.constant 1.280000e+02 : f32
    %177 = vector.broadcast %cst_99 : f32 to vector<128x1xf32>
    %178 = arith.divf %176, %177 : vector<128x1xf32>
    %179 = vector.broadcast %171 : vector<128x1xf32> to vector<128x128xf32>
    %180 = arith.subf %165, %179 : vector<128x128xf32>
    %cst_100 = arith.constant 9.99999974E-6 : f32
    %181 = vector.broadcast %cst_100 : f32 to vector<128x1xf32>
    %182 = arith.addf %178, %181 : vector<128x1xf32>
    %183 = math.rsqrt %182 : vector<128x1xf32>
    %184 = vector.broadcast %183 : vector<128x1xf32> to vector<128x128xf32>
    %185 = arith.mulf %180, %184 : vector<128x128xf32>
    %186 = vector.broadcast %166 : vector<1x128xf32> to vector<128x128xf32>
    %187 = arith.mulf %185, %186 : vector<128x128xf32>
    %188 = vector.broadcast %167 : vector<1x128xf32> to vector<128x128xf32>
    %189 = arith.addf %187, %188 : vector<128x128xf32>
    %c0_101 = arith.constant 0 : index
    %c0_102 = arith.constant 0 : index
    %190 = vector.load %arg16[%c0_101, %c0_102] : memref<1x128xf32, #tpu.memory_space<vmem>>, vector<1x128xf32>
    %191 = vector.broadcast %190 : vector<1x128xf32> to vector<128x128xf32>
    %192 = arith.mulf %189, %191 : vector<128x128xf32>
    %cst_103 = arith.constant dense<0.000000e+00> : vector<128xf32>
    %193 = vector.multi_reduction <add>, %192, %cst_103 [1] : vector<128x128xf32> to vector<128xf32>
    %194 = vector.shape_cast %193 : vector<128xf32> to vector<128x1xf32>
    %c0_104 = arith.constant 0 : index
    %c0_105 = arith.constant 0 : index
    %195 = vector.load %arg17[%c0_104, %c0_105] : memref<1x1xf32, #tpu.memory_space<vmem>>, vector<1x1xf32>
    %196 = vector.broadcast %195 : vector<1x1xf32> to vector<128x1xf32>
    %197 = arith.addf %194, %196 : vector<128x1xf32>
    %c0_106 = arith.constant 0 : index
    %c0_107 = arith.constant 0 : index
    %198 = vector.load %arg18[%c0_106, %c0_107] : memref<128x1xf32, #tpu.memory_space<vmem>>, vector<128x1xf32>
    tpu.vector_store %arg18[%c0_106, %c0_107], %197 {strides = array<i32>} : memref<128x1xf32, #tpu.memory_space<vmem>>, vector<128x1xf32>,
    return
  }
  func.func @transform_0(%arg0: i32) -> (i32, i32) {
    %c0_i32 = arith.constant 0 : i32
    %c0_i32_0 = arith.constant 0 : i32
    return %arg0, %c0_i32 : i32, i32
  }
  func.func @transform_1(%arg0: i32) -> (i32, i32) {
    %c0_i32 = arith.constant 0 : i32
    %c0_i32_0 = arith.constant 0 : i32
    %c0_i32_1 = arith.constant 0 : i32
    return %c0_i32, %c0_i32_0 : i32, i32
  }
  func.func @transform_2(%arg0: i32) -> (i32, i32) {
    %c0_i32 = arith.constant 0 : i32
    %c0_i32_0 = arith.constant 0 : i32
    %c0_i32_1 = arith.constant 0 : i32
    return %c0_i32, %c0_i32_0 : i32, i32
  }
  func.func @transform_3(%arg0: i32) -> (i32, i32, i32) {
    %c0_i32 = arith.constant 0 : i32
    %c0_i32_0 = arith.constant 0 : i32
    %c0_i32_1 = arith.constant 0 : i32
    %c0_i32_2 = arith.constant 0 : i32
    return %c0_i32, %c0_i32_0, %c0_i32_1 : i32, i32, i32
  }
  func.func @transform_4(%arg0: i32) -> (i32, i32, i32) {
    %c0_i32 = arith.constant 0 : i32
    %c0_i32_0 = arith.constant 0 : i32
    %c0_i32_1 = arith.constant 0 : i32
    %c0_i32_2 = arith.constant 0 : i32
    return %c0_i32, %c0_i32_0, %c0_i32_1 : i32, i32, i32
  }
  func.func @transform_5(%arg0: i32) -> (i32, i32, i32) {
    %c0_i32 = arith.constant 0 : i32
    %c0_i32_0 = arith.constant 0 : i32
    %c0_i32_1 = arith.constant 0 : i32
    %c0_i32_2 = arith.constant 0 : i32
    return %c0_i32, %c0_i32_0, %c0_i32_1 : i32, i32, i32
  }
  func.func @transform_6(%arg0: i32) -> (i32, i32, i32) {
    %c0_i32 = arith.constant 0 : i32
    %c0_i32_0 = arith.constant 0 : i32
    %c0_i32_1 = arith.constant 0 : i32
    %c0_i32_2 = arith.constant 0 : i32
    return %c0_i32, %c0_i32_0, %c0_i32_1 : i32, i32, i32
  }
  func.func @transform_7(%arg0: i32) -> (i32, i32, i32) {
    %c0_i32 = arith.constant 0 : i32
    %c0_i32_0 = arith.constant 0 : i32
    %c0_i32_1 = arith.constant 0 : i32
    %c0_i32_2 = arith.constant 0 : i32
    return %c0_i32, %c0_i32_0, %c0_i32_1 : i32, i32, i32
  }
  func.func @transform_8(%arg0: i32) -> (i32, i32, i32) {
    %c0_i32 = arith.constant 0 : i32
    %c0_i32_0 = arith.constant 0 : i32
    %c0_i32_1 = arith.constant 0 : i32
    %c0_i32_2 = arith.constant 0 : i32
    return %c0_i32, %c0_i32_0, %c0_i32_1 : i32, i32, i32
  }
  func.func @transform_9(%arg0: i32) -> (i32, i32, i32) {
    %c0_i32 = arith.constant 0 : i32
    %c0_i32_0 = arith.constant 0 : i32
    %c0_i32_1 = arith.constant 0 : i32
    %c0_i32_2 = arith.constant 0 : i32
    return %c0_i32, %c0_i32_0, %c0_i32_1 : i32, i32, i32
  }
  func.func @transform_10(%arg0: i32) -> (i32, i32, i32) {
    %c0_i32 = arith.constant 0 : i32
    %c0_i32_0 = arith.constant 0 : i32
    %c0_i32_1 = arith.constant 0 : i32
    %c0_i32_2 = arith.constant 0 : i32
    return %c0_i32, %c0_i32_0, %c0_i32_1 : i32, i32, i32
  }
  func.func @transform_11(%arg0: i32) -> (i32, i32, i32) {
    %c0_i32 = arith.constant 0 : i32
    %c0_i32_0 = arith.constant 0 : i32
    %c0_i32_1 = arith.constant 0 : i32
    %c0_i32_2 = arith.constant 0 : i32
    return %c0_i32, %c0_i32_0, %c0_i32_1 : i32, i32, i32
  }
  func.func @transform_12(%arg0: i32) -> (i32, i32, i32) {
    %c0_i32 = arith.constant 0 : i32
    %c0_i32_0 = arith.constant 0 : i32
    %c0_i32_1 = arith.constant 0 : i32
    %c0_i32_2 = arith.constant 0 : i32
    return %c0_i32, %c0_i32_0, %c0_i32_1 : i32, i32, i32
  }
  func.func @transform_13(%arg0: i32) -> (i32, i32) {
    %c0_i32 = arith.constant 0 : i32
    %c0_i32_0 = arith.constant 0 : i32
    %c0_i32_1 = arith.constant 0 : i32
    return %c0_i32, %c0_i32_0 : i32, i32
  }
  func.func @transform_14(%arg0: i32) -> (i32, i32) {
    %c0_i32 = arith.constant 0 : i32
    %c0_i32_0 = arith.constant 0 : i32
    %c0_i32_1 = arith.constant 0 : i32
    return %c0_i32, %c0_i32_0 : i32, i32
  }
  func.func @transform_15(%arg0: i32) -> (i32, i32) {
    %c0_i32 = arith.constant 0 : i32
    %c0_i32_0 = arith.constant 0 : i32
    %c0_i32_1 = arith.constant 0 : i32
    return %c0_i32, %c0_i32_0 : i32, i32
  }
  func.func @transform_16(%arg0: i32) -> (i32, i32) {
    %c0_i32 = arith.constant 0 : i32
    %c0_i32_0 = arith.constant 0 : i32
    %c0_i32_1 = arith.constant 0 : i32
    return %c0_i32, %c0_i32_0 : i32, i32
  }
  func.func @transform_17(%arg0: i32) -> (i32, i32) {
    %c0_i32 = arith.constant 0 : i32
    %c0_i32_0 = arith.constant 0 : i32
    return %arg0, %c0_i32 : i32, i32
  }
}

</mosaic_0001>

<llo_original>
// kernel: tpu_custom_call.1
$region0: #{tpu_custom_call.1}
  #allocation0 [shape = 'u32[]', space=smem, size = 0x4, offset = 0x4, fixed_abs, tag = 'smem constant byte address 0x4 - core index']
  #allocation1 [shape = 'u32[144,128]{1,0:T(1,128)}', space=vmem, size = 0x12000, scoped, tag = 'internal scratch']
  #allocation2 [shape = 'f32[1,1]{1,0:T(1,128)S(1)}', space=vmem, size = 0x200, scoped, tag = 'scoped memory for tpu_custom_call.1']
  %s0 = inlined_call_operand.hbm [shape: bf16[256,128], index: 0, kind: input, shape index: {}]
  %s1 = inlined_call_operand.hbm [shape: bf16[128,128], index: 1, kind: input, shape index: {}]
  %s2 = inlined_call_operand.hbm [shape: f32[1,128], index: 2, kind: input, shape index: {}]
  %s3 = inlined_call_operand.hbm [shape: bf16[2,128,128], index: 3, kind: input, shape index: {}]
  %s4 = inlined_call_operand.vmem [shape: f32[2,1,128], index: 4, kind: input, shape index: {}]
  %s5 = inlined_call_operand.hbm [shape: f32[2,1,128], index: 5, kind: input, shape index: {}]
  %s6 = inlined_call_operand.hbm [shape: f32[2,1,128], index: 6, kind: input, shape index: {}]
  %s7 = inlined_call_operand.hbm [shape: bf16[2,128,2048], index: 7, kind: input, shape index: {}]
  %s8 = inlined_call_operand.vmem [shape: f32[2,1,2048], index: 8, kind: input, shape index: {}]
  %s9 = inlined_call_operand.hbm [shape: bf16[2,2048,128], index: 9, kind: input, shape index: {}]
  %s10 = inlined_call_operand.vmem [shape: f32[2,1,128], index: 10, kind: input, shape index: {}]
  %s11 = inlined_call_operand.vmem [shape: f32[2,1,128], index: 11, kind: input, shape index: {}]
  %s12 = inlined_call_operand.vmem [shape: f32[2,1,128], index: 12, kind: input, shape index: {}]
  %s13 = inlined_call_operand.vmem [shape: f32[1,128], index: 13, kind: input, shape index: {}]
  %s14 = inlined_call_operand.vmem [shape: f32[1,128], index: 14, kind: input, shape index: {}]
  %s15 = inlined_call_operand.vmem [shape: f32[1,128], index: 15, kind: input, shape index: {}]
  %s16 = inlined_call_operand.<no memory space> [shape: f32[1,1], index: 16, kind: input, shape index: {}]
  %s17 = inlined_call_operand.vmem [shape: f32[256,1], index: 17, kind: output, shape index: {}]
  %s18 = sld [smem:[#allocation0]]
  $region133: #{tpu_custom_call.1} parent=0
    _
  %s20 = ssub.s32 1, %s18
  %s21 = scalar_select 0, %s20, %s18
  %v22 = vstv %s16
  %23 = vst [vmem:[#allocation2] sm:$0x1] %v22
  $region1: #{tpu_custom_call.1} parent=0
    #allocation3 [shape = 'u8[65536]{0}', space=vmem, size = 0x10000, scoped, tag = 'input window, operand 0']
    #allocation4 [shape = 's32[2]{0}', space=sflag, size = 0x8, scoped, tag = 'scoped memory for tpu_custom_call.1']
    #allocation5 [shape = 'u8[32768]{0}', space=vmem, size = 0x8000, scoped, tag = 'input window, operand 1, single buffered']
    #allocation6 [shape = 's32[1]{0}', space=sflag, size = 0x4, scoped, tag = 'scoped memory for tpu_custom_call.1']
    #allocation7 [shape = 'u8[512]{0}', space=vmem, size = 0x400, scoped, tag = 'input window, operand 2, single buffered']
    #allocation8 [shape = 'u8[65536]{0}', space=vmem, size = 0x10000, scoped, tag = 'input window, operand 3, single buffered']
    #allocation9 [shape = 's32[1]{0}', space=sflag, size = 0x4, scoped, tag = 'scoped memory for tpu_custom_call.1']
    #allocation10 [shape = 'u8[1024]{0}', space=vmem, size = 0x400, scoped, tag = 'input window, operand 5, single buffered']
    #allocation11 [shape = 'u8[1024]{0}', space=vmem, size = 0x400, scoped, tag = 'input window, operand 6, single buffered']
    #allocation12 [shape = 's32[1]{0}', space=sflag, size = 0x4, scoped, tag = 'scoped memory for tpu_custom_call.1']
    #allocation13 [shape = 'u8[1048576]{0}', space=vmem, size = 0x100000, scoped, tag = 'input window, operand 7, single buffered']
    #allocation14 [shape = 'u8[1048576]{0}', space=vmem, size = 0x100000, scoped, tag = 'input window, operand 9, single buffered']
    #allocation15 [shape = 's32[1]{0}', space=sflag, size = 0x4, scoped, tag = 'scoped memory for tpu_custom_call.1']
    %24 = vsyncpa [#allocation4], 0
    %s25 = scalar_lea.sflag [#allocation4], 1
    %26 = vsyncpa %s25, 0
    %27 = vsyncpa [#allocation6], 0
    %28 = vsyncpa [#allocation9], 0
    %29 = vsyncpa [#allocation12], 0
    %30 = vsyncpa [#allocation15], 0
    loop: start=0, step=1, limit=4
    $region2: #{tpu_custom_call.1} parent=1 // loop_pre_header
      _
    $region3: #{tpu_custom_call.1} parent=1 // loop_header
      %s32 = sphi 0, %s36
      %p33 = scmp.ge.s32.totalorder %s32, 4
      %s42 = sphi 0, %s44
      %s45 = sphi 0, %s42
      %s46 = sphi 0, %s45
      %s62 = sphi 0, %s46
      %s66 = sphi 0, %s66
      %s68 = sphi 0, %s66
      %s69 = sphi 0, %s68
      %s83 = sphi 0, %s69
      %s87 = sphi 0, %s87
      %s89 = sphi 0, %s87
      %s90 = sphi 0, %s89
      %s104 = sphi 0, %s90
      %s108 = sphi 0, %s108
      %s110 = sphi 0, %s108
      %s111 = sphi 0, %s110
      %s125 = sphi 0, %s111
      %s129 = sphi 0, %s129
      %s131 = sphi 0, %s129
      %s132 = sphi 0, %s131
      %s146 = sphi 0, %s132
      %s150 = sphi 0, %s150
      %s152 = sphi 0, %s150
      %s153 = sphi 0, %s152
      %s167 = sphi 0, %s153
      %s171 = sphi 0, %s171
      %s173 = sphi 0, %s171
      %s174 = sphi 0, %s173
      %s188 = sphi 0, %s174
      %s192 = sphi 0, %s192
      %s194 = sphi 0, %s192
      %s195 = sphi 0, %s194
      %s209 = sphi 0, %s195
      %s213 = sphi 0, %s213
      %s215 = sphi 0, %s213
      %s216 = sphi 0, %s215
      %s230 = sphi 0, %s216
      %s234 = sphi 0, %s234
      %s236 = sphi 0, %s234
      %s237 = sphi 0, %s236
      %s251 = sphi 0, %s237
      %s255 = sphi 0, %s255
      %s257 = sphi 0, %s255
      %s258 = sphi 0, %s257
      %s272 = sphi 0, %s258
      %s276 = sphi 0, %s276
      %s278 = sphi 0, %s276
      %s279 = sphi 0, %s278
      %s293 = sphi 0, %s279
      %s297 = sphi 0, %s297
      %s299 = sphi 0, %s297
      %s300 = sphi 0, %s299
      %s314 = sphi 0, %s300
      %s318 = sphi 0, %s318
      %s320 = sphi 0, %s318
      %s321 = sphi 0, %s320
      %s335 = sphi 0, %s321
      %s339 = sphi 0, %s339
      %s341 = sphi 0, %s339
      %s342 = sphi 0, %s341
      %s356 = sphi 0, %s342
      %s360 = sphi 0, %s360
      %s362 = sphi 0, %s360
      %s363 = sphi 0, %s362
      %s377 = sphi 0, %s363
      %s381 = sphi 0, %s381
      %s383 = sphi 0, %s381
      %s384 = sphi 0, %s383
      %s398 = sphi 0, %s384
      %s404 = sphi 0, %s406
      %s407 = sphi 0, %s404
      %s408 = sphi 0, %s407
      %s424 = sphi 0, %s408
    $region4: #{tpu_custom_call.1} parent=1 // loop_header_branch
      %35 = sbr.rel (%p33) target = $region8
    $region5: #{tpu_custom_call.1} parent=1 // loop_body
      %s37 = ssub.s32 %s32, 1
      %s38 = ssub.s32 %s32, 2
      %s39 = sadd.s32 %s32, 1
      %s40 = ssub.s32 %s32, %s39
      %p41 = scmp.eq.s32.totalorder %s40, 0
      %s43 = sadd.s32 %s42, 1
      %s44 = scalar_select %p41, %s42, %s43
      %p47 = pneg %p41
      %p48 = scmp.eq.s32.totalorder %s32, 1
      %p49 = por %p47, %p48
      %p50 = scmp.ne.s32.totalorder %s42, %s45
      %p51 = scmp.eq.s32.totalorder %s32, 0
      %p52 = por %p50, %p51
      %p53 = scmp.ne.s32.totalorder %s42, %s45
      %p54 = scmp.eq.s32.totalorder %s37, 1
      %p55 = por %p53, %p54
      %p56 = scmp.ne.s32.totalorder %s45, %s46
      %p57 = scmp.eq.s32.totalorder %s37, 0
      %p58 = por %p56, %p57
      %p59 = scmp.ne.s32.totalorder %s45, %s46
      %p60 = scmp.eq.s32.totalorder %s38, 1
      %p61 = por %p59, %p60
      %p63 = scmp.ne.s32.totalorder %s46, %s62
      %p64 = scmp.eq.s32.totalorder %s38, 0
      %p65 = por %p63, %p64
      %s67 = sadd.s32 %s66, 1
      %p70 = scmp.eq.s32.totalorder %s32, 1
      %p71 = scmp.ne.s32.totalorder %s66, %s68
      %p72 = scmp.eq.s32.totalorder %s32, 0
      %p73 = por %p71, %p72
      %p74 = scmp.ne.s32.totalorder %s66, %s68
      %p75 = scmp.eq.s32.totalorder %s37, 1
      %p76 = por %p74, %p75
      %p77 = scmp.ne.s32.totalorder %s68, %s69
      %p78 = scmp.eq.s32.totalorder %s37, 0
      %p79 = por %p77, %p78
      %p80 = scmp.ne.s32.totalorder %s68, %s69
      %p81 = scmp.eq.s32.totalorder %s38, 1
      %p82 = por %p80, %p81
      %p84 = scmp.ne.s32.totalorder %s69, %s83
      %p85 = scmp.eq.s32.totalorder %s38, 0
      %p86 = por %p84, %p85
      %s88 = sadd.s32 %s87, 1
      %p91 = scmp.eq.s32.totalorder %s32, 1
      %p92 = scmp.ne.s32.totalorder %s87, %s89
      %p93 = scmp.eq.s32.totalorder %s32, 0
      %p94 = por %p92, %p93
      %p95 = scmp.ne.s32.totalorder %s87, %s89
      %p96 = scmp.eq.s32.totalorder %s37, 1
      %p97 = por %p95, %p96
      %p98 = scmp.ne.s32.totalorder %s89, %s90
      %p99 = scmp.eq.s32.totalorder %s37, 0
      %p100 = por %p98, %p99
      %p101 = scmp.ne.s32.totalorder %s89, %s90
      %p102 = scmp.eq.s32.totalorder %s38, 1
      %p103 = por %p101, %p102
      %p105 = scmp.ne.s32.totalorder %s90, %s104
      %p106 = scmp.eq.s32.totalorder %s38, 0
      %p107 = por %p105, %p106
      %s109 = sadd.s32 %s108, 1
      %p112 = scmp.eq.s32.totalorder %s32, 1
      %p113 = scmp.ne.s32.totalorder %s108, %s110
      %p114 = scmp.eq.s32.totalorder %s32, 0
      %p115 = por %p113, %p114
      %p116 = scmp.ne.s32.totalorder %s108, %s110
      %p117 = scmp.eq.s32.totalorder %s37, 1
      %p118 = por %p116, %p117
      %p119 = scmp.ne.s32.totalorder %s110, %s111
      %p120 = scmp.eq.s32.totalorder %s37, 0
      %p121 = por %p119, %p120
      %p122 = scmp.ne.s32.totalorder %s110, %s111
      %p123 = scmp.eq.s32.totalorder %s38, 1
      %p124 = por %p122, %p123
      %p126 = scmp.ne.s32.totalorder %s111, %s125
      %p127 = scmp.eq.s32.totalorder %s38, 0
      %p128 = por %p126, %p127
      %s130 = sadd.s32 %s129, 1
      %p133 = scmp.eq.s32.totalorder %s32, 1
      %p134 = scmp.ne.s32.totalorder %s129, %s131
      %p135 = scmp.eq.s32.totalorder %s32, 0
      %p136 = por %p134, %p135
      %p137 = scmp.ne.s32.totalorder %s129, %s131
      %p138 = scmp.eq.s32.totalorder %s37, 1
      %p139 = por %p137, %p138
      %p140 = scmp.ne.s32.totalorder %s131, %s132
      %p141 = scmp.eq.s32.totalorder %s37, 0
      %p142 = por %p140, %p141
      %p143 = scmp.ne.s32.totalorder %s131, %s132
      %p144 = scmp.eq.s32.totalorder %s38, 1
      %p145 = por %p143, %p144
      %p147 = scmp.ne.s32.totalorder %s132, %s146
      %p148 = scmp.eq.s32.totalorder %s38, 0
      %p149 = por %p147, %p148
      %s151 = sadd.s32 %s150, 1
      %p154 = scmp.eq.s32.totalorder %s32, 1
      %p155 = scmp.ne.s32.totalorder %s150, %s152
      %p156 = scmp.eq.s32.totalorder %s32, 0
      %p157 = por %p155, %p156
      %p158 = scmp.ne.s32.totalorder %s150, %s152
      %p159 = scmp.eq.s32.totalorder %s37, 1
      %p160 = por %p158, %p159
      %p161 = scmp.ne.s32.totalorder %s152, %s153
      %p162 = scmp.eq.s32.totalorder %s37, 0
      %p163 = por %p161, %p162
      %p164 = scmp.ne.s32.totalorder %s152, %s153
      %p165 = scmp.eq.s32.totalorder %s38, 1
      %p166 = por %p164, %p165
      %p168 = scmp.ne.s32.totalorder %s153, %s167
      %p169 = scmp.eq.s32.totalorder %s38, 0
      %p170 = por %p168, %p169
      %s172 = sadd.s32 %s171, 1
      %p175 = scmp.eq.s32.totalorder %s32, 1
      %p176 = scmp.ne.s32.totalorder %s171, %s173
      %p177 = scmp.eq.s32.totalorder %s32, 0
      %p178 = por %p176, %p177
      %p179 = scmp.ne.s32.totalorder %s171, %s173
      %p180 = scmp.eq.s32.totalorder %s37, 1
      %p181 = por %p179, %p180
      %p182 = scmp.ne.s32.totalorder %s173, %s174
      %p183 = scmp.eq.s32.totalorder %s37, 0
      %p184 = por %p182, %p183
      %p185 = scmp.ne.s32.totalorder %s173, %s174
      %p186 = scmp.eq.s32.totalorder %s38, 1
      %p187 = por %p185, %p186
      %p189 = scmp.ne.s32.totalorder %s174, %s188
      %p190 = scmp.eq.s32.totalorder %s38, 0
      %p191 = por %p189, %p190
      %s193 = sadd.s32 %s192, 1
      %p196 = scmp.eq.s32.totalorder %s32, 1
      %p197 = scmp.ne.s32.totalorder %s192, %s194
      %p198 = scmp.eq.s32.totalorder %s32, 0
      %p199 = por %p197, %p198
      %p200 = scmp.ne.s32.totalorder %s192, %s194
      %p201 = scmp.eq.s32.totalorder %s37, 1
      %p202 = por %p200, %p201
      %p203 = scmp.ne.s32.totalorder %s194, %s195
      %p204 = scmp.eq.s32.totalorder %s37, 0
      %p205 = por %p203, %p204
      %p206 = scmp.ne.s32.totalorder %s194, %s195
      %p207 = scmp.eq.s32.totalorder %s38, 1
      %p208 = por %p206, %p207
      %p210 = scmp.ne.s32.totalorder %s195, %s209
      %p211 = scmp.eq.s32.totalorder %s38, 0
      %p212 = por %p210, %p211
      %s214 = sadd.s32 %s213, 1
      %p217 = scmp.eq.s32.totalorder %s32, 1
      %p218 = scmp.ne.s32.totalorder %s213, %s215
      %p219 = scmp.eq.s32.totalorder %s32, 0
      %p220 = por %p218, %p219
      %p221 = scmp.ne.s32.totalorder %s213, %s215
      %p222 = scmp.eq.s32.totalorder %s37, 1
      %p223 = por %p221, %p222
      %p224 = scmp.ne.s32.totalorder %s215, %s216
      %p225 = scmp.eq.s32.totalorder %s37, 0
      %p226 = por %p224, %p225
      %p227 = scmp.ne.s32.totalorder %s215, %s216
      %p228 = scmp.eq.s32.totalorder %s38, 1
      %p229 = por %p227, %p228
      %p231 = scmp.ne.s32.totalorder %s216, %s230
      %p232 = scmp.eq.s32.totalorder %s38, 0
      %p233 = por %p231, %p232
      %s235 = sadd.s32 %s234, 1
      %p238 = scmp.eq.s32.totalorder %s32, 1
      %p239 = scmp.ne.s32.totalorder %s234, %s236
      %p240 = scmp.eq.s32.totalorder %s32, 0
      %p241 = por %p239, %p240
      %p242 = scmp.ne.s32.totalorder %s234, %s236
      %p243 = scmp.eq.s32.totalorder %s37, 1
      %p244 = por %p242, %p243
      %p245 = scmp.ne.s32.totalorder %s236, %s237
      %p246 = scmp.eq.s32.totalorder %s37, 0
      %p247 = por %p245, %p246
      %p248 = scmp.ne.s32.totalorder %s236, %s237
      %p249 = scmp.eq.s32.totalorder %s38, 1
      %p250 = por %p248, %p249
      %p252 = scmp.ne.s32.totalorder %s237, %s251
      %p253 = scmp.eq.s32.totalorder %s38, 0
      %p254 = por %p252, %p253
      %s256 = sadd.s32 %s255, 1
      %p259 = scmp.eq.s32.totalorder %s32, 1
      %p260 = scmp.ne.s32.totalorder %s255, %s257
      %p261 = scmp.eq.s32.totalorder %s32, 0
      %p262 = por %p260, %p261
      %p263 = scmp.ne.s32.totalorder %s255, %s257
      %p264 = scmp.eq.s32.totalorder %s37, 1
      %p265 = por %p263, %p264
      %p266 = scmp.ne.s32.totalorder %s257, %s258
      %p267 = scmp.eq.s32.totalorder %s37, 0
      %p268 = por %p266, %p267
      %p269 = scmp.ne.s32.totalorder %s257, %s258
      %p270 = scmp.eq.s32.totalorder %s38, 1
      %p271 = por %p269, %p270
      %p273 = scmp.ne.s32.totalorder %s258, %s272
      %p274 = scmp.eq.s32.totalorder %s38, 0
      %p275 = por %p273, %p274
      %s277 = sadd.s32 %s276, 1
      %p280 = scmp.eq.s32.totalorder %s32, 1
      %p281 = scmp.ne.s32.totalorder %s276, %s278
      %p282 = scmp.eq.s32.totalorder %s32, 0
      %p283 = por %p281, %p282
      %p284 = scmp.ne.s32.totalorder %s276, %s278
      %p285 = scmp.eq.s32.totalorder %s37, 1
      %p286 = por %p284, %p285
      %p287 = scmp.ne.s32.totalorder %s278, %s279
      %p288 = scmp.eq.s32.totalorder %s37, 0
      %p289 = por %p287, %p288
      %p290 = scmp.ne.s32.totalorder %s278, %s279
      %p291 = scmp.eq.s32.totalorder %s38, 1
      %p292 = por %p290, %p291
      %p294 = scmp.ne.s32.totalorder %s279, %s293
      %p295 = scmp.eq.s32.totalorder %s38, 0
      %p296 = por %p294, %p295
      %s298 = sadd.s32 %s297, 1
      %p301 = scmp.eq.s32.totalorder %s32, 1
      %p302 = scmp.ne.s32.totalorder %s297, %s299
      %p303 = scmp.eq.s32.totalorder %s32, 0
      %p304 = por %p302, %p303
      %p305 = scmp.ne.s32.totalorder %s297, %s299
      %p306 = scmp.eq.s32.totalorder %s37, 1
      %p307 = por %p305, %p306
      %p308 = scmp.ne.s32.totalorder %s299, %s300
      %p309 = scmp.eq.s32.totalorder %s37, 0
      %p310 = por %p308, %p309
      %p311 = scmp.ne.s32.totalorder %s299, %s300
      %p312 = scmp.eq.s32.totalorder %s38, 1
      %p313 = por %p311, %p312
      %p315 = scmp.ne.s32.totalorder %s300, %s314
      %p316 = scmp.eq.s32.totalorder %s38, 0
      %p317 = por %p315, %p316
      %s319 = sadd.s32 %s318, 1
      %p322 = scmp.eq.s32.totalorder %s32, 1
      %p323 = scmp.ne.s32.totalorder %s318, %s320
      %p324 = scmp.eq.s32.totalorder %s32, 0
      %p325 = por %p323, %p324
      %p326 = scmp.ne.s32.totalorder %s318, %s320
      %p327 = scmp.eq.s32.totalorder %s37, 1
      %p328 = por %p326, %p327
      %p329 = scmp.ne.s32.totalorder %s320, %s321
      %p330 = scmp.eq.s32.totalorder %s37, 0
      %p331 = por %p329, %p330
      %p332 = scmp.ne.s32.totalorder %s320, %s321
      %p333 = scmp.eq.s32.totalorder %s38, 1
      %p334 = por %p332, %p333
      %p336 = scmp.ne.s32.totalorder %s321, %s335
      %p337 = scmp.eq.s32.totalorder %s38, 0
      %p338 = por %p336, %p337
      %s340 = sadd.s32 %s339, 1
      %p343 = scmp.eq.s32.totalorder %s32, 1
      %p344 = scmp.ne.s32.totalorder %s339, %s341
      %p345 = scmp.eq.s32.totalorder %s32, 0
      %p346 = por %p344, %p345
      %p347 = scmp.ne.s32.totalorder %s339, %s341
      %p348 = scmp.eq.s32.totalorder %s37, 1
      %p349 = por %p347, %p348
      %p350 = scmp.ne.s32.totalorder %s341, %s342
      %p351 = scmp.eq.s32.totalorder %s37, 0
      %p352 = por %p350, %p351
      %p353 = scmp.ne.s32.totalorder %s341, %s342
      %p354 = scmp.eq.s32.totalorder %s38, 1
      %p355 = por %p353, %p354
      %p357 = scmp.ne.s32.totalorder %s342, %s356
      %p358 = scmp.eq.s32.totalorder %s38, 0
      %p359 = por %p357, %p358
      %s361 = sadd.s32 %s360, 1
      %p364 = scmp.eq.s32.totalorder %s32, 1
      %p365 = scmp.ne.s32.totalorder %s360, %s362
      %p366 = scmp.eq.s32.totalorder %s32, 0
      %p367 = por %p365, %p366
      %p368 = scmp.ne.s32.totalorder %s360, %s362
      %p369 = scmp.eq.s32.totalorder %s37, 1
      %p370 = por %p368, %p369
      %p371 = scmp.ne.s32.totalorder %s362, %s363
      %p372 = scmp.eq.s32.totalorder %s37, 0
      %p373 = por %p371, %p372
      %p374 = scmp.ne.s32.totalorder %s362, %s363
      %p375 = scmp.eq.s32.totalorder %s38, 1
      %p376 = por %p374, %p375
      %p378 = scmp.ne.s32.totalorder %s363, %s377
      %p379 = scmp.eq.s32.totalorder %s38, 0
      %p380 = por %p378, %p379
      %s382 = sadd.s32 %s381, 1
      %p385 = scmp.eq.s32.totalorder %s32, 1
      %p386 = scmp.ne.s32.totalorder %s381, %s383
      %p387 = scmp.eq.s32.totalorder %s32, 0
      %p388 = por %p386, %p387
      %p389 = scmp.ne.s32.totalorder %s381, %s383
      %p390 = scmp.eq.s32.totalorder %s37, 1
      %p391 = por %p389, %p390
      %p392 = scmp.ne.s32.totalorder %s383, %s384
      %p393 = scmp.eq.s32.totalorder %s37, 0
      %p394 = por %p392, %p393
      %p395 = scmp.ne.s32.totalorder %s383, %s384
      %p396 = scmp.eq.s32.totalorder %s38, 1
      %p397 = por %p395, %p396
      %p399 = scmp.ne.s32.totalorder %s384, %s398
      %p400 = scmp.eq.s32.totalorder %s38, 0
      %p401 = por %p399, %p400
      %s402 = ssub.s32 %s32, %s39
      %p403 = scmp.eq.s32.totalorder %s402, 0
      %s405 = sadd.s32 %s404, 1
      %s406 = scalar_select %p403, %s404, %s405
      %p409 = pneg %p403
      %p410 = scmp.eq.s32.totalorder %s32, 1
      %p411 = por %p409, %p410
      %p412 = scmp.ne.s32.totalorder %s404, %s407
      %p413 = scmp.eq.s32.totalorder %s32, 0
      %p414 = por %p412, %p413
      %p415 = scmp.ne.s32.totalorder %s404, %s407
      %p416 = scmp.eq.s32.totalorder %s37, 1
      %p417 = por %p415, %p416
      %p418 = scmp.ne.s32.totalorder %s407, %s408
      %p419 = scmp.eq.s32.totalorder %s37, 0
      %p420 = por %p418, %p419
      %p421 = scmp.ne.s32.totalorder %s407, %s408
      %p422 = scmp.eq.s32.totalorder %s38, 1
      %p423 = por %p421, %p422
      %p425 = scmp.ne.s32.totalorder %s408, %s424
      %p426 = scmp.eq.s32.totalorder %s38, 0
      %p427 = por %p425, %p426
      %p428 = scmp.le.s32.totalorder 1, %s32
      %p429 = scmp.lt.s32.totalorder %s32, 3
      %p430 = pnand %p428, %p429
      %p431 = pneg %p430
      // Predicated region
      $region9: #{tpu_custom_call.1} parent=5 // pred_check
        _
      $region10: #{tpu_custom_call.1} parent=5 // pred_check_branch
        %433 = sbr.rel (%p430) target = $region12
      $region11: #{tpu_custom_call.1} parent=5 // pred_region
        %s434 = ssub.s32 %s32, 1
        // Predicated region
        $region13: #{tpu_custom_call.1} parent=11 // pred_check
          %p435 = pneg %p79
        $region14: #{tpu_custom_call.1} parent=11 // pred_check_branch
          %437 = sbr.rel (%p435) target = $region16
        $region15: #{tpu_custom_call.1} parent=11 // pred_region
          %s439 = ssub.s32 1024, 1024
          %440 = vsyncadd [#allocation6], %s439
          %s441 = sshll.u32 [#allocation5], 4
          %s442 = int_to_ptr.vmem [resolvable:$true] %s441
          %447 = dma.hbm_to_vmem [thread:$0]  %s1, 1024, %s442, [#allocation6], 64, 64, 4
        $region16: #{tpu_custom_call.1} parent=11 // pred_fallthru
          _
        // Predicated region
        $region17: #{tpu_custom_call.1} parent=11 // pred_check
          %p448 = pneg %p100
        $region18: #{tpu_custom_call.1} parent=11 // pred_check_branch
          %450 = sbr.rel (%p448) target = $region20
        $region19: #{tpu_custom_call.1} parent=11 // pred_region
          %s452 = ssub.s32 16, 16
          %453 = vsyncadd [#allocation6], %s452
          %s455 = sshll.u32 [#allocation7], 4
          %s456 = int_to_ptr.vmem [resolvable:$true] %s455
          %458 = dma.hbm_to_vmem [thread:$0]  %s2, 16, %s456, [#allocation6]
        $region20: #{tpu_custom_call.1} parent=11 // pred_fallthru
          _
        // Predicated region
        $region21: #{tpu_custom_call.1} parent=11 // pred_check
          %p459 = pneg %p121
        $region22: #{tpu_custom_call.1} parent=11 // pred_check_branch
          %461 = sbr.rel (%p459) target = $region24
        $region23: #{tpu_custom_call.1} parent=11 // pred_region
          %s463 = ssub.s32 2048, 2048
          %464 = vsyncadd [#allocation9], %s463
          %s465 = sshll.u32 [#allocation8], 4
          %s466 = int_to_ptr.vmem [resolvable:$true] %s465
          %471 = dma.hbm_to_vmem [thread:$0]  %s3, 2048, %s466, [#allocation9], 64, 64, 4
        $region24: #{tpu_custom_call.1} parent=11 // pred_fallthru
          _
        // Predicated region
        $region25: #{tpu_custom_call.1} parent=11 // pred_check
          %p472 = pneg %p142
        $region26: #{tpu_custom_call.1} parent=11 // pred_check_branch
          %474 = sbr.rel (%p472) target = $region28
        $region27: #{tpu_custom_call.1} parent=11 // pred_region
          _
        $region28: #{tpu_custom_call.1} parent=11 // pred_fallthru
          _
        // Predicated region
        $region29: #{tpu_custom_call.1} parent=11 // pred_check
          %p475 = pneg %p163
        $region30: #{tpu_custom_call.1} parent=11 // pred_check_branch
          %477 = sbr.rel (%p475) target = $region32
        $region31: #{tpu_custom_call.1} parent=11 // pred_region
          %s479 = ssub.s32 32, 32
          %480 = vsyncadd [#allocation9], %s479
          %s481 = sshll.u32 [#allocation10], 4
          %s482 = int_to_ptr.vmem [resolvable:$true] %s481
          %487 = dma.hbm_to_vmem [thread:$0]  %s5, 32, %s482, [#allocation9], 16, 16, 1
        $region32: #{tpu_custom_call.1} parent=11 // pred_fallthru
          _
        // Predicated region
        $region33: #{tpu_custom_call.1} parent=11 // pred_check
          %p488 = pneg %p184
        $region34: #{tpu_custom_call.1} parent=11 // pred_check_branch
          %490 = sbr.rel (%p488) target = $region36
        $region35: #{tpu_custom_call.1} parent=11 // pred_region
          %s492 = ssub.s32 32, 32
          %493 = vsyncadd [#allocation12], %s492
          %s494 = sshll.u32 [#allocation11], 4
          %s495 = int_to_ptr.vmem [resolvable:$true] %s494
          %500 = dma.hbm_to_vmem [thread:$0]  %s6, 32, %s495, [#allocation12], 16, 16, 1
        $region36: #{tpu_custom_call.1} parent=11 // pred_fallthru
          _
        // Predicated region
        $region37: #{tpu_custom_call.1} parent=11 // pred_check
          %p501 = pneg %p205
        $region38: #{tpu_custom_call.1} parent=11 // pred_check_branch
          %503 = sbr.rel (%p501) target = $region40
        $region39: #{tpu_custom_call.1} parent=11 // pred_region
          %s505 = ssub.s32 32768, 32768
          %506 = vsyncadd [#allocation12], %s505
          %s507 = sshll.u32 [#allocation13], 4
          %s508 = int_to_ptr.vmem [resolvable:$true] %s507
          %513 = dma.hbm_to_vmem [thread:$0]  %s7, 32768, %s508, [#allocation12], 1024, 1024, 64
        $region40: #{tpu_custom_call.1} parent=11 // pred_fallthru
          _
        // Predicated region
        $region41: #{tpu_custom_call.1} parent=11 // pred_check
          %p514 = pneg %p226
        $region42: #{tpu_custom_call.1} parent=11 // pred_check_branch
          %516 = sbr.rel (%p514) target = $region44
        $region43: #{tpu_custom_call.1} parent=11 // pred_region
          _
        $region44: #{tpu_custom_call.1} parent=11 // pred_fallthru
          _
        // Predicated region
        $region45: #{tpu_custom_call.1} parent=11 // pred_check
          %p517 = pneg %p247
        $region46: #{tpu_custom_call.1} parent=11 // pred_check_branch
          %519 = sbr.rel (%p517) target = $region48
        $region47: #{tpu_custom_call.1} parent=11 // pred_region
          %s521 = ssub.s32 32768, 32768
          %522 = vsyncadd [#allocation15], %s521
          %s523 = sshll.u32 [#allocation14], 4
          %s524 = int_to_ptr.vmem [resolvable:$true] %s523
          %529 = dma.hbm_to_vmem [thread:$0]  %s9, 32768, %s524, [#allocation15], 64, 64, 4
        $region48: #{tpu_custom_call.1} parent=11 // pred_fallthru
          _
        // Predicated region
        $region49: #{tpu_custom_call.1} parent=11 // pred_check
          %p530 = pneg %p268
        $region50: #{tpu_custom_call.1} parent=11 // pred_check_branch
          %532 = sbr.rel (%p530) target = $region52
        $region51: #{tpu_custom_call.1} parent=11 // pred_region
          _
        $region52: #{tpu_custom_call.1} parent=11 // pred_fallthru
          _
        // Predicated region
        $region53: #{tpu_custom_call.1} parent=11 // pred_check
          %p533 = pneg %p289
        $region54: #{tpu_custom_call.1} parent=11 // pred_check_branch
          %535 = sbr.rel (%p533) target = $region56
        $region55: #{tpu_custom_call.1} parent=11 // pred_region
          _
        $region56: #{tpu_custom_call.1} parent=11 // pred_fallthru
          _
        // Predicated region
        $region57: #{tpu_custom_call.1} parent=11 // pred_check
          %p536 = pneg %p310
        $region58: #{tpu_custom_call.1} parent=11 // pred_check_branch
          %538 = sbr.rel (%p536) target = $region60
        $region59: #{tpu_custom_call.1} parent=11 // pred_region
          _
        $region60: #{tpu_custom_call.1} parent=11 // pred_fallthru
          _
        // Predicated region
        $region61: #{tpu_custom_call.1} parent=11 // pred_check
          %p539 = pneg %p331
        $region62: #{tpu_custom_call.1} parent=11 // pred_check_branch
          %541 = sbr.rel (%p539) target = $region64
        $region63: #{tpu_custom_call.1} parent=11 // pred_region
          _
        $region64: #{tpu_custom_call.1} parent=11 // pred_fallthru
          _
        // Predicated region
        $region65: #{tpu_custom_call.1} parent=11 // pred_check
          %p542 = pneg %p352
        $region66: #{tpu_custom_call.1} parent=11 // pred_check_branch
          %544 = sbr.rel (%p542) target = $region68
        $region67: #{tpu_custom_call.1} parent=11 // pred_region
          _
        $region68: #{tpu_custom_call.1} parent=11 // pred_fallthru
          _
        // Predicated region
        $region69: #{tpu_custom_call.1} parent=11 // pred_check
          %p545 = pneg %p373
        $region70: #{tpu_custom_call.1} parent=11 // pred_check_branch
          %547 = sbr.rel (%p545) target = $region72
        $region71: #{tpu_custom_call.1} parent=11 // pred_region
          _
        $region72: #{tpu_custom_call.1} parent=11 // pred_fallthru
          _
        // Predicated region
        $region73: #{tpu_custom_call.1} parent=11 // pred_check
          %p548 = pneg %p394
        $region74: #{tpu_custom_call.1} parent=11 // pred_check_branch
          %550 = sbr.rel (%p548) target = $region76
        $region75: #{tpu_custom_call.1} parent=11 // pred_region
          _
        $region76: #{tpu_custom_call.1} parent=11 // pred_fallthru
          _
      $region12: #{tpu_custom_call.1} parent=5 // pred_fallthru
        _
      %p551 = scmp.lt.s32.totalorder %s32, 2
      // Predicated region
      $region77: #{tpu_custom_call.1} parent=5 // pred_check
        %p552 = pneg %p551
      $region78: #{tpu_custom_call.1} parent=5 // pred_check_branch
        %554 = sbr.rel (%p552) target = $region80
      $region79: #{tpu_custom_call.1} parent=5 // pred_region
        // Predicated region
        $region81: #{tpu_custom_call.1} parent=79 // pred_check
          %p555 = pneg %p52
        $region82: #{tpu_custom_call.1} parent=79 // pred_check_branch
          %557 = sbr.rel (%p555) target = $region84
        $region83: #{tpu_custom_call.1} parent=79 // pred_region
          %s558 = sand.u32 %s42, 1
          %s559 = scalar_lea.sflag [#allocation4], %s558
          %s560 = sand.u32 %s42, 1
          %s561 = smul.addr %s560, 64
          %s562 = scalar_lea.vmem [#allocation3], %s561
          %s563 = smul.u32 16, %s32
          %s565 = ssub.s32 1024, 1024
          %566 = vsyncadd %s559, %s565
          %s567 = smul.addr %s563, 64
          %s568 = scalar_lea.hbm %s0, %s567
          %s569 = sshll.u32 %s562, 4
          %s570 = int_to_ptr.vmem [resolvable:$true] %s569
          %575 = dma.hbm_to_vmem [thread:$0]  %s568, 1024, %s570, %s559, 64, 64, 4
        $region84: #{tpu_custom_call.1} parent=79 // pred_fallthru
          _
      $region80: #{tpu_custom_call.1} parent=5 // pred_fallthru
        _
      %p576 = scmp.le.s32.totalorder 1, %s32
      %p577 = scmp.lt.s32.totalorder %s32, 3
      %p578 = pnand %p576, %p577
      %p579 = pneg %p578
      // Predicated region
      $region85: #{tpu_custom_call.1} parent=5 // pred_check
        _
      $region86: #{tpu_custom_call.1} parent=5 // pred_check_branch
        %581 = sbr.rel (%p578) target = $region88
      $region87: #{tpu_custom_call.1} parent=5 // pred_region
        %s582 = ssub.s32 %s32, 1
        %s583 = sand.u32 %s45, 1
        %s584 = scalar_lea.sflag [#allocation4], %s583
        %s585 = sand.u32 %s45, 1
        %s586 = smul.addr %s585, 64
        %s587 = scalar_lea.vmem [#allocation3], %s586
        // Predicated region
        $region89: #{tpu_custom_call.1} parent=87 // pred_check
          %p588 = pneg %p58
        $region90: #{tpu_custom_call.1} parent=87 // pred_check_branch
          %590 = sbr.rel (%p588) target = $region92
        $region91: #{tpu_custom_call.1} parent=87 // pred_region
          %591 = dma.done %s584, 1024
        $region92: #{tpu_custom_call.1} parent=87 // pred_fallthru
          _
        // Predicated region
        $region93: #{tpu_custom_call.1} parent=87 // pred_check
          %p592 = pneg %p79
        $region94: #{tpu_custom_call.1} parent=87 // pred_check_branch
          %594 = sbr.rel (%p592) target = $region96
        $region95: #{tpu_custom_call.1} parent=87 // pred_region
          %595 = dma.done [#allocation6], 1024
        $region96: #{tpu_custom_call.1} parent=87 // pred_fallthru
          _
        // Predicated region
        $region97: #{tpu_custom_call.1} parent=87 // pred_check
          %p596 = pneg %p100
        $region98: #{tpu_custom_call.1} parent=87 // pred_check_branch
          %598 = sbr.rel (%p596) target = $region100
        $region99: #{tpu_custom_call.1} parent=87 // pred_region
          %599 = dma.done [#allocation6], 16
        $region100: #{tpu_custom_call.1} parent=87 // pred_fallthru
          _
        // Predicated region
        $region101: #{tpu_custom_call.1} parent=87 // pred_check
          %p600 = pneg %p121
        $region102: #{tpu_custom_call.1} parent=87 // pred_check_branch
          %602 = sbr.rel (%p600) target = $region104
        $region103: #{tpu_custom_call.1} parent=87 // pred_region
          %603 = dma.done [#allocation9], 2048
        $region104: #{tpu_custom_call.1} parent=87 // pred_fallthru
          _
        // Predicated region
        $region105: #{tpu_custom_call.1} parent=87 // pred_check
          %p604 = pneg %p163
        $region106: #{tpu_custom_call.1} parent=87 // pred_check_branch
          %606 = sbr.rel (%p604) target = $region108
        $region107: #{tpu_custom_call.1} parent=87 // pred_region
          %607 = dma.done [#allocation9], 32
        $region108: #{tpu_custom_call.1} parent=87 // pred_fallthru
          _
        // Predicated region
        $region109: #{tpu_custom_call.1} parent=87 // pred_check
          %p608 = pneg %p184
        $region110: #{tpu_custom_call.1} parent=87 // pred_check_branch
          %610 = sbr.rel (%p608) target = $region112
        $region111: #{tpu_custom_call.1} parent=87 // pred_region
          %611 = dma.done [#allocation12], 32
        $region112: #{tpu_custom_call.1} parent=87 // pred_fallthru
          _
        // Predicated region
        $region113: #{tpu_custom_call.1} parent=87 // pred_check
          %p612 = pneg %p205
        $region114: #{tpu_custom_call.1} parent=87 // pred_check_branch
          %614 = sbr.rel (%p612) target = $region116
        $region115: #{tpu_custom_call.1} parent=87 // pred_region
          %615 = dma.done [#allocation12], 32768
        $region116: #{tpu_custom_call.1} parent=87 // pred_fallthru
          _
        // Predicated region
        $region117: #{tpu_custom_call.1} parent=87 // pred_check
          %p616 = pneg %p247
        $region118: #{tpu_custom_call.1} parent=87 // pred_check_branch
          %618 = sbr.rel (%p616) target = $region120
        $region119: #{tpu_custom_call.1} parent=87 // pred_region
          %619 = dma.done [#allocation15], 32768
        $region120: #{tpu_custom_call.1} parent=87 // pred_fallthru
          _
        %s620 = sand.u32 %s45, 1
        %s621 = scalar_lea.sflag [#allocation4], %s620
        %s622 = sand.u32 %s45, 1
        %s623 = smul.addr %s622, 64
        %s624 = scalar_lea.vmem [#allocation3], %s623
        %p625 = pneg %p58
        %p626 = pneg %p55
        %p627 = pneg %p79
        %p628 = pneg %p76
        %p629 = pneg %p100
        %p630 = pneg %p97
        %p631 = pneg %p121
        %p632 = pneg %p118
        %p633 = pneg %p142
        %p634 = pneg %p139
        %p635 = pneg %p163
        %p636 = pneg %p160
        %p637 = pneg %p184
        %p638 = pneg %p181
        %p639 = pneg %p205
        %p640 = pneg %p202
        %p641 = pneg %p226
        %p642 = pneg %p223
        %p643 = pneg %p247
        %p644 = pneg %p244
        %p645 = pneg %p268
        %p646 = pneg %p265
        %p647 = pneg %p289
        %p648 = pneg %p286
        %p649 = pneg %p310
        %p650 = pneg %p307
        %p651 = pneg %p331
        %p652 = pneg %p328
        %p653 = pneg %p352
        %p654 = pneg %p349
        %p655 = pneg %p373
        %p656 = pneg %p370
        %p657 = pneg %p394
        %p658 = pneg %p391
        %p659 = pneg %p420
        %p660 = pneg %p417
        %s661 = smul.u32 16, %s37
        %p662 = scmp.lt.s32.totalorder %s661, 31
        %s663 = scalar_select %p662, %s661, 31
        %s664 = smul.addr %s663, 8
        %s665 = scalar_lea.vmem %s17, %s664
        %s666 = smul.u32 16, %s37
        %s667 = smul.u32 16, %s37
        %p668 = scmp.lt.s32.totalorder %s667, 31
        %s669 = scalar_select %p668, %s667, 31
        %s670 = smul.addr %s669, 8
        %s671 = scalar_lea.vmem %s17, %s670
        %s672 = smul.u32 16, %s37
        %v674 = vld [vmem:[%s587] sm:$0xf]
        %v675 = vld [vmem:[%s587 + $0x4] sm:$0xf]
        %v676 = vld [vmem:[%s587 + $0x8] sm:$0xf]
        %v677 = vld [vmem:[%s587 + $0xc] sm:$0xf]
        %v678 = vld [vmem:[%s587 + $0x10] sm:$0xf]
        %v679 = vld [vmem:[%s587 + $0x14] sm:$0xf]
        %v680 = vld [vmem:[%s587 + $0x18] sm:$0xf]
        %v681 = vld [vmem:[%s587 + $0x1c] sm:$0xf]
        %v682 = vld [vmem:[%s587 + $0x20] sm:$0xf]
        %v683 = vld [vmem:[%s587 + $0x24] sm:$0xf]
        %v684 = vld [vmem:[%s587 + $0x28] sm:$0xf]
        %v685 = vld [vmem:[%s587 + $0x2c] sm:$0xf]
        %v686 = vld [vmem:[%s587 + $0x30] sm:$0xf]
        %v687 = vld [vmem:[%s587 + $0x34] sm:$0xf]
        %v688 = vld [vmem:[%s587 + $0x38] sm:$0xf]
        %v689 = vld [vmem:[%s587 + $0x3c] sm:$0xf]
        %v690 = vld [vmem:[#allocation5] sm:$0xf]
        %v691 = vld [vmem:[#allocation5 + $0x4] sm:$0xf]
        %v692 = vld [vmem:[#allocation5 + $0x8] sm:$0xf]
        %v693 = vld [vmem:[#allocation5 + $0xc] sm:$0xf]
        %v694 = vld [vmem:[#allocation5 + $0x10] sm:$0xf]
        %v695 = vld [vmem:[#allocation5 + $0x14] sm:$0xf]
        %v696 = vld [vmem:[#allocation5 + $0x18] sm:$0xf]
        %v697 = vld [vmem:[#allocation5 + $0x1c] sm:$0xf]
        %v698 = vld [vmem:[#allocation5 + $0x20] sm:$0xf]
        %v699 = vld [vmem:[#allocation5 + $0x24] sm:$0xf]
        %v700 = vld [vmem:[#allocation5 + $0x28] sm:$0xf]
        %v701 = vld [vmem:[#allocation5 + $0x2c] sm:$0xf]
        %v702 = vld [vmem:[#allocation5 + $0x30] sm:$0xf]
        %v703 = vld [vmem:[#allocation5 + $0x34] sm:$0xf]
        %v704 = vld [vmem:[#allocation5 + $0x38] sm:$0xf]
        %v705 = vld [vmem:[#allocation5 + $0x3c] sm:$0xf]
        %v706 = vld [vmem:[#allocation7] sm:$0x1]
        %v708 = vlaneseq
        %v709 = vshrl.u32 %v708, 7
        %v710 = vsub.s32 0, %v709
        %v711 = vrot.slane %v706, %v710
        %v729 = vunpack.c.l.b16 %v674
        %v730 = vunpack.c.l.b16 %v675
        %v731 = vunpack.c.l.b16 %v676
        %v732 = vunpack.c.l.b16 %v677
        %v733 = vunpack.c.l.b16 %v678
        %v734 = vunpack.c.l.b16 %v679
        %v735 = vunpack.c.l.b16 %v680
        %v736 = vunpack.c.l.b16 %v681
        %v737 = vunpack.c.l.b16 %v682
        %v738 = vunpack.c.l.b16 %v683
        %v739 = vunpack.c.l.b16 %v684
        %v740 = vunpack.c.l.b16 %v685
        %v741 = vunpack.c.l.b16 %v686
        %v742 = vunpack.c.l.b16 %v687
        %v743 = vunpack.c.l.b16 %v688
        %v744 = vunpack.c.l.b16 %v689
        %v745 = vpack.c.b16 %v730, %v729
        %v746 = vpack.c.b16 %v732, %v731
        %v747 = vpack.c.b16 %v734, %v733
        %v748 = vpack.c.b16 %v736, %v735
        %v749 = vpack.c.b16 %v738, %v737
        %v750 = vpack.c.b16 %v740, %v739
        %v751 = vpack.c.b16 %v742, %v741
        %v752 = vpack.c.b16 %v744, %v743
        %v777 = vunpack.c.l.b16 %v690
        %v778 = vunpack.c.l.b16 %v691
        %v779 = vunpack.c.l.b16 %v692
        %v780 = vunpack.c.l.b16 %v693
        %v781 = vunpack.c.l.b16 %v694
        %v782 = vunpack.c.l.b16 %v695
        %v783 = vunpack.c.l.b16 %v696
        %v784 = vunpack.c.l.b16 %v697
        %v785 = vunpack.c.l.b16 %v698
        %v786 = vunpack.c.l.b16 %v699
        %v787 = vunpack.c.l.b16 %v700
        %v788 = vunpack.c.l.b16 %v701
        %v789 = vunpack.c.l.b16 %v702
        %v790 = vunpack.c.l.b16 %v703
        %v791 = vunpack.c.l.b16 %v704
        %v792 = vunpack.c.l.b16 %v705
        %v793 = vpack.c.b16 %v778, %v777
        %v794 = vpack.c.b16 %v780, %v779
        %v795 = vpack.c.b16 %v782, %v781
        %v796 = vpack.c.b16 %v784, %v783
        %v797 = vpack.c.b16 %v786, %v785
        %v798 = vpack.c.b16 %v788, %v787
        %v799 = vpack.c.b16 %v790, %v789
        %v800 = vpack.c.b16 %v792, %v791
        %809 = vmatprep.subr.bf16.mxu0 0
        %810 = vmatpush1.bf16.msra.mxu0 %v793
        %811 = vmatprep.subr.bf16.mxu0 0
        %812 = vmatpush1.bf16.msra.mxu0 %v794
        %813 = vmatprep.subr.bf16.mxu0 0
        %814 = vmatpush1.bf16.msra.mxu0 %v795
        %815 = vmatprep.subr.bf16.mxu0 0
        %816 = vmatpush1.bf16.msra.mxu0 %v796
        %817 = vmatprep.subr.bf16.mxu0 0
        %818 = vmatpush1.bf16.msra.mxu0 %v797
        %819 = vmatprep.subr.bf16.mxu0 0
        %820 = vmatpush1.bf16.msra.mxu0 %v798
        %821 = vmatprep.subr.bf16.mxu0 0
        %822 = vmatpush1.bf16.msra.mxu0 %v799
        %823 = vmatprep.subr.bf16.mxu0 0
        %824 = vmatpush1.bf16.msra.mxu0 %v800
        %825 = vmatprep.subr.bf16.mxu0 0
        %826 = vmatpush1.bf16.msra.mxu0 0
        %827 = vmatprep.subr.bf16.mxu0 0
        %828 = vmatpush1.bf16.msra.mxu0 0
        %829 = vmatprep.subr.bf16.mxu0 0
        %830 = vmatpush1.bf16.msra.mxu0 0
        %831 = vmatprep.subr.bf16.mxu0 0
        %832 = vmatpush1.bf16.msra.mxu0 0
        %833 = vmatprep.subr.bf16.mxu0 0
        %834 = vmatpush1.bf16.msra.mxu0 0
        %835 = vmatprep.subr.bf16.mxu0 0
        %836 = vmatpush1.bf16.msra.mxu0 0
        %837 = vmatprep.subr.bf16.mxu0 0
        %838 = vmatpush1.bf16.msra.mxu0 0
        %839 = vmatprep.subr.bf16.mxu0 0
        %840 = vmatpush1.bf16.msra.mxu0 0
        %841 = vmatprep.mubr.bf16.mxu0 0
        %842 = vmatmul.mubr.bf16.gmra.mrb[0].mxu0 %v745
        %v843 = vpop.f32.mrb[0].mxu0
        %v844 = vadd.f32 %v711, %v843
        %v845 = vpop.f32.mrb[0].mxu0
        %v846 = vpop.f32.mrb[0].mxu0
        %v847 = vadd.f32 %v711, %v846
        %v848 = vpop.f32.mrb[0].mxu0
        %849 = vmatprep.mubr.bf16.mxu0 0
        %850 = vmatmul.mubr.bf16.gmra.mrb[0].mxu0 %v746
        %v851 = vpop.f32.mrb[0].mxu0
        %v852 = vadd.f32 %v711, %v851
        %v853 = vpop.f32.mrb[0].mxu0
        %v854 = vpop.f32.mrb[0].mxu0
        %v855 = vadd.f32 %v711, %v854
        %v856 = vpop.f32.mrb[0].mxu0
        %857 = vmatprep.mubr.bf16.mxu0 0
        %858 = vmatmul.mubr.bf16.gmra.mrb[0].mxu0 %v747
        %v859 = vpop.f32.mrb[0].mxu0
        %v860 = vadd.f32 %v711, %v859
        %v861 = vpop.f32.mrb[0].mxu0
        %v862 = vpop.f32.mrb[0].mxu0
        %v863 = vadd.f32 %v711, %v862
        %v864 = vpop.f32.mrb[0].mxu0
        %865 = vmatprep.mubr.bf16.mxu0 0
        %866 = vmatmul.mubr.bf16.gmra.mrb[0].mxu0 %v748
        %v867 = vpop.f32.mrb[0].mxu0
        %v868 = vadd.f32 %v711, %v867
        %v869 = vpop.f32.mrb[0].mxu0
        %v870 = vpop.f32.mrb[0].mxu0
        %v871 = vadd.f32 %v711, %v870
        %v872 = vpop.f32.mrb[0].mxu0
        %873 = vmatprep.mubr.bf16.mxu0 0
        %874 = vmatmul.mubr.bf16.gmra.mrb[0].mxu0 %v749
        %v875 = vpop.f32.mrb[0].mxu0
        %v876 = vadd.f32 %v711, %v875
        %v877 = vpop.f32.mrb[0].mxu0
        %v878 = vpop.f32.mrb[0].mxu0
        %v879 = vadd.f32 %v711, %v878
        %v880 = vpop.f32.mrb[0].mxu0
        %881 = vmatprep.mubr.bf16.mxu0 0
        %882 = vmatmul.mubr.bf16.gmra.mrb[0].mxu0 %v750
        %v883 = vpop.f32.mrb[0].mxu0
        %v884 = vadd.f32 %v711, %v883
        %v885 = vpop.f32.mrb[0].mxu0
        %v886 = vpop.f32.mrb[0].mxu0
        %v887 = vadd.f32 %v711, %v886
        %v888 = vpop.f32.mrb[0].mxu0
        %889 = vmatprep.mubr.bf16.mxu0 0
        %890 = vmatmul.mubr.bf16.gmra.mrb[0].mxu0 %v751
        %v891 = vpop.f32.mrb[0].mxu0
        %v892 = vadd.f32 %v711, %v891
        %v893 = vpop.f32.mrb[0].mxu0
        %v894 = vpop.f32.mrb[0].mxu0
        %v895 = vadd.f32 %v711, %v894
        %v896 = vpop.f32.mrb[0].mxu0
        %897 = vmatprep.mubr.bf16.mxu0 0
        %898 = vmatmul.mubr.bf16.gmra.mrb[0].mxu0 %v752
        %v899 = vpop.f32.mrb[0].mxu0
        %v900 = vadd.f32 %v711, %v899
        %v901 = vpop.f32.mrb[0].mxu0
        %v902 = vpop.f32.mrb[0].mxu0
        %v903 = vadd.f32 %v711, %v902
        %v904 = vpop.f32.mrb[0].mxu0
        %905 = vdwg.mxu0
        %v906 = vpack.c.bf16 %v847, %v844
        %v907 = vpack.c.bf16 %v855, %v852
        %v908 = vpack.c.bf16 %v863, %v860
        %v909 = vpack.c.bf16 %v871, %v868
        %v910 = vpack.c.bf16 %v879, %v876
        %v911 = vpack.c.bf16 %v887, %v884
        %v912 = vpack.c.bf16 %v895, %v892
        %v913 = vpack.c.bf16 %v903, %v900
        %v914 = vld [vmem:[#allocation8] sm:$0xf]
        %v915 = vld [vmem:[#allocation8 + $0x4] sm:$0xf]
        %v916 = vld [vmem:[#allocation8 + $0x8] sm:$0xf]
        %v917 = vld [vmem:[#allocation8 + $0xc] sm:$0xf]
        %v918 = vld [vmem:[#allocation8 + $0x10] sm:$0xf]
        %v919 = vld [vmem:[#allocation8 + $0x14] sm:$0xf]
        %v920 = vld [vmem:[#allocation8 + $0x18] sm:$0xf]
        %v921 = vld [vmem:[#allocation8 + $0x1c] sm:$0xf]
        %v922 = vld [vmem:[#allocation8 + $0x20] sm:$0xf]
        %v923 = vld [vmem:[#allocation8 + $0x24] sm:$0xf]
        %v924 = vld [vmem:[#allocation8 + $0x28] sm:$0xf]
        %v925 = vld [vmem:[#allocation8 + $0x2c] sm:$0xf]
        %v926 = vld [vmem:[#allocation8 + $0x30] sm:$0xf]
        %v927 = vld [vmem:[#allocation8 + $0x34] sm:$0xf]
        %v928 = vld [vmem:[#allocation8 + $0x38] sm:$0xf]
        %v929 = vld [vmem:[#allocation8 + $0x3c] sm:$0xf]
        %v930 = vld [vmem:[%s4] sm:$0x1]
        %v932 = vlaneseq
        %v933 = vshrl.u32 %v932, 7
        %v934 = vsub.s32 0, %v933
        %v935 = vrot.slane %v930, %v934
        %v953 = vunpack.c.l.b16 %v914
        %v954 = vunpack.c.l.b16 %v915
        %v955 = vunpack.c.l.b16 %v916
        %v956 = vunpack.c.l.b16 %v917
        %v957 = vunpack.c.l.b16 %v918
        %v958 = vunpack.c.l.b16 %v919
        %v959 = vunpack.c.l.b16 %v920
        %v960 = vunpack.c.l.b16 %v921
        %v961 = vunpack.c.l.b16 %v922
        %v962 = vunpack.c.l.b16 %v923
        %v963 = vunpack.c.l.b16 %v924
        %v964 = vunpack.c.l.b16 %v925
        %v965 = vunpack.c.l.b16 %v926
        %v966 = vunpack.c.l.b16 %v927
        %v967 = vunpack.c.l.b16 %v928
        %v968 = vunpack.c.l.b16 %v929
        %v969 = vpack.c.b16 %v954, %v953
        %v970 = vpack.c.b16 %v956, %v955
        %v971 = vpack.c.b16 %v958, %v957
        %v972 = vpack.c.b16 %v960, %v959
        %v973 = vpack.c.b16 %v962, %v961
        %v974 = vpack.c.b16 %v964, %v963
        %v975 = vpack.c.b16 %v966, %v965
        %v976 = vpack.c.b16 %v968, %v967
        %985 = vmatprep.subr.bf16.mxu0 0
        %986 = vmatpush1.bf16.msra.mxu0 %v969
        %987 = vmatprep.subr.bf16.mxu0 0
        %988 = vmatpush1.bf16.msra.mxu0 %v970
        %989 = vmatprep.subr.bf16.mxu0 0
        %990 = vmatpush1.bf16.msra.mxu0 %v971
        %991 = vmatprep.subr.bf16.mxu0 0
        %992 = vmatpush1.bf16.msra.mxu0 %v972
        %993 = vmatprep.subr.bf16.mxu0 0
        %994 = vmatpush1.bf16.msra.mxu0 %v973
        %995 = vmatprep.subr.bf16.mxu0 0
        %996 = vmatpush1.bf16.msra.mxu0 %v974
        %997 = vmatprep.subr.bf16.mxu0 0
        %998 = vmatpush1.bf16.msra.mxu0 %v975
        %999 = vmatprep.subr.bf16.mxu0 0
        %1000 = vmatpush1.bf16.msra.mxu0 %v976
        %1001 = vmatprep.subr.bf16.mxu0 0
        %1002 = vmatpush1.bf16.msra.mxu0 0
        %1003 = vmatprep.subr.bf16.mxu0 0
        %1004 = vmatpush1.bf16.msra.mxu0 0
        %1005 = vmatprep.subr.bf16.mxu0 0
        %1006 = vmatpush1.bf16.msra.mxu0 0
        %1007 = vmatprep.subr.bf16.mxu0 0
        %1008 = vmatpush1.bf16.msra.mxu0 0
        %1009 = vmatprep.subr.bf16.mxu0 0
        %1010 = vmatpush1.bf16.msra.mxu0 0
        %1011 = vmatprep.subr.bf16.mxu0 0
        %1012 = vmatpush1.bf16.msra.mxu0 0
        %1013 = vmatprep.subr.bf16.mxu0 0
        %1014 = vmatpush1.bf16.msra.mxu0 0
        %1015 = vmatprep.subr.bf16.mxu0 0
        %1016 = vmatpush1.bf16.msra.mxu0 0
        %1017 = vmatprep.mubr.bf16.mxu0 0
        %1018 = vmatmul.mubr.bf16.gmra.mrb[0].mxu0 %v906
        %v1019 = vpop.f32.mrb[0].mxu0
        %v1020 = vadd.f32 %v935, %v1019
        %v1021 = vpop.f32.mrb[0].mxu0
        %v1022 = vpop.f32.mrb[0].mxu0
        %v1023 = vadd.f32 %v935, %v1022
        %v1024 = vpop.f32.mrb[0].mxu0
        %1025 = vmatprep.mubr.bf16.mxu0 0
        %1026 = vmatmul.mubr.bf16.gmra.mrb[0].mxu0 %v907
        %v1027 = vpop.f32.mrb[0].mxu0
        %v1028 = vadd.f32 %v935, %v1027
        %v1029 = vpop.f32.mrb[0].mxu0
        %v1030 = vpop.f32.mrb[0].mxu0
        %v1031 = vadd.f32 %v935, %v1030
        %v1032 = vpop.f32.mrb[0].mxu0
        %1033 = vmatprep.mubr.bf16.mxu0 0
        %1034 = vmatmul.mubr.bf16.gmra.mrb[0].mxu0 %v908
        %v1035 = vpop.f32.mrb[0].mxu0
        %v1036 = vadd.f32 %v935, %v1035
        %v1037 = vpop.f32.mrb[0].mxu0
        %v1038 = vpop.f32.mrb[0].mxu0
        %v1039 = vadd.f32 %v935, %v1038
        %v1040 = vpop.f32.mrb[0].mxu0
        %1041 = vmatprep.mubr.bf16.mxu0 0
        %1042 = vmatmul.mubr.bf16.gmra.mrb[0].mxu0 %v909
        %v1043 = vpop.f32.mrb[0].mxu0
        %v1044 = vadd.f32 %v935, %v1043
        %v1045 = vpop.f32.mrb[0].mxu0
        %v1046 = vpop.f32.mrb[0].mxu0
        %v1047 = vadd.f32 %v935, %v1046
        %v1048 = vpop.f32.mrb[0].mxu0
        %1049 = vmatprep.mubr.bf16.mxu0 0
        %1050 = vmatmul.mubr.bf16.gmra.mrb[0].mxu0 %v910
        %v1051 = vpop.f32.mrb[0].mxu0
        %v1052 = vadd.f32 %v935, %v1051
        %v1053 = vpop.f32.mrb[0].mxu0
        %v1054 = vpop.f32.mrb[0].mxu0
        %v1055 = vadd.f32 %v935, %v1054
        %v1056 = vpop.f32.mrb[0].mxu0
        %1057 = vmatprep.mubr.bf16.mxu0 0
        %1058 = vmatmul.mubr.bf16.gmra.mrb[0].mxu0 %v911
        %v1059 = vpop.f32.mrb[0].mxu0
        %v1060 = vadd.f32 %v935, %v1059
        %v1061 = vpop.f32.mrb[0].mxu0
        %v1062 = vpop.f32.mrb[0].mxu0
        %v1063 = vadd.f32 %v935, %v1062
        %v1064 = vpop.f32.mrb[0].mxu0
        %1065 = vmatprep.mubr.bf16.mxu0 0
        %1066 = vmatmul.mubr.bf16.gmra.mrb[0].mxu0 %v912
        %v1067 = vpop.f32.mrb[0].mxu0
        %v1068 = vadd.f32 %v935, %v1067
        %v1069 = vpop.f32.mrb[0].mxu0
        %v1070 = vpop.f32.mrb[0].mxu0
        %v1071 = vadd.f32 %v935, %v1070
        %v1072 = vpop.f32.mrb[0].mxu0
        %1073 = vmatprep.mubr.bf16.mxu0 0
        %1074 = vmatmul.mubr.bf16.gmra.mrb[0].mxu0 %v913
        %v1075 = vpop.f32.mrb[0].mxu0
        %v1076 = vadd.f32 %v935, %v1075
        %v1077 = vpop.f32.mrb[0].mxu0
        %v1078 = vpop.f32.mrb[0].mxu0
        %v1079 = vadd.f32 %v935, %v1078
        %v1080 = vpop.f32.mrb[0].mxu0
        %1081 = vdwg.mxu0
        %v1082 = vadd.f32 %v844, %v1020
        %v1083 = vadd.f32 %v847, %v1023
        %v1084 = vadd.f32 %v852, %v1028
        %v1085 = vadd.f32 %v855, %v1031
        %v1086 = vadd.f32 %v860, %v1036
        %v1087 = vadd.f32 %v863, %v1039
        %v1088 = vadd.f32 %v868, %v1044
        %v1089 = vadd.f32 %v871, %v1047
        %v1090 = vadd.f32 %v876, %v1052
        %v1091 = vadd.f32 %v879, %v1055
        %v1092 = vadd.f32 %v884, %v1060
        %v1093 = vadd.f32 %v887, %v1063
        %v1094 = vadd.f32 %v892, %v1068
        %v1095 = vadd.f32 %v895, %v1071
        %v1096 = vadd.f32 %v900, %v1076
        %v1097 = vadd.f32 %v903, %v1079
        %v1098 = vld [vmem:[#allocation10] sm:$0x1]
        %v1099 = vld [vmem:[#allocation11] sm:$0x1]
        %1100 = vadd.xlane.f32.xlu0 %v1082
        %v1101 = vpop.xlane.xlu0 %1100
        %1102 = vadd.xlane.f32.xlu0 %v1083
        %v1103 = vpop.xlane.xlu0 %1102
        %1104 = vadd.xlane.f32.xlu0 %v1084
        %v1105 = vpop.xlane.xlu0 %1104
        %1106 = vadd.xlane.f32.xlu0 %v1085
        %v1107 = vpop.xlane.xlu0 %1106
        %1108 = vadd.xlane.f32.xlu0 %v1086
        %v1109 = vpop.xlane.xlu0 %1108
        %1110 = vadd.xlane.f32.xlu0 %v1087
        %v1111 = vpop.xlane.xlu0 %1110
        %1112 = vadd.xlane.f32.xlu0 %v1088
        %v1113 = vpop.xlane.xlu0 %1112
        %1114 = vadd.xlane.f32.xlu0 %v1089
        %v1115 = vpop.xlane.xlu0 %1114
        %1116 = vadd.xlane.f32.xlu0 %v1090
        %v1117 = vpop.xlane.xlu0 %1116
        %1118 = vadd.xlane.f32.xlu0 %v1091
        %v1119 = vpop.xlane.xlu0 %1118
        %1120 = vadd.xlane.f32.xlu0 %v1092
        %v1121 = vpop.xlane.xlu0 %1120
        %1122 = vadd.xlane.f32.xlu0 %v1093
        %v1123 = vpop.xlane.xlu0 %1122
        %1124 = vadd.xlane.f32.xlu0 %v1094
        %v1125 = vpop.xlane.xlu0 %1124
        %1126 = vadd.xlane.f32.xlu0 %v1095
        %v1127 = vpop.xlane.xlu0 %1126
        %1128 = vadd.xlane.f32.xlu0 %v1096
        %v1129 = vpop.xlane.xlu0 %1128
        %1130 = vadd.xlane.f32.xlu0 %v1097
        %v1131 = vpop.xlane.xlu0 %1130
        %v1132 = vrcp.pop 128.0
        %v1133 = vmul.f32 %v1101, %v1132
        %v1134 = vmul.f32 %v1103, %v1132
        %v1135 = vmul.f32 %v1105, %v1132
        %v1136 = vmul.f32 %v1107, %v1132
        %v1137 = vmul.f32 %v1109, %v1132
        %v1138 = vmul.f32 %v1111, %v1132
        %v1139 = vmul.f32 %v1113, %v1132
        %v1140 = vmul.f32 %v1115, %v1132
        %v1141 = vmul.f32 %v1117, %v1132
        %v1142 = vmul.f32 %v1119, %v1132
        %v1143 = vmul.f32 %v1121, %v1132
        %v1144 = vmul.f32 %v1123, %v1132
        %v1145 = vmul.f32 %v1125, %v1132
        %v1146 = vmul.f32 %v1127, %v1132
        %v1147 = vmul.f32 %v1129, %v1132
        %v1148 = vmul.f32 %v1131, %v1132
        %v1149 = vsub.f32 %v1082, %v1133
        %v1150 = vsub.f32 %v1083, %v1134
        %v1151 = vsub.f32 %v1084, %v1135
        %v1152 = vsub.f32 %v1085, %v1136
        %v1153 = vsub.f32 %v1086, %v1137
        %v1154 = vsub.f32 %v1087, %v1138
        %v1155 = vsub.f32 %v1088, %v1139
        %v1156 = vsub.f32 %v1089, %v1140
        %v1157 = vsub.f32 %v1090, %v1141
        %v1158 = vsub.f32 %v1091, %v1142
        %v1159 = vsub.f32 %v1092, %v1143
        %v1160 = vsub.f32 %v1093, %v1144
        %v1161 = vsub.f32 %v1094, %v1145
        %v1162 = vsub.f32 %v1095, %v1146
        %v1163 = vsub.f32 %v1096, %v1147
        %v1164 = vsub.f32 %v1097, %v1148
        %v1165 = vmul.f32 %v1149, %v1149
        %v1166 = vmul.f32 %v1150, %v1150
        %v1167 = vmul.f32 %v1151, %v1151
        %v1168 = vmul.f32 %v1152, %v1152
        %v1169 = vmul.f32 %v1153, %v1153
        %v1170 = vmul.f32 %v1154, %v1154
        %v1171 = vmul.f32 %v1155, %v1155
        %v1172 = vmul.f32 %v1156, %v1156
        %v1173 = vmul.f32 %v1157, %v1157
        %v1174 = vmul.f32 %v1158, %v1158
        %v1175 = vmul.f32 %v1159, %v1159
        %v1176 = vmul.f32 %v1160, %v1160
        %v1177 = vmul.f32 %v1161, %v1161
        %v1178 = vmul.f32 %v1162, %v1162
        %v1179 = vmul.f32 %v1163, %v1163
        %v1180 = vmul.f32 %v1164, %v1164
        %1181 = vadd.xlane.f32.xlu0 %v1165
        %v1182 = vpop.xlane.xlu0 %1181
        %1183 = vadd.xlane.f32.xlu0 %v1166
        %v1184 = vpop.xlane.xlu0 %1183
        %1185 = vadd.xlane.f32.xlu0 %v1167
        %v1186 = vpop.xlane.xlu0 %1185
        %1187 = vadd.xlane.f32.xlu0 %v1168
        %v1188 = vpop.xlane.xlu0 %1187
        %1189 = vadd.xlane.f32.xlu0 %v1169
        %v1190 = vpop.xlane.xlu0 %1189
        %1191 = vadd.xlane.f32.xlu0 %v1170
        %v1192 = vpop.xlane.xlu0 %1191
        %1193 = vadd.xlane.f32.xlu0 %v1171
        %v1194 = vpop.xlane.xlu0 %1193
        %1195 = vadd.xlane.f32.xlu0 %v1172
        %v1196 = vpop.xlane.xlu0 %1195
        %1197 = vadd.xlane.f32.xlu0 %v1173
        %v1198 = vpop.xlane.xlu0 %1197
        %1199 = vadd.xlane.f32.xlu0 %v1174
        %v1200 = vpop.xlane.xlu0 %1199
        %1201 = vadd.xlane.f32.xlu0 %v1175
        %v1202 = vpop.xlane.xlu0 %1201
        %1203 = vadd.xlane.f32.xlu0 %v1176
        %v1204 = vpop.xlane.xlu0 %1203
        %1205 = vadd.xlane.f32.xlu0 %v1177
        %v1206 = vpop.xlane.xlu0 %1205
        %1207 = vadd.xlane.f32.xlu0 %v1178
        %v1208 = vpop.xlane.xlu0 %1207
        %1209 = vadd.xlane.f32.xlu0 %v1179
        %v1210 = vpop.xlane.xlu0 %1209
        %1211 = vadd.xlane.f32.xlu0 %v1180
        %v1212 = vpop.xlane.xlu0 %1211
        %v1213 = vmul.f32 %v1182, %v1132
        %v1214 = vmul.f32 %v1184, %v1132
        %v1215 = vmul.f32 %v1186, %v1132
        %v1216 = vmul.f32 %v1188, %v1132
        %v1217 = vmul.f32 %v1190, %v1132
        %v1218 = vmul.f32 %v1192, %v1132
        %v1219 = vmul.f32 %v1194, %v1132
        %v1220 = vmul.f32 %v1196, %v1132
        %v1221 = vmul.f32 %v1198, %v1132
        %v1222 = vmul.f32 %v1200, %v1132
        %v1223 = vmul.f32 %v1202, %v1132
        %v1224 = vmul.f32 %v1204, %v1132
        %v1225 = vmul.f32 %v1206, %v1132
        %v1226 = vmul.f32 %v1208, %v1132
        %v1227 = vmul.f32 %v1210, %v1132
        %v1228 = vmul.f32 %v1212, %v1132
        %v1229 = vadd.f32 %v1213, 1e-05
        %v1230 = vadd.f32 %v1214, 1e-05
        %v1231 = vadd.f32 %v1215, 1e-05
        %v1232 = vadd.f32 %v1216, 1e-05
        %v1233 = vadd.f32 %v1217, 1e-05
        %v1234 = vadd.f32 %v1218, 1e-05
        %v1235 = vadd.f32 %v1219, 1e-05
        %v1236 = vadd.f32 %v1220, 1e-05
        %v1237 = vadd.f32 %v1221, 1e-05
        %v1238 = vadd.f32 %v1222, 1e-05
        %v1239 = vadd.f32 %v1223, 1e-05
        %v1240 = vadd.f32 %v1224, 1e-05
        %v1241 = vadd.f32 %v1225, 1e-05
        %v1242 = vadd.f32 %v1226, 1e-05
        %v1243 = vadd.f32 %v1227, 1e-05
        %v1244 = vadd.f32 %v1228, 1e-05
        %v1245 = vrsqrt.pop %v1229
        %v1246 = vrsqrt.pop %v1230
        %v1247 = vrsqrt.pop %v1231
        %v1248 = vrsqrt.pop %v1232
        %v1249 = vrsqrt.pop %v1233
        %v1250 = vrsqrt.pop %v1234
        %v1251 = vrsqrt.pop %v1235
        %v1252 = vrsqrt.pop %v1236
        %v1253 = vrsqrt.pop %v1237
        %v1254 = vrsqrt.pop %v1238
        %v1255 = vrsqrt.pop %v1239
        %v1256 = vrsqrt.pop %v1240
        %v1257 = vrsqrt.pop %v1241
        %v1258 = vrsqrt.pop %v1242
        %v1259 = vrsqrt.pop %v1243
        %v1260 = vrsqrt.pop %v1244
        %v1261 = vmul.f32 %v1149, %v1245
        %v1262 = vmul.f32 %v1150, %v1246
        %v1263 = vmul.f32 %v1151, %v1247
        %v1264 = vmul.f32 %v1152, %v1248
        %v1265 = vmul.f32 %v1153, %v1249
        %v1266 = vmul.f32 %v1154, %v1250
        %v1267 = vmul.f32 %v1155, %v1251
        %v1268 = vmul.f32 %v1156, %v1252
        %v1269 = vmul.f32 %v1157, %v1253
        %v1270 = vmul.f32 %v1158, %v1254
        %v1271 = vmul.f32 %v1159, %v1255
        %v1272 = vmul.f32 %v1160, %v1256
        %v1273 = vmul.f32 %v1161, %v1257
        %v1274 = vmul.f32 %v1162, %v1258
        %v1275 = vmul.f32 %v1163, %v1259
        %v1276 = vmul.f32 %v1164, %v1260
        %v1278 = vlaneseq
        %v1279 = vshrl.u32 %v1278, 7
        %v1280 = vsub.s32 0, %v1279
        %v1281 = vrot.slane %v1098, %v1280
        %v1283 = vmul.f32 %v1261, %v1281
        %v1284 = vmul.f32 %v1262, %v1281
        %v1285 = vmul.f32 %v1263, %v1281
        %v1286 = vmul.f32 %v1264, %v1281
        %v1287 = vmul.f32 %v1265, %v1281
        %v1288 = vmul.f32 %v1266, %v1281
        %v1289 = vmul.f32 %v1267, %v1281
        %v1290 = vmul.f32 %v1268, %v1281
        %v1291 = vmul.f32 %v1269, %v1281
        %v1292 = vmul.f32 %v1270, %v1281
        %v1293 = vmul.f32 %v1271, %v1281
        %v1294 = vmul.f32 %v1272, %v1281
        %v1295 = vmul.f32 %v1273, %v1281
        %v1296 = vmul.f32 %v1274, %v1281
        %v1297 = vmul.f32 %v1275, %v1281
        %v1298 = vmul.f32 %v1276, %v1281
        %v1300 = vlaneseq
        %v1301 = vshrl.u32 %v1300, 7
        %v1302 = vsub.s32 0, %v1301
        %v1303 = vrot.slane %v1099, %v1302
        %v1305 = vadd.f32 %v1283, %v1303
        %v1306 = vadd.f32 %v1284, %v1303
        %v1307 = vadd.f32 %v1285, %v1303
        %v1308 = vadd.f32 %v1286, %v1303
        %v1309 = vadd.f32 %v1287, %v1303
        %v1310 = vadd.f32 %v1288, %v1303
        %v1311 = vadd.f32 %v1289, %v1303
        %v1312 = vadd.f32 %v1290, %v1303
        %v1313 = vadd.f32 %v1291, %v1303
        %v1314 = vadd.f32 %v1292, %v1303
        %v1315 = vadd.f32 %v1293, %v1303
        %v1316 = vadd.f32 %v1294, %v1303
        %v1317 = vadd.f32 %v1295, %v1303
        %v1318 = vadd.f32 %v1296, %v1303
        %v1319 = vadd.f32 %v1297, %v1303
        %v1320 = vadd.f32 %v1298, %v1303
        %v1321 = vpack.c.bf16 %v1306, %v1305
        %v1322 = vpack.c.bf16 %v1308, %v1307
        %v1323 = vpack.c.bf16 %v1310, %v1309
        %v1324 = vpack.c.bf16 %v1312, %v1311
        %v1325 = vpack.c.bf16 %v1314, %v1313
        %v1326 = vpack.c.bf16 %v1316, %v1315
        %v1327 = vpack.c.bf16 %v1318, %v1317
        %v1328 = vpack.c.bf16 %v1320, %v1319
        %v1329 = vld [vmem:[#allocation13] sm:$0xff]
        %v1330 = vld [vmem:[#allocation13 + $0x8] sm:$0xff]
        %v1331 = vld [vmem:[#allocation13 + $0x10] sm:$0xff]
        %v1332 = vld [vmem:[#allocation13 + $0x18] sm:$0xff]
        %v1333 = vld [vmem:[#allocation13 + $0x20] sm:$0xff]
        %v1334 = vld [vmem:[#allocation13 + $0x28] sm:$0xff]
        %v1335 = vld [vmem:[#allocation13 + $0x30] sm:$0xff]
        %v1336 = vld [vmem:[#allocation13 + $0x38] sm:$0xff]
        %v1337 = vld [vmem:[#allocation13 + $0x40] sm:$0xff]
        %v1338 = vld [vmem:[#allocation13 + $0x48] sm:$0xff]
        %v1339 = vld [vmem:[#allocation13 + $0x50] sm:$0xff]
        %v1340 = vld [vmem:[#allocation13 + $0x58] sm:$0xff]
        %v1341 = vld [vmem:[#allocation13 + $0x60] sm:$0xff]
        %v1342 = vld [vmem:[#allocation13 + $0x68] sm:$0xff]
        %v1343 = vld [vmem:[#allocation13 + $0x70] sm:$0xff]
        %v1344 = vld [vmem:[#allocation13 + $0x78] sm:$0xff]
        %v1345 = vld [vmem:[#allocation13 + $0x80] sm:$0xff]
        %v1346 = vld [vmem:[#allocation13 + $0x88] sm:$0xff]
        %v1347 = vld [vmem:[#allocation13 + $0x90] sm:$0xff]
        %v1348 = vld [vmem:[#allocation13 + $0x98] sm:$0xff]
        %v1349 = vld [vmem:[#allocation13 + $0xa0] sm:$0xff]
        %v1350 = vld [vmem:[#allocation13 + $0xa8] sm:$0xff]
        %v1351 = vld [vmem:[#allocation13 + $0xb0] sm:$0xff]
        %v1352 = vld [vmem:[#allocation13 + $0xb8] sm:$0xff]
        %v1353 = vld [vmem:[#allocation13 + $0xc0] sm:$0xff]
        %v1354 = vld [vmem:[#allocation13 + $0xc8] sm:$0xff]
        %v1355 = vld [vmem:[#allocation13 + $0xd0] sm:$0xff]
        %v1356 = vld [vmem:[#allocation13 + $0xd8] sm:$0xff]
        %v1357 = vld [vmem:[#allocation13 + $0xe0] sm:$0xff]
        %v1358 = vld [vmem:[#allocation13 + $0xe8] sm:$0xff]
        %v1359 = vld [vmem:[#allocation13 + $0xf0] sm:$0xff]
        %v1360 = vld [vmem:[#allocation13 + $0xf8] sm:$0xff]
        %v1361 = vld [vmem:[#allocation13 + $0x100] sm:$0xff]
        %v1362 = vld [vmem:[#allocation13 + $0x108] sm:$0xff]
        %v1363 = vld [vmem:[#allocation13 + $0x110] sm:$0xff]
        %v1364 = vld [vmem:[#allocation13 + $0x118] sm:$0xff]
        %v1365 = vld [vmem:[#allocation13 + $0x120] sm:$0xff]
        %v1366 = vld [vmem:[#allocation13 + $0x128] sm:$0xff]
        %v1367 = vld [vmem:[#allocation13 + $0x130] sm:$0xff]
        %v1368 = vld [vmem:[#allocation13 + $0x138] sm:$0xff]
        %v1369 = vld [vmem:[#allocation13 + $0x140] sm:$0xff]
        %v1370 = vld [vmem:[#allocation13 + $0x148] sm:$0xff]
        %v1371 = vld [vmem:[#allocation13 + $0x150] sm:$0xff]
        %v1372 = vld [vmem:[#allocation13 + $0x158] sm:$0xff]
        %v1373 = vld [vmem:[#allocation13 + $0x160] sm:$0xff]
        %v1374 = vld [vmem:[#allocation13 + $0x168] sm:$0xff]
        %v1375 = vld [vmem:[#allocation13 + $0x170] sm:$0xff]
        %v1376 = vld [vmem:[#allocation13 + $0x178] sm:$0xff]
        %v1377 = vld [vmem:[#allocation13 + $0x180] sm:$0xff]
        %v1378 = vld [vmem:[#allocation13 + $0x188] sm:$0xff]
        %v1379 = vld [vmem:[#allocation13 + $0x190] sm:$0xff]
        %v1380 = vld [vmem:[#allocation13 + $0x198] sm:$0xff]
        %v1381 = vld [vmem:[#allocation13 + $0x1a0] sm:$0xff]
        %v1382 = vld [vmem:[#allocation13 + $0x1a8] sm:$0xff]
        %v1383 = vld [vmem:[#allocation13 + $0x1b0] sm:$0xff]
        %v1384 = vld [vmem:[#allocation13 + $0x1b8] sm:$0xff]
        %v1385 = vld [vmem:[#allocation13 + $0x1c0] sm:$0xff]
        %v1386 = vld [vmem:[#allocation13 + $0x1c8] sm:$0xff]
        %v1387 = vld [vmem:[#allocation13 + $0x1d0] sm:$0xff]
        %v1388 = vld [vmem:[#allocation13 + $0x1d8] sm:$0xff]
        %v1389 = vld [vmem:[#allocation13 + $0x1e0] sm:$0xff]
        %v1390 = vld [vmem:[#allocation13 + $0x1e8] sm:$0xff]
        %v1391 = vld [vmem:[#allocation13 + $0x1f0] sm:$0xff]
        %v1392 = vld [vmem:[#allocation13 + $0x1f8] sm:$0xff]
        %v1393 = vld [vmem:[#allocation13 + $0x200] sm:$0xff]
        %v1394 = vld [vmem:[#allocation13 + $0x208] sm:$0xff]
        %v1395 = vld [vmem:[#allocation13 + $0x210] sm:$0xff]
        %v1396 = vld [vmem:[#allocation13 + $0x218] sm:$0xff]
        %v1397 = vld [vmem:[#allocation13 + $0x220] sm:$0xff]
        %v1398 = vld [vmem:[#allocation13 + $0x228] sm:$0xff]
        %v1399 = vld [vmem:[#allocation13 + $0x230] sm:$0xff]
        %v1400 = vld [vmem:[#allocation13 + $0x238] sm:$0xff]
        %v1401 = vld [vmem:[#allocation13 + $0x240] sm:$0xff]
        %v1402 = vld [vmem:[#allocation13 + $0x248] sm:$0xff]
        %v1403 = vld [vmem:[#allocation13 + $0x250] sm:$0xff]
        %v1404 = vld [vmem:[#allocation13 + $0x258] sm:$0xff]
        %v1405 = vld [vmem:[#allocation13 + $0x260] sm:$0xff]
        %v1406 = vld [vmem:[#allocation13 + $0x268] sm:$0xff]
        %v1407 = vld [vmem:[#allocation13 + $0x270] sm:$0xff]
        %v1408 = vld [vmem:[#allocation13 + $0x278] sm:$0xff]
        %v1409 = vld [vmem:[#allocation13 + $0x280] sm:$0xff]
        %v1410 = vld [vmem:[#allocation13 + $0x288] sm:$0xff]
        %v1411 = vld [vmem:[#allocation13 + $0x290] sm:$0xff]
        %v1412 = vld [vmem:[#allocation13 + $0x298] sm:$0xff]
        %v1413 = vld [vmem:[#allocation13 + $0x2a0] sm:$0xff]
        %v1414 = vld [vmem:[#allocation13 + $0x2a8] sm:$0xff]
        %v1415 = vld [vmem:[#allocation13 + $0x2b0] sm:$0xff]
        %v1416 = vld [vmem:[#allocation13 + $0x2b8] sm:$0xff]
        %v1417 = vld [vmem:[#allocation13 + $0x2c0] sm:$0xff]
        %v1418 = vld [vmem:[#allocation13 + $0x2c8] sm:$0xff]
        %v1419 = vld [vmem:[#allocation13 + $0x2d0] sm:$0xff]
        %v1420 = vld [vmem:[#allocation13 + $0x2d8] sm:$0xff]
        %v1421 = vld [vmem:[#allocation13 + $0x2e0] sm:$0xff]
        %v1422 = vld [vmem:[#allocation13 + $0x2e8] sm:$0xff]
        %v1423 = vld [vmem:[#allocation13 + $0x2f0] sm:$0xff]
        %v1424 = vld [vmem:[#allocation13 + $0x2f8] sm:$0xff]
        %v1425 = vld [vmem:[#allocation13 + $0x300] sm:$0xff]
        %v1426 = vld [vmem:[#allocation13 + $0x308] sm:$0xff]
        %v1427 = vld [vmem:[#allocation13 + $0x310] sm:$0xff]
        %v1428 = vld [vmem:[#allocation13 + $0x318] sm:$0xff]
        %v1429 = vld [vmem:[#allocation13 + $0x320] sm:$0xff]
        %v1430 = vld [vmem:[#allocation13 + $0x328] sm:$0xff]
        %v1431 = vld [vmem:[#allocation13 + $0x330] sm:$0xff]
        %v1432 = vld [vmem:[#allocation13 + $0x338] sm:$0xff]
        %v1433 = vld [vmem:[#allocation13 + $0x340] sm:$0xff]
        %v1434 = vld [vmem:[#allocation13 + $0x348] sm:$0xff]
        %v1435 = vld [vmem:[#allocation13 + $0x350] sm:$0xff]
        %v1436 = vld [vmem:[#allocation13 + $0x358] sm:$0xff]
        %v1437 = vld [vmem:[#allocation13 + $0x360] sm:$0xff]
        %v1438 = vld [vmem:[#allocation13 + $0x368] sm:$0xff]
        %v1439 = vld [vmem:[#allocation13 + $0x370] sm:$0xff]
        %v1440 = vld [vmem:[#allocation13 + $0x378] sm:$0xff]
        %v1441 = vld [vmem:[#allocation13 + $0x380] sm:$0xff]
        %v1442 = vld [vmem:[#allocation13 + $0x388] sm:$0xff]
        %v1443 = vld [vmem:[#allocation13 + $0x390] sm:$0xff]
        %v1444 = vld [vmem:[#allocation13 + $0x398] sm:$0xff]
        %v1445 = vld [vmem:[#allocation13 + $0x3a0] sm:$0xff]
        %v1446 = vld [vmem:[#allocation13 + $0x3a8] sm:$0xff]
        %v1447 = vld [vmem:[#allocation13 + $0x3b0] sm:$0xff]
        %v1448 = vld [vmem:[#allocation13 + $0x3b8] sm:$0xff]
        %v1449 = vld [vmem:[#allocation13 + $0x3c0] sm:$0xff]
        %v1450 = vld [vmem:[#allocation13 + $0x3c8] sm:$0xff]
        %v1451 = vld [vmem:[#allocation13 + $0x3d0] sm:$0xff]
        %v1452 = vld [vmem:[#allocation13 + $0x3d8] sm:$0xff]
        %v1453 = vld [vmem:[#allocation13 + $0x3e0] sm:$0xff]
        %v1454 = vld [vmem:[#allocation13 + $0x3e8] sm:$0xff]
        %v1455 = vld [vmem:[#allocation13 + $0x3f0] sm:$0xff]
        %v1456 = vld [vmem:[#allocation13 + $0x3f8] sm:$0xff]
        %v1457 = vld [vmem:[%s8] sm:$0xff]
        %v1458 = vld [vmem:[%s8 + $0x8] sm:$0xff]
        %v1461 = vlaneseq
        %v1462 = vshrl.u32 %v1461, 7
        %v1463 = vsub.s32 0, %v1462
        %v1464 = vrot.slane %v1457, %v1463
        %v1465 = vlaneseq
        %v1466 = vshrl.u32 %v1465, 7
        %v1467 = vsub.s32 1, %v1466
        %v1468 = vrot.slane %v1457, %v1467
        %v1469 = vlaneseq
        %v1470 = vshrl.u32 %v1469, 7
        %v1471 = vsub.s32 2, %v1470
        %v1472 = vrot.slane %v1457, %v1471
        %v1473 = vlaneseq
        %v1474 = vshrl.u32 %v1473, 7
        %v1475 = vsub.s32 3, %v1474
        %v1476 = vrot.slane %v1457, %v1475
        %v1477 = vlaneseq
        %v1478 = vshrl.u32 %v1477, 7
        %v1479 = vsub.s32 4, %v1478
        %v1480 = vrot.slane %v1457, %v1479
        %v1481 = vlaneseq
        %v1482 = vshrl.u32 %v1481, 7
        %v1483 = vsub.s32 5, %v1482
        %v1484 = vrot.slane %v1457, %v1483
        %v1485 = vlaneseq
        %v1486 = vshrl.u32 %v1485, 7
        %v1487 = vsub.s32 6, %v1486
        %v1488 = vrot.slane %v1457, %v1487
        %v1489 = vlaneseq
        %v1490 = vshrl.u32 %v1489, 7
        %v1491 = vsub.s32 7, %v1490
        %v1492 = vrot.slane %v1457, %v1491
        %v1493 = vlaneseq
        %v1494 = vshrl.u32 %v1493, 7
        %v1495 = vsub.s32 0, %v1494
        %v1496 = vrot.slane %v1458, %v1495
        %v1497 = vlaneseq
        %v1498 = vshrl.u32 %v1497, 7
        %v1499 = vsub.s32 1, %v1498
        %v1500 = vrot.slane %v1458, %v1499
        %v1501 = vlaneseq
        %v1502 = vshrl.u32 %v1501, 7
        %v1503 = vsub.s32 2, %v1502
        %v1504 = vrot.slane %v1458, %v1503
        %v1505 = vlaneseq
        %v1506 = vshrl.u32 %v1505, 7
        %v1507 = vsub.s32 3, %v1506
        %v1508 = vrot.slane %v1458, %v1507
        %v1509 = vlaneseq
        %v1510 = vshrl.u32 %v1509, 7
        %v1511 = vsub.s32 4, %v1510
        %v1512 = vrot.slane %v1458, %v1511
        %v1513 = vlaneseq
        %v1514 = vshrl.u32 %v1513, 7
        %v1515 = vsub.s32 5, %v1514
        %v1516 = vrot.slane %v1458, %v1515
        %v1517 = vlaneseq
        %v1518 = vshrl.u32 %v1517, 7
        %v1519 = vsub.s32 6, %v1518
        %v1520 = vrot.slane %v1458, %v1519
        %v1521 = vlaneseq
        %v1522 = vshrl.u32 %v1521, 7
        %v1523 = vsub.s32 7, %v1522
        %v1524 = vrot.slane %v1458, %v1523
        %v1669 = vunpack.c.l.b16 %v1329
        %v1670 = vunpack.c.h.b16 %v1329
        %v1671 = vunpack.c.l.b16 %v1330
        %v1672 = vunpack.c.h.b16 %v1330
        %v1673 = vunpack.c.l.b16 %v1331
        %v1674 = vunpack.c.h.b16 %v1331
        %v1675 = vunpack.c.l.b16 %v1332
        %v1676 = vunpack.c.h.b16 %v1332
        %v1677 = vunpack.c.l.b16 %v1333
        %v1678 = vunpack.c.h.b16 %v1333
        %v1679 = vunpack.c.l.b16 %v1334
        %v1680 = vunpack.c.h.b16 %v1334
        %v1681 = vunpack.c.l.b16 %v1335
        %v1682 = vunpack.c.h.b16 %v1335
        %v1683 = vunpack.c.l.b16 %v1336
        %v1684 = vunpack.c.h.b16 %v1336
        %v1685 = vunpack.c.l.b16 %v1337
        %v1686 = vunpack.c.h.b16 %v1337
        %v1687 = vunpack.c.l.b16 %v1338
        %v1688 = vunpack.c.h.b16 %v1338
        %v1689 = vunpack.c.l.b16 %v1339
        %v1690 = vunpack.c.h.b16 %v1339
        %v1691 = vunpack.c.l.b16 %v1340
        %v1692 = vunpack.c.h.b16 %v1340
        %v1693 = vunpack.c.l.b16 %v1341
        %v1694 = vunpack.c.h.b16 %v1341
        %v1695 = vunpack.c.l.b16 %v1342
        %v1696 = vunpack.c.h.b16 %v1342
        %v1697 = vunpack.c.l.b16 %v1343
        %v1698 = vunpack.c.h.b16 %v1343
        %v1699 = vunpack.c.l.b16 %v1344
        %v1700 = vunpack.c.h.b16 %v1344
        %v1701 = vunpack.c.l.b16 %v1345
        %v1702 = vunpack.c.h.b16 %v1345
        %v1703 = vunpack.c.l.b16 %v1346
        %v1704 = vunpack.c.h.b16 %v1346
        %v1705 = vunpack.c.l.b16 %v1347
        %v1706 = vunpack.c.h.b16 %v1347
        %v1707 = vunpack.c.l.b16 %v1348
        %v1708 = vunpack.c.h.b16 %v1348
        %v1709 = vunpack.c.l.b16 %v1349
        %v1710 = vunpack.c.h.b16 %v1349
        %v1711 = vunpack.c.l.b16 %v1350
        %v1712 = vunpack.c.h.b16 %v1350
        %v1713 = vunpack.c.l.b16 %v1351
        %v1714 = vunpack.c.h.b16 %v1351
        %v1715 = vunpack.c.l.b16 %v1352
        %v1716 = vunpack.c.h.b16 %v1352
        %v1717 = vunpack.c.l.b16 %v1353
        %v1718 = vunpack.c.h.b16 %v1353
        %v1719 = vunpack.c.l.b16 %v1354
        %v1720 = vunpack.c.h.b16 %v1354
        %v1721 = vunpack.c.l.b16 %v1355
        %v1722 = vunpack.c.h.b16 %v1355
        %v1723 = vunpack.c.l.b16 %v1356
        %v1724 = vunpack.c.h.b16 %v1356
        %v1725 = vunpack.c.l.b16 %v1357
        %v1726 = vunpack.c.h.b16 %v1357
        %v1727 = vunpack.c.l.b16 %v1358
        %v1728 = vunpack.c.h.b16 %v1358
        %v1729 = vunpack.c.l.b16 %v1359
        %v1730 = vunpack.c.h.b16 %v1359
        %v1731 = vunpack.c.l.b16 %v1360
        %v1732 = vunpack.c.h.b16 %v1360
        %v1733 = vunpack.c.l.b16 %v1361
        %v1734 = vunpack.c.h.b16 %v1361
        %v1735 = vunpack.c.l.b16 %v1362
        %v1736 = vunpack.c.h.b16 %v1362
        %v1737 = vunpack.c.l.b16 %v1363
        %v1738 = vunpack.c.h.b16 %v1363
        %v1739 = vunpack.c.l.b16 %v1364
        %v1740 = vunpack.c.h.b16 %v1364
        %v1741 = vunpack.c.l.b16 %v1365
        %v1742 = vunpack.c.h.b16 %v1365
        %v1743 = vunpack.c.l.b16 %v1366
        %v1744 = vunpack.c.h.b16 %v1366
        %v1745 = vunpack.c.l.b16 %v1367
        %v1746 = vunpack.c.h.b16 %v1367
        %v1747 = vunpack.c.l.b16 %v1368
        %v1748 = vunpack.c.h.b16 %v1368
        %v1749 = vunpack.c.l.b16 %v1369
        %v1750 = vunpack.c.h.b16 %v1369
        %v1751 = vunpack.c.l.b16 %v1370
        %v1752 = vunpack.c.h.b16 %v1370
        %v1753 = vunpack.c.l.b16 %v1371
        %v1754 = vunpack.c.h.b16 %v1371
        %v1755 = vunpack.c.l.b16 %v1372
        %v1756 = vunpack.c.h.b16 %v1372
        %v1757 = vunpack.c.l.b16 %v1373
        %v1758 = vunpack.c.h.b16 %v1373
        %v1759 = vunpack.c.l.b16 %v1374
        %v1760 = vunpack.c.h.b16 %v1374
        %v1761 = vunpack.c.l.b16 %v1375
        %v1762 = vunpack.c.h.b16 %v1375
        %v1763 = vunpack.c.l.b16 %v1376
        %v1764 = vunpack.c.h.b16 %v1376
        %v1765 = vunpack.c.l.b16 %v1377
        %v1766 = vunpack.c.h.b16 %v1377
        %v1767 = vunpack.c.l.b16 %v1378
        %v1768 = vunpack.c.h.b16 %v1378
        %v1769 = vunpack.c.l.b16 %v1379
        %v1770 = vunpack.c.h.b16 %v1379
        %v1771 = vunpack.c.l.b16 %v1380
        %v1772 = vunpack.c.h.b16 %v1380
        %v1773 = vunpack.c.l.b16 %v1381
        %v1774 = vunpack.c.h.b16 %v1381
        %v1775 = vunpack.c.l.b16 %v1382
        %v1776 = vunpack.c.h.b16 %v1382
        %v1777 = vunpack.c.l.b16 %v1383
        %v1778 = vunpack.c.h.b16 %v1383
        %v1779 = vunpack.c.l.b16 %v1384
        %v1780 = vunpack.c.h.b16 %v1384
        %v1781 = vunpack.c.l.b16 %v1385
        %v1782 = vunpack.c.h.b16 %v1385
        %v1783 = vunpack.c.l.b16 %v1386
        %v1784 = vunpack.c.h.b16 %v1386
        %v1785 = vunpack.c.l.b16 %v1387
        %v1786 = vunpack.c.h.b16 %v1387
        %v1787 = vunpack.c.l.b16 %v1388
        %v1788 = vunpack.c.h.b16 %v1388
        %v1789 = vunpack.c.l.b16 %v1389
        %v1790 = vunpack.c.h.b16 %v1389
        %v1791 = vunpack.c.l.b16 %v1390
        %v1792 = vunpack.c.h.b16 %v1390
        %v1793 = vunpack.c.l.b16 %v1391
        %v1794 = vunpack.c.h.b16 %v1391
        %v1795 = vunpack.c.l.b16 %v1392
        %v1796 = vunpack.c.h.b16 %v1392
        %v1797 = vunpack.c.l.b16 %v1393
        %v1798 = vunpack.c.h.b16 %v1393
        %v1799 = vunpack.c.l.b16 %v1394
        %v1800 = vunpack.c.h.b16 %v1394
        %v1801 = vunpack.c.l.b16 %v1395
        %v1802 = vunpack.c.h.b16 %v1395
        %v1803 = vunpack.c.l.b16 %v1396
        %v1804 = vunpack.c.h.b16 %v1396
        %v1805 = vunpack.c.l.b16 %v1397
        %v1806 = vunpack.c.h.b16 %v1397
        %v1807 = vunpack.c.l.b16 %v1398
        %v1808 = vunpack.c.h.b16 %v1398
        %v1809 = vunpack.c.l.b16 %v1399
        %v1810 = vunpack.c.h.b16 %v1399
        %v1811 = vunpack.c.l.b16 %v1400
        %v1812 = vunpack.c.h.b16 %v1400
        %v1813 = vunpack.c.l.b16 %v1401
        %v1814 = vunpack.c.h.b16 %v1401
        %v1815 = vunpack.c.l.b16 %v1402
        %v1816 = vunpack.c.h.b16 %v1402
        %v1817 = vunpack.c.l.b16 %v1403
        %v1818 = vunpack.c.h.b16 %v1403
        %v1819 = vunpack.c.l.b16 %v1404
        %v1820 = vunpack.c.h.b16 %v1404
        %v1821 = vunpack.c.l.b16 %v1405
        %v1822 = vunpack.c.h.b16 %v1405
        %v1823 = vunpack.c.l.b16 %v1406
        %v1824 = vunpack.c.h.b16 %v1406
        %v1825 = vunpack.c.l.b16 %v1407
        %v1826 = vunpack.c.h.b16 %v1407
        %v1827 = vunpack.c.l.b16 %v1408
        %v1828 = vunpack.c.h.b16 %v1408
        %v1829 = vunpack.c.l.b16 %v1409
        %v1830 = vunpack.c.h.b16 %v1409
        %v1831 = vunpack.c.l.b16 %v1410
        %v1832 = vunpack.c.h.b16 %v1410
        %v1833 = vunpack.c.l.b16 %v1411
        %v1834 = vunpack.c.h.b16 %v1411
        %v1835 = vunpack.c.l.b16 %v1412
        %v1836 = vunpack.c.h.b16 %v1412
        %v1837 = vunpack.c.l.b16 %v1413
        %v1838 = vunpack.c.h.b16 %v1413
        %v1839 = vunpack.c.l.b16 %v1414
        %v1840 = vunpack.c.h.b16 %v1414
        %v1841 = vunpack.c.l.b16 %v1415
        %v1842 = vunpack.c.h.b16 %v1415
        %v1843 = vunpack.c.l.b16 %v1416
        %v1844 = vunpack.c.h.b16 %v1416
        %v1845 = vunpack.c.l.b16 %v1417
        %v1846 = vunpack.c.h.b16 %v1417
        %v1847 = vunpack.c.l.b16 %v1418
        %v1848 = vunpack.c.h.b16 %v1418
        %v1849 = vunpack.c.l.b16 %v1419
        %v1850 = vunpack.c.h.b16 %v1419
        %v1851 = vunpack.c.l.b16 %v1420
        %v1852 = vunpack.c.h.b16 %v1420
        %v1853 = vunpack.c.l.b16 %v1421
        %v1854 = vunpack.c.h.b16 %v1421
        %v1855 = vunpack.c.l.b16 %v1422
        %v1856 = vunpack.c.h.b16 %v1422
        %v1857 = vunpack.c.l.b16 %v1423
        %v1858 = vunpack.c.h.b16 %v1423
        %v1859 = vunpack.c.l.b16 %v1424
        %v1860 = vunpack.c.h.b16 %v1424
        %v1861 = vunpack.c.l.b16 %v1425
        %v1862 = vunpack.c.h.b16 %v1425
        %v1863 = vunpack.c.l.b16 %v1426
        %v1864 = vunpack.c.h.b16 %v1426
        %v1865 = vunpack.c.l.b16 %v1427
        %v1866 = vunpack.c.h.b16 %v1427
        %v1867 = vunpack.c.l.b16 %v1428
        %v1868 = vunpack.c.h.b16 %v1428
        %v1869 = vunpack.c.l.b16 %v1429
        %v1870 = vunpack.c.h.b16 %v1429
        %v1871 = vunpack.c.l.b16 %v1430
        %v1872 = vunpack.c.h.b16 %v1430
        %v1873 = vunpack.c.l.b16 %v1431
        %v1874 = vunpack.c.h.b16 %v1431
        %v1875 = vunpack.c.l.b16 %v1432
        %v1876 = vunpack.c.h.b16 %v1432
        %v1877 = vunpack.c.l.b16 %v1433
        %v1878 = vunpack.c.h.b16 %v1433
        %v1879 = vunpack.c.l.b16 %v1434
        %v1880 = vunpack.c.h.b16 %v1434
        %v1881 = vunpack.c.l.b16 %v1435
        %v1882 = vunpack.c.h.b16 %v1435
        %v1883 = vunpack.c.l.b16 %v1436
        %v1884 = vunpack.c.h.b16 %v1436
        %v1885 = vunpack.c.l.b16 %v1437
        %v1886 = vunpack.c.h.b16 %v1437
        %v1887 = vunpack.c.l.b16 %v1438
        %v1888 = vunpack.c.h.b16 %v1438
        %v1889 = vunpack.c.l.b16 %v1439
        %v1890 = vunpack.c.h.b16 %v1439
        %v1891 = vunpack.c.l.b16 %v1440
        %v1892 = vunpack.c.h.b16 %v1440
        %v1893 = vunpack.c.l.b16 %v1441
        %v1894 = vunpack.c.h.b16 %v1441
        %v1895 = vunpack.c.l.b16 %v1442
        %v1896 = vunpack.c.h.b16 %v1442
        %v1897 = vunpack.c.l.b16 %v1443
        %v1898 = vunpack.c.h.b16 %v1443
        %v1899 = vunpack.c.l.b16 %v1444
        %v1900 = vunpack.c.h.b16 %v1444
        %v1901 = vunpack.c.l.b16 %v1445
        %v1902 = vunpack.c.h.b16 %v1445
        %v1903 = vunpack.c.l.b16 %v1446
        %v1904 = vunpack.c.h.b16 %v1446
        %v1905 = vunpack.c.l.b16 %v1447
        %v1906 = vunpack.c.h.b16 %v1447
        %v1907 = vunpack.c.l.b16 %v1448
        %v1908 = vunpack.c.h.b16 %v1448
        %v1909 = vunpack.c.l.b16 %v1449
        %v1910 = vunpack.c.h.b16 %v1449
        %v1911 = vunpack.c.l.b16 %v1450
        %v1912 = vunpack.c.h.b16 %v1450
        %v1913 = vunpack.c.l.b16 %v1451
        %v1914 = vunpack.c.h.b16 %v1451
        %v1915 = vunpack.c.l.b16 %v1452
        %v1916 = vunpack.c.h.b16 %v1452
        %v1917 = vunpack.c.l.b16 %v1453
        %v1918 = vunpack.c.h.b16 %v1453
        %v1919 = vunpack.c.l.b16 %v1454
        %v1920 = vunpack.c.h.b16 %v1454
        %v1921 = vunpack.c.l.b16 %v1455
        %v1922 = vunpack.c.h.b16 %v1455
        %v1923 = vunpack.c.l.b16 %v1456
        %v1924 = vunpack.c.h.b16 %v1456
        %v1925 = vpack.c.b16 %v1685, %v1669
        %v1926 = vpack.c.b16 %v1686, %v1670
        %v1927 = vpack.c.b16 %v1687, %v1671
        %v1928 = vpack.c.b16 %v1688, %v1672
        %v1929 = vpack.c.b16 %v1689, %v1673
        %v1930 = vpack.c.b16 %v1690, %v1674
        %v1931 = vpack.c.b16 %v1691, %v1675
        %v1932 = vpack.c.b16 %v1692, %v1676
        %v1933 = vpack.c.b16 %v1693, %v1677
        %v1934 = vpack.c.b16 %v1694, %v1678
        %v1935 = vpack.c.b16 %v1695, %v1679
        %v1936 = vpack.c.b16 %v1696, %v1680
        %v1937 = vpack.c.b16 %v1697, %v1681
        %v1938 = vpack.c.b16 %v1698, %v1682
        %v1939 = vpack.c.b16 %v1699, %v1683
        %v1940 = vpack.c.b16 %v1700, %v1684
        %v1941 = vpack.c.b16 %v1717, %v1701
        %v1942 = vpack.c.b16 %v1718, %v1702
        %v1943 = vpack.c.b16 %v1719, %v1703
        %v1944 = vpack.c.b16 %v1720, %v1704
        %v1945 = vpack.c.b16 %v1721, %v1705
        %v1946 = vpack.c.b16 %v1722, %v1706
        %v1947 = vpack.c.b16 %v1723, %v1707
        %v1948 = vpack.c.b16 %v1724, %v1708
        %v1949 = vpack.c.b16 %v1725, %v1709
        %v1950 = vpack.c.b16 %v1726, %v1710
        %v1951 = vpack.c.b16 %v1727, %v1711
        %v1952 = vpack.c.b16 %v1728, %v1712
        %v1953 = vpack.c.b16 %v1729, %v1713
        %v1954 = vpack.c.b16 %v1730, %v1714
        %v1955 = vpack.c.b16 %v1731, %v1715
        %v1956 = vpack.c.b16 %v1732, %v1716
        %v1957 = vpack.c.b16 %v1749, %v1733
        %v1958 = vpack.c.b16 %v1750, %v1734
        %v1959 = vpack.c.b16 %v1751, %v1735
        %v1960 = vpack.c.b16 %v1752, %v1736
        %v1961 = vpack.c.b16 %v1753, %v1737
        %v1962 = vpack.c.b16 %v1754, %v1738
        %v1963 = vpack.c.b16 %v1755, %v1739
        %v1964 = vpack.c.b16 %v1756, %v1740
        %v1965 = vpack.c.b16 %v1757, %v1741
        %v1966 = vpack.c.b16 %v1758, %v1742
        %v1967 = vpack.c.b16 %v1759, %v1743
        %v1968 = vpack.c.b16 %v1760, %v1744
        %v1969 = vpack.c.b16 %v1761, %v1745
        %v1970 = vpack.c.b16 %v1762, %v1746
        %v1971 = vpack.c.b16 %v1763, %v1747
        %v1972 = vpack.c.b16 %v1764, %v1748
        %v1973 = vpack.c.b16 %v1781, %v1765
        %v1974 = vpack.c.b16 %v1782, %v1766
        %v1975 = vpack.c.b16 %v1783, %v1767
        %v1976 = vpack.c.b16 %v1784, %v1768
        %v1977 = vpack.c.b16 %v1785, %v1769
        %v1978 = vpack.c.b16 %v1786, %v1770
        %v1979 = vpack.c.b16 %v1787, %v1771
        %v1980 = vpack.c.b16 %v1788, %v1772
        %v1981 = vpack.c.b16 %v1789, %v1773
        %v1982 = vpack.c.b16 %v1790, %v1774
        %v1983 = vpack.c.b16 %v1791, %v1775
        %v1984 = vpack.c.b16 %v1792, %v1776
        %v1985 = vpack.c.b16 %v1793, %v1777
        %v1986 = vpack.c.b16 %v1794, %v1778
        %v1987 = vpack.c.b16 %v1795, %v1779
        %v1988 = vpack.c.b16 %v1796, %v1780
        %v1989 = vpack.c.b16 %v1813, %v1797
        %v1990 = vpack.c.b16 %v1814, %v1798
        %v1991 = vpack.c.b16 %v1815, %v1799
        %v1992 = vpack.c.b16 %v1816, %v1800
        %v1993 = vpack.c.b16 %v1817, %v1801
        %v1994 = vpack.c.b16 %v1818, %v1802
        %v1995 = vpack.c.b16 %v1819, %v1803
        %v1996 = vpack.c.b16 %v1820, %v1804
        %v1997 = vpack.c.b16 %v1821, %v1805
        %v1998 = vpack.c.b16 %v1822, %v1806
        %v1999 = vpack.c.b16 %v1823, %v1807
        %v2000 = vpack.c.b16 %v1824, %v1808
        %v2001 = vpack.c.b16 %v1825, %v1809
        %v2002 = vpack.c.b16 %v1826, %v1810
        %v2003 = vpack.c.b16 %v1827, %v1811
        %v2004 = vpack.c.b16 %v1828, %v1812
        %v2005 = vpack.c.b16 %v1845, %v1829
        %v2006 = vpack.c.b16 %v1846, %v1830
        %v2007 = vpack.c.b16 %v1847, %v1831
        %v2008 = vpack.c.b16 %v1848, %v1832
        %v2009 = vpack.c.b16 %v1849, %v1833
        %v2010 = vpack.c.b16 %v1850, %v1834
        %v2011 = vpack.c.b16 %v1851, %v1835
        %v2012 = vpack.c.b16 %v1852, %v1836
        %v2013 = vpack.c.b16 %v1853, %v1837
        %v2014 = vpack.c.b16 %v1854, %v1838
        %v2015 = vpack.c.b16 %v1855, %v1839
        %v2016 = vpack.c.b16 %v1856, %v1840
        %v2017 = vpack.c.b16 %v1857, %v1841
        %v2018 = vpack.c.b16 %v1858, %v1842
        %v2019 = vpack.c.b16 %v1859, %v1843
        %v2020 = vpack.c.b16 %v1860, %v1844
        %v2021 = vpack.c.b16 %v1877, %v1861
        %v2022 = vpack.c.b16 %v1878, %v1862
        %v2023 = vpack.c.b16 %v1879, %v1863
        %v2024 = vpack.c.b16 %v1880, %v1864
        %v2025 = vpack.c.b16 %v1881, %v1865
        %v2026 = vpack.c.b16 %v1882, %v1866
        %v2027 = vpack.c.b16 %v1883, %v1867
        %v2028 = vpack.c.b16 %v1884, %v1868
        %v2029 = vpack.c.b16 %v1885, %v1869
        %v2030 = vpack.c.b16 %v1886, %v1870
        %v2031 = vpack.c.b16 %v1887, %v1871
        %v2032 = vpack.c.b16 %v1888, %v1872
        %v2033 = vpack.c.b16 %v1889, %v1873
        %v2034 = vpack.c.b16 %v1890, %v1874
        %v2035 = vpack.c.b16 %v1891, %v1875
        %v2036 = vpack.c.b16 %v1892, %v1876
        %v2037 = vpack.c.b16 %v1909, %v1893
        %v2038 = vpack.c.b16 %v1910, %v1894
        %v2039 = vpack.c.b16 %v1911, %v1895
        %v2040 = vpack.c.b16 %v1912, %v1896
        %v2041 = vpack.c.b16 %v1913, %v1897
        %v2042 = vpack.c.b16 %v1914, %v1898
        %v2043 = vpack.c.b16 %v1915, %v1899
        %v2044 = vpack.c.b16 %v1916, %v1900
        %v2045 = vpack.c.b16 %v1917, %v1901
        %v2046 = vpack.c.b16 %v1918, %v1902
        %v2047 = vpack.c.b16 %v1919, %v1903
        %v2048 = vpack.c.b16 %v1920, %v1904
        %v2049 = vpack.c.b16 %v1921, %v1905
        %v2050 = vpack.c.b16 %v1922, %v1906
        %v2051 = vpack.c.b16 %v1923, %v1907
        %v2052 = vpack.c.b16 %v1924, %v1908
        %2181 = vmatprep.subr.bf16.mxu0 %v1926
        %2182 = vmatpush1.bf16.msra.mxu0 %v1925
        %2183 = vmatprep.subr.bf16.mxu0 %v1942
        %2184 = vmatpush1.bf16.msra.mxu0 %v1941
        %2185 = vmatprep.subr.bf16.mxu0 %v1958
        %2186 = vmatpush1.bf16.msra.mxu0 %v1957
        %2187 = vmatprep.subr.bf16.mxu0 %v1974
        %2188 = vmatpush1.bf16.msra.mxu0 %v1973
        %2189 = vmatprep.subr.bf16.mxu0 %v1990
        %2190 = vmatpush1.bf16.msra.mxu0 %v1989
        %2191 = vmatprep.subr.bf16.mxu0 %v2006
        %2192 = vmatpush1.bf16.msra.mxu0 %v2005
        %2193 = vmatprep.subr.bf16.mxu0 %v2022
        %2194 = vmatpush1.bf16.msra.mxu0 %v2021
        %2195 = vmatprep.subr.bf16.mxu0 %v2038
        %2196 = vmatpush1.bf16.msra.mxu0 %v2037
        %2197 = vmatprep.subr.bf16.mxu0 0
        %2198 = vmatpush1.bf16.msra.mxu0 0
        %2199 = vmatprep.subr.bf16.mxu0 0
        %2200 = vmatpush1.bf16.msra.mxu0 0
        %2201 = vmatprep.subr.bf16.mxu0 0
        %2202 = vmatpush1.bf16.msra.mxu0 0
        %2203 = vmatprep.subr.bf16.mxu0 0
        %2204 = vmatpush1.bf16.msra.mxu0 0
        %2205 = vmatprep.subr.bf16.mxu0 0
        %2206 = vmatpush1.bf16.msra.mxu0 0
        %2207 = vmatprep.subr.bf16.mxu0 0
        %2208 = vmatpush1.bf16.msra.mxu0 0
        %2209 = vmatprep.subr.bf16.mxu0 0
        %2210 = vmatpush1.bf16.msra.mxu0 0
        %2211 = vmatprep.subr.bf16.mxu0 0
        %2212 = vmatpush1.bf16.msra.mxu0 0
        %2213 = vmatprep.mubr.bf16.mxu0 0
        %2214 = vmatmul.mubr.bf16.gmra.mrb[0].mxu0 %v1321
        %v2215 = vpop.f32.mrb[0].mxu0
        %v2216 = vadd.f32 %v1464, %v2215
        %v2217 = vpop.f32.mrb[0].mxu0
        %v2218 = vadd.f32 %v1468, %v2217
        %v2219 = vpop.f32.mrb[0].mxu0
        %v2220 = vadd.f32 %v1464, %v2219
        %v2221 = vpop.f32.mrb[0].mxu0
        %v2222 = vadd.f32 %v1468, %v2221
        %2223 = vmatprep.mubr.bf16.mxu0 0
        %2224 = vmatmul.mubr.bf16.gmra.mrb[0].mxu0 %v1322
        %v2225 = vpop.f32.mrb[0].mxu0
        %v2226 = vadd.f32 %v1464, %v2225
        %v2227 = vpop.f32.mrb[0].mxu0
        %v2228 = vadd.f32 %v1468, %v2227
        %v2229 = vpop.f32.mrb[0].mxu0
        %v2230 = vadd.f32 %v1464, %v2229
        %v2231 = vpop.f32.mrb[0].mxu0
        %v2232 = vadd.f32 %v1468, %v2231
        %2233 = vmatprep.mubr.bf16.mxu0 0
        %2234 = vmatmul.mubr.bf16.gmra.mrb[0].mxu0 %v1323
        %v2235 = vpop.f32.mrb[0].mxu0
        %v2236 = vadd.f32 %v1464, %v2235
        %v2237 = vpop.f32.mrb[0].mxu0
        %v2238 = vadd.f32 %v1468, %v2237
        %v2239 = vpop.f32.mrb[0].mxu0
        %v2240 = vadd.f32 %v1464, %v2239
        %v2241 = vpop.f32.mrb[0].mxu0
        %v2242 = vadd.f32 %v1468, %v2241
        %2243 = vmatprep.mubr.bf16.mxu0 0
        %2244 = vmatmul.mubr.bf16.gmra.mrb[0].mxu0 %v1324
        %v2245 = vpop.f32.mrb[0].mxu0
        %v2246 = vadd.f32 %v1464, %v2245
        %v2247 = vpop.f32.mrb[0].mxu0
        %v2248 = vadd.f32 %v1468, %v2247
        %v2249 = vpop.f32.mrb[0].mxu0
        %v2250 = vadd.f32 %v1464, %v2249
        %v2251 = vpop.f32.mrb[0].mxu0
        %v2252 = vadd.f32 %v1468, %v2251
        %2253 = vmatprep.mubr.bf16.mxu0 0
        %2254 = vmatmul.mubr.bf16.gmra.mrb[0].mxu0 %v1325
        %v2255 = vpop.f32.mrb[0].mxu0
        %v2256 = vadd.f32 %v1464, %v2255
        %v2257 = vpop.f32.mrb[0].mxu0
        %v2258 = vadd.f32 %v1468, %v2257
        %v2259 = vpop.f32.mrb[0].mxu0
        %v2260 = vadd.f32 %v1464, %v2259
        %v2261 = vpop.f32.mrb[0].mxu0
        %v2262 = vadd.f32 %v1468, %v2261
        %2263 = vmatprep.mubr.bf16.mxu0 0
        %2264 = vmatmul.mubr.bf16.gmra.mrb[0].mxu0 %v1326
        %v2265 = vpop.f32.mrb[0].mxu0
        %v2266 = vadd.f32 %v1464, %v2265
        %v2267 = vpop.f32.mrb[0].mxu0
        %v2268 = vadd.f32 %v1468, %v2267
        %v2269 = vpop.f32.mrb[0].mxu0
        %v2270 = vadd.f32 %v1464, %v2269
        %v2271 = vpop.f32.mrb[0].mxu0
        %v2272 = vadd.f32 %v1468, %v2271
        %2273 = vmatprep.mubr.bf16.mxu0 0
        %2274 = vmatmul.mubr.bf16.gmra.mrb[0].mxu0 %v1327
        %v2275 = vpop.f32.mrb[0].mxu0
        %v2276 = vadd.f32 %v1464, %v2275
        %v2277 = vpop.f32.mrb[0].mxu0
        %v2278 = vadd.f32 %v1468, %v2277
        %v2279 = vpop.f32.mrb[0].mxu0
        %v2280 = vadd.f32 %v1464, %v2279
        %v2281 = vpop.f32.mrb[0].mxu0
        %v2282 = vadd.f32 %v1468, %v2281
        %2283 = vmatprep.mubr.bf16.mxu0 0
        %2284 = vmatmul.mubr.bf16.gmra.mrb[0].mxu0 %v1328
        %v2285 = vpop.f32.mrb[0].mxu0
        %v2286 = vadd.f32 %v1464, %v2285
        %v2287 = vpop.f32.mrb[0].mxu0
        %v2288 = vadd.f32 %v1468, %v2287
        %v2289 = vpop.f32.mrb[0].mxu0
        %v2290 = vadd.f32 %v1464, %v2289
        %v2291 = vpop.f32.mrb[0].mxu0
        %v2292 = vadd.f32 %v1468, %v2291
        %2293 = vdwg.mxu0
        %2294 = vmatprep.subr.bf16.mxu0 %v1928
        %2295 = vmatpush1.bf16.msra.mxu0 %v1927
        %2296 = vmatprep.subr.bf16.mxu0 %v1944
        %2297 = vmatpush1.bf16.msra.mxu0 %v1943
        %2298 = vmatprep.subr.bf16.mxu0 %v1960
        %2299 = vmatpush1.bf16.msra.mxu0 %v1959
        %2300 = vmatprep.subr.bf16.mxu0 %v1976
        %2301 = vmatpush1.bf16.msra.mxu0 %v1975
        %2302 = vmatprep.subr.bf16.mxu0 %v1992
        %2303 = vmatpush1.bf16.msra.mxu0 %v1991
        %2304 = vmatprep.subr.bf16.mxu0 %v2008
        %2305 = vmatpush1.bf16.msra.mxu0 %v2007
        %2306 = vmatprep.subr.bf16.mxu0 %v2024
        %2307 = vmatpush1.bf16.msra.mxu0 %v2023
        %2308 = vmatprep.subr.bf16.mxu0 %v2040
        %2309 = vmatpush1.bf16.msra.mxu0 %v2039
        %2310 = vmatprep.subr.bf16.mxu0 0
        %2311 = vmatpush1.bf16.msra.mxu0 0
        %2312 = vmatprep.subr.bf16.mxu0 0
        %2313 = vmatpush1.bf16.msra.mxu0 0
        %2314 = vmatprep.subr.bf16.mxu0 0
        %2315 = vmatpush1.bf16.msra.mxu0 0
        %2316 = vmatprep.subr.bf16.mxu0 0
        %2317 = vmatpush1.bf16.msra.mxu0 0
        %2318 = vmatprep.subr.bf16.mxu0 0
        %2319 = vmatpush1.bf16.msra.mxu0 0
        %2320 = vmatprep.subr.bf16.mxu0 0
        %2321 = vmatpush1.bf16.msra.mxu0 0
        %2322 = vmatprep.subr.bf16.mxu0 0
        %2323 = vmatpush1.bf16.msra.mxu0 0
        %2324 = vmatprep.subr.bf16.mxu0 0
        %2325 = vmatpush1.bf16.msra.mxu0 0
        %2326 = vmatprep.mubr.bf16.mxu0 0
        %2327 = vmatmul.mubr.bf16.gmra.mrb[0].mxu0 %v1321
        %v2328 = vpop.f32.mrb[0].mxu0
        %v2329 = vadd.f32 %v1472, %v2328
        %v2330 = vpop.f32.mrb[0].mxu0
        %v2331 = vadd.f32 %v1476, %v2330
        %v2332 = vpop.f32.mrb[0].mxu0
        %v2333 = vadd.f32 %v1472, %v2332
        %v2334 = vpop.f32.mrb[0].mxu0
        %v2335 = vadd.f32 %v1476, %v2334
        %2336 = vmatprep.mubr.bf16.mxu0 0
        %2337 = vmatmul.mubr.bf16.gmra.mrb[0].mxu0 %v1322
        %v2338 = vpop.f32.mrb[0].mxu0
        %v2339 = vadd.f32 %v1472, %v2338
        %v2340 = vpop.f32.mrb[0].mxu0
        %v2341 = vadd.f32 %v1476, %v2340
        %v2342 = vpop.f32.mrb[0].mxu0
        %v2343 = vadd.f32 %v1472, %v2342
        %v2344 = vpop.f32.mrb[0].mxu0
        %v2345 = vadd.f32 %v1476, %v2344
        %2346 = vmatprep.mubr.bf16.mxu0 0
        %2347 = vmatmul.mubr.bf16.gmra.mrb[0].mxu0 %v1323
        %v2348 = vpop.f32.mrb[0].mxu0
        %v2349 = vadd.f32 %v1472, %v2348
        %v2350 = vpop.f32.mrb[0].mxu0
        %v2351 = vadd.f32 %v1476, %v2350
        %v2352 = vpop.f32.mrb[0].mxu0
        %v2353 = vadd.f32 %v1472, %v2352
        %v2354 = vpop.f32.mrb[0].mxu0
        %v2355 = vadd.f32 %v1476, %v2354
        %2356 = vmatprep.mubr.bf16.mxu0 0
        %2357 = vmatmul.mubr.bf16.gmra.mrb[0].mxu0 %v1324
        %v2358 = vpop.f32.mrb[0].mxu0
        %v2359 = vadd.f32 %v1472, %v2358
        %v2360 = vpop.f32.mrb[0].mxu0
        %v2361 = vadd.f32 %v1476, %v2360
        %v2362 = vpop.f32.mrb[0].mxu0
        %v2363 = vadd.f32 %v1472, %v2362
        %v2364 = vpop.f32.mrb[0].mxu0
        %v2365 = vadd.f32 %v1476, %v2364
        %2366 = vmatprep.mubr.bf16.mxu0 0
        %2367 = vmatmul.mubr.bf16.gmra.mrb[0].mxu0 %v1325
        %v2368 = vpop.f32.mrb[0].mxu0
        %v2369 = vadd.f32 %v1472, %v2368
        %v2370 = vpop.f32.mrb[0].mxu0
        %v2371 = vadd.f32 %v1476, %v2370
        %v2372 = vpop.f32.mrb[0].mxu0
        %v2373 = vadd.f32 %v1472, %v2372
        %v2374 = vpop.f32.mrb[0].mxu0
        %v2375 = vadd.f32 %v1476, %v2374
        %2376 = vmatprep.mubr.bf16.mxu0 0
        %2377 = vmatmul.mubr.bf16.gmra.mrb[0].mxu0 %v1326
        %v2378 = vpop.f32.mrb[0].mxu0
        %v2379 = vadd.f32 %v1472, %v2378
        %v2380 = vpop.f32.mrb[0].mxu0
        %v2381 = vadd.f32 %v1476, %v2380
        %v2382 = vpop.f32.mrb[0].mxu0
        %v2383 = vadd.f32 %v1472, %v2382
        %v2384 = vpop.f32.mrb[0].mxu0
        %v2385 = vadd.f32 %v1476, %v2384
        %2386 = vmatprep.mubr.bf16.mxu0 0
        %2387 = vmatmul.mubr.bf16.gmra.mrb[0].mxu0 %v1327
        %v2388 = vpop.f32.mrb[0].mxu0
        %v2389 = vadd.f32 %v1472, %v2388
        %v2390 = vpop.f32.mrb[0].mxu0
        %v2391 = vadd.f32 %v1476, %v2390
        %v2392 = vpop.f32.mrb[0].mxu0
        %v2393 = vadd.f32 %v1472, %v2392
        %v2394 = vpop.f32.mrb[0].mxu0
        %v2395 = vadd.f32 %v1476, %v2394
        %2396 = vmatprep.mubr.bf16.mxu0 0
        %2397 = vmatmul.mubr.bf16.gmra.mrb[0].mxu0 %v1328
        %v2398 = vpop.f32.mrb[0].mxu0
        %v2399 = vadd.f32 %v1472, %v2398
        %v2400 = vpop.f32.mrb[0].mxu0
        %v2401 = vadd.f32 %v1476, %v2400
        %v2402 = vpop.f32.mrb[0].mxu0
        %v2403 = vadd.f32 %v1472, %v2402
        %v2404 = vpop.f32.mrb[0].mxu0
        %v2405 = vadd.f32 %v1476, %v2404
        %2406 = vdwg.mxu0
        %2407 = vmatprep.subr.bf16.mxu0 %v1930
        %2408 = vmatpush1.bf16.msra.mxu0 %v1929
        %2409 = vmatprep.subr.bf16.mxu0 %v1946
        %2410 = vmatpush1.bf16.msra.mxu0 %v1945
        %2411 = vmatprep.subr.bf16.mxu0 %v1962
        %2412 = vmatpush1.bf16.msra.mxu0 %v1961
        %2413 = vmatprep.subr.bf16.mxu0 %v1978
        %2414 = vmatpush1.bf16.msra.mxu0 %v1977
        %2415 = vmatprep.subr.bf16.mxu0 %v1994
        %2416 = vmatpush1.bf16.msra.mxu0 %v1993
        %2417 = vmatprep.subr.bf16.mxu0 %v2010
        %2418 = vmatpush1.bf16.msra.mxu0 %v2009
        %2419 = vmatprep.subr.bf16.mxu0 %v2026
        %2420 = vmatpush1.bf16.msra.mxu0 %v2025
        %2421 = vmatprep.subr.bf16.mxu0 %v2042
        %2422 = vmatpush1.bf16.msra.mxu0 %v2041
        %2423 = vmatprep.subr.bf16.mxu0 0
        %2424 = vmatpush1.bf16.msra.mxu0 0
        %2425 = vmatprep.subr.bf16.mxu0 0
        %2426 = vmatpush1.bf16.msra.mxu0 0
        %2427 = vmatprep.subr.bf16.mxu0 0
        %2428 = vmatpush1.bf16.msra.mxu0 0
        %2429 = vmatprep.subr.bf16.mxu0 0
        %2430 = vmatpush1.bf16.msra.mxu0 0
        %2431 = vmatprep.subr.bf16.mxu0 0
        %2432 = vmatpush1.bf16.msra.mxu0 0
        %2433 = vmatprep.subr.bf16.mxu0 0
        %2434 = vmatpush1.bf16.msra.mxu0 0
        %2435 = vmatprep.subr.bf16.mxu0 0
        %2436 = vmatpush1.bf16.msra.mxu0 0
        %2437 = vmatprep.subr.bf16.mxu0 0
        %2438 = vmatpush1.bf16.msra.mxu0 0
        %2439 = vmatprep.mubr.bf16.mxu0 0
        %2440 = vmatmul.mubr.bf16.gmra.mrb[0].mxu0 %v1321
        %v2441 = vpop.f32.mrb[0].mxu0
        %v2442 = vadd.f32 %v1480, %v2441
        %v2443 = vpop.f32.mrb[0].mxu0
        %v2444 = vadd.f32 %v1484, %v2443
        %v2445 = vpop.f32.mrb[0].mxu0
        %v2446 = vadd.f32 %v1480, %v2445
        %v2447 = vpop.f32.mrb[0].mxu0
        %v2448 = vadd.f32 %v1484, %v2447
        %2449 = vmatprep.mubr.bf16.mxu0 0
        %2450 = vmatmul.mubr.bf16.gmra.mrb[0].mxu0 %v1322
        %v2451 = vpop.f32.mrb[0].mxu0
        %v2452 = vadd.f32 %v1480, %v2451
        %v2453 = vpop.f32.mrb[0].mxu0
        %v2454 = vadd.f32 %v1484, %v2453
        %v2455 = vpop.f32.mrb[0].mxu0
        %v2456 = vadd.f32 %v1480, %v2455
        %v2457 = vpop.f32.mrb[0].mxu0
        %v2458 = vadd.f32 %v1484, %v2457
        %2459 = vmatprep.mubr.bf16.mxu0 0
        %2460 = vmatmul.mubr.bf16.gmra.mrb[0].mxu0 %v1323
        %v2461 = vpop.f32.mrb[0].mxu0
        %v2462 = vadd.f32 %v1480, %v2461
        %v2463 = vpop.f32.mrb[0].mxu0
        %v2464 = vadd.f32 %v1484, %v2463
        %v2465 = vpop.f32.mrb[0].mxu0
        %v2466 = vadd.f32 %v1480, %v2465
        %v2467 = vpop.f32.mrb[0].mxu0
        %v2468 = vadd.f32 %v1484, %v2467
        %2469 = vmatprep.mubr.bf16.mxu0 0
        %2470 = vmatmul.mubr.bf16.gmra.mrb[0].mxu0 %v1324
        %v2471 = vpop.f32.mrb[0].mxu0
        %v2472 = vadd.f32 %v1480, %v2471
        %v2473 = vpop.f32.mrb[0].mxu0
        %v2474 = vadd.f32 %v1484, %v2473
        %v2475 = vpop.f32.mrb[0].mxu0
        %v2476 = vadd.f32 %v1480, %v2475
        %v2477 = vpop.f32.mrb[0].mxu0
        %v2478 = vadd.f32 %v1484, %v2477
        %2479 = vmatprep.mubr.bf16.mxu0 0
        %2480 = vmatmul.mubr.bf16.gmra.mrb[0].mxu0 %v1325
        %v2481 = vpop.f32.mrb[0].mxu0
        %v2482 = vadd.f32 %v1480, %v2481
        %v2483 = vpop.f32.mrb[0].mxu0
        %v2484 = vadd.f32 %v1484, %v2483
        %v2485 = vpop.f32.mrb[0].mxu0
        %v2486 = vadd.f32 %v1480, %v2485
        %v2487 = vpop.f32.mrb[0].mxu0
        %v2488 = vadd.f32 %v1484, %v2487
        %2489 = vmatprep.mubr.bf16.mxu0 0
        %2490 = vmatmul.mubr.bf16.gmra.mrb[0].mxu0 %v1326
        %v2491 = vpop.f32.mrb[0].mxu0
        %v2492 = vadd.f32 %v1480, %v2491
        %v2493 = vpop.f32.mrb[0].mxu0
        %v2494 = vadd.f32 %v1484, %v2493
        %v2495 = vpop.f32.mrb[0].mxu0
        %v2496 = vadd.f32 %v1480, %v2495
        %v2497 = vpop.f32.mrb[0].mxu0
        %v2498 = vadd.f32 %v1484, %v2497
        %2499 = vmatprep.mubr.bf16.mxu0 0
        %2500 = vmatmul.mubr.bf16.gmra.mrb[0].mxu0 %v1327
        %v2501 = vpop.f32.mrb[0].mxu0
        %v2502 = vadd.f32 %v1480, %v2501
        %v2503 = vpop.f32.mrb[0].mxu0
        %v2504 = vadd.f32 %v1484, %v2503
        %v2505 = vpop.f32.mrb[0].mxu0
        %v2506 = vadd.f32 %v1480, %v2505
        %v2507 = vpop.f32.mrb[0].mxu0
        %v2508 = vadd.f32 %v1484, %v2507
        %2509 = vmatprep.mubr.bf16.mxu0 0
        %2510 = vmatmul.mubr.bf16.gmra.mrb[0].mxu0 %v1328
        %v2511 = vpop.f32.mrb[0].mxu0
        %v2512 = vadd.f32 %v1480, %v2511
        %v2513 = vpop.f32.mrb[0].mxu0
        %v2514 = vadd.f32 %v1484, %v2513
        %v2515 = vpop.f32.mrb[0].mxu0
        %v2516 = vadd.f32 %v1480, %v2515
        %v2517 = vpop.f32.mrb[0].mxu0
        %v2518 = vadd.f32 %v1484, %v2517
        %2519 = vdwg.mxu0
        %2520 = vmatprep.subr.bf16.mxu0 %v1932
        %2521 = vmatpush1.bf16.msra.mxu0 %v1931
        %2522 = vmatprep.subr.bf16.mxu0 %v1948
        %2523 = vmatpush1.bf16.msra.mxu0 %v1947
        %2524 = vmatprep.subr.bf16.mxu0 %v1964
        %2525 = vmatpush1.bf16.msra.mxu0 %v1963
        %2526 = vmatprep.subr.bf16.mxu0 %v1980
        %2527 = vmatpush1.bf16.msra.mxu0 %v1979
        %2528 = vmatprep.subr.bf16.mxu0 %v1996
        %2529 = vmatpush1.bf16.msra.mxu0 %v1995
        %2530 = vmatprep.subr.bf16.mxu0 %v2012
        %2531 = vmatpush1.bf16.msra.mxu0 %v2011
        %2532 = vmatprep.subr.bf16.mxu0 %v2028
        %2533 = vmatpush1.bf16.msra.mxu0 %v2027
        %2534 = vmatprep.subr.bf16.mxu0 %v2044
        %2535 = vmatpush1.bf16.msra.mxu0 %v2043
        %2536 = vmatprep.subr.bf16.mxu0 0
        %2537 = vmatpush1.bf16.msra.mxu0 0
        %2538 = vmatprep.subr.bf16.mxu0 0
        %2539 = vmatpush1.bf16.msra.mxu0 0
        %2540 = vmatprep.subr.bf16.mxu0 0
        %2541 = vmatpush1.bf16.msra.mxu0 0
        %2542 = vmatprep.subr.bf16.mxu0 0
        %2543 = vmatpush1.bf16.msra.mxu0 0
        %2544 = vmatprep.subr.bf16.mxu0 0
        %2545 = vmatpush1.bf16.msra.mxu0 0
        %2546 = vmatprep.subr.bf16.mxu0 0
        %2547 = vmatpush1.bf16.msra.mxu0 0
        %2548 = vmatprep.subr.bf16.mxu0 0
        %2549 = vmatpush1.bf16.msra.mxu0 0
        %2550 = vmatprep.subr.bf16.mxu0 0
        %2551 = vmatpush1.bf16.msra.mxu0 0
        %2552 = vmatprep.mubr.bf16.mxu0 0
        %2553 = vmatmul.mubr.bf16.gmra.mrb[0].mxu0 %v1321
        %v2554 = vpop.f32.mrb[0].mxu0
        %v2555 = vadd.f32 %v1488, %v2554
        %v2556 = vpop.f32.mrb[0].mxu0
        %v2557 = vadd.f32 %v1492, %v2556
        %v2558 = vpop.f32.mrb[0].mxu0
        %v2559 = vadd.f32 %v1488, %v2558
        %v2560 = vpop.f32.mrb[0].mxu0
        %v2561 = vadd.f32 %v1492, %v2560
        %2562 = vmatprep.mubr.bf16.mxu0 0
        %2563 = vmatmul.mubr.bf16.gmra.mrb[0].mxu0 %v1322
        %v2564 = vpop.f32.mrb[0].mxu0
        %v2565 = vadd.f32 %v1488, %v2564
        %v2566 = vpop.f32.mrb[0].mxu0
        %v2567 = vadd.f32 %v1492, %v2566
        %v2568 = vpop.f32.mrb[0].mxu0
        %v2569 = vadd.f32 %v1488, %v2568
        %v2570 = vpop.f32.mrb[0].mxu0
        %v2571 = vadd.f32 %v1492, %v2570
        %2572 = vmatprep.mubr.bf16.mxu0 0
        %2573 = vmatmul.mubr.bf16.gmra.mrb[0].mxu0 %v1323
        %v2574 = vpop.f32.mrb[0].mxu0
        %v2575 = vadd.f32 %v1488, %v2574
        %v2576 = vpop.f32.mrb[0].mxu0
        %v2577 = vadd.f32 %v1492, %v2576
        %v2578 = vpop.f32.mrb[0].mxu0
        %v2579 = vadd.f32 %v1488, %v2578
        %v2580 = vpop.f32.mrb[0].mxu0
        %v2581 = vadd.f32 %v1492, %v2580
        %2582 = vmatprep.mubr.bf16.mxu0 0
        %2583 = vmatmul.mubr.bf16.gmra.mrb[0].mxu0 %v1324
        %v2584 = vpop.f32.mrb[0].mxu0
        %v2585 = vadd.f32 %v1488, %v2584
        %v2586 = vpop.f32.mrb[0].mxu0
        %v2587 = vadd.f32 %v1492, %v2586
        %v2588 = vpop.f32.mrb[0].mxu0
        %v2589 = vadd.f32 %v1488, %v2588
        %v2590 = vpop.f32.mrb[0].mxu0
        %v2591 = vadd.f32 %v1492, %v2590
        %2592 = vmatprep.mubr.bf16.mxu0 0
        %2593 = vmatmul.mubr.bf16.gmra.mrb[0].mxu0 %v1325
        %v2594 = vpop.f32.mrb[0].mxu0
        %v2595 = vadd.f32 %v1488, %v2594
        %v2596 = vpop.f32.mrb[0].mxu0
        %v2597 = vadd.f32 %v1492, %v2596
        %v2598 = vpop.f32.mrb[0].mxu0
        %v2599 = vadd.f32 %v1488, %v2598
        %v2600 = vpop.f32.mrb[0].mxu0
        %v2601 = vadd.f32 %v1492, %v2600
        %2602 = vmatprep.mubr.bf16.mxu0 0
        %2603 = vmatmul.mubr.bf16.gmra.mrb[0].mxu0 %v1326
        %v2604 = vpop.f32.mrb[0].mxu0
        %v2605 = vadd.f32 %v1488, %v2604
        %v2606 = vpop.f32.mrb[0].mxu0
        %v2607 = vadd.f32 %v1492, %v2606
        %v2608 = vpop.f32.mrb[0].mxu0
        %v2609 = vadd.f32 %v1488, %v2608
        %v2610 = vpop.f32.mrb[0].mxu0
        %v2611 = vadd.f32 %v1492, %v2610
        %2612 = vmatprep.mubr.bf16.mxu0 0
        %2613 = vmatmul.mubr.bf16.gmra.mrb[0].mxu0 %v1327
        %v2614 = vpop.f32.mrb[0].mxu0
        %v2615 = vadd.f32 %v1488, %v2614
        %v2616 = vpop.f32.mrb[0].mxu0
        %v2617 = vadd.f32 %v1492, %v2616
        %v2618 = vpop.f32.mrb[0].mxu0
        %v2619 = vadd.f32 %v1488, %v2618
        %v2620 = vpop.f32.mrb[0].mxu0
        %v2621 = vadd.f32 %v1492, %v2620
        %2622 = vmatprep.mubr.bf16.mxu0 0
        %2623 = vmatmul.mubr.bf16.gmra.mrb[0].mxu0 %v1328
        %v2624 = vpop.f32.mrb[0].mxu0
        %v2625 = vadd.f32 %v1488, %v2624
        %v2626 = vpop.f32.mrb[0].mxu0
        %v2627 = vadd.f32 %v1492, %v2626
        %v2628 = vpop.f32.mrb[0].mxu0
        %v2629 = vadd.f32 %v1488, %v2628
        %v2630 = vpop.f32.mrb[0].mxu0
        %v2631 = vadd.f32 %v1492, %v2630
        %2632 = vdwg.mxu0
        %2633 = vmatprep.subr.bf16.mxu0 %v1934
        %2634 = vmatpush1.bf16.msra.mxu0 %v1933
        %2635 = vmatprep.subr.bf16.mxu0 %v1950
        %2636 = vmatpush1.bf16.msra.mxu0 %v1949
        %2637 = vmatprep.subr.bf16.mxu0 %v1966
        %2638 = vmatpush1.bf16.msra.mxu0 %v1965
        %2639 = vmatprep.subr.bf16.mxu0 %v1982
        %2640 = vmatpush1.bf16.msra.mxu0 %v1981
        %2641 = vmatprep.subr.bf16.mxu0 %v1998
        %2642 = vmatpush1.bf16.msra.mxu0 %v1997
        %2643 = vmatprep.subr.bf16.mxu0 %v2014
        %2644 = vmatpush1.bf16.msra.mxu0 %v2013
        %2645 = vmatprep.subr.bf16.mxu0 %v2030
        %2646 = vmatpush1.bf16.msra.mxu0 %v2029
        %2647 = vmatprep.subr.bf16.mxu0 %v2046
        %2648 = vmatpush1.bf16.msra.mxu0 %v2045
        %2649 = vmatprep.subr.bf16.mxu0 0
        %2650 = vmatpush1.bf16.msra.mxu0 0
        %2651 = vmatprep.subr.bf16.mxu0 0
        %2652 = vmatpush1.bf16.msra.mxu0 0
        %2653 = vmatprep.subr.bf16.mxu0 0
        %2654 = vmatpush1.bf16.msra.mxu0 0
        %2655 = vmatprep.subr.bf16.mxu0 0
        %2656 = vmatpush1.bf16.msra.mxu0 0
        %2657 = vmatprep.subr.bf16.mxu0 0
        %2658 = vmatpush1.bf16.msra.mxu0 0
        %2659 = vmatprep.subr.bf16.mxu0 0
        %2660 = vmatpush1.bf16.msra.mxu0 0
        %2661 = vmatprep.subr.bf16.mxu0 0
        %2662 = vmatpush1.bf16.msra.mxu0 0
        %2663 = vmatprep.subr.bf16.mxu0 0
        %2664 = vmatpush1.bf16.msra.mxu0 0
        %2665 = vmatprep.mubr.bf16.mxu0 0
        %2666 = vmatmul.mubr.bf16.gmra.mrb[0].mxu0 %v1321
        %v2667 = vpop.f32.mrb[0].mxu0
        %v2668 = vadd.f32 %v1496, %v2667
        %v2669 = vpop.f32.mrb[0].mxu0
        %v2670 = vadd.f32 %v1500, %v2669
        %v2671 = vpop.f32.mrb[0].mxu0
        %v2672 = vadd.f32 %v1496, %v2671
        %v2673 = vpop.f32.mrb[0].mxu0
        %v2674 = vadd.f32 %v1500, %v2673
        %2675 = vmatprep.mubr.bf16.mxu0 0
        %2676 = vmatmul.mubr.bf16.gmra.mrb[0].mxu0 %v1322
        %v2677 = vpop.f32.mrb[0].mxu0
        %v2678 = vadd.f32 %v1496, %v2677
        %v2679 = vpop.f32.mrb[0].mxu0
        %v2680 = vadd.f32 %v1500, %v2679
        %v2681 = vpop.f32.mrb[0].mxu0
        %v2682 = vadd.f32 %v1496, %v2681
        %v2683 = vpop.f32.mrb[0].mxu0
        %v2684 = vadd.f32 %v1500, %v2683
        %2685 = vmatprep.mubr.bf16.mxu0 0
        %2686 = vmatmul.mubr.bf16.gmra.mrb[0].mxu0 %v1323
        %v2687 = vpop.f32.mrb[0].mxu0
        %v2688 = vadd.f32 %v1496, %v2687
        %v2689 = vpop.f32.mrb[0].mxu0
        %v2690 = vadd.f32 %v1500, %v2689
        %v2691 = vpop.f32.mrb[0].mxu0
        %v2692 = vadd.f32 %v1496, %v2691
        %v2693 = vpop.f32.mrb[0].mxu0
        %v2694 = vadd.f32 %v1500, %v2693
        %2695 = vmatprep.mubr.bf16.mxu0 0
        %2696 = vmatmul.mubr.bf16.gmra.mrb[0].mxu0 %v1324
        %v2697 = vpop.f32.mrb[0].mxu0
        %v2698 = vadd.f32 %v1496, %v2697
        %v2699 = vpop.f32.mrb[0].mxu0
        %v2700 = vadd.f32 %v1500, %v2699
        %v2701 = vpop.f32.mrb[0].mxu0
        %v2702 = vadd.f32 %v1496, %v2701
        %v2703 = vpop.f32.mrb[0].mxu0
        %v2704 = vadd.f32 %v1500, %v2703
        %2705 = vmatprep.mubr.bf16.mxu0 0
        %2706 = vmatmul.mubr.bf16.gmra.mrb[0].mxu0 %v1325
        %v2707 = vpop.f32.mrb[0].mxu0
        %v2708 = vadd.f32 %v1496, %v2707
        %v2709 = vpop.f32.mrb[0].mxu0
        %v2710 = vadd.f32 %v1500, %v2709
        %v2711 = vpop.f32.mrb[0].mxu0
        %v2712 = vadd.f32 %v1496, %v2711
        %v2713 = vpop.f32.mrb[0].mxu0
        %v2714 = vadd.f32 %v1500, %v2713
        %2715 = vmatprep.mubr.bf16.mxu0 0
        %2716 = vmatmul.mubr.bf16.gmra.mrb[0].mxu0 %v1326
        %v2717 = vpop.f32.mrb[0].mxu0
        %v2718 = vadd.f32 %v1496, %v2717
        %v2719 = vpop.f32.mrb[0].mxu0
        %v2720 = vadd.f32 %v1500, %v2719
        %v2721 = vpop.f32.mrb[0].mxu0
        %v2722 = vadd.f32 %v1496, %v2721
        %v2723 = vpop.f32.mrb[0].mxu0
        %v2724 = vadd.f32 %v1500, %v2723
        %2725 = vmatprep.mubr.bf16.mxu0 0
        %2726 = vmatmul.mubr.bf16.gmra.mrb[0].mxu0 %v1327
        %v2727 = vpop.f32.mrb[0].mxu0
        %v2728 = vadd.f32 %v1496, %v2727
        %v2729 = vpop.f32.mrb[0].mxu0
        %v2730 = vadd.f32 %v1500, %v2729
        %v2731 = vpop.f32.mrb[0].mxu0
        %v2732 = vadd.f32 %v1496, %v2731
        %v2733 = vpop.f32.mrb[0].mxu0
        %v2734 = vadd.f32 %v1500, %v2733
        %2735 = vmatprep.mubr.bf16.mxu0 0
        %2736 = vmatmul.mubr.bf16.gmra.mrb[0].mxu0 %v1328
        %v2737 = vpop.f32.mrb[0].mxu0
        %v2738 = vadd.f32 %v1496, %v2737
        %v2739 = vpop.f32.mrb[0].mxu0
        %v2740 = vadd.f32 %v1500, %v2739
        %v2741 = vpop.f32.mrb[0].mxu0
        %v2742 = vadd.f32 %v1496, %v2741
        %v2743 = vpop.f32.mrb[0].mxu0
        %v2744 = vadd.f32 %v1500, %v2743
        %2745 = vdwg.mxu0
        %2746 = vmatprep.subr.bf16.mxu0 %v1936
        %2747 = vmatpush1.bf16.msra.mxu0 %v1935
        %2748 = vmatprep.subr.bf16.mxu0 %v1952
        %2749 = vmatpush1.bf16.msra.mxu0 %v1951
        %2750 = vmatprep.subr.bf16.mxu0 %v1968
        %2751 = vmatpush1.bf16.msra.mxu0 %v1967
        %2752 = vmatprep.subr.bf16.mxu0 %v1984
        %2753 = vmatpush1.bf16.msra.mxu0 %v1983
        %2754 = vmatprep.subr.bf16.mxu0 %v2000
        %2755 = vmatpush1.bf16.msra.mxu0 %v1999
        %2756 = vmatprep.subr.bf16.mxu0 %v2016
        %2757 = vmatpush1.bf16.msra.mxu0 %v2015
        %2758 = vmatprep.subr.bf16.mxu0 %v2032
        %2759 = vmatpush1.bf16.msra.mxu0 %v2031
        %2760 = vmatprep.subr.bf16.mxu0 %v2048
        %2761 = vmatpush1.bf16.msra.mxu0 %v2047
        %2762 = vmatprep.subr.bf16.mxu0 0
        %2763 = vmatpush1.bf16.msra.mxu0 0
        %2764 = vmatprep.subr.bf16.mxu0 0
        %2765 = vmatpush1.bf16.msra.mxu0 0
        %2766 = vmatprep.subr.bf16.mxu0 0
        %2767 = vmatpush1.bf16.msra.mxu0 0
        %2768 = vmatprep.subr.bf16.mxu0 0
        %2769 = vmatpush1.bf16.msra.mxu0 0
        %2770 = vmatprep.subr.bf16.mxu0 0
        %2771 = vmatpush1.bf16.msra.mxu0 0
        %2772 = vmatprep.subr.bf16.mxu0 0
        %2773 = vmatpush1.bf16.msra.mxu0 0
        %2774 = vmatprep.subr.bf16.mxu0 0
        %2775 = vmatpush1.bf16.msra.mxu0 0
        %2776 = vmatprep.subr.bf16.mxu0 0
        %2777 = vmatpush1.bf16.msra.mxu0 0
        %2778 = vmatprep.mubr.bf16.mxu0 0
        %2779 = vmatmul.mubr.bf16.gmra.mrb[0].mxu0 %v1321
        %v2780 = vpop.f32.mrb[0].mxu0
        %v2781 = vadd.f32 %v1504, %v2780
        %v2782 = vpop.f32.mrb[0].mxu0
        %v2783 = vadd.f32 %v1508, %v2782
        %v2784 = vpop.f32.mrb[0].mxu0
        %v2785 = vadd.f32 %v1504, %v2784
        %v2786 = vpop.f32.mrb[0].mxu0
        %v2787 = vadd.f32 %v1508, %v2786
        %2788 = vmatprep.mubr.bf16.mxu0 0
        %2789 = vmatmul.mubr.bf16.gmra.mrb[0].mxu0 %v1322
        %v2790 = vpop.f32.mrb[0].mxu0
        %v2791 = vadd.f32 %v1504, %v2790
        %v2792 = vpop.f32.mrb[0].mxu0
        %v2793 = vadd.f32 %v1508, %v2792
        %v2794 = vpop.f32.mrb[0].mxu0
        %v2795 = vadd.f32 %v1504, %v2794
        %v2796 = vpop.f32.mrb[0].mxu0
        %v2797 = vadd.f32 %v1508, %v2796
        %2798 = vmatprep.mubr.bf16.mxu0 0
        %2799 = vmatmul.mubr.bf16.gmra.mrb[0].mxu0 %v1323
        %v2800 = vpop.f32.mrb[0].mxu0
        %v2801 = vadd.f32 %v1504, %v2800
        %v2802 = vpop.f32.mrb[0].mxu0
        %v2803 = vadd.f32 %v1508, %v2802
        %v2804 = vpop.f32.mrb[0].mxu0
        %v2805 = vadd.f32 %v1504, %v2804
        %v2806 = vpop.f32.mrb[0].mxu0
        %v2807 = vadd.f32 %v1508, %v2806
        %2808 = vmatprep.mubr.bf16.mxu0 0
        %2809 = vmatmul.mubr.bf16.gmra.mrb[0].mxu0 %v1324
        %v2810 = vpop.f32.mrb[0].mxu0
        %v2811 = vadd.f32 %v1504, %v2810
        %v2812 = vpop.f32.mrb[0].mxu0
        %v2813 = vadd.f32 %v1508, %v2812
        %v2814 = vpop.f32.mrb[0].mxu0
        %v2815 = vadd.f32 %v1504, %v2814
        %v2816 = vpop.f32.mrb[0].mxu0
        %v2817 = vadd.f32 %v1508, %v2816
        %2818 = vmatprep.mubr.bf16.mxu0 0
        %2819 = vmatmul.mubr.bf16.gmra.mrb[0].mxu0 %v1325
        %v2820 = vpop.f32.mrb[0].mxu0
        %v2821 = vadd.f32 %v1504, %v2820
        %v2822 = vpop.f32.mrb[0].mxu0
        %v2823 = vadd.f32 %v1508, %v2822
        %v2824 = vpop.f32.mrb[0].mxu0
        %v2825 = vadd.f32 %v1504, %v2824
        %v2826 = vpop.f32.mrb[0].mxu0
        %v2827 = vadd.f32 %v1508, %v2826
        %2828 = vmatprep.mubr.bf16.mxu0 0
        %2829 = vmatmul.mubr.bf16.gmra.mrb[0].mxu0 %v1326
        %v2830 = vpop.f32.mrb[0].mxu0
        %v2831 = vadd.f32 %v1504, %v2830
        %v2832 = vpop.f32.mrb[0].mxu0
        %v2833 = vadd.f32 %v1508, %v2832
        %v2834 = vpop.f32.mrb[0].mxu0
        %v2835 = vadd.f32 %v1504, %v2834
        %v2836 = vpop.f32.mrb[0].mxu0
        %v2837 = vadd.f32 %v1508, %v2836
        %2838 = vmatprep.mubr.bf16.mxu0 0
        %2839 = vmatmul.mubr.bf16.gmra.mrb[0].mxu0 %v1327
        %v2840 = vpop.f32.mrb[0].mxu0
        %v2841 = vadd.f32 %v1504, %v2840
        %v2842 = vpop.f32.mrb[0].mxu0
        %v2843 = vadd.f32 %v1508, %v2842
        %v2844 = vpop.f32.mrb[0].mxu0
        %v2845 = vadd.f32 %v1504, %v2844
        %v2846 = vpop.f32.mrb[0].mxu0
        %v2847 = vadd.f32 %v1508, %v2846
        %2848 = vmatprep.mubr.bf16.mxu0 0
        %2849 = vmatmul.mubr.bf16.gmra.mrb[0].mxu0 %v1328
        %v2850 = vpop.f32.mrb[0].mxu0
        %v2851 = vadd.f32 %v1504, %v2850
        %v2852 = vpop.f32.mrb[0].mxu0
        %v2853 = vadd.f32 %v1508, %v2852
        %v2854 = vpop.f32.mrb[0].mxu0
        %v2855 = vadd.f32 %v1504, %v2854
        %v2856 = vpop.f32.mrb[0].mxu0
        %v2857 = vadd.f32 %v1508, %v2856
        %2858 = vdwg.mxu0
        %2859 = vmatprep.subr.bf16.mxu0 %v1938
        %2860 = vmatpush1.bf16.msra.mxu0 %v1937
        %2861 = vmatprep.subr.bf16.mxu0 %v1954
        %2862 = vmatpush1.bf16.msra.mxu0 %v1953
        %2863 = vmatprep.subr.bf16.mxu0 %v1970
        %2864 = vmatpush1.bf16.msra.mxu0 %v1969
        %2865 = vmatprep.subr.bf16.mxu0 %v1986
        %2866 = vmatpush1.bf16.msra.mxu0 %v1985
        %2867 = vmatprep.subr.bf16.mxu0 %v2002
        %2868 = vmatpush1.bf16.msra.mxu0 %v2001
        %2869 = vmatprep.subr.bf16.mxu0 %v2018
        %2870 = vmatpush1.bf16.msra.mxu0 %v2017
        %2871 = vmatprep.subr.bf16.mxu0 %v2034
        %2872 = vmatpush1.bf16.msra.mxu0 %v2033
        %2873 = vmatprep.subr.bf16.mxu0 %v2050
        %2874 = vmatpush1.bf16.msra.mxu0 %v2049
        %2875 = vmatprep.subr.bf16.mxu0 0
        %2876 = vmatpush1.bf16.msra.mxu0 0
        %2877 = vmatprep.subr.bf16.mxu0 0
        %2878 = vmatpush1.bf16.msra.mxu0 0
        %2879 = vmatprep.subr.bf16.mxu0 0
        %2880 = vmatpush1.bf16.msra.mxu0 0
        %2881 = vmatprep.subr.bf16.mxu0 0
        %2882 = vmatpush1.bf16.msra.mxu0 0
        %2883 = vmatprep.subr.bf16.mxu0 0
        %2884 = vmatpush1.bf16.msra.mxu0 0
        %2885 = vmatprep.subr.bf16.mxu0 0
        %2886 = vmatpush1.bf16.msra.mxu0 0
        %2887 = vmatprep.subr.bf16.mxu0 0
        %2888 = vmatpush1.bf16.msra.mxu0 0
        %2889 = vmatprep.subr.bf16.mxu0 0
        %2890 = vmatpush1.bf16.msra.mxu0 0
        %2891 = vmatprep.mubr.bf16.mxu0 0
        %2892 = vmatmul.mubr.bf16.gmra.mrb[0].mxu0 %v1321
        %v2893 = vpop.f32.mrb[0].mxu0
        %v2894 = vadd.f32 %v1512, %v2893
        %v2895 = vpop.f32.mrb[0].mxu0
        %v2896 = vadd.f32 %v1516, %v2895
        %v2897 = vpop.f32.mrb[0].mxu0
        %v2898 = vadd.f32 %v1512, %v2897
        %v2899 = vpop.f32.mrb[0].mxu0
        %v2900 = vadd.f32 %v1516, %v2899
        %2901 = vmatprep.mubr.bf16.mxu0 0
        %2902 = vmatmul.mubr.bf16.gmra.mrb[0].mxu0 %v1322
        %v2903 = vpop.f32.mrb[0].mxu0
        %v2904 = vadd.f32 %v1512, %v2903
        %v2905 = vpop.f32.mrb[0].mxu0
        %v2906 = vadd.f32 %v1516, %v2905
        %v2907 = vpop.f32.mrb[0].mxu0
        %v2908 = vadd.f32 %v1512, %v2907
        %v2909 = vpop.f32.mrb[0].mxu0
        %v2910 = vadd.f32 %v1516, %v2909
        %2911 = vmatprep.mubr.bf16.mxu0 0
        %2912 = vmatmul.mubr.bf16.gmra.mrb[0].mxu0 %v1323
        %v2913 = vpop.f32.mrb[0].mxu0
        %v2914 = vadd.f32 %v1512, %v2913
        %v2915 = vpop.f32.mrb[0].mxu0
        %v2916 = vadd.f32 %v1516, %v2915
        %v2917 = vpop.f32.mrb[0].mxu0
        %v2918 = vadd.f32 %v1512, %v2917
        %v2919 = vpop.f32.mrb[0].mxu0
        %v2920 = vadd.f32 %v1516, %v2919
        %2921 = vmatprep.mubr.bf16.mxu0 0
        %2922 = vmatmul.mubr.bf16.gmra.mrb[0].mxu0 %v1324
        %v2923 = vpop.f32.mrb[0].mxu0
        %v2924 = vadd.f32 %v1512, %v2923
        %v2925 = vpop.f32.mrb[0].mxu0
        %v2926 = vadd.f32 %v1516, %v2925
        %v2927 = vpop.f32.mrb[0].mxu0
        %v2928 = vadd.f32 %v1512, %v2927
        %v2929 = vpop.f32.mrb[0].mxu0
        %v2930 = vadd.f32 %v1516, %v2929
        %2931 = vmatprep.mubr.bf16.mxu0 0
        %2932 = vmatmul.mubr.bf16.gmra.mrb[0].mxu0 %v1325
        %v2933 = vpop.f32.mrb[0].mxu0
        %v2934 = vadd.f32 %v1512, %v2933
        %v2935 = vpop.f32.mrb[0].mxu0
        %v2936 = vadd.f32 %v1516, %v2935
        %v2937 = vpop.f32.mrb[0].mxu0
        %v2938 = vadd.f32 %v1512, %v2937
        %v2939 = vpop.f32.mrb[0].mxu0
        %v2940 = vadd.f32 %v1516, %v2939
        %2941 = vmatprep.mubr.bf16.mxu0 0
        %2942 = vmatmul.mubr.bf16.gmra.mrb[0].mxu0 %v1326
        %v2943 = vpop.f32.mrb[0].mxu0
        %v2944 = vadd.f32 %v1512, %v2943
        %v2945 = vpop.f32.mrb[0].mxu0
        %v2946 = vadd.f32 %v1516, %v2945
        %v2947 = vpop.f32.mrb[0].mxu0
        %v2948 = vadd.f32 %v1512, %v2947
        %v2949 = vpop.f32.mrb[0].mxu0
        %v2950 = vadd.f32 %v1516, %v2949
        %2951 = vmatprep.mubr.bf16.mxu0 0
        %2952 = vmatmul.mubr.bf16.gmra.mrb[0].mxu0 %v1327
        %v2953 = vpop.f32.mrb[0].mxu0
        %v2954 = vadd.f32 %v1512, %v2953
        %v2955 = vpop.f32.mrb[0].mxu0
        %v2956 = vadd.f32 %v1516, %v2955
        %v2957 = vpop.f32.mrb[0].mxu0
        %v2958 = vadd.f32 %v1512, %v2957
        %v2959 = vpop.f32.mrb[0].mxu0
        %v2960 = vadd.f32 %v1516, %v2959
        %2961 = vmatprep.mubr.bf16.mxu0 0
        %2962 = vmatmul.mubr.bf16.gmra.mrb[0].mxu0 %v1328
        %v2963 = vpop.f32.mrb[0].mxu0
        %v2964 = vadd.f32 %v1512, %v2963
        %v2965 = vpop.f32.mrb[0].mxu0
        %v2966 = vadd.f32 %v1516, %v2965
        %v2967 = vpop.f32.mrb[0].mxu0
        %v2968 = vadd.f32 %v1512, %v2967
        %v2969 = vpop.f32.mrb[0].mxu0
        %v2970 = vadd.f32 %v1516, %v2969
        %2971 = vdwg.mxu0
        %2972 = vmatprep.subr.bf16.mxu0 %v1940
        %2973 = vmatpush1.bf16.msra.mxu0 %v1939
        %2974 = vmatprep.subr.bf16.mxu0 %v1956
        %2975 = vmatpush1.bf16.msra.mxu0 %v1955
        %2976 = vmatprep.subr.bf16.mxu0 %v1972
        %2977 = vmatpush1.bf16.msra.mxu0 %v1971
        %2978 = vmatprep.subr.bf16.mxu0 %v1988
        %2979 = vmatpush1.bf16.msra.mxu0 %v1987
        %2980 = vmatprep.subr.bf16.mxu0 %v2004
        %2981 = vmatpush1.bf16.msra.mxu0 %v2003
        %2982 = vmatprep.subr.bf16.mxu0 %v2020
        %2983 = vmatpush1.bf16.msra.mxu0 %v2019
        %2984 = vmatprep.subr.bf16.mxu0 %v2036
        %2985 = vmatpush1.bf16.msra.mxu0 %v2035
        %2986 = vmatprep.subr.bf16.mxu0 %v2052
        %2987 = vmatpush1.bf16.msra.mxu0 %v2051
        %2988 = vmatprep.subr.bf16.mxu0 0
        %2989 = vmatpush1.bf16.msra.mxu0 0
        %2990 = vmatprep.subr.bf16.mxu0 0
        %2991 = vmatpush1.bf16.msra.mxu0 0
        %2992 = vmatprep.subr.bf16.mxu0 0
        %2993 = vmatpush1.bf16.msra.mxu0 0
        %2994 = vmatprep.subr.bf16.mxu0 0
        %2995 = vmatpush1.bf16.msra.mxu0 0
        %2996 = vmatprep.subr.bf16.mxu0 0
        %2997 = vmatpush1.bf16.msra.mxu0 0
        %2998 = vmatprep.subr.bf16.mxu0 0
        %2999 = vmatpush1.bf16.msra.mxu0 0
        %3000 = vmatprep.subr.bf16.mxu0 0
        %3001 = vmatpush1.bf16.msra.mxu0 0
        %3002 = vmatprep.subr.bf16.mxu0 0
        %3003 = vmatpush1.bf16.msra.mxu0 0
        %3004 = vmatprep.mubr.bf16.mxu0 0
        %3005 = vmatmul.mubr.bf16.gmra.mrb[0].mxu0 %v1321
        %v3006 = vpop.f32.mrb[0].mxu0
        %v3007 = vadd.f32 %v1520, %v3006
        %v3008 = vpop.f32.mrb[0].mxu0
        %v3009 = vadd.f32 %v1524, %v3008
        %v3010 = vpop.f32.mrb[0].mxu0
        %v3011 = vadd.f32 %v1520, %v3010
        %v3012 = vpop.f32.mrb[0].mxu0
        %v3013 = vadd.f32 %v1524, %v3012
        %3014 = vmatprep.mubr.bf16.mxu0 0
        %3015 = vmatmul.mubr.bf16.gmra.mrb[0].mxu0 %v1322
        %v3016 = vpop.f32.mrb[0].mxu0
        %v3017 = vadd.f32 %v1520, %v3016
        %v3018 = vpop.f32.mrb[0].mxu0
        %v3019 = vadd.f32 %v1524, %v3018
        %v3020 = vpop.f32.mrb[0].mxu0
        %v3021 = vadd.f32 %v1520, %v3020
        %v3022 = vpop.f32.mrb[0].mxu0
        %v3023 = vadd.f32 %v1524, %v3022
        %3024 = vmatprep.mubr.bf16.mxu0 0
        %3025 = vmatmul.mubr.bf16.gmra.mrb[0].mxu0 %v1323
        %v3026 = vpop.f32.mrb[0].mxu0
        %v3027 = vadd.f32 %v1520, %v3026
        %v3028 = vpop.f32.mrb[0].mxu0
        %v3029 = vadd.f32 %v1524, %v3028
        %v3030 = vpop.f32.mrb[0].mxu0
        %v3031 = vadd.f32 %v1520, %v3030
        %v3032 = vpop.f32.mrb[0].mxu0
        %v3033 = vadd.f32 %v1524, %v3032
        %3034 = vmatprep.mubr.bf16.mxu0 0
        %3035 = vmatmul.mubr.bf16.gmra.mrb[0].mxu0 %v1324
        %v3036 = vpop.f32.mrb[0].mxu0
        %v3037 = vadd.f32 %v1520, %v3036
        %v3038 = vpop.f32.mrb[0].mxu0
        %v3039 = vadd.f32 %v1524, %v3038
        %v3040 = vpop.f32.mrb[0].mxu0
        %v3041 = vadd.f32 %v1520, %v3040
        %v3042 = vpop.f32.mrb[0].mxu0
        %v3043 = vadd.f32 %v1524, %v3042
        %3044 = vmatprep.mubr.bf16.mxu0 0
        %3045 = vmatmul.mubr.bf16.gmra.mrb[0].mxu0 %v1325
        %v3046 = vpop.f32.mrb[0].mxu0
        %v3047 = vadd.f32 %v1520, %v3046
        %v3048 = vpop.f32.mrb[0].mxu0
        %v3049 = vadd.f32 %v1524, %v3048
        %v3050 = vpop.f32.mrb[0].mxu0
        %v3051 = vadd.f32 %v1520, %v3050
        %v3052 = vpop.f32.mrb[0].mxu0
        %v3053 = vadd.f32 %v1524, %v3052
        %3054 = vmatprep.mubr.bf16.mxu0 0
        %3055 = vmatmul.mubr.bf16.gmra.mrb[0].mxu0 %v1326
        %v3056 = vpop.f32.mrb[0].mxu0
        %v3057 = vadd.f32 %v1520, %v3056
        %v3058 = vpop.f32.mrb[0].mxu0
        %v3059 = vadd.f32 %v1524, %v3058
        %v3060 = vpop.f32.mrb[0].mxu0
        %v3061 = vadd.f32 %v1520, %v3060
        %v3062 = vpop.f32.mrb[0].mxu0
        %v3063 = vadd.f32 %v1524, %v3062
        %3064 = vmatprep.mubr.bf16.mxu0 0
        %3065 = vmatmul.mubr.bf16.gmra.mrb[0].mxu0 %v1327
        %v3066 = vpop.f32.mrb[0].mxu0
        %v3067 = vadd.f32 %v1520, %v3066
        %v3068 = vpop.f32.mrb[0].mxu0
        %v3069 = vadd.f32 %v1524, %v3068
        %v3070 = vpop.f32.mrb[0].mxu0
        %v3071 = vadd.f32 %v1520, %v3070
        %v3072 = vpop.f32.mrb[0].mxu0
        %v3073 = vadd.f32 %v1524, %v3072
        %3074 = vmatprep.mubr.bf16.mxu0 0
        %3075 = vmatmul.mubr.bf16.gmra.mrb[0].mxu0 %v1328
        %v3076 = vpop.f32.mrb[0].mxu0
        %v3077 = vadd.f32 %v1520, %v3076
        %v3078 = vpop.f32.mrb[0].mxu0
        %v3079 = vadd.f32 %v1524, %v3078
        %v3080 = vpop.f32.mrb[0].mxu0
        %v3081 = vadd.f32 %v1520, %v3080
        %v3082 = vpop.f32.mrb[0].mxu0
        %v3083 = vadd.f32 %v1524, %v3082
        %3084 = vdwg.mxu0
        %v3085 = vmax.f32 %v2216, 0.0
        %v3086 = vmax.f32 %v2218, 0.0
        %v3087 = vmax.f32 %v2329, 0.0
        %v3088 = vmax.f32 %v2331, 0.0
        %v3089 = vmax.f32 %v2442, 0.0
        %v3090 = vmax.f32 %v2444, 0.0
        %v3091 = vmax.f32 %v2555, 0.0
        %v3092 = vmax.f32 %v2557, 0.0
        %v3093 = vmax.f32 %v2668, 0.0
        %v3094 = vmax.f32 %v2670, 0.0
        %v3095 = vmax.f32 %v2781, 0.0
        %v3096 = vmax.f32 %v2783, 0.0
        %v3097 = vmax.f32 %v2894, 0.0
        %v3098 = vmax.f32 %v2896, 0.0
        %v3099 = vmax.f32 %v3007, 0.0
        %v3100 = vmax.f32 %v3009, 0.0
        %v3101 = vmax.f32 %v2220, 0.0
        %v3102 = vmax.f32 %v2222, 0.0
        %v3103 = vmax.f32 %v2333, 0.0
        %v3104 = vmax.f32 %v2335, 0.0
        %v3105 = vmax.f32 %v2446, 0.0
        %v3106 = vmax.f32 %v2448, 0.0
        %v3107 = vmax.f32 %v2559, 0.0
        %v3108 = vmax.f32 %v2561, 0.0
        %v3109 = vmax.f32 %v2672, 0.0
        %v3110 = vmax.f32 %v2674, 0.0
        %v3111 = vmax.f32 %v2785, 0.0
        %v3112 = vmax.f32 %v2787, 0.0
        %v3113 = vmax.f32 %v2898, 0.0
        %v3114 = vmax.f32 %v2900, 0.0
        %v3115 = vmax.f32 %v3011, 0.0
        %v3116 = vmax.f32 %v3013, 0.0
        %v3117 = vmax.f32 %v2226, 0.0
        %v3118 = vmax.f32 %v2228, 0.0
        %v3119 = vmax.f32 %v2339, 0.0
        %v3120 = vmax.f32 %v2341, 0.0
        %v3121 = vmax.f32 %v2452, 0.0
        %v3122 = vmax.f32 %v2454, 0.0
        %v3123 = vmax.f32 %v2565, 0.0
        %v3124 = vmax.f32 %v2567, 0.0
        %v3125 = vmax.f32 %v2678, 0.0
        %v3126 = vmax.f32 %v2680, 0.0
        %v3127 = vmax.f32 %v2791, 0.0
        %v3128 = vmax.f32 %v2793, 0.0
        %v3129 = vmax.f32 %v2904, 0.0
        %v3130 = vmax.f32 %v2906, 0.0
        %v3131 = vmax.f32 %v3017, 0.0
        %v3132 = vmax.f32 %v3019, 0.0
        %v3133 = vmax.f32 %v2230, 0.0
        %v3134 = vmax.f32 %v2232, 0.0
        %v3135 = vmax.f32 %v2343, 0.0
        %v3136 = vmax.f32 %v2345, 0.0
        %v3137 = vmax.f32 %v2456, 0.0
        %v3138 = vmax.f32 %v2458, 0.0
        %v3139 = vmax.f32 %v2569, 0.0
        %v3140 = vmax.f32 %v2571, 0.0
        %v3141 = vmax.f32 %v2682, 0.0
        %v3142 = vmax.f32 %v2684, 0.0
        %v3143 = vmax.f32 %v2795, 0.0
        %v3144 = vmax.f32 %v2797, 0.0
        %v3145 = vmax.f32 %v2908, 0.0
        %v3146 = vmax.f32 %v2910, 0.0
        %v3147 = vmax.f32 %v3021, 0.0
        %v3148 = vmax.f32 %v3023, 0.0
        %v3149 = vmax.f32 %v2236, 0.0
        %v3150 = vmax.f32 %v2238, 0.0
        %v3151 = vmax.f32 %v2349, 0.0
        %v3152 = vmax.f32 %v2351, 0.0
        %v3153 = vmax.f32 %v2462, 0.0
        %v3154 = vmax.f32 %v2464, 0.0
        %v3155 = vmax.f32 %v2575, 0.0
        %v3156 = vmax.f32 %v2577, 0.0
        %v3157 = vmax.f32 %v2688, 0.0
        %v3158 = vmax.f32 %v2690, 0.0
        %v3159 = vmax.f32 %v2801, 0.0
        %v3160 = vmax.f32 %v2803, 0.0
        %v3161 = vmax.f32 %v2914, 0.0
        %v3162 = vmax.f32 %v2916, 0.0
        %v3163 = vmax.f32 %v3027, 0.0
        %v3164 = vmax.f32 %v3029, 0.0
        %v3165 = vmax.f32 %v2240, 0.0
        %v3166 = vmax.f32 %v2242, 0.0
        %v3167 = vmax.f32 %v2353, 0.0
        %v3168 = vmax.f32 %v2355, 0.0
        %v3169 = vmax.f32 %v2466, 0.0
        %v3170 = vmax.f32 %v2468, 0.0
        %v3171 = vmax.f32 %v2579, 0.0
        %v3172 = vmax.f32 %v2581, 0.0
        %v3173 = vmax.f32 %v2692, 0.0
        %v3174 = vmax.f32 %v2694, 0.0
        %v3175 = vmax.f32 %v2805, 0.0
        %v3176 = vmax.f32 %v2807, 0.0
        %v3177 = vmax.f32 %v2918, 0.0
        %v3178 = vmax.f32 %v2920, 0.0
        %v3179 = vmax.f32 %v3031, 0.0
        %v3180 = vmax.f32 %v3033, 0.0
        %v3181 = vmax.f32 %v2246, 0.0
        %v3182 = vmax.f32 %v2248, 0.0
        %v3183 = vmax.f32 %v2359, 0.0
        %v3184 = vmax.f32 %v2361, 0.0
        %v3185 = vmax.f32 %v2472, 0.0
        %v3186 = vmax.f32 %v2474, 0.0
        %v3187 = vmax.f32 %v2585, 0.0
        %v3188 = vmax.f32 %v2587, 0.0
        %v3189 = vmax.f32 %v2698, 0.0
        %v3190 = vmax.f32 %v2700, 0.0
        %v3191 = vmax.f32 %v2811, 0.0
        %v3192 = vmax.f32 %v2813, 0.0
        %v3193 = vmax.f32 %v2924, 0.0
        %v3194 = vmax.f32 %v2926, 0.0
        %v3195 = vmax.f32 %v3037, 0.0
        %v3196 = vmax.f32 %v3039, 0.0
        %v3197 = vmax.f32 %v2250, 0.0
        %v3198 = vmax.f32 %v2252, 0.0
        %v3199 = vmax.f32 %v2363, 0.0
        %v3200 = vmax.f32 %v2365, 0.0
        %v3201 = vmax.f32 %v2476, 0.0
        %v3202 = vmax.f32 %v2478, 0.0
        %v3203 = vmax.f32 %v2589, 0.0
        %v3204 = vmax.f32 %v2591, 0.0
        %v3205 = vmax.f32 %v2702, 0.0
        %v3206 = vmax.f32 %v2704, 0.0
        %v3207 = vmax.f32 %v2815, 0.0
        %v3208 = vmax.f32 %v2817, 0.0
        %v3209 = vmax.f32 %v2928, 0.0
        %v3210 = vmax.f32 %v2930, 0.0
        %v3211 = vmax.f32 %v3041, 0.0
        %v3212 = vmax.f32 %v3043, 0.0
        %v3213 = vmax.f32 %v2256, 0.0
        %v3214 = vmax.f32 %v2258, 0.0
        %v3215 = vmax.f32 %v2369, 0.0
        %v3216 = vmax.f32 %v2371, 0.0
        %v3217 = vmax.f32 %v2482, 0.0
        %v3218 = vmax.f32 %v2484, 0.0
        %v3219 = vmax.f32 %v2595, 0.0
        %v3220 = vmax.f32 %v2597, 0.0
        %v3221 = vmax.f32 %v2708, 0.0
        %v3222 = vmax.f32 %v2710, 0.0
        %v3223 = vmax.f32 %v2821, 0.0
        %v3224 = vmax.f32 %v2823, 0.0
        %v3225 = vmax.f32 %v2934, 0.0
        %v3226 = vmax.f32 %v2936, 0.0
        %v3227 = vmax.f32 %v3047, 0.0
        %v3228 = vmax.f32 %v3049, 0.0
        %v3229 = vmax.f32 %v2260, 0.0
        %v3230 = vmax.f32 %v2262, 0.0
        %v3231 = vmax.f32 %v2373, 0.0
        %v3232 = vmax.f32 %v2375, 0.0
        %v3233 = vmax.f32 %v2486, 0.0
        %v3234 = vmax.f32 %v2488, 0.0
        %v3235 = vmax.f32 %v2599, 0.0
        %v3236 = vmax.f32 %v2601, 0.0
        %v3237 = vmax.f32 %v2712, 0.0
        %v3238 = vmax.f32 %v2714, 0.0
        %v3239 = vmax.f32 %v2825, 0.0
        %v3240 = vmax.f32 %v2827, 0.0
        %v3241 = vmax.f32 %v2938, 0.0
        %v3242 = vmax.f32 %v2940, 0.0
        %v3243 = vmax.f32 %v3051, 0.0
        %v3244 = vmax.f32 %v3053, 0.0
        %v3245 = vmax.f32 %v2266, 0.0
        %v3246 = vmax.f32 %v2268, 0.0
        %v3247 = vmax.f32 %v2379, 0.0
        %v3248 = vmax.f32 %v2381, 0.0
        %v3249 = vmax.f32 %v2492, 0.0
        %v3250 = vmax.f32 %v2494, 0.0
        %v3251 = vmax.f32 %v2605, 0.0
        %v3252 = vmax.f32 %v2607, 0.0
        %v3253 = vmax.f32 %v2718, 0.0
        %v3254 = vmax.f32 %v2720, 0.0
        %v3255 = vmax.f32 %v2831, 0.0
        %v3256 = vmax.f32 %v2833, 0.0
        %v3257 = vmax.f32 %v2944, 0.0
        %v3258 = vmax.f32 %v2946, 0.0
        %v3259 = vmax.f32 %v3057, 0.0
        %v3260 = vmax.f32 %v3059, 0.0
        %v3261 = vmax.f32 %v2270, 0.0
        %v3262 = vmax.f32 %v2272, 0.0
        %v3263 = vmax.f32 %v2383, 0.0
        %v3264 = vmax.f32 %v2385, 0.0
        %v3265 = vmax.f32 %v2496, 0.0
        %v3266 = vmax.f32 %v2498, 0.0
        %v3267 = vmax.f32 %v2609, 0.0
        %v3268 = vmax.f32 %v2611, 0.0
        %v3269 = vmax.f32 %v2722, 0.0
        %v3270 = vmax.f32 %v2724, 0.0
        %v3271 = vmax.f32 %v2835, 0.0
        %v3272 = vmax.f32 %v2837, 0.0
        %v3273 = vmax.f32 %v2948, 0.0
        %v3274 = vmax.f32 %v2950, 0.0
        %v3275 = vmax.f32 %v3061, 0.0
        %v3276 = vmax.f32 %v3063, 0.0
        %v3277 = vmax.f32 %v2276, 0.0
        %v3278 = vmax.f32 %v2278, 0.0
        %v3279 = vmax.f32 %v2389, 0.0
        %v3280 = vmax.f32 %v2391, 0.0
        %v3281 = vmax.f32 %v2502, 0.0
        %v3282 = vmax.f32 %v2504, 0.0
        %v3283 = vmax.f32 %v2615, 0.0
        %v3284 = vmax.f32 %v2617, 0.0
        %v3285 = vmax.f32 %v2728, 0.0
        %v3286 = vmax.f32 %v2730, 0.0
        %v3287 = vmax.f32 %v2841, 0.0
        %v3288 = vmax.f32 %v2843, 0.0
        %v3289 = vmax.f32 %v2954, 0.0
        %v3290 = vmax.f32 %v2956, 0.0
        %v3291 = vmax.f32 %v3067, 0.0
        %v3292 = vmax.f32 %v3069, 0.0
        %v3293 = vmax.f32 %v2280, 0.0
        %v3294 = vmax.f32 %v2282, 0.0
        %v3295 = vmax.f32 %v2393, 0.0
        %v3296 = vmax.f32 %v2395, 0.0
        %v3297 = vmax.f32 %v2506, 0.0
        %v3298 = vmax.f32 %v2508, 0.0
        %v3299 = vmax.f32 %v2619, 0.0
        %v3300 = vmax.f32 %v2621, 0.0
        %v3301 = vmax.f32 %v2732, 0.0
        %v3302 = vmax.f32 %v2734, 0.0
        %v3303 = vmax.f32 %v2845, 0.0
        %v3304 = vmax.f32 %v2847, 0.0
        %v3305 = vmax.f32 %v2958, 0.0
        %v3306 = vmax.f32 %v2960, 0.0
        %v3307 = vmax.f32 %v3071, 0.0
        %v3308 = vmax.f32 %v3073, 0.0
        %v3309 = vmax.f32 %v2286, 0.0
        %v3310 = vmax.f32 %v2288, 0.0
        %v3311 = vmax.f32 %v2399, 0.0
        %v3312 = vmax.f32 %v2401, 0.0
        %v3313 = vmax.f32 %v2512, 0.0
        %v3314 = vmax.f32 %v2514, 0.0
        %v3315 = vmax.f32 %v2625, 0.0
        %v3316 = vmax.f32 %v2627, 0.0
        %v3317 = vmax.f32 %v2738, 0.0
        %v3318 = vmax.f32 %v2740, 0.0
        %v3319 = vmax.f32 %v2851, 0.0
        %v3320 = vmax.f32 %v2853, 0.0
        %v3321 = vmax.f32 %v2964, 0.0
        %v3322 = vmax.f32 %v2966, 0.0
        %v3323 = vmax.f32 %v3077, 0.0
        %v3324 = vmax.f32 %v3079, 0.0
        %v3325 = vmax.f32 %v2290, 0.0
        %v3326 = vmax.f32 %v2292, 0.0
        %v3327 = vmax.f32 %v2403, 0.0
        %v3328 = vmax.f32 %v2405, 0.0
        %v3329 = vmax.f32 %v2516, 0.0
        %v3330 = vmax.f32 %v2518, 0.0
        %v3331 = vmax.f32 %v2629, 0.0
        %v3332 = vmax.f32 %v2631, 0.0
        %v3333 = vmax.f32 %v2742, 0.0
        %v3334 = vmax.f32 %v2744, 0.0
        %v3335 = vmax.f32 %v2855, 0.0
        %v3336 = vmax.f32 %v2857, 0.0
        %v3337 = vmax.f32 %v2968, 0.0
        %v3338 = vmax.f32 %v2970, 0.0
        %v3339 = vmax.f32 %v3081, 0.0
        %v3340 = vmax.f32 %v3083, 0.0
        %v3341 = vpack.c.bf16 %v3101, %v3085
        %v3342 = vpack.c.bf16 %v3102, %v3086
        %v3343 = vpack.c.bf16 %v3103, %v3087
        %v3344 = vpack.c.bf16 %v3104, %v3088
        %v3345 = vpack.c.bf16 %v3105, %v3089
        %v3346 = vpack.c.bf16 %v3106, %v3090
        %v3347 = vpack.c.bf16 %v3107, %v3091
        %v3348 = vpack.c.bf16 %v3108, %v3092
        %v3349 = vpack.c.bf16 %v3109, %v3093
        %v3350 = vpack.c.bf16 %v3110, %v3094
        %v3351 = vpack.c.bf16 %v3111, %v3095
        %v3352 = vpack.c.bf16 %v3112, %v3096
        %v3353 = vpack.c.bf16 %v3113, %v3097
        %v3354 = vpack.c.bf16 %v3114, %v3098
        %v3355 = vpack.c.bf16 %v3115, %v3099
        %v3356 = vpack.c.bf16 %v3116, %v3100
        %v3357 = vpack.c.bf16 %v3133, %v3117
        %v3358 = vpack.c.bf16 %v3134, %v3118
        %v3359 = vpack.c.bf16 %v3135, %v3119
        %v3360 = vpack.c.bf16 %v3136, %v3120
        %v3361 = vpack.c.bf16 %v3137, %v3121
        %v3362 = vpack.c.bf16 %v3138, %v3122
        %v3363 = vpack.c.bf16 %v3139, %v3123
        %v3364 = vpack.c.bf16 %v3140, %v3124
        %v3365 = vpack.c.bf16 %v3141, %v3125
        %v3366 = vpack.c.bf16 %v3142, %v3126
        %v3367 = vpack.c.bf16 %v3143, %v3127
        %v3368 = vpack.c.bf16 %v3144, %v3128
        %v3369 = vpack.c.bf16 %v3145, %v3129
        %v3370 = vpack.c.bf16 %v3146, %v3130
        %v3371 = vpack.c.bf16 %v3147, %v3131
        %v3372 = vpack.c.bf16 %v3148, %v3132
        %v3373 = vpack.c.bf16 %v3165, %v3149
        %v3374 = vpack.c.bf16 %v3166, %v3150
        %v3375 = vpack.c.bf16 %v3167, %v3151
        %v3376 = vpack.c.bf16 %v3168, %v3152
        %v3377 = vpack.c.bf16 %v3169, %v3153
        %v3378 = vpack.c.bf16 %v3170, %v3154
        %v3379 = vpack.c.bf16 %v3171, %v3155
        %v3380 = vpack.c.bf16 %v3172, %v3156
        %v3381 = vpack.c.bf16 %v3173, %v3157
        %v3382 = vpack.c.bf16 %v3174, %v3158
        %v3383 = vpack.c.bf16 %v3175, %v3159
        %v3384 = vpack.c.bf16 %v3176, %v3160
        %v3385 = vpack.c.bf16 %v3177, %v3161
        %v3386 = vpack.c.bf16 %v3178, %v3162
        %v3387 = vpack.c.bf16 %v3179, %v3163
        %v3388 = vpack.c.bf16 %v3180, %v3164
        %v3389 = vpack.c.bf16 %v3197, %v3181
        %v3390 = vpack.c.bf16 %v3198, %v3182
        %v3391 = vpack.c.bf16 %v3199, %v3183
        %v3392 = vpack.c.bf16 %v3200, %v3184
        %v3393 = vpack.c.bf16 %v3201, %v3185
        %v3394 = vpack.c.bf16 %v3202, %v3186
        %v3395 = vpack.c.bf16 %v3203, %v3187
        %v3396 = vpack.c.bf16 %v3204, %v3188
        %v3397 = vpack.c.bf16 %v3205, %v3189
        %v3398 = vpack.c.bf16 %v3206, %v3190
        %v3399 = vpack.c.bf16 %v3207, %v3191
        %v3400 = vpack.c.bf16 %v3208, %v3192
        %v3401 = vpack.c.bf16 %v3209, %v3193
        %v3402 = vpack.c.bf16 %v3210, %v3194
        %v3403 = vpack.c.bf16 %v3211, %v3195
        %v3404 = vpack.c.bf16 %v3212, %v3196
        %v3405 = vpack.c.bf16 %v3229, %v3213
        %v3406 = vpack.c.bf16 %v3230, %v3214
        %v3407 = vpack.c.bf16 %v3231, %v3215
        %v3408 = vpack.c.bf16 %v3232, %v3216
        %v3409 = vpack.c.bf16 %v3233, %v3217
        %v3410 = vpack.c.bf16 %v3234, %v3218
        %v3411 = vpack.c.bf16 %v3235, %v3219
        %v3412 = vpack.c.bf16 %v3236, %v3220
        %v3413 = vpack.c.bf16 %v3237, %v3221
        %v3414 = vpack.c.bf16 %v3238, %v3222
        %v3415 = vpack.c.bf16 %v3239, %v3223
        %v3416 = vpack.c.bf16 %v3240, %v3224
        %v3417 = vpack.c.bf16 %v3241, %v3225
        %v3418 = vpack.c.bf16 %v3242, %v3226
        %v3419 = vpack.c.bf16 %v3243, %v3227
        %v3420 = vpack.c.bf16 %v3244, %v3228
        %v3421 = vpack.c.bf16 %v3261, %v3245
        %v3422 = vpack.c.bf16 %v3262, %v3246
        %v3423 = vpack.c.bf16 %v3263, %v3247
        %v3424 = vpack.c.bf16 %v3264, %v3248
        %v3425 = vpack.c.bf16 %v3265, %v3249
        %v3426 = vpack.c.bf16 %v3266, %v3250
        %v3427 = vpack.c.bf16 %v3267, %v3251
        %v3428 = vpack.c.bf16 %v3268, %v3252
        %v3429 = vpack.c.bf16 %v3269, %v3253
        %v3430 = vpack.c.bf16 %v3270, %v3254
        %v3431 = vpack.c.bf16 %v3271, %v3255
        %v3432 = vpack.c.bf16 %v3272, %v3256
        %v3433 = vpack.c.bf16 %v3273, %v3257
        %v3434 = vpack.c.bf16 %v3274, %v3258
        %v3435 = vpack.c.bf16 %v3275, %v3259
        %v3436 = vpack.c.bf16 %v3276, %v3260
        %v3437 = vpack.c.bf16 %v3293, %v3277
        %v3438 = vpack.c.bf16 %v3294, %v3278
        %v3439 = vpack.c.bf16 %v3295, %v3279
        %v3440 = vpack.c.bf16 %v3296, %v3280
        %v3441 = vpack.c.bf16 %v3297, %v3281
        %v3442 = vpack.c.bf16 %v3298, %v3282
        %v3443 = vpack.c.bf16 %v3299, %v3283
        %v3444 = vpack.c.bf16 %v3300, %v3284
        %v3445 = vpack.c.bf16 %v3301, %v3285
        %v3446 = vpack.c.bf16 %v3302, %v3286
        %v3447 = vpack.c.bf16 %v3303, %v3287
        %v3448 = vpack.c.bf16 %v3304, %v3288
        %v3449 = vpack.c.bf16 %v3305, %v3289
        %v3450 = vpack.c.bf16 %v3306, %v3290
        %v3451 = vpack.c.bf16 %v3307, %v3291
        %v3452 = vpack.c.bf16 %v3308, %v3292
        %v3453 = vpack.c.bf16 %v3325, %v3309
        %v3454 = vpack.c.bf16 %v3326, %v3310
        %v3455 = vpack.c.bf16 %v3327, %v3311
        %v3456 = vpack.c.bf16 %v3328, %v3312
        %v3457 = vpack.c.bf16 %v3329, %v3313
        %v3458 = vpack.c.bf16 %v3330, %v3314
        %v3459 = vpack.c.bf16 %v3331, %v3315
        %v3460 = vpack.c.bf16 %v3332, %v3316
        %v3461 = vpack.c.bf16 %v3333, %v3317
        %v3462 = vpack.c.bf16 %v3334, %v3318
        %v3463 = vpack.c.bf16 %v3335, %v3319
        %v3464 = vpack.c.bf16 %v3336, %v3320
        %v3465 = vpack.c.bf16 %v3337, %v3321
        %v3466 = vpack.c.bf16 %v3338, %v3322
        %v3467 = vpack.c.bf16 %v3339, %v3323
        %v3468 = vpack.c.bf16 %v3340, %v3324
        %v3469 = vld [vmem:[#allocation14] sm:$0xf]
        %v3470 = vld [vmem:[#allocation14 + $0x4] sm:$0xf]
        %v3471 = vld [vmem:[#allocation14 + $0x8] sm:$0xf]
        %v3472 = vld [vmem:[#allocation14 + $0xc] sm:$0xf]
        %v3473 = vld [vmem:[#allocation14 + $0x10] sm:$0xf]
        %v3474 = vld [vmem:[#allocation14 + $0x14] sm:$0xf]
        %v3475 = vld [vmem:[#allocation14 + $0x18] sm:$0xf]
        %v3476 = vld [vmem:[#allocation14 + $0x1c] sm:$0xf]
        %v3477 = vld [vmem:[#allocation14 + $0x20] sm:$0xf]
        %v3478 = vld [vmem:[#allocation14 + $0x24] sm:$0xf]
        %v3479 = vld [vmem:[#allocation14 + $0x28] sm:$0xf]
        %v3480 = vld [vmem:[#allocation14 + $0x2c] sm:$0xf]
        %v3481 = vld [vmem:[#allocation14 + $0x30] sm:$0xf]
        %v3482 = vld [vmem:[#allocation14 + $0x34] sm:$0xf]
        %v3483 = vld [vmem:[#allocation14 + $0x38] sm:$0xf]
        %v3484 = vld [vmem:[#allocation14 + $0x3c] sm:$0xf]
        %v3485 = vld [vmem:[#allocation14 + $0x40] sm:$0xf]
        %v3486 = vld [vmem:[#allocation14 + $0x44] sm:$0xf]
        %v3487 = vld [vmem:[#allocation14 + $0x48] sm:$0xf]
        %v3488 = vld [vmem:[#allocation14 + $0x4c] sm:$0xf]
        %v3489 = vld [vmem:[#allocation14 + $0x50] sm:$0xf]
        %v3490 = vld [vmem:[#allocation14 + $0x54] sm:$0xf]
        %v3491 = vld [vmem:[#allocation14 + $0x58] sm:$0xf]
        %v3492 = vld [vmem:[#allocation14 + $0x5c] sm:$0xf]
        %v3493 = vld [vmem:[#allocation14 + $0x60] sm:$0xf]
        %v3494 = vld [vmem:[#allocation14 + $0x64] sm:$0xf]
        %v3495 = vld [vmem:[#allocation14 + $0x68] sm:$0xf]
        %v3496 = vld [vmem:[#allocation14 + $0x6c] sm:$0xf]
        %v3497 = vld [vmem:[#allocation14 + $0x70] sm:$0xf]
        %v3498 = vld [vmem:[#allocation14 + $0x74] sm:$0xf]
        %v3499 = vld [vmem:[#allocation14 + $0x78] sm:$0xf]
        %v3500 = vld [vmem:[#allocation14 + $0x7c] sm:$0xf]
        %v3501 = vld [vmem:[#allocation14 + $0x80] sm:$0xf]
        %v3502 = vld [vmem:[#allocation14 + $0x84] sm:$0xf]
        %v3503 = vld [vmem:[#allocation14 + $0x88] sm:$0xf]
        %v3504 = vld [vmem:[#allocation14 + $0x8c] sm:$0xf]
        %v3505 = vld [vmem:[#allocation14 + $0x90] sm:$0xf]
        %v3506 = vld [vmem:[#allocation14 + $0x94] sm:$0xf]
        %v3507 = vld [vmem:[#allocation14 + $0x98] sm:$0xf]
        %v3508 = vld [vmem:[#allocation14 + $0x9c] sm:$0xf]
        %v3509 = vld [vmem:[#allocation14 + $0xa0] sm:$0xf]
        %v3510 = vld [vmem:[#allocation14 + $0xa4] sm:$0xf]
        %v3511 = vld [vmem:[#allocation14 + $0xa8] sm:$0xf]
        %v3512 = vld [vmem:[#allocation14 + $0xac] sm:$0xf]
        %v3513 = vld [vmem:[#allocation14 + $0xb0] sm:$0xf]
        %v3514 = vld [vmem:[#allocation14 + $0xb4] sm:$0xf]
        %v3515 = vld [vmem:[#allocation14 + $0xb8] sm:$0xf]
        %v3516 = vld [vmem:[#allocation14 + $0xbc] sm:$0xf]
        %v3517 = vld [vmem:[#allocation14 + $0xc0] sm:$0xf]
        %v3518 = vld [vmem:[#allocation14 + $0xc4] sm:$0xf]
        %v3519 = vld [vmem:[#allocation14 + $0xc8] sm:$0xf]
        %v3520 = vld [vmem:[#allocation14 + $0xcc] sm:$0xf]
        %v3521 = vld [vmem:[#allocation14 + $0xd0] sm:$0xf]
        %v3522 = vld [vmem:[#allocation14 + $0xd4] sm:$0xf]
        %v3523 = vld [vmem:[#allocation14 + $0xd8] sm:$0xf]
        %v3524 = vld [vmem:[#allocation14 + $0xdc] sm:$0xf]
        %v3525 = vld [vmem:[#allocation14 + $0xe0] sm:$0xf]
        %v3526 = vld [vmem:[#allocation14 + $0xe4] sm:$0xf]
        %v3527 = vld [vmem:[#allocation14 + $0xe8] sm:$0xf]
        %v3528 = vld [vmem:[#allocation14 + $0xec] sm:$0xf]
        %v3529 = vld [vmem:[#allocation14 + $0xf0] sm:$0xf]
        %v3530 = vld [vmem:[#allocation14 + $0xf4] sm:$0xf]
        %v3531 = vld [vmem:[#allocation14 + $0xf8] sm:$0xf]
        %v3532 = vld [vmem:[#allocation14 + $0xfc] sm:$0xf]
        %v3533 = vld [vmem:[#allocation14 + $0x100] sm:$0xf]
        %v3534 = vld [vmem:[#allocation14 + $0x104] sm:$0xf]
        %v3535 = vld [vmem:[#allocation14 + $0x108] sm:$0xf]
        %v3536 = vld [vmem:[#allocation14 + $0x10c] sm:$0xf]
        %v3537 = vld [vmem:[#allocation14 + $0x110] sm:$0xf]
        %v3538 = vld [vmem:[#allocation14 + $0x114] sm:$0xf]
        %v3539 = vld [vmem:[#allocation14 + $0x118] sm:$0xf]
        %v3540 = vld [vmem:[#allocation14 + $0x11c] sm:$0xf]
        %v3541 = vld [vmem:[#allocation14 + $0x120] sm:$0xf]
        %v3542 = vld [vmem:[#allocation14 + $0x124] sm:$0xf]
        %v3543 = vld [vmem:[#allocation14 + $0x128] sm:$0xf]
        %v3544 = vld [vmem:[#allocation14 + $0x12c] sm:$0xf]
        %v3545 = vld [vmem:[#allocation14 + $0x130] sm:$0xf]
        %v3546 = vld [vmem:[#allocation14 + $0x134] sm:$0xf]
        %v3547 = vld [vmem:[#allocation14 + $0x138] sm:$0xf]
        %v3548 = vld [vmem:[#allocation14 + $0x13c] sm:$0xf]
        %v3549 = vld [vmem:[#allocation14 + $0x140] sm:$0xf]
        %v3550 = vld [vmem:[#allocation14 + $0x144] sm:$0xf]
        %v3551 = vld [vmem:[#allocation14 + $0x148] sm:$0xf]
        %v3552 = vld [vmem:[#allocation14 + $0x14c] sm:$0xf]
        %v3553 = vld [vmem:[#allocation14 + $0x150] sm:$0xf]
        %v3554 = vld [vmem:[#allocation14 + $0x154] sm:$0xf]
        %v3555 = vld [vmem:[#allocation14 + $0x158] sm:$0xf]
        %v3556 = vld [vmem:[#allocation14 + $0x15c] sm:$0xf]
        %v3557 = vld [vmem:[#allocation14 + $0x160] sm:$0xf]
        %v3558 = vld [vmem:[#allocation14 + $0x164] sm:$0xf]
        %v3559 = vld [vmem:[#allocation14 + $0x168] sm:$0xf]
        %v3560 = vld [vmem:[#allocation14 + $0x16c] sm:$0xf]
        %v3561 = vld [vmem:[#allocation14 + $0x170] sm:$0xf]
        %v3562 = vld [vmem:[#allocation14 + $0x174] sm:$0xf]
        %v3563 = vld [vmem:[#allocation14 + $0x178] sm:$0xf]
        %v3564 = vld [vmem:[#allocation14 + $0x17c] sm:$0xf]
        %v3565 = vld [vmem:[#allocation14 + $0x180] sm:$0xf]
        %v3566 = vld [vmem:[#allocation14 + $0x184] sm:$0xf]
        %v3567 = vld [vmem:[#allocation14 + $0x188] sm:$0xf]
        %v3568 = vld [vmem:[#allocation14 + $0x18c] sm:$0xf]
        %v3569 = vld [vmem:[#allocation14 + $0x190] sm:$0xf]
        %v3570 = vld [vmem:[#allocation14 + $0x194] sm:$0xf]
        %v3571 = vld [vmem:[#allocation14 + $0x198] sm:$0xf]
        %v3572 = vld [vmem:[#allocation14 + $0x19c] sm:$0xf]
        %v3573 = vld [vmem:[#allocation14 + $0x1a0] sm:$0xf]
        %v3574 = vld [vmem:[#allocation14 + $0x1a4] sm:$0xf]
        %v3575 = vld [vmem:[#allocation14 + $0x1a8] sm:$0xf]
        %v3576 = vld [vmem:[#allocation14 + $0x1ac] sm:$0xf]
        %v3577 = vld [vmem:[#allocation14 + $0x1b0] sm:$0xf]
        %v3578 = vld [vmem:[#allocation14 + $0x1b4] sm:$0xf]
        %v3579 = vld [vmem:[#allocation14 + $0x1b8] sm:$0xf]
        %v3580 = vld [vmem:[#allocation14 + $0x1bc] sm:$0xf]
        %v3581 = vld [vmem:[#allocation14 + $0x1c0] sm:$0xf]
        %v3582 = vld [vmem:[#allocation14 + $0x1c4] sm:$0xf]
        %v3583 = vld [vmem:[#allocation14 + $0x1c8] sm:$0xf]
        %v3584 = vld [vmem:[#allocation14 + $0x1cc] sm:$0xf]
        %v3585 = vld [vmem:[#allocation14 + $0x1d0] sm:$0xf]
        %v3586 = vld [vmem:[#allocation14 + $0x1d4] sm:$0xf]
        %v3587 = vld [vmem:[#allocation14 + $0x1d8] sm:$0xf]
        %v3588 = vld [vmem:[#allocation14 + $0x1dc] sm:$0xf]
        %v3589 = vld [vmem:[#allocation14 + $0x1e0] sm:$0xf]
        %v3590 = vld [vmem:[#allocation14 + $0x1e4] sm:$0xf]
        %v3591 = vld [vmem:[#allocation14 + $0x1e8] sm:$0xf]
        %v3592 = vld [vmem:[#allocation14 + $0x1ec] sm:$0xf]
        %v3593 = vld [vmem:[#allocation14 + $0x1f0] sm:$0xf]
        %v3594 = vld [vmem:[#allocation14 + $0x1f4] sm:$0xf]
        %v3595 = vld [vmem:[#allocation14 + $0x1f8] sm:$0xf]
        %v3596 = vld [vmem:[#allocation14 + $0x1fc] sm:$0xf]
        %v3597 = vld [vmem:[#allocation14 + $0x200] sm:$0xf]
        %v3598 = vld [vmem:[#allocation14 + $0x204] sm:$0xf]
        %v3599 = vld [vmem:[#allocation14 + $0x208] sm:$0xf]
        %v3600 = vld [vmem:[#allocation14 + $0x20c] sm:$0xf]
        %v3601 = vld [vmem:[#allocation14 + $0x210] sm:$0xf]
        %v3602 = vld [vmem:[#allocation14 + $0x214] sm:$0xf]
        %v3603 = vld [vmem:[#allocation14 + $0x218] sm:$0xf]
        %v3604 = vld [vmem:[#allocation14 + $0x21c] sm:$0xf]
        %v3605 = vld [vmem:[#allocation14 + $0x220] sm:$0xf]
        %v3606 = vld [vmem:[#allocation14 + $0x224] sm:$0xf]
        %v3607 = vld [vmem:[#allocation14 + $0x228] sm:$0xf]
        %v3608 = vld [vmem:[#allocation14 + $0x22c] sm:$0xf]
        %v3609 = vld [vmem:[#allocation14 + $0x230] sm:$0xf]
        %v3610 = vld [vmem:[#allocation14 + $0x234] sm:$0xf]
        %v3611 = vld [vmem:[#allocation14 + $0x238] sm:$0xf]
        %v3612 = vld [vmem:[#allocation14 + $0x23c] sm:$0xf]
        %v3613 = vld [vmem:[#allocation14 + $0x240] sm:$0xf]
        %v3614 = vld [vmem:[#allocation14 + $0x244] sm:$0xf]
        %v3615 = vld [vmem:[#allocation14 + $0x248] sm:$0xf]
        %v3616 = vld [vmem:[#allocation14 + $0x24c] sm:$0xf]
        %v3617 = vld [vmem:[#allocation14 + $0x250] sm:$0xf]
        %v3618 = vld [vmem:[#allocation14 + $0x254] sm:$0xf]
        %v3619 = vld [vmem:[#allocation14 + $0x258] sm:$0xf]
        %v3620 = vld [vmem:[#allocation14 + $0x25c] sm:$0xf]
        %v3621 = vld [vmem:[#allocation14 + $0x260] sm:$0xf]
        %v3622 = vld [vmem:[#allocation14 + $0x264] sm:$0xf]
        %v3623 = vld [vmem:[#allocation14 + $0x268] sm:$0xf]
        %v3624 = vld [vmem:[#allocation14 + $0x26c] sm:$0xf]
        %v3625 = vld [vmem:[#allocation14 + $0x270] sm:$0xf]
        %v3626 = vld [vmem:[#allocation14 + $0x274] sm:$0xf]
        %v3627 = vld [vmem:[#allocation14 + $0x278] sm:$0xf]
        %v3628 = vld [vmem:[#allocation14 + $0x27c] sm:$0xf]
        %v3629 = vld [vmem:[#allocation14 + $0x280] sm:$0xf]
        %v3630 = vld [vmem:[#allocation14 + $0x284] sm:$0xf]
        %v3631 = vld [vmem:[#allocation14 + $0x288] sm:$0xf]
        %v3632 = vld [vmem:[#allocation14 + $0x28c] sm:$0xf]
        %v3633 = vld [vmem:[#allocation14 + $0x290] sm:$0xf]
        %v3634 = vld [vmem:[#allocation14 + $0x294] sm:$0xf]
        %v3635 = vld [vmem:[#allocation14 + $0x298] sm:$0xf]
        %v3636 = vld [vmem:[#allocation14 + $0x29c] sm:$0xf]
        %v3637 = vld [vmem:[#allocation14 + $0x2a0] sm:$0xf]
        %v3638 = vld [vmem:[#allocation14 + $0x2a4] sm:$0xf]
        %v3639 = vld [vmem:[#allocation14 + $0x2a8] sm:$0xf]
        %v3640 = vld [vmem:[#allocation14 + $0x2ac] sm:$0xf]
        %v3641 = vld [vmem:[#allocation14 + $0x2b0] sm:$0xf]
        %v3642 = vld [vmem:[#allocation14 + $0x2b4] sm:$0xf]
        %v3643 = vld [vmem:[#allocation14 + $0x2b8] sm:$0xf]
        %v3644 = vld [vmem:[#allocation14 + $0x2bc] sm:$0xf]
        %v3645 = vld [vmem:[#allocation14 + $0x2c0] sm:$0xf]
        %v3646 = vld [vmem:[#allocation14 + $0x2c4] sm:$0xf]
        %v3647 = vld [vmem:[#allocation14 + $0x2c8] sm:$0xf]
        %v3648 = vld [vmem:[#allocation14 + $0x2cc] sm:$0xf]
        %v3649 = vld [vmem:[#allocation14 + $0x2d0] sm:$0xf]
        %v3650 = vld [vmem:[#allocation14 + $0x2d4] sm:$0xf]
        %v3651 = vld [vmem:[#allocation14 + $0x2d8] sm:$0xf]
        %v3652 = vld [vmem:[#allocation14 + $0x2dc] sm:$0xf]
        %v3653 = vld [vmem:[#allocation14 + $0x2e0] sm:$0xf]
        %v3654 = vld [vmem:[#allocation14 + $0x2e4] sm:$0xf]
        %v3655 = vld [vmem:[#allocation14 + $0x2e8] sm:$0xf]
        %v3656 = vld [vmem:[#allocation14 + $0x2ec] sm:$0xf]
        %v3657 = vld [vmem:[#allocation14 + $0x2f0] sm:$0xf]
        %v3658 = vld [vmem:[#allocation14 + $0x2f4] sm:$0xf]
        %v3659 = vld [vmem:[#allocation14 + $0x2f8] sm:$0xf]
        %v3660 = vld [vmem:[#allocation14 + $0x2fc] sm:$0xf]
        %v3661 = vld [vmem:[#allocation14 + $0x300] sm:$0xf]
        %v3662 = vld [vmem:[#allocation14 + $0x304] sm:$0xf]
        %v3663 = vld [vmem:[#allocation14 + $0x308] sm:$0xf]
        %v3664 = vld [vmem:[#allocation14 + $0x30c] sm:$0xf]
        %v3665 = vld [vmem:[#allocation14 + $0x310] sm:$0xf]
        %v3666 = vld [vmem:[#allocation14 + $0x314] sm:$0xf]
        %v3667 = vld [vmem:[#allocation14 + $0x318] sm:$0xf]
        %v3668 = vld [vmem:[#allocation14 + $0x31c] sm:$0xf]
        %v3669 = vld [vmem:[#allocation14 + $0x320] sm:$0xf]
        %v3670 = vld [vmem:[#allocation14 + $0x324] sm:$0xf]
        %v3671 = vld [vmem:[#allocation14 + $0x328] sm:$0xf]
        %v3672 = vld [vmem:[#allocation14 + $0x32c] sm:$0xf]
        %v3673 = vld [vmem:[#allocation14 + $0x330] sm:$0xf]
        %v3674 = vld [vmem:[#allocation14 + $0x334] sm:$0xf]
        %v3675 = vld [vmem:[#allocation14 + $0x338] sm:$0xf]
        %v3676 = vld [vmem:[#allocation14 + $0x33c] sm:$0xf]
        %v3677 = vld [vmem:[#allocation14 + $0x340] sm:$0xf]
        %v3678 = vld [vmem:[#allocation14 + $0x344] sm:$0xf]
        %v3679 = vld [vmem:[#allocation14 + $0x348] sm:$0xf]
        %v3680 = vld [vmem:[#allocation14 + $0x34c] sm:$0xf]
        %v3681 = vld [vmem:[#allocation14 + $0x350] sm:$0xf]
        %v3682 = vld [vmem:[#allocation14 + $0x354] sm:$0xf]
        %v3683 = vld [vmem:[#allocation14 + $0x358] sm:$0xf]
        %v3684 = vld [vmem:[#allocation14 + $0x35c] sm:$0xf]
        %v3685 = vld [vmem:[#allocation14 + $0x360] sm:$0xf]
        %v3686 = vld [vmem:[#allocation14 + $0x364] sm:$0xf]
        %v3687 = vld [vmem:[#allocation14 + $0x368] sm:$0xf]
        %v3688 = vld [vmem:[#allocation14 + $0x36c] sm:$0xf]
        %v3689 = vld [vmem:[#allocation14 + $0x370] sm:$0xf]
        %v3690 = vld [vmem:[#allocation14 + $0x374] sm:$0xf]
        %v3691 = vld [vmem:[#allocation14 + $0x378] sm:$0xf]
        %v3692 = vld [vmem:[#allocation14 + $0x37c] sm:$0xf]
        %v3693 = vld [vmem:[#allocation14 + $0x380] sm:$0xf]
        %v3694 = vld [vmem:[#allocation14 + $0x384] sm:$0xf]
        %v3695 = vld [vmem:[#allocation14 + $0x388] sm:$0xf]
        %v3696 = vld [vmem:[#allocation14 + $0x38c] sm:$0xf]
        %v3697 = vld [vmem:[#allocation14 + $0x390] sm:$0xf]
        %v3698 = vld [vmem:[#allocation14 + $0x394] sm:$0xf]
        %v3699 = vld [vmem:[#allocation14 + $0x398] sm:$0xf]
        %v3700 = vld [vmem:[#allocation14 + $0x39c] sm:$0xf]
        %v3701 = vld [vmem:[#allocation14 + $0x3a0] sm:$0xf]
        %v3702 = vld [vmem:[#allocation14 + $0x3a4] sm:$0xf]
        %v3703 = vld [vmem:[#allocation14 + $0x3a8] sm:$0xf]
        %v3704 = vld [vmem:[#allocation14 + $0x3ac] sm:$0xf]
        %v3705 = vld [vmem:[#allocation14 + $0x3b0] sm:$0xf]
        %v3706 = vld [vmem:[#allocation14 + $0x3b4] sm:$0xf]
        %v3707 = vld [vmem:[#allocation14 + $0x3b8] sm:$0xf]
        %v3708 = vld [vmem:[#allocation14 + $0x3bc] sm:$0xf]
        %v3709 = vld [vmem:[#allocation14 + $0x3c0] sm:$0xf]
        %v3710 = vld [vmem:[#allocation14 + $0x3c4] sm:$0xf]
        %v3711 = vld [vmem:[#allocation14 + $0x3c8] sm:$0xf]
        %v3712 = vld [vmem:[#allocation14 + $0x3cc] sm:$0xf]
        %v3713 = vld [vmem:[#allocation14 + $0x3d0] sm:$0xf]
        %v3714 = vld [vmem:[#allocation14 + $0x3d4] sm:$0xf]
        %v3715 = vld [vmem:[#allocation14 + $0x3d8] sm:$0xf]
        %v3716 = vld [vmem:[#allocation14 + $0x3dc] sm:$0xf]
        %v3717 = vld [vmem:[#allocation14 + $0x3e0] sm:$0xf]
        %v3718 = vld [vmem:[#allocation14 + $0x3e4] sm:$0xf]
        %v3719 = vld [vmem:[#allocation14 + $0x3e8] sm:$0xf]
        %v3720 = vld [vmem:[#allocation14 + $0x3ec] sm:$0xf]
        %v3721 = vld [vmem:[#allocation14 + $0x3f0] sm:$0xf]
        %v3722 = vld [vmem:[#allocation14 + $0x3f4] sm:$0xf]
        %v3723 = vld [vmem:[#allocation14 + $0x3f8] sm:$0xf]
        %v3724 = vld [vmem:[#allocation14 + $0x3fc] sm:$0xf]
        %v3725 = vld [vmem:[%s10] sm:$0x1]
        %v3727 = vlaneseq
        %v3728 = vshrl.u32 %v3727, 7
        %v3729 = vsub.s32 0, %v3728
        %v3730 = vrot.slane %v3725, %v3729
        %v3988 = vunpack.c.l.b16 %v3469
        %v3989 = vunpack.c.l.b16 %v3470
        %v3990 = vunpack.c.l.b16 %v3471
        %v3991 = vunpack.c.l.b16 %v3472
        %v3992 = vunpack.c.l.b16 %v3473
        %v3993 = vunpack.c.l.b16 %v3474
        %v3994 = vunpack.c.l.b16 %v3475
        %v3995 = vunpack.c.l.b16 %v3476
        %v3996 = vunpack.c.l.b16 %v3477
        %v3997 = vunpack.c.l.b16 %v3478
        %v3998 = vunpack.c.l.b16 %v3479
        %v3999 = vunpack.c.l.b16 %v3480
        %v4000 = vunpack.c.l.b16 %v3481
        %v4001 = vunpack.c.l.b16 %v3482
        %v4002 = vunpack.c.l.b16 %v3483
        %v4003 = vunpack.c.l.b16 %v3484
        %v4004 = vunpack.c.l.b16 %v3485
        %v4005 = vunpack.c.l.b16 %v3486
        %v4006 = vunpack.c.l.b16 %v3487
        %v4007 = vunpack.c.l.b16 %v3488
        %v4008 = vunpack.c.l.b16 %v3489
        %v4009 = vunpack.c.l.b16 %v3490
        %v4010 = vunpack.c.l.b16 %v3491
        %v4011 = vunpack.c.l.b16 %v3492
        %v4012 = vunpack.c.l.b16 %v3493
        %v4013 = vunpack.c.l.b16 %v3494
        %v4014 = vunpack.c.l.b16 %v3495
        %v4015 = vunpack.c.l.b16 %v3496
        %v4016 = vunpack.c.l.b16 %v3497
        %v4017 = vunpack.c.l.b16 %v3498
        %v4018 = vunpack.c.l.b16 %v3499
        %v4019 = vunpack.c.l.b16 %v3500
        %v4020 = vunpack.c.l.b16 %v3501
        %v4021 = vunpack.c.l.b16 %v3502
        %v4022 = vunpack.c.l.b16 %v3503
        %v4023 = vunpack.c.l.b16 %v3504
        %v4024 = vunpack.c.l.b16 %v3505
        %v4025 = vunpack.c.l.b16 %v3506
        %v4026 = vunpack.c.l.b16 %v3507
        %v4027 = vunpack.c.l.b16 %v3508
        %v4028 = vunpack.c.l.b16 %v3509
        %v4029 = vunpack.c.l.b16 %v3510
        %v4030 = vunpack.c.l.b16 %v3511
        %v4031 = vunpack.c.l.b16 %v3512
        %v4032 = vunpack.c.l.b16 %v3513
        %v4033 = vunpack.c.l.b16 %v3514
        %v4034 = vunpack.c.l.b16 %v3515
        %v4035 = vunpack.c.l.b16 %v3516
        %v4036 = vunpack.c.l.b16 %v3517
        %v4037 = vunpack.c.l.b16 %v3518
        %v4038 = vunpack.c.l.b16 %v3519
        %v4039 = vunpack.c.l.b16 %v3520
        %v4040 = vunpack.c.l.b16 %v3521
        %v4041 = vunpack.c.l.b16 %v3522
        %v4042 = vunpack.c.l.b16 %v3523
        %v4043 = vunpack.c.l.b16 %v3524
        %v4044 = vunpack.c.l.b16 %v3525
        %v4045 = vunpack.c.l.b16 %v3526
        %v4046 = vunpack.c.l.b16 %v3527
        %v4047 = vunpack.c.l.b16 %v3528
        %v4048 = vunpack.c.l.b16 %v3529
        %v4049 = vunpack.c.l.b16 %v3530
        %v4050 = vunpack.c.l.b16 %v3531
        %v4051 = vunpack.c.l.b16 %v3532
        %v4052 = vunpack.c.l.b16 %v3533
        %v4053 = vunpack.c.l.b16 %v3534
        %v4054 = vunpack.c.l.b16 %v3535
        %v4055 = vunpack.c.l.b16 %v3536
        %v4056 = vunpack.c.l.b16 %v3537
        %v4057 = vunpack.c.l.b16 %v3538
        %v4058 = vunpack.c.l.b16 %v3539
        %v4059 = vunpack.c.l.b16 %v3540
        %v4060 = vunpack.c.l.b16 %v3541
        %v4061 = vunpack.c.l.b16 %v3542
        %v4062 = vunpack.c.l.b16 %v3543
        %v4063 = vunpack.c.l.b16 %v3544
        %v4064 = vunpack.c.l.b16 %v3545
        %v4065 = vunpack.c.l.b16 %v3546
        %v4066 = vunpack.c.l.b16 %v3547
        %v4067 = vunpack.c.l.b16 %v3548
        %v4068 = vunpack.c.l.b16 %v3549
        %v4069 = vunpack.c.l.b16 %v3550
        %v4070 = vunpack.c.l.b16 %v3551
        %v4071 = vunpack.c.l.b16 %v3552
        %v4072 = vunpack.c.l.b16 %v3553
        %v4073 = vunpack.c.l.b16 %v3554
        %v4074 = vunpack.c.l.b16 %v3555
        %v4075 = vunpack.c.l.b16 %v3556
        %v4076 = vunpack.c.l.b16 %v3557
        %v4077 = vunpack.c.l.b16 %v3558
        %v4078 = vunpack.c.l.b16 %v3559
        %v4079 = vunpack.c.l.b16 %v3560
        %v4080 = vunpack.c.l.b16 %v3561
        %v4081 = vunpack.c.l.b16 %v3562
        %v4082 = vunpack.c.l.b16 %v3563
        %v4083 = vunpack.c.l.b16 %v3564
        %v4084 = vunpack.c.l.b16 %v3565
        %v4085 = vunpack.c.l.b16 %v3566
        %v4086 = vunpack.c.l.b16 %v3567
        %v4087 = vunpack.c.l.b16 %v3568
        %v4088 = vunpack.c.l.b16 %v3569
        %v4089 = vunpack.c.l.b16 %v3570
        %v4090 = vunpack.c.l.b16 %v3571
        %v4091 = vunpack.c.l.b16 %v3572
        %v4092 = vunpack.c.l.b16 %v3573
        %v4093 = vunpack.c.l.b16 %v3574
        %v4094 = vunpack.c.l.b16 %v3575
        %v4095 = vunpack.c.l.b16 %v3576
        %v4096 = vunpack.c.l.b16 %v3577
        %v4097 = vunpack.c.l.b16 %v3578
        %v4098 = vunpack.c.l.b16 %v3579
        %v4099 = vunpack.c.l.b16 %v3580
        %v4100 = vunpack.c.l.b16 %v3581
        %v4101 = vunpack.c.l.b16 %v3582
        %v4102 = vunpack.c.l.b16 %v3583
        %v4103 = vunpack.c.l.b16 %v3584
        %v4104 = vunpack.c.l.b16 %v3585
        %v4105 = vunpack.c.l.b16 %v3586
        %v4106 = vunpack.c.l.b16 %v3587
        %v4107 = vunpack.c.l.b16 %v3588
        %v4108 = vunpack.c.l.b16 %v3589
        %v4109 = vunpack.c.l.b16 %v3590
        %v4110 = vunpack.c.l.b16 %v3591
        %v4111 = vunpack.c.l.b16 %v3592
        %v4112 = vunpack.c.l.b16 %v3593
        %v4113 = vunpack.c.l.b16 %v3594
        %v4114 = vunpack.c.l.b16 %v3595
        %v4115 = vunpack.c.l.b16 %v3596
        %v4116 = vunpack.c.l.b16 %v3597
        %v4117 = vunpack.c.l.b16 %v3598
        %v4118 = vunpack.c.l.b16 %v3599
        %v4119 = vunpack.c.l.b16 %v3600
        %v4120 = vunpack.c.l.b16 %v3601
        %v4121 = vunpack.c.l.b16 %v3602
        %v4122 = vunpack.c.l.b16 %v3603
        %v4123 = vunpack.c.l.b16 %v3604
        %v4124 = vunpack.c.l.b16 %v3605
        %v4125 = vunpack.c.l.b16 %v3606
        %v4126 = vunpack.c.l.b16 %v3607
        %v4127 = vunpack.c.l.b16 %v3608
        %v4128 = vunpack.c.l.b16 %v3609
        %v4129 = vunpack.c.l.b16 %v3610
        %v4130 = vunpack.c.l.b16 %v3611
        %v4131 = vunpack.c.l.b16 %v3612
        %v4132 = vunpack.c.l.b16 %v3613
        %v4133 = vunpack.c.l.b16 %v3614
        %v4134 = vunpack.c.l.b16 %v3615
        %v4135 = vunpack.c.l.b16 %v3616
        %v4136 = vunpack.c.l.b16 %v3617
        %v4137 = vunpack.c.l.b16 %v3618
        %v4138 = vunpack.c.l.b16 %v3619
        %v4139 = vunpack.c.l.b16 %v3620
        %v4140 = vunpack.c.l.b16 %v3621
        %v4141 = vunpack.c.l.b16 %v3622
        %v4142 = vunpack.c.l.b16 %v3623
        %v4143 = vunpack.c.l.b16 %v3624
        %v4144 = vunpack.c.l.b16 %v3625
        %v4145 = vunpack.c.l.b16 %v3626
        %v4146 = vunpack.c.l.b16 %v3627
        %v4147 = vunpack.c.l.b16 %v3628
        %v4148 = vunpack.c.l.b16 %v3629
        %v4149 = vunpack.c.l.b16 %v3630
        %v4150 = vunpack.c.l.b16 %v3631
        %v4151 = vunpack.c.l.b16 %v3632
        %v4152 = vunpack.c.l.b16 %v3633
        %v4153 = vunpack.c.l.b16 %v3634
        %v4154 = vunpack.c.l.b16 %v3635
        %v4155 = vunpack.c.l.b16 %v3636
        %v4156 = vunpack.c.l.b16 %v3637
        %v4157 = vunpack.c.l.b16 %v3638
        %v4158 = vunpack.c.l.b16 %v3639
        %v4159 = vunpack.c.l.b16 %v3640
        %v4160 = vunpack.c.l.b16 %v3641
        %v4161 = vunpack.c.l.b16 %v3642
        %v4162 = vunpack.c.l.b16 %v3643
        %v4163 = vunpack.c.l.b16 %v3644
        %v4164 = vunpack.c.l.b16 %v3645
        %v4165 = vunpack.c.l.b16 %v3646
        %v4166 = vunpack.c.l.b16 %v3647
        %v4167 = vunpack.c.l.b16 %v3648
        %v4168 = vunpack.c.l.b16 %v3649
        %v4169 = vunpack.c.l.b16 %v3650
        %v4170 = vunpack.c.l.b16 %v3651
        %v4171 = vunpack.c.l.b16 %v3652
        %v4172 = vunpack.c.l.b16 %v3653
        %v4173 = vunpack.c.l.b16 %v3654
        %v4174 = vunpack.c.l.b16 %v3655
        %v4175 = vunpack.c.l.b16 %v3656
        %v4176 = vunpack.c.l.b16 %v3657
        %v4177 = vunpack.c.l.b16 %v3658
        %v4178 = vunpack.c.l.b16 %v3659
        %v4179 = vunpack.c.l.b16 %v3660
        %v4180 = vunpack.c.l.b16 %v3661
        %v4181 = vunpack.c.l.b16 %v3662
        %v4182 = vunpack.c.l.b16 %v3663
        %v4183 = vunpack.c.l.b16 %v3664
        %v4184 = vunpack.c.l.b16 %v3665
        %v4185 = vunpack.c.l.b16 %v3666
        %v4186 = vunpack.c.l.b16 %v3667
        %v4187 = vunpack.c.l.b16 %v3668
        %v4188 = vunpack.c.l.b16 %v3669
        %v4189 = vunpack.c.l.b16 %v3670
        %v4190 = vunpack.c.l.b16 %v3671
        %v4191 = vunpack.c.l.b16 %v3672
        %v4192 = vunpack.c.l.b16 %v3673
        %v4193 = vunpack.c.l.b16 %v3674
        %v4194 = vunpack.c.l.b16 %v3675
        %v4195 = vunpack.c.l.b16 %v3676
        %v4196 = vunpack.c.l.b16 %v3677
        %v4197 = vunpack.c.l.b16 %v3678
        %v4198 = vunpack.c.l.b16 %v3679
        %v4199 = vunpack.c.l.b16 %v3680
        %v4200 = vunpack.c.l.b16 %v3681
        %v4201 = vunpack.c.l.b16 %v3682
        %v4202 = vunpack.c.l.b16 %v3683
        %v4203 = vunpack.c.l.b16 %v3684
        %v4204 = vunpack.c.l.b16 %v3685
        %v4205 = vunpack.c.l.b16 %v3686
        %v4206 = vunpack.c.l.b16 %v3687
        %v4207 = vunpack.c.l.b16 %v3688
        %v4208 = vunpack.c.l.b16 %v3689
        %v4209 = vunpack.c.l.b16 %v3690
        %v4210 = vunpack.c.l.b16 %v3691
        %v4211 = vunpack.c.l.b16 %v3692
        %v4212 = vunpack.c.l.b16 %v3693
        %v4213 = vunpack.c.l.b16 %v3694
        %v4214 = vunpack.c.l.b16 %v3695
        %v4215 = vunpack.c.l.b16 %v3696
        %v4216 = vunpack.c.l.b16 %v3697
        %v4217 = vunpack.c.l.b16 %v3698
        %v4218 = vunpack.c.l.b16 %v3699
        %v4219 = vunpack.c.l.b16 %v3700
        %v4220 = vunpack.c.l.b16 %v3701
        %v4221 = vunpack.c.l.b16 %v3702
        %v4222 = vunpack.c.l.b16 %v3703
        %v4223 = vunpack.c.l.b16 %v3704
        %v4224 = vunpack.c.l.b16 %v3705
        %v4225 = vunpack.c.l.b16 %v3706
        %v4226 = vunpack.c.l.b16 %v3707
        %v4227 = vunpack.c.l.b16 %v3708
        %v4228 = vunpack.c.l.b16 %v3709
        %v4229 = vunpack.c.l.b16 %v3710
        %v4230 = vunpack.c.l.b16 %v3711
        %v4231 = vunpack.c.l.b16 %v3712
        %v4232 = vunpack.c.l.b16 %v3713
        %v4233 = vunpack.c.l.b16 %v3714
        %v4234 = vunpack.c.l.b16 %v3715
        %v4235 = vunpack.c.l.b16 %v3716
        %v4236 = vunpack.c.l.b16 %v3717
        %v4237 = vunpack.c.l.b16 %v3718
        %v4238 = vunpack.c.l.b16 %v3719
        %v4239 = vunpack.c.l.b16 %v3720
        %v4240 = vunpack.c.l.b16 %v3721
        %v4241 = vunpack.c.l.b16 %v3722
        %v4242 = vunpack.c.l.b16 %v3723
        %v4243 = vunpack.c.l.b16 %v3724
        %v4244 = vpack.c.b16 %v3989, %v3988
        %v4245 = vpack.c.b16 %v3991, %v3990
        %v4246 = vpack.c.b16 %v3993, %v3992
        %v4247 = vpack.c.b16 %v3995, %v3994
        %v4248 = vpack.c.b16 %v3997, %v3996
        %v4249 = vpack.c.b16 %v3999, %v3998
        %v4250 = vpack.c.b16 %v4001, %v4000
        %v4251 = vpack.c.b16 %v4003, %v4002
        %v4252 = vpack.c.b16 %v4005, %v4004
        %v4253 = vpack.c.b16 %v4007, %v4006
        %v4254 = vpack.c.b16 %v4009, %v4008
        %v4255 = vpack.c.b16 %v4011, %v4010
        %v4256 = vpack.c.b16 %v4013, %v4012
        %v4257 = vpack.c.b16 %v4015, %v4014
        %v4258 = vpack.c.b16 %v4017, %v4016
        %v4259 = vpack.c.b16 %v4019, %v4018
        %v4260 = vpack.c.b16 %v4021, %v4020
        %v4261 = vpack.c.b16 %v4023, %v4022
        %v4262 = vpack.c.b16 %v4025, %v4024
        %v4263 = vpack.c.b16 %v4027, %v4026
        %v4264 = vpack.c.b16 %v4029, %v4028
        %v4265 = vpack.c.b16 %v4031, %v4030
        %v4266 = vpack.c.b16 %v4033, %v4032
        %v4267 = vpack.c.b16 %v4035, %v4034
        %v4268 = vpack.c.b16 %v4037, %v4036
        %v4269 = vpack.c.b16 %v4039, %v4038
        %v4270 = vpack.c.b16 %v4041, %v4040
        %v4271 = vpack.c.b16 %v4043, %v4042
        %v4272 = vpack.c.b16 %v4045, %v4044
        %v4273 = vpack.c.b16 %v4047, %v4046
        %v4274 = vpack.c.b16 %v4049, %v4048
        %v4275 = vpack.c.b16 %v4051, %v4050
        %v4276 = vpack.c.b16 %v4053, %v4052
        %v4277 = vpack.c.b16 %v4055, %v4054
        %v4278 = vpack.c.b16 %v4057, %v4056
        %v4279 = vpack.c.b16 %v4059, %v4058
        %v4280 = vpack.c.b16 %v4061, %v4060
        %v4281 = vpack.c.b16 %v4063, %v4062
        %v4282 = vpack.c.b16 %v4065, %v4064
        %v4283 = vpack.c.b16 %v4067, %v4066
        %v4284 = vpack.c.b16 %v4069, %v4068
        %v4285 = vpack.c.b16 %v4071, %v4070
        %v4286 = vpack.c.b16 %v4073, %v4072
        %v4287 = vpack.c.b16 %v4075, %v4074
        %v4288 = vpack.c.b16 %v4077, %v4076
        %v4289 = vpack.c.b16 %v4079, %v4078
        %v4290 = vpack.c.b16 %v4081, %v4080
        %v4291 = vpack.c.b16 %v4083, %v4082
        %v4292 = vpack.c.b16 %v4085, %v4084
        %v4293 = vpack.c.b16 %v4087, %v4086
        %v4294 = vpack.c.b16 %v4089, %v4088
        %v4295 = vpack.c.b16 %v4091, %v4090
        %v4296 = vpack.c.b16 %v4093, %v4092
        %v4297 = vpack.c.b16 %v4095, %v4094
        %v4298 = vpack.c.b16 %v4097, %v4096
        %v4299 = vpack.c.b16 %v4099, %v4098
        %v4300 = vpack.c.b16 %v4101, %v4100
        %v4301 = vpack.c.b16 %v4103, %v4102
        %v4302 = vpack.c.b16 %v4105, %v4104
        %v4303 = vpack.c.b16 %v4107, %v4106
        %v4304 = vpack.c.b16 %v4109, %v4108
        %v4305 = vpack.c.b16 %v4111, %v4110
        %v4306 = vpack.c.b16 %v4113, %v4112
        %v4307 = vpack.c.b16 %v4115, %v4114
        %v4308 = vpack.c.b16 %v4117, %v4116
        %v4309 = vpack.c.b16 %v4119, %v4118
        %v4310 = vpack.c.b16 %v4121, %v4120
        %v4311 = vpack.c.b16 %v4123, %v4122
        %v4312 = vpack.c.b16 %v4125, %v4124
        %v4313 = vpack.c.b16 %v4127, %v4126
        %v4314 = vpack.c.b16 %v4129, %v4128
        %v4315 = vpack.c.b16 %v4131, %v4130
        %v4316 = vpack.c.b16 %v4133, %v4132
        %v4317 = vpack.c.b16 %v4135, %v4134
        %v4318 = vpack.c.b16 %v4137, %v4136
        %v4319 = vpack.c.b16 %v4139, %v4138
        %v4320 = vpack.c.b16 %v4141, %v4140
        %v4321 = vpack.c.b16 %v4143, %v4142
        %v4322 = vpack.c.b16 %v4145, %v4144
        %v4323 = vpack.c.b16 %v4147, %v4146
        %v4324 = vpack.c.b16 %v4149, %v4148
        %v4325 = vpack.c.b16 %v4151, %v4150
        %v4326 = vpack.c.b16 %v4153, %v4152
        %v4327 = vpack.c.b16 %v4155, %v4154
        %v4328 = vpack.c.b16 %v4157, %v4156
        %v4329 = vpack.c.b16 %v4159, %v4158
        %v4330 = vpack.c.b16 %v4161, %v4160
        %v4331 = vpack.c.b16 %v4163, %v4162
        %v4332 = vpack.c.b16 %v4165, %v4164
        %v4333 = vpack.c.b16 %v4167, %v4166
        %v4334 = vpack.c.b16 %v4169, %v4168
        %v4335 = vpack.c.b16 %v4171, %v4170
        %v4336 = vpack.c.b16 %v4173, %v4172
        %v4337 = vpack.c.b16 %v4175, %v4174
        %v4338 = vpack.c.b16 %v4177, %v4176
        %v4339 = vpack.c.b16 %v4179, %v4178
        %v4340 = vpack.c.b16 %v4181, %v4180
        %v4341 = vpack.c.b16 %v4183, %v4182
        %v4342 = vpack.c.b16 %v4185, %v4184
        %v4343 = vpack.c.b16 %v4187, %v4186
        %v4344 = vpack.c.b16 %v4189, %v4188
        %v4345 = vpack.c.b16 %v4191, %v4190
        %v4346 = vpack.c.b16 %v4193, %v4192
        %v4347 = vpack.c.b16 %v4195, %v4194
        %v4348 = vpack.c.b16 %v4197, %v4196
        %v4349 = vpack.c.b16 %v4199, %v4198
        %v4350 = vpack.c.b16 %v4201, %v4200
        %v4351 = vpack.c.b16 %v4203, %v4202
        %v4352 = vpack.c.b16 %v4205, %v4204
        %v4353 = vpack.c.b16 %v4207, %v4206
        %v4354 = vpack.c.b16 %v4209, %v4208
        %v4355 = vpack.c.b16 %v4211, %v4210
        %v4356 = vpack.c.b16 %v4213, %v4212
        %v4357 = vpack.c.b16 %v4215, %v4214
        %v4358 = vpack.c.b16 %v4217, %v4216
        %v4359 = vpack.c.b16 %v4219, %v4218
        %v4360 = vpack.c.b16 %v4221, %v4220
        %v4361 = vpack.c.b16 %v4223, %v4222
        %v4362 = vpack.c.b16 %v4225, %v4224
        %v4363 = vpack.c.b16 %v4227, %v4226
        %v4364 = vpack.c.b16 %v4229, %v4228
        %v4365 = vpack.c.b16 %v4231, %v4230
        %v4366 = vpack.c.b16 %v4233, %v4232
        %v4367 = vpack.c.b16 %v4235, %v4234
        %v4368 = vpack.c.b16 %v4237, %v4236
        %v4369 = vpack.c.b16 %v4239, %v4238
        %v4370 = vpack.c.b16 %v4241, %v4240
        %v4371 = vpack.c.b16 %v4243, %v4242
        %4500 = vmatprep.subr.bf16.mxu0 0
        %4501 = vmatpush1.bf16.msra.mxu0 %v4244
        %4502 = vmatprep.subr.bf16.mxu0 0
        %4503 = vmatpush1.bf16.msra.mxu0 %v4245
        %4504 = vmatprep.subr.bf16.mxu0 0
        %4505 = vmatpush1.bf16.msra.mxu0 %v4246
        %4506 = vmatprep.subr.bf16.mxu0 0
        %4507 = vmatpush1.bf16.msra.mxu0 %v4247
        %4508 = vmatprep.subr.bf16.mxu0 0
        %4509 = vmatpush1.bf16.msra.mxu0 %v4248
        %4510 = vmatprep.subr.bf16.mxu0 0
        %4511 = vmatpush1.bf16.msra.mxu0 %v4249
        %4512 = vmatprep.subr.bf16.mxu0 0
        %4513 = vmatpush1.bf16.msra.mxu0 %v4250
        %4514 = vmatprep.subr.bf16.mxu0 0
        %4515 = vmatpush1.bf16.msra.mxu0 %v4251
        %4516 = vmatprep.subr.bf16.mxu0 0
        %4517 = vmatpush1.bf16.msra.mxu0 %v4252
        %4518 = vmatprep.subr.bf16.mxu0 0
        %4519 = vmatpush1.bf16.msra.mxu0 %v4253
        %4520 = vmatprep.subr.bf16.mxu0 0
        %4521 = vmatpush1.bf16.msra.mxu0 %v4254
        %4522 = vmatprep.subr.bf16.mxu0 0
        %4523 = vmatpush1.bf16.msra.mxu0 %v4255
        %4524 = vmatprep.subr.bf16.mxu0 0
        %4525 = vmatpush1.bf16.msra.mxu0 %v4256
        %4526 = vmatprep.subr.bf16.mxu0 0
        %4527 = vmatpush1.bf16.msra.mxu0 %v4257
        %4528 = vmatprep.subr.bf16.mxu0 0
        %4529 = vmatpush1.bf16.msra.mxu0 %v4258
        %4530 = vmatprep.subr.bf16.mxu0 0
        %4531 = vmatpush1.bf16.msra.mxu0 %v4259
        %4532 = vmatprep.mubr.bf16.mxu0 %v3342
        %4533 = vmatmul.mubr.bf16.gmra.mrb[0].mxu0 %v3341
        %v4534 = vpop.f32.mrb[0].mxu0
        %v4535 = vadd.f32 %v3730, %v4534
        %v4536 = vpop.f32.mrb[0].mxu0
        %v4537 = vpop.f32.mrb[0].mxu0
        %v4538 = vadd.f32 %v3730, %v4537
        %v4539 = vpop.f32.mrb[0].mxu0
        %4540 = vmatprep.mubr.bf16.mxu0 %v3358
        %4541 = vmatmul.mubr.bf16.gmra.mrb[0].mxu0 %v3357
        %v4542 = vpop.f32.mrb[0].mxu0
        %v4543 = vadd.f32 %v3730, %v4542
        %v4544 = vpop.f32.mrb[0].mxu0
        %v4545 = vpop.f32.mrb[0].mxu0
        %v4546 = vadd.f32 %v3730, %v4545
        %v4547 = vpop.f32.mrb[0].mxu0
        %4548 = vmatprep.mubr.bf16.mxu0 %v3374
        %4549 = vmatmul.mubr.bf16.gmra.mrb[0].mxu0 %v3373
        %v4550 = vpop.f32.mrb[0].mxu0
        %v4551 = vadd.f32 %v3730, %v4550
        %v4552 = vpop.f32.mrb[0].mxu0
        %v4553 = vpop.f32.mrb[0].mxu0
        %v4554 = vadd.f32 %v3730, %v4553
        %v4555 = vpop.f32.mrb[0].mxu0
        %4556 = vmatprep.mubr.bf16.mxu0 %v3390
        %4557 = vmatmul.mubr.bf16.gmra.mrb[0].mxu0 %v3389
        %v4558 = vpop.f32.mrb[0].mxu0
        %v4559 = vadd.f32 %v3730, %v4558
        %v4560 = vpop.f32.mrb[0].mxu0
        %v4561 = vpop.f32.mrb[0].mxu0
        %v4562 = vadd.f32 %v3730, %v4561
        %v4563 = vpop.f32.mrb[0].mxu0
        %4564 = vmatprep.mubr.bf16.mxu0 %v3406
        %4565 = vmatmul.mubr.bf16.gmra.mrb[0].mxu0 %v3405
        %v4566 = vpop.f32.mrb[0].mxu0
        %v4567 = vadd.f32 %v3730, %v4566
        %v4568 = vpop.f32.mrb[0].mxu0
        %v4569 = vpop.f32.mrb[0].mxu0
        %v4570 = vadd.f32 %v3730, %v4569
        %v4571 = vpop.f32.mrb[0].mxu0
        %4572 = vmatprep.mubr.bf16.mxu0 %v3422
        %4573 = vmatmul.mubr.bf16.gmra.mrb[0].mxu0 %v3421
        %v4574 = vpop.f32.mrb[0].mxu0
        %v4575 = vadd.f32 %v3730, %v4574
        %v4576 = vpop.f32.mrb[0].mxu0
        %v4577 = vpop.f32.mrb[0].mxu0
        %v4578 = vadd.f32 %v3730, %v4577
        %v4579 = vpop.f32.mrb[0].mxu0
        %4580 = vmatprep.mubr.bf16.mxu0 %v3438
        %4581 = vmatmul.mubr.bf16.gmra.mrb[0].mxu0 %v3437
        %v4582 = vpop.f32.mrb[0].mxu0
        %v4583 = vadd.f32 %v3730, %v4582
        %v4584 = vpop.f32.mrb[0].mxu0
        %v4585 = vpop.f32.mrb[0].mxu0
        %v4586 = vadd.f32 %v3730, %v4585
        %v4587 = vpop.f32.mrb[0].mxu0
        %4588 = vmatprep.mubr.bf16.mxu0 %v3454
        %4589 = vmatmul.mubr.bf16.gmra.mrb[0].mxu0 %v3453
        %v4590 = vpop.f32.mrb[0].mxu0
        %v4591 = vadd.f32 %v3730, %v4590
        %v4592 = vpop.f32.mrb[0].mxu0
        %v4593 = vpop.f32.mrb[0].mxu0
        %v4594 = vadd.f32 %v3730, %v4593
        %v4595 = vpop.f32.mrb[0].mxu0
        %4596 = vdwg.mxu0
        %4597 = vmatprep.subr.bf16.mxu0 0
        %4598 = vmatpush1.bf16.msra.mxu0 %v4260
        %4599 = vmatprep.subr.bf16.mxu0 0
        %4600 = vmatpush1.bf16.msra.mxu0 %v4261
        %4601 = vmatprep.subr.bf16.mxu0 0
        %4602 = vmatpush1.bf16.msra.mxu0 %v4262
        %4603 = vmatprep.subr.bf16.mxu0 0
        %4604 = vmatpush1.bf16.msra.mxu0 %v4263
        %4605 = vmatprep.subr.bf16.mxu0 0
        %4606 = vmatpush1.bf16.msra.mxu0 %v4264
        %4607 = vmatprep.subr.bf16.mxu0 0
        %4608 = vmatpush1.bf16.msra.mxu0 %v4265
        %4609 = vmatprep.subr.bf16.mxu0 0
        %4610 = vmatpush1.bf16.msra.mxu0 %v4266
        %4611 = vmatprep.subr.bf16.mxu0 0
        %4612 = vmatpush1.bf16.msra.mxu0 %v4267
        %4613 = vmatprep.subr.bf16.mxu0 0
        %4614 = vmatpush1.bf16.msra.mxu0 %v4268
        %4615 = vmatprep.subr.bf16.mxu0 0
        %4616 = vmatpush1.bf16.msra.mxu0 %v4269
        %4617 = vmatprep.subr.bf16.mxu0 0
        %4618 = vmatpush1.bf16.msra.mxu0 %v4270
        %4619 = vmatprep.subr.bf16.mxu0 0
        %4620 = vmatpush1.bf16.msra.mxu0 %v4271
        %4621 = vmatprep.subr.bf16.mxu0 0
        %4622 = vmatpush1.bf16.msra.mxu0 %v4272
        %4623 = vmatprep.subr.bf16.mxu0 0
        %4624 = vmatpush1.bf16.msra.mxu0 %v4273
        %4625 = vmatprep.subr.bf16.mxu0 0
        %4626 = vmatpush1.bf16.msra.mxu0 %v4274
        %4627 = vmatprep.subr.bf16.mxu0 0
        %4628 = vmatpush1.bf16.msra.mxu0 %v4275
        %4629 = vmatprep.mubr.bf16.mxu0 %v3344
        %4630 = vmatmul.mubr.bf16.gmra.mrb[0].mxu0 %v3343
        %v4631 = vpop.f32.mrb[0].mxu0
        %v4632 = vadd.f32 %v4535, %v4631
        %v4633 = vpop.f32.mrb[0].mxu0
        %v4634 = vpop.f32.mrb[0].mxu0
        %v4635 = vadd.f32 %v4538, %v4634
        %v4636 = vpop.f32.mrb[0].mxu0
        %4637 = vmatprep.mubr.bf16.mxu0 %v3360
        %4638 = vmatmul.mubr.bf16.gmra.mrb[0].mxu0 %v3359
        %v4639 = vpop.f32.mrb[0].mxu0
        %v4640 = vadd.f32 %v4543, %v4639
        %v4641 = vpop.f32.mrb[0].mxu0
        %v4642 = vpop.f32.mrb[0].mxu0
        %v4643 = vadd.f32 %v4546, %v4642
        %v4644 = vpop.f32.mrb[0].mxu0
        %4645 = vmatprep.mubr.bf16.mxu0 %v3376
        %4646 = vmatmul.mubr.bf16.gmra.mrb[0].mxu0 %v3375
        %v4647 = vpop.f32.mrb[0].mxu0
        %v4648 = vadd.f32 %v4551, %v4647
        %v4649 = vpop.f32.mrb[0].mxu0
        %v4650 = vpop.f32.mrb[0].mxu0
        %v4651 = vadd.f32 %v4554, %v4650
        %v4652 = vpop.f32.mrb[0].mxu0
        %4653 = vmatprep.mubr.bf16.mxu0 %v3392
        %4654 = vmatmul.mubr.bf16.gmra.mrb[0].mxu0 %v3391
        %v4655 = vpop.f32.mrb[0].mxu0
        %v4656 = vadd.f32 %v4559, %v4655
        %v4657 = vpop.f32.mrb[0].mxu0
        %v4658 = vpop.f32.mrb[0].mxu0
        %v4659 = vadd.f32 %v4562, %v4658
        %v4660 = vpop.f32.mrb[0].mxu0
        %4661 = vmatprep.mubr.bf16.mxu0 %v3408
        %4662 = vmatmul.mubr.bf16.gmra.mrb[0].mxu0 %v3407
        %v4663 = vpop.f32.mrb[0].mxu0
        %v4664 = vadd.f32 %v4567, %v4663
        %v4665 = vpop.f32.mrb[0].mxu0
        %v4666 = vpop.f32.mrb[0].mxu0
        %v4667 = vadd.f32 %v4570, %v4666
        %v4668 = vpop.f32.mrb[0].mxu0
        %4669 = vmatprep.mubr.bf16.mxu0 %v3424
        %4670 = vmatmul.mubr.bf16.gmra.mrb[0].mxu0 %v3423
        %v4671 = vpop.f32.mrb[0].mxu0
        %v4672 = vadd.f32 %v4575, %v4671
        %v4673 = vpop.f32.mrb[0].mxu0
        %v4674 = vpop.f32.mrb[0].mxu0
        %v4675 = vadd.f32 %v4578, %v4674
        %v4676 = vpop.f32.mrb[0].mxu0
        %4677 = vmatprep.mubr.bf16.mxu0 %v3440
        %4678 = vmatmul.mubr.bf16.gmra.mrb[0].mxu0 %v3439
        %v4679 = vpop.f32.mrb[0].mxu0
        %v4680 = vadd.f32 %v4583, %v4679
        %v4681 = vpop.f32.mrb[0].mxu0
        %v4682 = vpop.f32.mrb[0].mxu0
        %v4683 = vadd.f32 %v4586, %v4682
        %v4684 = vpop.f32.mrb[0].mxu0
        %4685 = vmatprep.mubr.bf16.mxu0 %v3456
        %4686 = vmatmul.mubr.bf16.gmra.mrb[0].mxu0 %v3455
        %v4687 = vpop.f32.mrb[0].mxu0
        %v4688 = vadd.f32 %v4591, %v4687
        %v4689 = vpop.f32.mrb[0].mxu0
        %v4690 = vpop.f32.mrb[0].mxu0
        %v4691 = vadd.f32 %v4594, %v4690
        %v4692 = vpop.f32.mrb[0].mxu0
        %4693 = vdwg.mxu0
        %4694 = vmatprep.subr.bf16.mxu0 0
        %4695 = vmatpush1.bf16.msra.mxu0 %v4276
        %4696 = vmatprep.subr.bf16.mxu0 0
        %4697 = vmatpush1.bf16.msra.mxu0 %v4277
        %4698 = vmatprep.subr.bf16.mxu0 0
        %4699 = vmatpush1.bf16.msra.mxu0 %v4278
        %4700 = vmatprep.subr.bf16.mxu0 0
        %4701 = vmatpush1.bf16.msra.mxu0 %v4279
        %4702 = vmatprep.subr.bf16.mxu0 0
        %4703 = vmatpush1.bf16.msra.mxu0 %v4280
        %4704 = vmatprep.subr.bf16.mxu0 0
        %4705 = vmatpush1.bf16.msra.mxu0 %v4281
        %4706 = vmatprep.subr.bf16.mxu0 0
        %4707 = vmatpush1.bf16.msra.mxu0 %v4282
        %4708 = vmatprep.subr.bf16.mxu0 0
        %4709 = vmatpush1.bf16.msra.mxu0 %v4283
        %4710 = vmatprep.subr.bf16.mxu0 0
        %4711 = vmatpush1.bf16.msra.mxu0 %v4284
        %4712 = vmatprep.subr.bf16.mxu0 0
        %4713 = vmatpush1.bf16.msra.mxu0 %v4285
        %4714 = vmatprep.subr.bf16.mxu0 0
        %4715 = vmatpush1.bf16.msra.mxu0 %v4286
        %4716 = vmatprep.subr.bf16.mxu0 0
        %4717 = vmatpush1.bf16.msra.mxu0 %v4287
        %4718 = vmatprep.subr.bf16.mxu0 0
        %4719 = vmatpush1.bf16.msra.mxu0 %v4288
        %4720 = vmatprep.subr.bf16.mxu0 0
        %4721 = vmatpush1.bf16.msra.mxu0 %v4289
        %4722 = vmatprep.subr.bf16.mxu0 0
        %4723 = vmatpush1.bf16.msra.mxu0 %v4290
        %4724 = vmatprep.subr.bf16.mxu0 0
        %4725 = vmatpush1.bf16.msra.mxu0 %v4291
        %4726 = vmatprep.mubr.bf16.mxu0 %v3346
        %4727 = vmatmul.mubr.bf16.gmra.mrb[0].mxu0 %v3345
        %v4728 = vpop.f32.mrb[0].mxu0
        %v4729 = vadd.f32 %v4632, %v4728
        %v4730 = vpop.f32.mrb[0].mxu0
        %v4731 = vpop.f32.mrb[0].mxu0
        %v4732 = vadd.f32 %v4635, %v4731
        %v4733 = vpop.f32.mrb[0].mxu0
        %4734 = vmatprep.mubr.bf16.mxu0 %v3362
        %4735 = vmatmul.mubr.bf16.gmra.mrb[0].mxu0 %v3361
        %v4736 = vpop.f32.mrb[0].mxu0
        %v4737 = vadd.f32 %v4640, %v4736
        %v4738 = vpop.f32.mrb[0].mxu0
        %v4739 = vpop.f32.mrb[0].mxu0
        %v4740 = vadd.f32 %v4643, %v4739
        %v4741 = vpop.f32.mrb[0].mxu0
        %4742 = vmatprep.mubr.bf16.mxu0 %v3378
        %4743 = vmatmul.mubr.bf16.gmra.mrb[0].mxu0 %v3377
        %v4744 = vpop.f32.mrb[0].mxu0
        %v4745 = vadd.f32 %v4648, %v4744
        %v4746 = vpop.f32.mrb[0].mxu0
        %v4747 = vpop.f32.mrb[0].mxu0
        %v4748 = vadd.f32 %v4651, %v4747
        %v4749 = vpop.f32.mrb[0].mxu0
        %4750 = vmatprep.mubr.bf16.mxu0 %v3394
        %4751 = vmatmul.mubr.bf16.gmra.mrb[0].mxu0 %v3393
        %v4752 = vpop.f32.mrb[0].mxu0
        %v4753 = vadd.f32 %v4656, %v4752
        %v4754 = vpop.f32.mrb[0].mxu0
        %v4755 = vpop.f32.mrb[0].mxu0
        %v4756 = vadd.f32 %v4659, %v4755
        %v4757 = vpop.f32.mrb[0].mxu0
        %4758 = vmatprep.mubr.bf16.mxu0 %v3410
        %4759 = vmatmul.mubr.bf16.gmra.mrb[0].mxu0 %v3409
        %v4760 = vpop.f32.mrb[0].mxu0
        %v4761 = vadd.f32 %v4664, %v4760
        %v4762 = vpop.f32.mrb[0].mxu0
        %v4763 = vpop.f32.mrb[0].mxu0
        %v4764 = vadd.f32 %v4667, %v4763
        %v4765 = vpop.f32.mrb[0].mxu0
        %4766 = vmatprep.mubr.bf16.mxu0 %v3426
        %4767 = vmatmul.mubr.bf16.gmra.mrb[0].mxu0 %v3425
        %v4768 = vpop.f32.mrb[0].mxu0
        %v4769 = vadd.f32 %v4672, %v4768
        %v4770 = vpop.f32.mrb[0].mxu0
        %v4771 = vpop.f32.mrb[0].mxu0
        %v4772 = vadd.f32 %v4675, %v4771
        %v4773 = vpop.f32.mrb[0].mxu0
        %4774 = vmatprep.mubr.bf16.mxu0 %v3442
        %4775 = vmatmul.mubr.bf16.gmra.mrb[0].mxu0 %v3441
        %v4776 = vpop.f32.mrb[0].mxu0
        %v4777 = vadd.f32 %v4680, %v4776
        %v4778 = vpop.f32.mrb[0].mxu0
        %v4779 = vpop.f32.mrb[0].mxu0
        %v4780 = vadd.f32 %v4683, %v4779
        %v4781 = vpop.f32.mrb[0].mxu0
        %4782 = vmatprep.mubr.bf16.mxu0 %v3458
        %4783 = vmatmul.mubr.bf16.gmra.mrb[0].mxu0 %v3457
        %v4784 = vpop.f32.mrb[0].mxu0
        %v4785 = vadd.f32 %v4688, %v4784
        %v4786 = vpop.f32.mrb[0].mxu0
        %v4787 = vpop.f32.mrb[0].mxu0
        %v4788 = vadd.f32 %v4691, %v4787
        %v4789 = vpop.f32.mrb[0].mxu0
        %4790 = vdwg.mxu0
        %4791 = vmatprep.subr.bf16.mxu0 0
        %4792 = vmatpush1.bf16.msra.mxu0 %v4292
        %4793 = vmatprep.subr.bf16.mxu0 0
        %4794 = vmatpush1.bf16.msra.mxu0 %v4293
        %4795 = vmatprep.subr.bf16.mxu0 0
        %4796 = vmatpush1.bf16.msra.mxu0 %v4294
        %4797 = vmatprep.subr.bf16.mxu0 0
        %4798 = vmatpush1.bf16.msra.mxu0 %v4295
        %4799 = vmatprep.subr.bf16.mxu0 0
        %4800 = vmatpush1.bf16.msra.mxu0 %v4296
        %4801 = vmatprep.subr.bf16.mxu0 0
        %4802 = vmatpush1.bf16.msra.mxu0 %v4297
        %4803 = vmatprep.subr.bf16.mxu0 0
        %4804 = vmatpush1.bf16.msra.mxu0 %v4298
        %4805 = vmatprep.subr.bf16.mxu0 0
        %4806 = vmatpush1.bf16.msra.mxu0 %v4299
        %4807 = vmatprep.subr.bf16.mxu0 0
        %4808 = vmatpush1.bf16.msra.mxu0 %v4300
        %4809 = vmatprep.subr.bf16.mxu0 0
        %4810 = vmatpush1.bf16.msra.mxu0 %v4301
        %4811 = vmatprep.subr.bf16.mxu0 0
        %4812 = vmatpush1.bf16.msra.mxu0 %v4302
        %4813 = vmatprep.subr.bf16.mxu0 0
        %4814 = vmatpush1.bf16.msra.mxu0 %v4303
        %4815 = vmatprep.subr.bf16.mxu0 0
        %4816 = vmatpush1.bf16.msra.mxu0 %v4304
        %4817 = vmatprep.subr.bf16.mxu0 0
        %4818 = vmatpush1.bf16.msra.mxu0 %v4305
        %4819 = vmatprep.subr.bf16.mxu0 0
        %4820 = vmatpush1.bf16.msra.mxu0 %v4306
        %4821 = vmatprep.subr.bf16.mxu0 0
        %4822 = vmatpush1.bf16.msra.mxu0 %v4307
        %4823 = vmatprep.mubr.bf16.mxu0 %v3348
        %4824 = vmatmul.mubr.bf16.gmra.mrb[0].mxu0 %v3347
        %v4825 = vpop.f32.mrb[0].mxu0
        %v4826 = vadd.f32 %v4729, %v4825
        %v4827 = vpop.f32.mrb[0].mxu0
        %v4828 = vpop.f32.mrb[0].mxu0
        %v4829 = vadd.f32 %v4732, %v4828
        %v4830 = vpop.f32.mrb[0].mxu0
        %4831 = vmatprep.mubr.bf16.mxu0 %v3364
        %4832 = vmatmul.mubr.bf16.gmra.mrb[0].mxu0 %v3363
        %v4833 = vpop.f32.mrb[0].mxu0
        %v4834 = vadd.f32 %v4737, %v4833
        %v4835 = vpop.f32.mrb[0].mxu0
        %v4836 = vpop.f32.mrb[0].mxu0
        %v4837 = vadd.f32 %v4740, %v4836
        %v4838 = vpop.f32.mrb[0].mxu0
        %4839 = vmatprep.mubr.bf16.mxu0 %v3380
        %4840 = vmatmul.mubr.bf16.gmra.mrb[0].mxu0 %v3379
        %v4841 = vpop.f32.mrb[0].mxu0
        %v4842 = vadd.f32 %v4745, %v4841
        %v4843 = vpop.f32.mrb[0].mxu0
        %v4844 = vpop.f32.mrb[0].mxu0
        %v4845 = vadd.f32 %v4748, %v4844
        %v4846 = vpop.f32.mrb[0].mxu0
        %4847 = vmatprep.mubr.bf16.mxu0 %v3396
        %4848 = vmatmul.mubr.bf16.gmra.mrb[0].mxu0 %v3395
        %v4849 = vpop.f32.mrb[0].mxu0
        %v4850 = vadd.f32 %v4753, %v4849
        %v4851 = vpop.f32.mrb[0].mxu0
        %v4852 = vpop.f32.mrb[0].mxu0
        %v4853 = vadd.f32 %v4756, %v4852
        %v4854 = vpop.f32.mrb[0].mxu0
        %4855 = vmatprep.mubr.bf16.mxu0 %v3412
        %4856 = vmatmul.mubr.bf16.gmra.mrb[0].mxu0 %v3411
        %v4857 = vpop.f32.mrb[0].mxu0
        %v4858 = vadd.f32 %v4761, %v4857
        %v4859 = vpop.f32.mrb[0].mxu0
        %v4860 = vpop.f32.mrb[0].mxu0
        %v4861 = vadd.f32 %v4764, %v4860
        %v4862 = vpop.f32.mrb[0].mxu0
        %4863 = vmatprep.mubr.bf16.mxu0 %v3428
        %4864 = vmatmul.mubr.bf16.gmra.mrb[0].mxu0 %v3427
        %v4865 = vpop.f32.mrb[0].mxu0
        %v4866 = vadd.f32 %v4769, %v4865
        %v4867 = vpop.f32.mrb[0].mxu0
        %v4868 = vpop.f32.mrb[0].mxu0
        %v4869 = vadd.f32 %v4772, %v4868
        %v4870 = vpop.f32.mrb[0].mxu0
        %4871 = vmatprep.mubr.bf16.mxu0 %v3444
        %4872 = vmatmul.mubr.bf16.gmra.mrb[0].mxu0 %v3443
        %v4873 = vpop.f32.mrb[0].mxu0
        %v4874 = vadd.f32 %v4777, %v4873
        %v4875 = vpop.f32.mrb[0].mxu0
        %v4876 = vpop.f32.mrb[0].mxu0
        %v4877 = vadd.f32 %v4780, %v4876
        %v4878 = vpop.f32.mrb[0].mxu0
        %4879 = vmatprep.mubr.bf16.mxu0 %v3460
        %4880 = vmatmul.mubr.bf16.gmra.mrb[0].mxu0 %v3459
        %v4881 = vpop.f32.mrb[0].mxu0
        %v4882 = vadd.f32 %v4785, %v4881
        %v4883 = vpop.f32.mrb[0].mxu0
        %v4884 = vpop.f32.mrb[0].mxu0
        %v4885 = vadd.f32 %v4788, %v4884
        %v4886 = vpop.f32.mrb[0].mxu0
        %4887 = vdwg.mxu0
        %4888 = vmatprep.subr.bf16.mxu0 0
        %4889 = vmatpush1.bf16.msra.mxu0 %v4308
        %4890 = vmatprep.subr.bf16.mxu0 0
        %4891 = vmatpush1.bf16.msra.mxu0 %v4309
        %4892 = vmatprep.subr.bf16.mxu0 0
        %4893 = vmatpush1.bf16.msra.mxu0 %v4310
        %4894 = vmatprep.subr.bf16.mxu0 0
        %4895 = vmatpush1.bf16.msra.mxu0 %v4311
        %4896 = vmatprep.subr.bf16.mxu0 0
        %4897 = vmatpush1.bf16.msra.mxu0 %v4312
        %4898 = vmatprep.subr.bf16.mxu0 0
        %4899 = vmatpush1.bf16.msra.mxu0 %v4313
        %4900 = vmatprep.subr.bf16.mxu0 0
        %4901 = vmatpush1.bf16.msra.mxu0 %v4314
        %4902 = vmatprep.subr.bf16.mxu0 0
        %4903 = vmatpush1.bf16.msra.mxu0 %v4315
        %4904 = vmatprep.subr.bf16.mxu0 0
        %4905 = vmatpush1.bf16.msra.mxu0 %v4316
        %4906 = vmatprep.subr.bf16.mxu0 0
        %4907 = vmatpush1.bf16.msra.mxu0 %v4317
        %4908 = vmatprep.subr.bf16.mxu0 0
        %4909 = vmatpush1.bf16.msra.mxu0 %v4318
        %4910 = vmatprep.subr.bf16.mxu0 0
        %4911 = vmatpush1.bf16.msra.mxu0 %v4319
        %4912 = vmatprep.subr.bf16.mxu0 0
        %4913 = vmatpush1.bf16.msra.mxu0 %v4320
        %4914 = vmatprep.subr.bf16.mxu0 0
        %4915 = vmatpush1.bf16.msra.mxu0 %v4321
        %4916 = vmatprep.subr.bf16.mxu0 0
        %4917 = vmatpush1.bf16.msra.mxu0 %v4322
        %4918 = vmatprep.subr.bf16.mxu0 0
        %4919 = vmatpush1.bf16.msra.mxu0 %v4323
        %4920 = vmatprep.mubr.bf16.mxu0 %v3350
        %4921 = vmatmul.mubr.bf16.gmra.mrb[0].mxu0 %v3349
        %v4922 = vpop.f32.mrb[0].mxu0
        %v4923 = vadd.f32 %v4826, %v4922
        %v4924 = vpop.f32.mrb[0].mxu0
        %v4925 = vpop.f32.mrb[0].mxu0
        %v4926 = vadd.f32 %v4829, %v4925
        %v4927 = vpop.f32.mrb[0].mxu0
        %4928 = vmatprep.mubr.bf16.mxu0 %v3366
        %4929 = vmatmul.mubr.bf16.gmra.mrb[0].mxu0 %v3365
        %v4930 = vpop.f32.mrb[0].mxu0
        %v4931 = vadd.f32 %v4834, %v4930
        %v4932 = vpop.f32.mrb[0].mxu0
        %v4933 = vpop.f32.mrb[0].mxu0
        %v4934 = vadd.f32 %v4837, %v4933
        %v4935 = vpop.f32.mrb[0].mxu0
        %4936 = vmatprep.mubr.bf16.mxu0 %v3382
        %4937 = vmatmul.mubr.bf16.gmra.mrb[0].mxu0 %v3381
        %v4938 = vpop.f32.mrb[0].mxu0
        %v4939 = vadd.f32 %v4842, %v4938
        %v4940 = vpop.f32.mrb[0].mxu0
        %v4941 = vpop.f32.mrb[0].mxu0
        %v4942 = vadd.f32 %v4845, %v4941
        %v4943 = vpop.f32.mrb[0].mxu0
        %4944 = vmatprep.mubr.bf16.mxu0 %v3398
        %4945 = vmatmul.mubr.bf16.gmra.mrb[0].mxu0 %v3397
        %v4946 = vpop.f32.mrb[0].mxu0
        %v4947 = vadd.f32 %v4850, %v4946
        %v4948 = vpop.f32.mrb[0].mxu0
        %v4949 = vpop.f32.mrb[0].mxu0
        %v4950 = vadd.f32 %v4853, %v4949
        %v4951 = vpop.f32.mrb[0].mxu0
        %4952 = vmatprep.mubr.bf16.mxu0 %v3414
        %4953 = vmatmul.mubr.bf16.gmra.mrb[0].mxu0 %v3413
        %v4954 = vpop.f32.mrb[0].mxu0
        %v4955 = vadd.f32 %v4858, %v4954
        %v4956 = vpop.f32.mrb[0].mxu0
        %v4957 = vpop.f32.mrb[0].mxu0
        %v4958 = vadd.f32 %v4861, %v4957
        %v4959 = vpop.f32.mrb[0].mxu0
        %4960 = vmatprep.mubr.bf16.mxu0 %v3430
        %4961 = vmatmul.mubr.bf16.gmra.mrb[0].mxu0 %v3429
        %v4962 = vpop.f32.mrb[0].mxu0
        %v4963 = vadd.f32 %v4866, %v4962
        %v4964 = vpop.f32.mrb[0].mxu0
        %v4965 = vpop.f32.mrb[0].mxu0
        %v4966 = vadd.f32 %v4869, %v4965
        %v4967 = vpop.f32.mrb[0].mxu0
        %4968 = vmatprep.mubr.bf16.mxu0 %v3446
        %4969 = vmatmul.mubr.bf16.gmra.mrb[0].mxu0 %v3445
        %v4970 = vpop.f32.mrb[0].mxu0
        %v4971 = vadd.f32 %v4874, %v4970
        %v4972 = vpop.f32.mrb[0].mxu0
        %v4973 = vpop.f32.mrb[0].mxu0
        %v4974 = vadd.f32 %v4877, %v4973
        %v4975 = vpop.f32.mrb[0].mxu0
        %4976 = vmatprep.mubr.bf16.mxu0 %v3462
        %4977 = vmatmul.mubr.bf16.gmra.mrb[0].mxu0 %v3461
        %v4978 = vpop.f32.mrb[0].mxu0
        %v4979 = vadd.f32 %v4882, %v4978
        %v4980 = vpop.f32.mrb[0].mxu0
        %v4981 = vpop.f32.mrb[0].mxu0
        %v4982 = vadd.f32 %v4885, %v4981
        %v4983 = vpop.f32.mrb[0].mxu0
        %4984 = vdwg.mxu0
        %4985 = vmatprep.subr.bf16.mxu0 0
        %4986 = vmatpush1.bf16.msra.mxu0 %v4324
        %4987 = vmatprep.subr.bf16.mxu0 0
        %4988 = vmatpush1.bf16.msra.mxu0 %v4325
        %4989 = vmatprep.subr.bf16.mxu0 0
        %4990 = vmatpush1.bf16.msra.mxu0 %v4326
        %4991 = vmatprep.subr.bf16.mxu0 0
        %4992 = vmatpush1.bf16.msra.mxu0 %v4327
        %4993 = vmatprep.subr.bf16.mxu0 0
        %4994 = vmatpush1.bf16.msra.mxu0 %v4328
        %4995 = vmatprep.subr.bf16.mxu0 0
        %4996 = vmatpush1.bf16.msra.mxu0 %v4329
        %4997 = vmatprep.subr.bf16.mxu0 0
        %4998 = vmatpush1.bf16.msra.mxu0 %v4330
        %4999 = vmatprep.subr.bf16.mxu0 0
        %5000 = vmatpush1.bf16.msra.mxu0 %v4331
        %5001 = vmatprep.subr.bf16.mxu0 0
        %5002 = vmatpush1.bf16.msra.mxu0 %v4332
        %5003 = vmatprep.subr.bf16.mxu0 0
        %5004 = vmatpush1.bf16.msra.mxu0 %v4333
        %5005 = vmatprep.subr.bf16.mxu0 0
        %5006 = vmatpush1.bf16.msra.mxu0 %v4334
        %5007 = vmatprep.subr.bf16.mxu0 0
        %5008 = vmatpush1.bf16.msra.mxu0 %v4335
        %5009 = vmatprep.subr.bf16.mxu0 0
        %5010 = vmatpush1.bf16.msra.mxu0 %v4336
        %5011 = vmatprep.subr.bf16.mxu0 0
        %5012 = vmatpush1.bf16.msra.mxu0 %v4337
        %5013 = vmatprep.subr.bf16.mxu0 0
        %5014 = vmatpush1.bf16.msra.mxu0 %v4338
        %5015 = vmatprep.subr.bf16.mxu0 0
        %5016 = vmatpush1.bf16.msra.mxu0 %v4339
        %5017 = vmatprep.mubr.bf16.mxu0 %v3352
        %5018 = vmatmul.mubr.bf16.gmra.mrb[0].mxu0 %v3351
        %v5019 = vpop.f32.mrb[0].mxu0
        %v5020 = vadd.f32 %v4923, %v5019
        %v5021 = vpop.f32.mrb[0].mxu0
        %v5022 = vpop.f32.mrb[0].mxu0
        %v5023 = vadd.f32 %v4926, %v5022
        %v5024 = vpop.f32.mrb[0].mxu0
        %5025 = vmatprep.mubr.bf16.mxu0 %v3368
        %5026 = vmatmul.mubr.bf16.gmra.mrb[0].mxu0 %v3367
        %v5027 = vpop.f32.mrb[0].mxu0
        %v5028 = vadd.f32 %v4931, %v5027
        %v5029 = vpop.f32.mrb[0].mxu0
        %v5030 = vpop.f32.mrb[0].mxu0
        %v5031 = vadd.f32 %v4934, %v5030
        %v5032 = vpop.f32.mrb[0].mxu0
        %5033 = vmatprep.mubr.bf16.mxu0 %v3384
        %5034 = vmatmul.mubr.bf16.gmra.mrb[0].mxu0 %v3383
        %v5035 = vpop.f32.mrb[0].mxu0
        %v5036 = vadd.f32 %v4939, %v5035
        %v5037 = vpop.f32.mrb[0].mxu0
        %v5038 = vpop.f32.mrb[0].mxu0
        %v5039 = vadd.f32 %v4942, %v5038
        %v5040 = vpop.f32.mrb[0].mxu0
        %5041 = vmatprep.mubr.bf16.mxu0 %v3400
        %5042 = vmatmul.mubr.bf16.gmra.mrb[0].mxu0 %v3399
        %v5043 = vpop.f32.mrb[0].mxu0
        %v5044 = vadd.f32 %v4947, %v5043
        %v5045 = vpop.f32.mrb[0].mxu0
        %v5046 = vpop.f32.mrb[0].mxu0
        %v5047 = vadd.f32 %v4950, %v5046
        %v5048 = vpop.f32.mrb[0].mxu0
        %5049 = vmatprep.mubr.bf16.mxu0 %v3416
        %5050 = vmatmul.mubr.bf16.gmra.mrb[0].mxu0 %v3415
        %v5051 = vpop.f32.mrb[0].mxu0
        %v5052 = vadd.f32 %v4955, %v5051
        %v5053 = vpop.f32.mrb[0].mxu0
        %v5054 = vpop.f32.mrb[0].mxu0
        %v5055 = vadd.f32 %v4958, %v5054
        %v5056 = vpop.f32.mrb[0].mxu0
        %5057 = vmatprep.mubr.bf16.mxu0 %v3432
        %5058 = vmatmul.mubr.bf16.gmra.mrb[0].mxu0 %v3431
        %v5059 = vpop.f32.mrb[0].mxu0
        %v5060 = vadd.f32 %v4963, %v5059
        %v5061 = vpop.f32.mrb[0].mxu0
        %v5062 = vpop.f32.mrb[0].mxu0
        %v5063 = vadd.f32 %v4966, %v5062
        %v5064 = vpop.f32.mrb[0].mxu0
        %5065 = vmatprep.mubr.bf16.mxu0 %v3448
        %5066 = vmatmul.mubr.bf16.gmra.mrb[0].mxu0 %v3447
        %v5067 = vpop.f32.mrb[0].mxu0
        %v5068 = vadd.f32 %v4971, %v5067
        %v5069 = vpop.f32.mrb[0].mxu0
        %v5070 = vpop.f32.mrb[0].mxu0
        %v5071 = vadd.f32 %v4974, %v5070
        %v5072 = vpop.f32.mrb[0].mxu0
        %5073 = vmatprep.mubr.bf16.mxu0 %v3464
        %5074 = vmatmul.mubr.bf16.gmra.mrb[0].mxu0 %v3463
        %v5075 = vpop.f32.mrb[0].mxu0
        %v5076 = vadd.f32 %v4979, %v5075
        %v5077 = vpop.f32.mrb[0].mxu0
        %v5078 = vpop.f32.mrb[0].mxu0
        %v5079 = vadd.f32 %v4982, %v5078
        %v5080 = vpop.f32.mrb[0].mxu0
        %5081 = vdwg.mxu0
        %5082 = vmatprep.subr.bf16.mxu0 0
        %5083 = vmatpush1.bf16.msra.mxu0 %v4340
        %5084 = vmatprep.subr.bf16.mxu0 0
        %5085 = vmatpush1.bf16.msra.mxu0 %v4341
        %5086 = vmatprep.subr.bf16.mxu0 0
        %5087 = vmatpush1.bf16.msra.mxu0 %v4342
        %5088 = vmatprep.subr.bf16.mxu0 0
        %5089 = vmatpush1.bf16.msra.mxu0 %v4343
        %5090 = vmatprep.subr.bf16.mxu0 0
        %5091 = vmatpush1.bf16.msra.mxu0 %v4344
        %5092 = vmatprep.subr.bf16.mxu0 0
        %5093 = vmatpush1.bf16.msra.mxu0 %v4345
        %5094 = vmatprep.subr.bf16.mxu0 0
        %5095 = vmatpush1.bf16.msra.mxu0 %v4346
        %5096 = vmatprep.subr.bf16.mxu0 0
        %5097 = vmatpush1.bf16.msra.mxu0 %v4347
        %5098 = vmatprep.subr.bf16.mxu0 0
        %5099 = vmatpush1.bf16.msra.mxu0 %v4348
        %5100 = vmatprep.subr.bf16.mxu0 0
        %5101 = vmatpush1.bf16.msra.mxu0 %v4349
        %5102 = vmatprep.subr.bf16.mxu0 0
        %5103 = vmatpush1.bf16.msra.mxu0 %v4350
        %5104 = vmatprep.subr.bf16.mxu0 0
        %5105 = vmatpush1.bf16.msra.mxu0 %v4351
        %5106 = vmatprep.subr.bf16.mxu0 0
        %5107 = vmatpush1.bf16.msra.mxu0 %v4352
        %5108 = vmatprep.subr.bf16.mxu0 0
        %5109 = vmatpush1.bf16.msra.mxu0 %v4353
        %5110 = vmatprep.subr.bf16.mxu0 0
        %5111 = vmatpush1.bf16.msra.mxu0 %v4354
        %5112 = vmatprep.subr.bf16.mxu0 0
        %5113 = vmatpush1.bf16.msra.mxu0 %v4355
        %5114 = vmatprep.mubr.bf16.mxu0 %v3354
        %5115 = vmatmul.mubr.bf16.gmra.mrb[0].mxu0 %v3353
        %v5116 = vpop.f32.mrb[0].mxu0
        %v5117 = vadd.f32 %v5020, %v5116
        %v5118 = vpop.f32.mrb[0].mxu0
        %v5119 = vpop.f32.mrb[0].mxu0
        %v5120 = vadd.f32 %v5023, %v5119
        %v5121 = vpop.f32.mrb[0].mxu0
        %5122 = vmatprep.mubr.bf16.mxu0 %v3370
        %5123 = vmatmul.mubr.bf16.gmra.mrb[0].mxu0 %v3369
        %v5124 = vpop.f32.mrb[0].mxu0
        %v5125 = vadd.f32 %v5028, %v5124
        %v5126 = vpop.f32.mrb[0].mxu0
        %v5127 = vpop.f32.mrb[0].mxu0
        %v5128 = vadd.f32 %v5031, %v5127
        %v5129 = vpop.f32.mrb[0].mxu0
        %5130 = vmatprep.mubr.bf16.mxu0 %v3386
        %5131 = vmatmul.mubr.bf16.gmra.mrb[0].mxu0 %v3385
        %v5132 = vpop.f32.mrb[0].mxu0
        %v5133 = vadd.f32 %v5036, %v5132
        %v5134 = vpop.f32.mrb[0].mxu0
        %v5135 = vpop.f32.mrb[0].mxu0
        %v5136 = vadd.f32 %v5039, %v5135
        %v5137 = vpop.f32.mrb[0].mxu0
        %5138 = vmatprep.mubr.bf16.mxu0 %v3402
        %5139 = vmatmul.mubr.bf16.gmra.mrb[0].mxu0 %v3401
        %v5140 = vpop.f32.mrb[0].mxu0
        %v5141 = vadd.f32 %v5044, %v5140
        %v5142 = vpop.f32.mrb[0].mxu0
        %v5143 = vpop.f32.mrb[0].mxu0
        %v5144 = vadd.f32 %v5047, %v5143
        %v5145 = vpop.f32.mrb[0].mxu0
        %5146 = vmatprep.mubr.bf16.mxu0 %v3418
        %5147 = vmatmul.mubr.bf16.gmra.mrb[0].mxu0 %v3417
        %v5148 = vpop.f32.mrb[0].mxu0
        %v5149 = vadd.f32 %v5052, %v5148
        %v5150 = vpop.f32.mrb[0].mxu0
        %v5151 = vpop.f32.mrb[0].mxu0
        %v5152 = vadd.f32 %v5055, %v5151
        %v5153 = vpop.f32.mrb[0].mxu0
        %5154 = vmatprep.mubr.bf16.mxu0 %v3434
        %5155 = vmatmul.mubr.bf16.gmra.mrb[0].mxu0 %v3433
        %v5156 = vpop.f32.mrb[0].mxu0
        %v5157 = vadd.f32 %v5060, %v5156
        %v5158 = vpop.f32.mrb[0].mxu0
        %v5159 = vpop.f32.mrb[0].mxu0
        %v5160 = vadd.f32 %v5063, %v5159
        %v5161 = vpop.f32.mrb[0].mxu0
        %5162 = vmatprep.mubr.bf16.mxu0 %v3450
        %5163 = vmatmul.mubr.bf16.gmra.mrb[0].mxu0 %v3449
        %v5164 = vpop.f32.mrb[0].mxu0
        %v5165 = vadd.f32 %v5068, %v5164
        %v5166 = vpop.f32.mrb[0].mxu0
        %v5167 = vpop.f32.mrb[0].mxu0
        %v5168 = vadd.f32 %v5071, %v5167
        %v5169 = vpop.f32.mrb[0].mxu0
        %5170 = vmatprep.mubr.bf16.mxu0 %v3466
        %5171 = vmatmul.mubr.bf16.gmra.mrb[0].mxu0 %v3465
        %v5172 = vpop.f32.mrb[0].mxu0
        %v5173 = vadd.f32 %v5076, %v5172
        %v5174 = vpop.f32.mrb[0].mxu0
        %v5175 = vpop.f32.mrb[0].mxu0
        %v5176 = vadd.f32 %v5079, %v5175
        %v5177 = vpop.f32.mrb[0].mxu0
        %5178 = vdwg.mxu0
        %5179 = vmatprep.subr.bf16.mxu0 0
        %5180 = vmatpush1.bf16.msra.mxu0 %v4356
        %5181 = vmatprep.subr.bf16.mxu0 0
        %5182 = vmatpush1.bf16.msra.mxu0 %v4357
        %5183 = vmatprep.subr.bf16.mxu0 0
        %5184 = vmatpush1.bf16.msra.mxu0 %v4358
        %5185 = vmatprep.subr.bf16.mxu0 0
        %5186 = vmatpush1.bf16.msra.mxu0 %v4359
        %5187 = vmatprep.subr.bf16.mxu0 0
        %5188 = vmatpush1.bf16.msra.mxu0 %v4360
        %5189 = vmatprep.subr.bf16.mxu0 0
        %5190 = vmatpush1.bf16.msra.mxu0 %v4361
        %5191 = vmatprep.subr.bf16.mxu0 0
        %5192 = vmatpush1.bf16.msra.mxu0 %v4362
        %5193 = vmatprep.subr.bf16.mxu0 0
        %5194 = vmatpush1.bf16.msra.mxu0 %v4363
        %5195 = vmatprep.subr.bf16.mxu0 0
        %5196 = vmatpush1.bf16.msra.mxu0 %v4364
        %5197 = vmatprep.subr.bf16.mxu0 0
        %5198 = vmatpush1.bf16.msra.mxu0 %v4365
        %5199 = vmatprep.subr.bf16.mxu0 0
        %5200 = vmatpush1.bf16.msra.mxu0 %v4366
        %5201 = vmatprep.subr.bf16.mxu0 0
        %5202 = vmatpush1.bf16.msra.mxu0 %v4367
        %5203 = vmatprep.subr.bf16.mxu0 0
        %5204 = vmatpush1.bf16.msra.mxu0 %v4368
        %5205 = vmatprep.subr.bf16.mxu0 0
        %5206 = vmatpush1.bf16.msra.mxu0 %v4369
        %5207 = vmatprep.subr.bf16.mxu0 0
        %5208 = vmatpush1.bf16.msra.mxu0 %v4370
        %5209 = vmatprep.subr.bf16.mxu0 0
        %5210 = vmatpush1.bf16.msra.mxu0 %v4371
        %5211 = vmatprep.mubr.bf16.mxu0 %v3356
        %5212 = vmatmul.mubr.bf16.gmra.mrb[0].mxu0 %v3355
        %v5213 = vpop.f32.mrb[0].mxu0
        %v5214 = vadd.f32 %v5117, %v5213
        %v5215 = vpop.f32.mrb[0].mxu0
        %v5216 = vpop.f32.mrb[0].mxu0
        %v5217 = vadd.f32 %v5120, %v5216
        %v5218 = vpop.f32.mrb[0].mxu0
        %5219 = vmatprep.mubr.bf16.mxu0 %v3372
        %5220 = vmatmul.mubr.bf16.gmra.mrb[0].mxu0 %v3371
        %v5221 = vpop.f32.mrb[0].mxu0
        %v5222 = vadd.f32 %v5125, %v5221
        %v5223 = vpop.f32.mrb[0].mxu0
        %v5224 = vpop.f32.mrb[0].mxu0
        %v5225 = vadd.f32 %v5128, %v5224
        %v5226 = vpop.f32.mrb[0].mxu0
        %5227 = vmatprep.mubr.bf16.mxu0 %v3388
        %5228 = vmatmul.mubr.bf16.gmra.mrb[0].mxu0 %v3387
        %v5229 = vpop.f32.mrb[0].mxu0
        %v5230 = vadd.f32 %v5133, %v5229
        %v5231 = vpop.f32.mrb[0].mxu0
        %v5232 = vpop.f32.mrb[0].mxu0
        %v5233 = vadd.f32 %v5136, %v5232
        %v5234 = vpop.f32.mrb[0].mxu0
        %5235 = vmatprep.mubr.bf16.mxu0 %v3404
        %5236 = vmatmul.mubr.bf16.gmra.mrb[0].mxu0 %v3403
        %v5237 = vpop.f32.mrb[0].mxu0
        %v5238 = vadd.f32 %v5141, %v5237
        %v5239 = vpop.f32.mrb[0].mxu0
        %v5240 = vpop.f32.mrb[0].mxu0
        %v5241 = vadd.f32 %v5144, %v5240
        %v5242 = vpop.f32.mrb[0].mxu0
        %5243 = vmatprep.mubr.bf16.mxu0 %v3420
        %5244 = vmatmul.mubr.bf16.gmra.mrb[0].mxu0 %v3419
        %v5245 = vpop.f32.mrb[0].mxu0
        %v5246 = vadd.f32 %v5149, %v5245
        %v5247 = vpop.f32.mrb[0].mxu0
        %v5248 = vpop.f32.mrb[0].mxu0
        %v5249 = vadd.f32 %v5152, %v5248
        %v5250 = vpop.f32.mrb[0].mxu0
        %5251 = vmatprep.mubr.bf16.mxu0 %v3436
        %5252 = vmatmul.mubr.bf16.gmra.mrb[0].mxu0 %v3435
        %v5253 = vpop.f32.mrb[0].mxu0
        %v5254 = vadd.f32 %v5157, %v5253
        %v5255 = vpop.f32.mrb[0].mxu0
        %v5256 = vpop.f32.mrb[0].mxu0
        %v5257 = vadd.f32 %v5160, %v5256
        %v5258 = vpop.f32.mrb[0].mxu0
        %5259 = vmatprep.mubr.bf16.mxu0 %v3452
        %5260 = vmatmul.mubr.bf16.gmra.mrb[0].mxu0 %v3451
        %v5261 = vpop.f32.mrb[0].mxu0
        %v5262 = vadd.f32 %v5165, %v5261
        %v5263 = vpop.f32.mrb[0].mxu0
        %v5264 = vpop.f32.mrb[0].mxu0
        %v5265 = vadd.f32 %v5168, %v5264
        %v5266 = vpop.f32.mrb[0].mxu0
        %5267 = vmatprep.mubr.bf16.mxu0 %v3468
        %5268 = vmatmul.mubr.bf16.gmra.mrb[0].mxu0 %v3467
        %v5269 = vpop.f32.mrb[0].mxu0
        %v5270 = vadd.f32 %v5173, %v5269
        %v5271 = vpop.f32.mrb[0].mxu0
        %v5272 = vpop.f32.mrb[0].mxu0
        %v5273 = vadd.f32 %v5176, %v5272
        %v5274 = vpop.f32.mrb[0].mxu0
        %5275 = vdwg.mxu0
        %v5276 = vadd.f32 %v1305, %v5214
        %v5277 = vadd.f32 %v1306, %v5217
        %v5278 = vadd.f32 %v1307, %v5222
        %v5279 = vadd.f32 %v1308, %v5225
        %v5280 = vadd.f32 %v1309, %v5230
        %v5281 = vadd.f32 %v1310, %v5233
        %v5282 = vadd.f32 %v1311, %v5238
        %v5283 = vadd.f32 %v1312, %v5241
        %v5284 = vadd.f32 %v1313, %v5246
        %v5285 = vadd.f32 %v1314, %v5249
        %v5286 = vadd.f32 %v1315, %v5254
        %v5287 = vadd.f32 %v1316, %v5257
        %v5288 = vadd.f32 %v1317, %v5262
        %v5289 = vadd.f32 %v1318, %v5265
        %v5290 = vadd.f32 %v1319, %v5270
        %v5291 = vadd.f32 %v1320, %v5273
        %v5292 = vld [vmem:[%s11] sm:$0x1]
        %v5293 = vld [vmem:[%s12] sm:$0x1]
        %5294 = vadd.xlane.f32.xlu0 %v5276
        %v5295 = vpop.xlane.xlu0 %5294
        %5296 = vadd.xlane.f32.xlu0 %v5277
        %v5297 = vpop.xlane.xlu0 %5296
        %5298 = vadd.xlane.f32.xlu0 %v5278
        %v5299 = vpop.xlane.xlu0 %5298
        %5300 = vadd.xlane.f32.xlu0 %v5279
        %v5301 = vpop.xlane.xlu0 %5300
        %5302 = vadd.xlane.f32.xlu0 %v5280
        %v5303 = vpop.xlane.xlu0 %5302
        %5304 = vadd.xlane.f32.xlu0 %v5281
        %v5305 = vpop.xlane.xlu0 %5304
        %5306 = vadd.xlane.f32.xlu0 %v5282
        %v5307 = vpop.xlane.xlu0 %5306
        %5308 = vadd.xlane.f32.xlu0 %v5283
        %v5309 = vpop.xlane.xlu0 %5308
        %5310 = vadd.xlane.f32.xlu0 %v5284
        %v5311 = vpop.xlane.xlu0 %5310
        %5312 = vadd.xlane.f32.xlu0 %v5285
        %v5313 = vpop.xlane.xlu0 %5312
        %5314 = vadd.xlane.f32.xlu0 %v5286
        %v5315 = vpop.xlane.xlu0 %5314
        %5316 = vadd.xlane.f32.xlu0 %v5287
        %v5317 = vpop.xlane.xlu0 %5316
        %5318 = vadd.xlane.f32.xlu0 %v5288
        %v5319 = vpop.xlane.xlu0 %5318
        %5320 = vadd.xlane.f32.xlu0 %v5289
        %v5321 = vpop.xlane.xlu0 %5320
        %5322 = vadd.xlane.f32.xlu0 %v5290
        %v5323 = vpop.xlane.xlu0 %5322
        %5324 = vadd.xlane.f32.xlu0 %v5291
        %v5325 = vpop.xlane.xlu0 %5324
        %v5326 = vmul.f32 %v5295, %v1132
        %v5327 = vmul.f32 %v5297, %v1132
        %v5328 = vmul.f32 %v5299, %v1132
        %v5329 = vmul.f32 %v5301, %v1132
        %v5330 = vmul.f32 %v5303, %v1132
        %v5331 = vmul.f32 %v5305, %v1132
        %v5332 = vmul.f32 %v5307, %v1132
        %v5333 = vmul.f32 %v5309, %v1132
        %v5334 = vmul.f32 %v5311, %v1132
        %v5335 = vmul.f32 %v5313, %v1132
        %v5336 = vmul.f32 %v5315, %v1132
        %v5337 = vmul.f32 %v5317, %v1132
        %v5338 = vmul.f32 %v5319, %v1132
        %v5339 = vmul.f32 %v5321, %v1132
        %v5340 = vmul.f32 %v5323, %v1132
        %v5341 = vmul.f32 %v5325, %v1132
        %v5342 = vsub.f32 %v5276, %v5326
        %v5343 = vsub.f32 %v5277, %v5327
        %v5344 = vsub.f32 %v5278, %v5328
        %v5345 = vsub.f32 %v5279, %v5329
        %v5346 = vsub.f32 %v5280, %v5330
        %v5347 = vsub.f32 %v5281, %v5331
        %v5348 = vsub.f32 %v5282, %v5332
        %v5349 = vsub.f32 %v5283, %v5333
        %v5350 = vsub.f32 %v5284, %v5334
        %v5351 = vsub.f32 %v5285, %v5335
        %v5352 = vsub.f32 %v5286, %v5336
        %v5353 = vsub.f32 %v5287, %v5337
        %v5354 = vsub.f32 %v5288, %v5338
        %v5355 = vsub.f32 %v5289, %v5339
        %v5356 = vsub.f32 %v5290, %v5340
        %v5357 = vsub.f32 %v5291, %v5341
        %v5358 = vmul.f32 %v5342, %v5342
        %v5359 = vmul.f32 %v5343, %v5343
        %v5360 = vmul.f32 %v5344, %v5344
        %v5361 = vmul.f32 %v5345, %v5345
        %v5362 = vmul.f32 %v5346, %v5346
        %v5363 = vmul.f32 %v5347, %v5347
        %v5364 = vmul.f32 %v5348, %v5348
        %v5365 = vmul.f32 %v5349, %v5349
        %v5366 = vmul.f32 %v5350, %v5350
        %v5367 = vmul.f32 %v5351, %v5351
        %v5368 = vmul.f32 %v5352, %v5352
        %v5369 = vmul.f32 %v5353, %v5353
        %v5370 = vmul.f32 %v5354, %v5354
        %v5371 = vmul.f32 %v5355, %v5355
        %v5372 = vmul.f32 %v5356, %v5356
        %v5373 = vmul.f32 %v5357, %v5357
        %5374 = vadd.xlane.f32.xlu0 %v5358
        %v5375 = vpop.xlane.xlu0 %5374
        %5376 = vadd.xlane.f32.xlu0 %v5359
        %v5377 = vpop.xlane.xlu0 %5376
        %5378 = vadd.xlane.f32.xlu0 %v5360
        %v5379 = vpop.xlane.xlu0 %5378
        %5380 = vadd.xlane.f32.xlu0 %v5361
        %v5381 = vpop.xlane.xlu0 %5380
        %5382 = vadd.xlane.f32.xlu0 %v5362
        %v5383 = vpop.xlane.xlu0 %5382
        %5384 = vadd.xlane.f32.xlu0 %v5363
        %v5385 = vpop.xlane.xlu0 %5384
        %5386 = vadd.xlane.f32.xlu0 %v5364
        %v5387 = vpop.xlane.xlu0 %5386
        %5388 = vadd.xlane.f32.xlu0 %v5365
        %v5389 = vpop.xlane.xlu0 %5388
        %5390 = vadd.xlane.f32.xlu0 %v5366
        %v5391 = vpop.xlane.xlu0 %5390
        %5392 = vadd.xlane.f32.xlu0 %v5367
        %v5393 = vpop.xlane.xlu0 %5392
        %5394 = vadd.xlane.f32.xlu0 %v5368
        %v5395 = vpop.xlane.xlu0 %5394
        %5396 = vadd.xlane.f32.xlu0 %v5369
        %v5397 = vpop.xlane.xlu0 %5396
        %5398 = vadd.xlane.f32.xlu0 %v5370
        %v5399 = vpop.xlane.xlu0 %5398
        %5400 = vadd.xlane.f32.xlu0 %v5371
        %v5401 = vpop.xlane.xlu0 %5400
        %5402 = vadd.xlane.f32.xlu0 %v5372
        %v5403 = vpop.xlane.xlu0 %5402
        %5404 = vadd.xlane.f32.xlu0 %v5373
        %v5405 = vpop.xlane.xlu0 %5404
        %v5406 = vmul.f32 %v5375, %v1132
        %v5407 = vmul.f32 %v5377, %v1132
        %v5408 = vmul.f32 %v5379, %v1132
        %v5409 = vmul.f32 %v5381, %v1132
        %v5410 = vmul.f32 %v5383, %v1132
        %v5411 = vmul.f32 %v5385, %v1132
        %v5412 = vmul.f32 %v5387, %v1132
        %v5413 = vmul.f32 %v5389, %v1132
        %v5414 = vmul.f32 %v5391, %v1132
        %v5415 = vmul.f32 %v5393, %v1132
        %v5416 = vmul.f32 %v5395, %v1132
        %v5417 = vmul.f32 %v5397, %v1132
        %v5418 = vmul.f32 %v5399, %v1132
        %v5419 = vmul.f32 %v5401, %v1132
        %v5420 = vmul.f32 %v5403, %v1132
        %v5421 = vmul.f32 %v5405, %v1132
        %v5422 = vadd.f32 %v5406, 1e-05
        %v5423 = vadd.f32 %v5407, 1e-05
        %v5424 = vadd.f32 %v5408, 1e-05
        %v5425 = vadd.f32 %v5409, 1e-05
        %v5426 = vadd.f32 %v5410, 1e-05
        %v5427 = vadd.f32 %v5411, 1e-05
        %v5428 = vadd.f32 %v5412, 1e-05
        %v5429 = vadd.f32 %v5413, 1e-05
        %v5430 = vadd.f32 %v5414, 1e-05
        %v5431 = vadd.f32 %v5415, 1e-05
        %v5432 = vadd.f32 %v5416, 1e-05
        %v5433 = vadd.f32 %v5417, 1e-05
        %v5434 = vadd.f32 %v5418, 1e-05
        %v5435 = vadd.f32 %v5419, 1e-05
        %v5436 = vadd.f32 %v5420, 1e-05
        %v5437 = vadd.f32 %v5421, 1e-05
        %v5438 = vrsqrt.pop %v5422
        %v5439 = vrsqrt.pop %v5423
        %v5440 = vrsqrt.pop %v5424
        %v5441 = vrsqrt.pop %v5425
        %v5442 = vrsqrt.pop %v5426
        %v5443 = vrsqrt.pop %v5427
        %v5444 = vrsqrt.pop %v5428
        %v5445 = vrsqrt.pop %v5429
        %v5446 = vrsqrt.pop %v5430
        %v5447 = vrsqrt.pop %v5431
        %v5448 = vrsqrt.pop %v5432
        %v5449 = vrsqrt.pop %v5433
        %v5450 = vrsqrt.pop %v5434
        %v5451 = vrsqrt.pop %v5435
        %v5452 = vrsqrt.pop %v5436
        %v5453 = vrsqrt.pop %v5437
        %v5454 = vmul.f32 %v5342, %v5438
        %v5455 = vmul.f32 %v5343, %v5439
        %v5456 = vmul.f32 %v5344, %v5440
        %v5457 = vmul.f32 %v5345, %v5441
        %v5458 = vmul.f32 %v5346, %v5442
        %v5459 = vmul.f32 %v5347, %v5443
        %v5460 = vmul.f32 %v5348, %v5444
        %v5461 = vmul.f32 %v5349, %v5445
        %v5462 = vmul.f32 %v5350, %v5446
        %v5463 = vmul.f32 %v5351, %v5447
        %v5464 = vmul.f32 %v5352, %v5448
        %v5465 = vmul.f32 %v5353, %v5449
        %v5466 = vmul.f32 %v5354, %v5450
        %v5467 = vmul.f32 %v5355, %v5451
        %v5468 = vmul.f32 %v5356, %v5452
        %v5469 = vmul.f32 %v5357, %v5453
        %v5471 = vlaneseq
        %v5472 = vshrl.u32 %v5471, 7
        %v5473 = vsub.s32 0, %v5472
        %v5474 = vrot.slane %v5292, %v5473
        %v5476 = vmul.f32 %v5454, %v5474
        %v5477 = vmul.f32 %v5455, %v5474
        %v5478 = vmul.f32 %v5456, %v5474
        %v5479 = vmul.f32 %v5457, %v5474
        %v5480 = vmul.f32 %v5458, %v5474
        %v5481 = vmul.f32 %v5459, %v5474
        %v5482 = vmul.f32 %v5460, %v5474
        %v5483 = vmul.f32 %v5461, %v5474
        %v5484 = vmul.f32 %v5462, %v5474
        %v5485 = vmul.f32 %v5463, %v5474
        %v5486 = vmul.f32 %v5464, %v5474
        %v5487 = vmul.f32 %v5465, %v5474
        %v5488 = vmul.f32 %v5466, %v5474
        %v5489 = vmul.f32 %v5467, %v5474
        %v5490 = vmul.f32 %v5468, %v5474
        %v5491 = vmul.f32 %v5469, %v5474
        %v5493 = vlaneseq
        %v5494 = vshrl.u32 %v5493, 7
        %v5495 = vsub.s32 0, %v5494
        %v5496 = vrot.slane %v5293, %v5495
        %v5498 = vadd.f32 %v5476, %v5496
        %v5499 = vadd.f32 %v5477, %v5496
        %v5500 = vadd.f32 %v5478, %v5496
        %v5501 = vadd.f32 %v5479, %v5496
        %v5502 = vadd.f32 %v5480, %v5496
        %v5503 = vadd.f32 %v5481, %v5496
        %v5504 = vadd.f32 %v5482, %v5496
        %v5505 = vadd.f32 %v5483, %v5496
        %v5506 = vadd.f32 %v5484, %v5496
        %v5507 = vadd.f32 %v5485, %v5496
        %v5508 = vadd.f32 %v5486, %v5496
        %v5509 = vadd.f32 %v5487, %v5496
        %v5510 = vadd.f32 %v5488, %v5496
        %v5511 = vadd.f32 %v5489, %v5496
        %v5512 = vadd.f32 %v5490, %v5496
        %v5513 = vadd.f32 %v5491, %v5496
        %v5514 = vpack.c.bf16 %v5499, %v5498
        %v5515 = vpack.c.bf16 %v5501, %v5500
        %v5516 = vpack.c.bf16 %v5503, %v5502
        %v5517 = vpack.c.bf16 %v5505, %v5504
        %v5518 = vpack.c.bf16 %v5507, %v5506
        %v5519 = vpack.c.bf16 %v5509, %v5508
        %v5520 = vpack.c.bf16 %v5511, %v5510
        %v5521 = vpack.c.bf16 %v5513, %v5512
        %s5522 = scalar_lea.vmem [#allocation8], 64
        %v5523 = vld [vmem:[%s5522] sm:$0xf]
        %v5524 = vld [vmem:[%s5522 + $0x4] sm:$0xf]
        %v5525 = vld [vmem:[%s5522 + $0x8] sm:$0xf]
        %v5526 = vld [vmem:[%s5522 + $0xc] sm:$0xf]
        %v5527 = vld [vmem:[%s5522 + $0x10] sm:$0xf]
        %v5528 = vld [vmem:[%s5522 + $0x14] sm:$0xf]
        %v5529 = vld [vmem:[%s5522 + $0x18] sm:$0xf]
        %v5530 = vld [vmem:[%s5522 + $0x1c] sm:$0xf]
        %v5531 = vld [vmem:[%s5522 + $0x20] sm:$0xf]
        %v5532 = vld [vmem:[%s5522 + $0x24] sm:$0xf]
        %v5533 = vld [vmem:[%s5522 + $0x28] sm:$0xf]
        %v5534 = vld [vmem:[%s5522 + $0x2c] sm:$0xf]
        %v5535 = vld [vmem:[%s5522 + $0x30] sm:$0xf]
        %v5536 = vld [vmem:[%s5522 + $0x34] sm:$0xf]
        %v5537 = vld [vmem:[%s5522 + $0x38] sm:$0xf]
        %v5538 = vld [vmem:[%s5522 + $0x3c] sm:$0xf]
        %s5539 = scalar_lea.vmem %s4, 1
        %v5540 = vld [vmem:[%s5539] sm:$0x1]
        %v5542 = vlaneseq
        %v5543 = vshrl.u32 %v5542, 7
        %v5544 = vsub.s32 0, %v5543
        %v5545 = vrot.slane %v5540, %v5544
        %v5563 = vunpack.c.l.b16 %v5523
        %v5564 = vunpack.c.l.b16 %v5524
        %v5565 = vunpack.c.l.b16 %v5525
        %v5566 = vunpack.c.l.b16 %v5526
        %v5567 = vunpack.c.l.b16 %v5527
        %v5568 = vunpack.c.l.b16 %v5528
        %v5569 = vunpack.c.l.b16 %v5529
        %v5570 = vunpack.c.l.b16 %v5530
        %v5571 = vunpack.c.l.b16 %v5531
        %v5572 = vunpack.c.l.b16 %v5532
        %v5573 = vunpack.c.l.b16 %v5533
        %v5574 = vunpack.c.l.b16 %v5534
        %v5575 = vunpack.c.l.b16 %v5535
        %v5576 = vunpack.c.l.b16 %v5536
        %v5577 = vunpack.c.l.b16 %v5537
        %v5578 = vunpack.c.l.b16 %v5538
        %v5579 = vpack.c.b16 %v5564, %v5563
        %v5580 = vpack.c.b16 %v5566, %v5565
        %v5581 = vpack.c.b16 %v5568, %v5567
        %v5582 = vpack.c.b16 %v5570, %v5569
        %v5583 = vpack.c.b16 %v5572, %v5571
        %v5584 = vpack.c.b16 %v5574, %v5573
        %v5585 = vpack.c.b16 %v5576, %v5575
        %v5586 = vpack.c.b16 %v5578, %v5577
        %5595 = vmatprep.subr.bf16.mxu0 0
        %5596 = vmatpush1.bf16.msra.mxu0 %v5579
        %5597 = vmatprep.subr.bf16.mxu0 0
        %5598 = vmatpush1.bf16.msra.mxu0 %v5580
        %5599 = vmatprep.subr.bf16.mxu0 0
        %5600 = vmatpush1.bf16.msra.mxu0 %v5581
        %5601 = vmatprep.subr.bf16.mxu0 0
        %5602 = vmatpush1.bf16.msra.mxu0 %v5582
        %5603 = vmatprep.subr.bf16.mxu0 0
        %5604 = vmatpush1.bf16.msra.mxu0 %v5583
        %5605 = vmatprep.subr.bf16.mxu0 0
        %5606 = vmatpush1.bf16.msra.mxu0 %v5584
        %5607 = vmatprep.subr.bf16.mxu0 0
        %5608 = vmatpush1.bf16.msra.mxu0 %v5585
        %5609 = vmatprep.subr.bf16.mxu0 0
        %5610 = vmatpush1.bf16.msra.mxu0 %v5586
        %5611 = vmatprep.subr.bf16.mxu0 0
        %5612 = vmatpush1.bf16.msra.mxu0 0
        %5613 = vmatprep.subr.bf16.mxu0 0
        %5614 = vmatpush1.bf16.msra.mxu0 0
        %5615 = vmatprep.subr.bf16.mxu0 0
        %5616 = vmatpush1.bf16.msra.mxu0 0
        %5617 = vmatprep.subr.bf16.mxu0 0
        %5618 = vmatpush1.bf16.msra.mxu0 0
        %5619 = vmatprep.subr.bf16.mxu0 0
        %5620 = vmatpush1.bf16.msra.mxu0 0
        %5621 = vmatprep.subr.bf16.mxu0 0
        %5622 = vmatpush1.bf16.msra.mxu0 0
        %5623 = vmatprep.subr.bf16.mxu0 0
        %5624 = vmatpush1.bf16.msra.mxu0 0
        %5625 = vmatprep.subr.bf16.mxu0 0
        %5626 = vmatpush1.bf16.msra.mxu0 0
        %5627 = vmatprep.mubr.bf16.mxu0 0
        %5628 = vmatmul.mubr.bf16.gmra.mrb[0].mxu0 %v5514
        %v5629 = vpop.f32.mrb[0].mxu0
        %v5630 = vadd.f32 %v5545, %v5629
        %v5631 = vpop.f32.mrb[0].mxu0
        %v5632 = vpop.f32.mrb[0].mxu0
        %v5633 = vadd.f32 %v5545, %v5632
        %v5634 = vpop.f32.mrb[0].mxu0
        %5635 = vmatprep.mubr.bf16.mxu0 0
        %5636 = vmatmul.mubr.bf16.gmra.mrb[0].mxu0 %v5515
        %v5637 = vpop.f32.mrb[0].mxu0
        %v5638 = vadd.f32 %v5545, %v5637
        %v5639 = vpop.f32.mrb[0].mxu0
        %v5640 = vpop.f32.mrb[0].mxu0
        %v5641 = vadd.f32 %v5545, %v5640
        %v5642 = vpop.f32.mrb[0].mxu0
        %5643 = vmatprep.mubr.bf16.mxu0 0
        %5644 = vmatmul.mubr.bf16.gmra.mrb[0].mxu0 %v5516
        %v5645 = vpop.f32.mrb[0].mxu0
        %v5646 = vadd.f32 %v5545, %v5645
        %v5647 = vpop.f32.mrb[0].mxu0
        %v5648 = vpop.f32.mrb[0].mxu0
        %v5649 = vadd.f32 %v5545, %v5648
        %v5650 = vpop.f32.mrb[0].mxu0
        %5651 = vmatprep.mubr.bf16.mxu0 0
        %5652 = vmatmul.mubr.bf16.gmra.mrb[0].mxu0 %v5517
        %v5653 = vpop.f32.mrb[0].mxu0
        %v5654 = vadd.f32 %v5545, %v5653
        %v5655 = vpop.f32.mrb[0].mxu0
        %v5656 = vpop.f32.mrb[0].mxu0
        %v5657 = vadd.f32 %v5545, %v5656
        %v5658 = vpop.f32.mrb[0].mxu0
        %5659 = vmatprep.mubr.bf16.mxu0 0
        %5660 = vmatmul.mubr.bf16.gmra.mrb[0].mxu0 %v5518
        %v5661 = vpop.f32.mrb[0].mxu0
        %v5662 = vadd.f32 %v5545, %v5661
        %v5663 = vpop.f32.mrb[0].mxu0
        %v5664 = vpop.f32.mrb[0].mxu0
        %v5665 = vadd.f32 %v5545, %v5664
        %v5666 = vpop.f32.mrb[0].mxu0
        %5667 = vmatprep.mubr.bf16.mxu0 0
        %5668 = vmatmul.mubr.bf16.gmra.mrb[0].mxu0 %v5519
        %v5669 = vpop.f32.mrb[0].mxu0
        %v5670 = vadd.f32 %v5545, %v5669
        %v5671 = vpop.f32.mrb[0].mxu0
        %v5672 = vpop.f32.mrb[0].mxu0
        %v5673 = vadd.f32 %v5545, %v5672
        %v5674 = vpop.f32.mrb[0].mxu0
        %5675 = vmatprep.mubr.bf16.mxu0 0
        %5676 = vmatmul.mubr.bf16.gmra.mrb[0].mxu0 %v5520
        %v5677 = vpop.f32.mrb[0].mxu0
        %v5678 = vadd.f32 %v5545, %v5677
        %v5679 = vpop.f32.mrb[0].mxu0
        %v5680 = vpop.f32.mrb[0].mxu0
        %v5681 = vadd.f32 %v5545, %v5680
        %v5682 = vpop.f32.mrb[0].mxu0
        %5683 = vmatprep.mubr.bf16.mxu0 0
        %5684 = vmatmul.mubr.bf16.gmra.mrb[0].mxu0 %v5521
        %v5685 = vpop.f32.mrb[0].mxu0
        %v5686 = vadd.f32 %v5545, %v5685
        %v5687 = vpop.f32.mrb[0].mxu0
        %v5688 = vpop.f32.mrb[0].mxu0
        %v5689 = vadd.f32 %v5545, %v5688
        %v5690 = vpop.f32.mrb[0].mxu0
        %5691 = vdwg.mxu0
        %v5692 = vadd.f32 %v5498, %v5630
        %v5693 = vadd.f32 %v5499, %v5633
        %v5694 = vadd.f32 %v5500, %v5638
        %v5695 = vadd.f32 %v5501, %v5641
        %v5696 = vadd.f32 %v5502, %v5646
        %v5697 = vadd.f32 %v5503, %v5649
        %v5698 = vadd.f32 %v5504, %v5654
        %v5699 = vadd.f32 %v5505, %v5657
        %v5700 = vadd.f32 %v5506, %v5662
        %v5701 = vadd.f32 %v5507, %v5665
        %v5702 = vadd.f32 %v5508, %v5670
        %v5703 = vadd.f32 %v5509, %v5673
        %v5704 = vadd.f32 %v5510, %v5678
        %v5705 = vadd.f32 %v5511, %v5681
        %v5706 = vadd.f32 %v5512, %v5686
        %v5707 = vadd.f32 %v5513, %v5689
        %s5708 = scalar_lea.vmem [#allocation10], 1
        %v5709 = vld [vmem:[%s5708] sm:$0x1]
        %s5710 = scalar_lea.vmem [#allocation11], 1
        %v5711 = vld [vmem:[%s5710] sm:$0x1]
        %5712 = vadd.xlane.f32.xlu0 %v5692
        %v5713 = vpop.xlane.xlu0 %5712
        %5714 = vadd.xlane.f32.xlu0 %v5693
        %v5715 = vpop.xlane.xlu0 %5714
        %5716 = vadd.xlane.f32.xlu0 %v5694
        %v5717 = vpop.xlane.xlu0 %5716
        %5718 = vadd.xlane.f32.xlu0 %v5695
        %v5719 = vpop.xlane.xlu0 %5718
        %5720 = vadd.xlane.f32.xlu0 %v5696
        %v5721 = vpop.xlane.xlu0 %5720
        %5722 = vadd.xlane.f32.xlu0 %v5697
        %v5723 = vpop.xlane.xlu0 %5722
        %5724 = vadd.xlane.f32.xlu0 %v5698
        %v5725 = vpop.xlane.xlu0 %5724
        %5726 = vadd.xlane.f32.xlu0 %v5699
        %v5727 = vpop.xlane.xlu0 %5726
        %5728 = vadd.xlane.f32.xlu0 %v5700
        %v5729 = vpop.xlane.xlu0 %5728
        %5730 = vadd.xlane.f32.xlu0 %v5701
        %v5731 = vpop.xlane.xlu0 %5730
        %5732 = vadd.xlane.f32.xlu0 %v5702
        %v5733 = vpop.xlane.xlu0 %5732
        %5734 = vadd.xlane.f32.xlu0 %v5703
        %v5735 = vpop.xlane.xlu0 %5734
        %5736 = vadd.xlane.f32.xlu0 %v5704
        %v5737 = vpop.xlane.xlu0 %5736
        %5738 = vadd.xlane.f32.xlu0 %v5705
        %v5739 = vpop.xlane.xlu0 %5738
        %5740 = vadd.xlane.f32.xlu0 %v5706
        %v5741 = vpop.xlane.xlu0 %5740
        %5742 = vadd.xlane.f32.xlu0 %v5707
        %v5743 = vpop.xlane.xlu0 %5742
        %v5744 = vmul.f32 %v5713, %v1132
        %v5745 = vmul.f32 %v5715, %v1132
        %v5746 = vmul.f32 %v5717, %v1132
        %v5747 = vmul.f32 %v5719, %v1132
        %v5748 = vmul.f32 %v5721, %v1132
        %v5749 = vmul.f32 %v5723, %v1132
        %v5750 = vmul.f32 %v5725, %v1132
        %v5751 = vmul.f32 %v5727, %v1132
        %v5752 = vmul.f32 %v5729, %v1132
        %v5753 = vmul.f32 %v5731, %v1132
        %v5754 = vmul.f32 %v5733, %v1132
        %v5755 = vmul.f32 %v5735, %v1132
        %v5756 = vmul.f32 %v5737, %v1132
        %v5757 = vmul.f32 %v5739, %v1132
        %v5758 = vmul.f32 %v5741, %v1132
        %v5759 = vmul.f32 %v5743, %v1132
        %v5760 = vsub.f32 %v5692, %v5744
        %v5761 = vsub.f32 %v5693, %v5745
        %v5762 = vsub.f32 %v5694, %v5746
        %v5763 = vsub.f32 %v5695, %v5747
        %v5764 = vsub.f32 %v5696, %v5748
        %v5765 = vsub.f32 %v5697, %v5749
        %v5766 = vsub.f32 %v5698, %v5750
        %v5767 = vsub.f32 %v5699, %v5751
        %v5768 = vsub.f32 %v5700, %v5752
        %v5769 = vsub.f32 %v5701, %v5753
        %v5770 = vsub.f32 %v5702, %v5754
        %v5771 = vsub.f32 %v5703, %v5755
        %v5772 = vsub.f32 %v5704, %v5756
        %v5773 = vsub.f32 %v5705, %v5757
        %v5774 = vsub.f32 %v5706, %v5758
        %v5775 = vsub.f32 %v5707, %v5759
        %v5776 = vmul.f32 %v5760, %v5760
        %v5777 = vmul.f32 %v5761, %v5761
        %v5778 = vmul.f32 %v5762, %v5762
        %v5779 = vmul.f32 %v5763, %v5763
        %v5780 = vmul.f32 %v5764, %v5764
        %v5781 = vmul.f32 %v5765, %v5765
        %v5782 = vmul.f32 %v5766, %v5766
        %v5783 = vmul.f32 %v5767, %v5767
        %v5784 = vmul.f32 %v5768, %v5768
        %v5785 = vmul.f32 %v5769, %v5769
        %v5786 = vmul.f32 %v5770, %v5770
        %v5787 = vmul.f32 %v5771, %v5771
        %v5788 = vmul.f32 %v5772, %v5772
        %v5789 = vmul.f32 %v5773, %v5773
        %v5790 = vmul.f32 %v5774, %v5774
        %v5791 = vmul.f32 %v5775, %v5775
        %5792 = vadd.xlane.f32.xlu0 %v5776
        %v5793 = vpop.xlane.xlu0 %5792
        %5794 = vadd.xlane.f32.xlu0 %v5777
        %v5795 = vpop.xlane.xlu0 %5794
        %5796 = vadd.xlane.f32.xlu0 %v5778
        %v5797 = vpop.xlane.xlu0 %5796
        %5798 = vadd.xlane.f32.xlu0 %v5779
        %v5799 = vpop.xlane.xlu0 %5798
        %5800 = vadd.xlane.f32.xlu0 %v5780
        %v5801 = vpop.xlane.xlu0 %5800
        %5802 = vadd.xlane.f32.xlu0 %v5781
        %v5803 = vpop.xlane.xlu0 %5802
        %5804 = vadd.xlane.f32.xlu0 %v5782
        %v5805 = vpop.xlane.xlu0 %5804
        %5806 = vadd.xlane.f32.xlu0 %v5783
        %v5807 = vpop.xlane.xlu0 %5806
        %5808 = vadd.xlane.f32.xlu0 %v5784
        %v5809 = vpop.xlane.xlu0 %5808
        %5810 = vadd.xlane.f32.xlu0 %v5785
        %v5811 = vpop.xlane.xlu0 %5810
        %5812 = vadd.xlane.f32.xlu0 %v5786
        %v5813 = vpop.xlane.xlu0 %5812
        %5814 = vadd.xlane.f32.xlu0 %v5787
        %v5815 = vpop.xlane.xlu0 %5814
        %5816 = vadd.xlane.f32.xlu0 %v5788
        %v5817 = vpop.xlane.xlu0 %5816
        %5818 = vadd.xlane.f32.xlu0 %v5789
        %v5819 = vpop.xlane.xlu0 %5818
        %5820 = vadd.xlane.f32.xlu0 %v5790
        %v5821 = vpop.xlane.xlu0 %5820
        %5822 = vadd.xlane.f32.xlu0 %v5791
        %v5823 = vpop.xlane.xlu0 %5822
        %v5824 = vmul.f32 %v5793, %v1132
        %v5825 = vmul.f32 %v5795, %v1132
        %v5826 = vmul.f32 %v5797, %v1132
        %v5827 = vmul.f32 %v5799, %v1132
        %v5828 = vmul.f32 %v5801, %v1132
        %v5829 = vmul.f32 %v5803, %v1132
        %v5830 = vmul.f32 %v5805, %v1132
        %v5831 = vmul.f32 %v5807, %v1132
        %v5832 = vmul.f32 %v5809, %v1132
        %v5833 = vmul.f32 %v5811, %v1132
        %v5834 = vmul.f32 %v5813, %v1132
        %v5835 = vmul.f32 %v5815, %v1132
        %v5836 = vmul.f32 %v5817, %v1132
        %v5837 = vmul.f32 %v5819, %v1132
        %v5838 = vmul.f32 %v5821, %v1132
        %v5839 = vmul.f32 %v5823, %v1132
        %v5840 = vadd.f32 %v5824, 1e-05
        %v5841 = vadd.f32 %v5825, 1e-05
        %v5842 = vadd.f32 %v5826, 1e-05
        %v5843 = vadd.f32 %v5827, 1e-05
        %v5844 = vadd.f32 %v5828, 1e-05
        %v5845 = vadd.f32 %v5829, 1e-05
        %v5846 = vadd.f32 %v5830, 1e-05
        %v5847 = vadd.f32 %v5831, 1e-05
        %v5848 = vadd.f32 %v5832, 1e-05
        %v5849 = vadd.f32 %v5833, 1e-05
        %v5850 = vadd.f32 %v5834, 1e-05
        %v5851 = vadd.f32 %v5835, 1e-05
        %v5852 = vadd.f32 %v5836, 1e-05
        %v5853 = vadd.f32 %v5837, 1e-05
        %v5854 = vadd.f32 %v5838, 1e-05
        %v5855 = vadd.f32 %v5839, 1e-05
        %v5856 = vrsqrt.pop %v5840
        %v5857 = vrsqrt.pop %v5841
        %v5858 = vrsqrt.pop %v5842
        %v5859 = vrsqrt.pop %v5843
        %v5860 = vrsqrt.pop %v5844
        %v5861 = vrsqrt.pop %v5845
        %v5862 = vrsqrt.pop %v5846
        %v5863 = vrsqrt.pop %v5847
        %v5864 = vrsqrt.pop %v5848
        %v5865 = vrsqrt.pop %v5849
        %v5866 = vrsqrt.pop %v5850
        %v5867 = vrsqrt.pop %v5851
        %v5868 = vrsqrt.pop %v5852
        %v5869 = vrsqrt.pop %v5853
        %v5870 = vrsqrt.pop %v5854
        %v5871 = vrsqrt.pop %v5855
        %v5872 = vmul.f32 %v5760, %v5856
        %v5873 = vmul.f32 %v5761, %v5857
        %v5874 = vmul.f32 %v5762, %v5858
        %v5875 = vmul.f32 %v5763, %v5859
        %v5876 = vmul.f32 %v5764, %v5860
        %v5877 = vmul.f32 %v5765, %v5861
        %v5878 = vmul.f32 %v5766, %v5862
        %v5879 = vmul.f32 %v5767, %v5863
        %v5880 = vmul.f32 %v5768, %v5864
        %v5881 = vmul.f32 %v5769, %v5865
        %v5882 = vmul.f32 %v5770, %v5866
        %v5883 = vmul.f32 %v5771, %v5867
        %v5884 = vmul.f32 %v5772, %v5868
        %v5885 = vmul.f32 %v5773, %v5869
        %v5886 = vmul.f32 %v5774, %v5870
        %v5887 = vmul.f32 %v5775, %v5871
        %v5889 = vlaneseq
        %v5890 = vshrl.u32 %v5889, 7
        %v5891 = vsub.s32 0, %v5890
        %v5892 = vrot.slane %v5709, %v5891
        %v5894 = vmul.f32 %v5872, %v5892
        %v5895 = vmul.f32 %v5873, %v5892
        %v5896 = vmul.f32 %v5874, %v5892
        %v5897 = vmul.f32 %v5875, %v5892
        %v5898 = vmul.f32 %v5876, %v5892
        %v5899 = vmul.f32 %v5877, %v5892
        %v5900 = vmul.f32 %v5878, %v5892
        %v5901 = vmul.f32 %v5879, %v5892
        %v5902 = vmul.f32 %v5880, %v5892
        %v5903 = vmul.f32 %v5881, %v5892
        %v5904 = vmul.f32 %v5882, %v5892
        %v5905 = vmul.f32 %v5883, %v5892
        %v5906 = vmul.f32 %v5884, %v5892
        %v5907 = vmul.f32 %v5885, %v5892
        %v5908 = vmul.f32 %v5886, %v5892
        %v5909 = vmul.f32 %v5887, %v5892
        %v5911 = vlaneseq
        %v5912 = vshrl.u32 %v5911, 7
        %v5913 = vsub.s32 0, %v5912
        %v5914 = vrot.slane %v5711, %v5913
        %v5916 = vadd.f32 %v5894, %v5914
        %v5917 = vadd.f32 %v5895, %v5914
        %v5918 = vadd.f32 %v5896, %v5914
        %v5919 = vadd.f32 %v5897, %v5914
        %v5920 = vadd.f32 %v5898, %v5914
        %v5921 = vadd.f32 %v5899, %v5914
        %v5922 = vadd.f32 %v5900, %v5914
        %v5923 = vadd.f32 %v5901, %v5914
        %v5924 = vadd.f32 %v5902, %v5914
        %v5925 = vadd.f32 %v5903, %v5914
        %v5926 = vadd.f32 %v5904, %v5914
        %v5927 = vadd.f32 %v5905, %v5914
        %v5928 = vadd.f32 %v5906, %v5914
        %v5929 = vadd.f32 %v5907, %v5914
        %v5930 = vadd.f32 %v5908, %v5914
        %v5931 = vadd.f32 %v5909, %v5914
        %v5932 = vpack.c.bf16 %v5917, %v5916
        %v5933 = vpack.c.bf16 %v5919, %v5918
        %v5934 = vpack.c.bf16 %v5921, %v5920
        %v5935 = vpack.c.bf16 %v5923, %v5922
        %v5936 = vpack.c.bf16 %v5925, %v5924
        %v5937 = vpack.c.bf16 %v5927, %v5926
        %v5938 = vpack.c.bf16 %v5929, %v5928
        %v5939 = vpack.c.bf16 %v5931, %v5930
        %s5940 = scalar_lea.vmem [#allocation13], 1024
        %v5941 = vld [vmem:[%s5940] sm:$0xff]
        %v5942 = vld [vmem:[%s5940 + $0x8] sm:$0xff]
        %v5943 = vld [vmem:[%s5940 + $0x10] sm:$0xff]
        %v5944 = vld [vmem:[%s5940 + $0x18] sm:$0xff]
        %v5945 = vld [vmem:[%s5940 + $0x20] sm:$0xff]
        %v5946 = vld [vmem:[%s5940 + $0x28] sm:$0xff]
        %v5947 = vld [vmem:[%s5940 + $0x30] sm:$0xff]
        %v5948 = vld [vmem:[%s5940 + $0x38] sm:$0xff]
        %v5949 = vld [vmem:[%s5940 + $0x40] sm:$0xff]
        %v5950 = vld [vmem:[%s5940 + $0x48] sm:$0xff]
        %v5951 = vld [vmem:[%s5940 + $0x50] sm:$0xff]
        %v5952 = vld [vmem:[%s5940 + $0x58] sm:$0xff]
        %v5953 = vld [vmem:[%s5940 + $0x60] sm:$0xff]
        %v5954 = vld [vmem:[%s5940 + $0x68] sm:$0xff]
        %v5955 = vld [vmem:[%s5940 + $0x70] sm:$0xff]
        %v5956 = vld [vmem:[%s5940 + $0x78] sm:$0xff]
        %v5957 = vld [vmem:[%s5940 + $0x80] sm:$0xff]
        %v5958 = vld [vmem:[%s5940 + $0x88] sm:$0xff]
        %v5959 = vld [vmem:[%s5940 + $0x90] sm:$0xff]
        %v5960 = vld [vmem:[%s5940 + $0x98] sm:$0xff]
        %v5961 = vld [vmem:[%s5940 + $0xa0] sm:$0xff]
        %v5962 = vld [vmem:[%s5940 + $0xa8] sm:$0xff]
        %v5963 = vld [vmem:[%s5940 + $0xb0] sm:$0xff]
        %v5964 = vld [vmem:[%s5940 + $0xb8] sm:$0xff]
        %v5965 = vld [vmem:[%s5940 + $0xc0] sm:$0xff]
        %v5966 = vld [vmem:[%s5940 + $0xc8] sm:$0xff]
        %v5967 = vld [vmem:[%s5940 + $0xd0] sm:$0xff]
        %v5968 = vld [vmem:[%s5940 + $0xd8] sm:$0xff]
        %v5969 = vld [vmem:[%s5940 + $0xe0] sm:$0xff]
        %v5970 = vld [vmem:[%s5940 + $0xe8] sm:$0xff]
        %v5971 = vld [vmem:[%s5940 + $0xf0] sm:$0xff]
        %v5972 = vld [vmem:[%s5940 + $0xf8] sm:$0xff]
        %v5973 = vld [vmem:[%s5940 + $0x100] sm:$0xff]
        %v5974 = vld [vmem:[%s5940 + $0x108] sm:$0xff]
        %v5975 = vld [vmem:[%s5940 + $0x110] sm:$0xff]
        %v5976 = vld [vmem:[%s5940 + $0x118] sm:$0xff]
        %v5977 = vld [vmem:[%s5940 + $0x120] sm:$0xff]
        %v5978 = vld [vmem:[%s5940 + $0x128] sm:$0xff]
        %v5979 = vld [vmem:[%s5940 + $0x130] sm:$0xff]
        %v5980 = vld [vmem:[%s5940 + $0x138] sm:$0xff]
        %v5981 = vld [vmem:[%s5940 + $0x140] sm:$0xff]
        %v5982 = vld [vmem:[%s5940 + $0x148] sm:$0xff]
        %v5983 = vld [vmem:[%s5940 + $0x150] sm:$0xff]
        %v5984 = vld [vmem:[%s5940 + $0x158] sm:$0xff]
        %v5985 = vld [vmem:[%s5940 + $0x160] sm:$0xff]
        %v5986 = vld [vmem:[%s5940 + $0x168] sm:$0xff]
        %v5987 = vld [vmem:[%s5940 + $0x170] sm:$0xff]
        %v5988 = vld [vmem:[%s5940 + $0x178] sm:$0xff]
        %v5989 = vld [vmem:[%s5940 + $0x180] sm:$0xff]
        %v5990 = vld [vmem:[%s5940 + $0x188] sm:$0xff]
        %v5991 = vld [vmem:[%s5940 + $0x190] sm:$0xff]
        %v5992 = vld [vmem:[%s5940 + $0x198] sm:$0xff]
        %v5993 = vld [vmem:[%s5940 + $0x1a0] sm:$0xff]
        %v5994 = vld [vmem:[%s5940 + $0x1a8] sm:$0xff]
        %v5995 = vld [vmem:[%s5940 + $0x1b0] sm:$0xff]
        %v5996 = vld [vmem:[%s5940 + $0x1b8] sm:$0xff]
        %v5997 = vld [vmem:[%s5940 + $0x1c0] sm:$0xff]
        %v5998 = vld [vmem:[%s5940 + $0x1c8] sm:$0xff]
        %v5999 = vld [vmem:[%s5940 + $0x1d0] sm:$0xff]
        %v6000 = vld [vmem:[%s5940 + $0x1d8] sm:$0xff]
        %v6001 = vld [vmem:[%s5940 + $0x1e0] sm:$0xff]
        %v6002 = vld [vmem:[%s5940 + $0x1e8] sm:$0xff]
        %v6003 = vld [vmem:[%s5940 + $0x1f0] sm:$0xff]
        %v6004 = vld [vmem:[%s5940 + $0x1f8] sm:$0xff]
        %v6005 = vld [vmem:[%s5940 + $0x200] sm:$0xff]
        %v6006 = vld [vmem:[%s5940 + $0x208] sm:$0xff]
        %v6007 = vld [vmem:[%s5940 + $0x210] sm:$0xff]
        %v6008 = vld [vmem:[%s5940 + $0x218] sm:$0xff]
        %v6009 = vld [vmem:[%s5940 + $0x220] sm:$0xff]
        %v6010 = vld [vmem:[%s5940 + $0x228] sm:$0xff]
        %v6011 = vld [vmem:[%s5940 + $0x230] sm:$0xff]
        %v6012 = vld [vmem:[%s5940 + $0x238] sm:$0xff]
        %v6013 = vld [vmem:[%s5940 + $0x240] sm:$0xff]
        %v6014 = vld [vmem:[%s5940 + $0x248] sm:$0xff]
        %v6015 = vld [vmem:[%s5940 + $0x250] sm:$0xff]
        %v6016 = vld [vmem:[%s5940 + $0x258] sm:$0xff]
        %v6017 = vld [vmem:[%s5940 + $0x260] sm:$0xff]
        %v6018 = vld [vmem:[%s5940 + $0x268] sm:$0xff]
        %v6019 = vld [vmem:[%s5940 + $0x270] sm:$0xff]
        %v6020 = vld [vmem:[%s5940 + $0x278] sm:$0xff]
        %v6021 = vld [vmem:[%s5940 + $0x280] sm:$0xff]
        %v6022 = vld [vmem:[%s5940 + $0x288] sm:$0xff]
        %v6023 = vld [vmem:[%s5940 + $0x290] sm:$0xff]
        %v6024 = vld [vmem:[%s5940 + $0x298] sm:$0xff]
        %v6025 = vld [vmem:[%s5940 + $0x2a0] sm:$0xff]
        %v6026 = vld [vmem:[%s5940 + $0x2a8] sm:$0xff]
        %v6027 = vld [vmem:[%s5940 + $0x2b0] sm:$0xff]
        %v6028 = vld [vmem:[%s5940 + $0x2b8] sm:$0xff]
        %v6029 = vld [vmem:[%s5940 + $0x2c0] sm:$0xff]
        %v6030 = vld [vmem:[%s5940 + $0x2c8] sm:$0xff]
        %v6031 = vld [vmem:[%s5940 + $0x2d0] sm:$0xff]
        %v6032 = vld [vmem:[%s5940 + $0x2d8] sm:$0xff]
        %v6033 = vld [vmem:[%s5940 + $0x2e0] sm:$0xff]
        %v6034 = vld [vmem:[%s5940 + $0x2e8] sm:$0xff]
        %v6035 = vld [vmem:[%s5940 + $0x2f0] sm:$0xff]
        %v6036 = vld [vmem:[%s5940 + $0x2f8] sm:$0xff]
        %v6037 = vld [vmem:[%s5940 + $0x300] sm:$0xff]
        %v6038 = vld [vmem:[%s5940 + $0x308] sm:$0xff]
        %v6039 = vld [vmem:[%s5940 + $0x310] sm:$0xff]
        %v6040 = vld [vmem:[%s5940 + $0x318] sm:$0xff]
        %v6041 = vld [vmem:[%s5940 + $0x320] sm:$0xff]
        %v6042 = vld [vmem:[%s5940 + $0x328] sm:$0xff]
        %v6043 = vld [vmem:[%s5940 + $0x330] sm:$0xff]
        %v6044 = vld [vmem:[%s5940 + $0x338] sm:$0xff]
        %v6045 = vld [vmem:[%s5940 + $0x340] sm:$0xff]
        %v6046 = vld [vmem:[%s5940 + $0x348] sm:$0xff]
        %v6047 = vld [vmem:[%s5940 + $0x350] sm:$0xff]
        %v6048 = vld [vmem:[%s5940 + $0x358] sm:$0xff]
        %v6049 = vld [vmem:[%s5940 + $0x360] sm:$0xff]
        %v6050 = vld [vmem:[%s5940 + $0x368] sm:$0xff]
        %v6051 = vld [vmem:[%s5940 + $0x370] sm:$0xff]
        %v6052 = vld [vmem:[%s5940 + $0x378] sm:$0xff]
        %v6053 = vld [vmem:[%s5940 + $0x380] sm:$0xff]
        %v6054 = vld [vmem:[%s5940 + $0x388] sm:$0xff]
        %v6055 = vld [vmem:[%s5940 + $0x390] sm:$0xff]
        %v6056 = vld [vmem:[%s5940 + $0x398] sm:$0xff]
        %v6057 = vld [vmem:[%s5940 + $0x3a0] sm:$0xff]
        %v6058 = vld [vmem:[%s5940 + $0x3a8] sm:$0xff]
        %v6059 = vld [vmem:[%s5940 + $0x3b0] sm:$0xff]
        %v6060 = vld [vmem:[%s5940 + $0x3b8] sm:$0xff]
        %v6061 = vld [vmem:[%s5940 + $0x3c0] sm:$0xff]
        %v6062 = vld [vmem:[%s5940 + $0x3c8] sm:$0xff]
        %v6063 = vld [vmem:[%s5940 + $0x3d0] sm:$0xff]
        %v6064 = vld [vmem:[%s5940 + $0x3d8] sm:$0xff]
        %v6065 = vld [vmem:[%s5940 + $0x3e0] sm:$0xff]
        %v6066 = vld [vmem:[%s5940 + $0x3e8] sm:$0xff]
        %v6067 = vld [vmem:[%s5940 + $0x3f0] sm:$0xff]
        %v6068 = vld [vmem:[%s5940 + $0x3f8] sm:$0xff]
        %s6069 = scalar_lea.vmem %s8, 16
        %v6070 = vld [vmem:[%s6069] sm:$0xff]
        %v6071 = vld [vmem:[%s6069 + $0x8] sm:$0xff]
        %v6074 = vlaneseq
        %v6075 = vshrl.u32 %v6074, 7
        %v6076 = vsub.s32 0, %v6075
        %v6077 = vrot.slane %v6070, %v6076
        %v6078 = vlaneseq
        %v6079 = vshrl.u32 %v6078, 7
        %v6080 = vsub.s32 1, %v6079
        %v6081 = vrot.slane %v6070, %v6080
        %v6082 = vlaneseq
        %v6083 = vshrl.u32 %v6082, 7
        %v6084 = vsub.s32 2, %v6083
        %v6085 = vrot.slane %v6070, %v6084
        %v6086 = vlaneseq
        %v6087 = vshrl.u32 %v6086, 7
        %v6088 = vsub.s32 3, %v6087
        %v6089 = vrot.slane %v6070, %v6088
        %v6090 = vlaneseq
        %v6091 = vshrl.u32 %v6090, 7
        %v6092 = vsub.s32 4, %v6091
        %v6093 = vrot.slane %v6070, %v6092
        %v6094 = vlaneseq
        %v6095 = vshrl.u32 %v6094, 7
        %v6096 = vsub.s32 5, %v6095
        %v6097 = vrot.slane %v6070, %v6096
        %v6098 = vlaneseq
        %v6099 = vshrl.u32 %v6098, 7
        %v6100 = vsub.s32 6, %v6099
        %v6101 = vrot.slane %v6070, %v6100
        %v6102 = vlaneseq
        %v6103 = vshrl.u32 %v6102, 7
        %v6104 = vsub.s32 7, %v6103
        %v6105 = vrot.slane %v6070, %v6104
        %v6106 = vlaneseq
        %v6107 = vshrl.u32 %v6106, 7
        %v6108 = vsub.s32 0, %v6107
        %v6109 = vrot.slane %v6071, %v6108
        %v6110 = vlaneseq
        %v6111 = vshrl.u32 %v6110, 7
        %v6112 = vsub.s32 1, %v6111
        %v6113 = vrot.slane %v6071, %v6112
        %v6114 = vlaneseq
        %v6115 = vshrl.u32 %v6114, 7
        %v6116 = vsub.s32 2, %v6115
        %v6117 = vrot.slane %v6071, %v6116
        %v6118 = vlaneseq
        %v6119 = vshrl.u32 %v6118, 7
        %v6120 = vsub.s32 3, %v6119
        %v6121 = vrot.slane %v6071, %v6120
        %v6122 = vlaneseq
        %v6123 = vshrl.u32 %v6122, 7
        %v6124 = vsub.s32 4, %v6123
        %v6125 = vrot.slane %v6071, %v6124
        %v6126 = vlaneseq
        %v6127 = vshrl.u32 %v6126, 7
        %v6128 = vsub.s32 5, %v6127
        %v6129 = vrot.slane %v6071, %v6128
        %v6130 = vlaneseq
        %v6131 = vshrl.u32 %v6130, 7
        %v6132 = vsub.s32 6, %v6131
        %v6133 = vrot.slane %v6071, %v6132
        %v6134 = vlaneseq
        %v6135 = vshrl.u32 %v6134, 7
        %v6136 = vsub.s32 7, %v6135
        %v6137 = vrot.slane %v6071, %v6136
        %v6282 = vunpack.c.l.b16 %v5941
        %v6283 = vunpack.c.h.b16 %v5941
        %v6284 = vunpack.c.l.b16 %v5942
        %v6285 = vunpack.c.h.b16 %v5942
        %v6286 = vunpack.c.l.b16 %v5943
        %v6287 = vunpack.c.h.b16 %v5943
        %v6288 = vunpack.c.l.b16 %v5944
        %v6289 = vunpack.c.h.b16 %v5944
        %v6290 = vunpack.c.l.b16 %v5945
        %v6291 = vunpack.c.h.b16 %v5945
        %v6292 = vunpack.c.l.b16 %v5946
        %v6293 = vunpack.c.h.b16 %v5946
        %v6294 = vunpack.c.l.b16 %v5947
        %v6295 = vunpack.c.h.b16 %v5947
        %v6296 = vunpack.c.l.b16 %v5948
        %v6297 = vunpack.c.h.b16 %v5948
        %v6298 = vunpack.c.l.b16 %v5949
        %v6299 = vunpack.c.h.b16 %v5949
        %v6300 = vunpack.c.l.b16 %v5950
        %v6301 = vunpack.c.h.b16 %v5950
        %v6302 = vunpack.c.l.b16 %v5951
        %v6303 = vunpack.c.h.b16 %v5951
        %v6304 = vunpack.c.l.b16 %v5952
        %v6305 = vunpack.c.h.b16 %v5952
        %v6306 = vunpack.c.l.b16 %v5953
        %v6307 = vunpack.c.h.b16 %v5953
        %v6308 = vunpack.c.l.b16 %v5954
        %v6309 = vunpack.c.h.b16 %v5954
        %v6310 = vunpack.c.l.b16 %v5955
        %v6311 = vunpack.c.h.b16 %v5955
        %v6312 = vunpack.c.l.b16 %v5956
        %v6313 = vunpack.c.h.b16 %v5956
        %v6314 = vunpack.c.l.b16 %v5957
        %v6315 = vunpack.c.h.b16 %v5957
        %v6316 = vunpack.c.l.b16 %v5958
        %v6317 = vunpack.c.h.b16 %v5958
        %v6318 = vunpack.c.l.b16 %v5959
        %v6319 = vunpack.c.h.b16 %v5959
        %v6320 = vunpack.c.l.b16 %v5960
        %v6321 = vunpack.c.h.b16 %v5960
        %v6322 = vunpack.c.l.b16 %v5961
        %v6323 = vunpack.c.h.b16 %v5961
        %v6324 = vunpack.c.l.b16 %v5962
        %v6325 = vunpack.c.h.b16 %v5962
        %v6326 = vunpack.c.l.b16 %v5963
        %v6327 = vunpack.c.h.b16 %v5963
        %v6328 = vunpack.c.l.b16 %v5964
        %v6329 = vunpack.c.h.b16 %v5964
        %v6330 = vunpack.c.l.b16 %v5965
        %v6331 = vunpack.c.h.b16 %v5965
        %v6332 = vunpack.c.l.b16 %v5966
        %v6333 = vunpack.c.h.b16 %v5966
        %v6334 = vunpack.c.l.b16 %v5967
        %v6335 = vunpack.c.h.b16 %v5967
        %v6336 = vunpack.c.l.b16 %v5968
        %v6337 = vunpack.c.h.b16 %v5968
        %v6338 = vunpack.c.l.b16 %v5969
        %v6339 = vunpack.c.h.b16 %v5969
        %v6340 = vunpack.c.l.b16 %v5970
        %v6341 = vunpack.c.h.b16 %v5970
        %v6342 = vunpack.c.l.b16 %v5971
        %v6343 = vunpack.c.h.b16 %v5971
        %v6344 = vunpack.c.l.b16 %v5972
        %v6345 = vunpack.c.h.b16 %v5972
        %v6346 = vunpack.c.l.b16 %v5973
        %v6347 = vunpack.c.h.b16 %v5973
        %v6348 = vunpack.c.l.b16 %v5974
        %v6349 = vunpack.c.h.b16 %v5974
        %v6350 = vunpack.c.l.b16 %v5975
        %v6351 = vunpack.c.h.b16 %v5975
        %v6352 = vunpack.c.l.b16 %v5976
        %v6353 = vunpack.c.h.b16 %v5976
        %v6354 = vunpack.c.l.b16 %v5977
        %v6355 = vunpack.c.h.b16 %v5977
        %v6356 = vunpack.c.l.b16 %v5978
        %v6357 = vunpack.c.h.b16 %v5978
        %v6358 = vunpack.c.l.b16 %v5979
        %v6359 = vunpack.c.h.b16 %v5979
        %v6360 = vunpack.c.l.b16 %v5980
        %v6361 = vunpack.c.h.b16 %v5980
        %v6362 = vunpack.c.l.b16 %v5981
        %v6363 = vunpack.c.h.b16 %v5981
        %v6364 = vunpack.c.l.b16 %v5982
        %v6365 = vunpack.c.h.b16 %v5982
        %v6366 = vunpack.c.l.b16 %v5983
        %v6367 = vunpack.c.h.b16 %v5983
        %v6368 = vunpack.c.l.b16 %v5984
        %v6369 = vunpack.c.h.b16 %v5984
        %v6370 = vunpack.c.l.b16 %v5985
        %v6371 = vunpack.c.h.b16 %v5985
        %v6372 = vunpack.c.l.b16 %v5986
        %v6373 = vunpack.c.h.b16 %v5986
        %v6374 = vunpack.c.l.b16 %v5987
        %v6375 = vunpack.c.h.b16 %v5987
        %v6376 = vunpack.c.l.b16 %v5988
        %v6377 = vunpack.c.h.b16 %v5988
        %v6378 = vunpack.c.l.b16 %v5989
        %v6379 = vunpack.c.h.b16 %v5989
        %v6380 = vunpack.c.l.b16 %v5990
        %v6381 = vunpack.c.h.b16 %v5990
        %v6382 = vunpack.c.l.b16 %v5991
        %v6383 = vunpack.c.h.b16 %v5991
        %v6384 = vunpack.c.l.b16 %v5992
        %v6385 = vunpack.c.h.b16 %v5992
        %v6386 = vunpack.c.l.b16 %v5993
        %v6387 = vunpack.c.h.b16 %v5993
        %v6388 = vunpack.c.l.b16 %v5994
        %v6389 = vunpack.c.h.b16 %v5994
        %v6390 = vunpack.c.l.b16 %v5995
        %v6391 = vunpack.c.h.b16 %v5995
        %v6392 = vunpack.c.l.b16 %v5996
        %v6393 = vunpack.c.h.b16 %v5996
        %v6394 = vunpack.c.l.b16 %v5997
        %v6395 = vunpack.c.h.b16 %v5997
        %v6396 = vunpack.c.l.b16 %v5998
        %v6397 = vunpack.c.h.b16 %v5998
        %v6398 = vunpack.c.l.b16 %v5999
        %v6399 = vunpack.c.h.b16 %v5999
        %v6400 = vunpack.c.l.b16 %v6000
        %v6401 = vunpack.c.h.b16 %v6000
        %v6402 = vunpack.c.l.b16 %v6001
        %v6403 = vunpack.c.h.b16 %v6001
        %v6404 = vunpack.c.l.b16 %v6002
        %v6405 = vunpack.c.h.b16 %v6002
        %v6406 = vunpack.c.l.b16 %v6003
        %v6407 = vunpack.c.h.b16 %v6003
        %v6408 = vunpack.c.l.b16 %v6004
        %v6409 = vunpack.c.h.b16 %v6004
        %v6410 = vunpack.c.l.b16 %v6005
        %v6411 = vunpack.c.h.b16 %v6005
        %v6412 = vunpack.c.l.b16 %v6006
        %v6413 = vunpack.c.h.b16 %v6006
        %v6414 = vunpack.c.l.b16 %v6007
        %v6415 = vunpack.c.h.b16 %v6007
        %v6416 = vunpack.c.l.b16 %v6008
        %v6417 = vunpack.c.h.b16 %v6008
        %v6418 = vunpack.c.l.b16 %v6009
        %v6419 = vunpack.c.h.b16 %v6009
        %v6420 = vunpack.c.l.b16 %v6010
        %v6421 = vunpack.c.h.b16 %v6010
        %v6422 = vunpack.c.l.b16 %v6011
        %v6423 = vunpack.c.h.b16 %v6011
        %v6424 = vunpack.c.l.b16 %v6012
        %v6425 = vunpack.c.h.b16 %v6012
        %v6426 = vunpack.c.l.b16 %v6013
        %v6427 = vunpack.c.h.b16 %v6013
        %v6428 = vunpack.c.l.b16 %v6014
        %v6429 = vunpack.c.h.b16 %v6014
        %v6430 = vunpack.c.l.b16 %v6015
        %v6431 = vunpack.c.h.b16 %v6015
        %v6432 = vunpack.c.l.b16 %v6016
        %v6433 = vunpack.c.h.b16 %v6016
        %v6434 = vunpack.c.l.b16 %v6017
        %v6435 = vunpack.c.h.b16 %v6017
        %v6436 = vunpack.c.l.b16 %v6018
        %v6437 = vunpack.c.h.b16 %v6018
        %v6438 = vunpack.c.l.b16 %v6019
        %v6439 = vunpack.c.h.b16 %v6019
        %v6440 = vunpack.c.l.b16 %v6020
        %v6441 = vunpack.c.h.b16 %v6020
        %v6442 = vunpack.c.l.b16 %v6021
        %v6443 = vunpack.c.h.b16 %v6021
        %v6444 = vunpack.c.l.b16 %v6022
        %v6445 = vunpack.c.h.b16 %v6022
        %v6446 = vunpack.c.l.b16 %v6023
        %v6447 = vunpack.c.h.b16 %v6023
        %v6448 = vunpack.c.l.b16 %v6024
        %v6449 = vunpack.c.h.b16 %v6024
        %v6450 = vunpack.c.l.b16 %v6025
        %v6451 = vunpack.c.h.b16 %v6025
        %v6452 = vunpack.c.l.b16 %v6026
        %v6453 = vunpack.c.h.b16 %v6026
        %v6454 = vunpack.c.l.b16 %v6027
        %v6455 = vunpack.c.h.b16 %v6027
        %v6456 = vunpack.c.l.b16 %v6028
        %v6457 = vunpack.c.h.b16 %v6028
        %v6458 = vunpack.c.l.b16 %v6029
        %v6459 = vunpack.c.h.b16 %v6029
        %v6460 = vunpack.c.l.b16 %v6030
        %v6461 = vunpack.c.h.b16 %v6030
        %v6462 = vunpack.c.l.b16 %v6031
        %v6463 = vunpack.c.h.b16 %v6031
        %v6464 = vunpack.c.l.b16 %v6032
        %v6465 = vunpack.c.h.b16 %v6032
        %v6466 = vunpack.c.l.b16 %v6033
        %v6467 = vunpack.c.h.b16 %v6033
        %v6468 = vunpack.c.l.b16 %v6034
        %v6469 = vunpack.c.h.b16 %v6034
        %v6470 = vunpack.c.l.b16 %v6035
        %v6471 = vunpack.c.h.b16 %v6035
        %v6472 = vunpack.c.l.b16 %v6036
        %v6473 = vunpack.c.h.b16 %v6036
        %v6474 = vunpack.c.l.b16 %v6037
        %v6475 = vunpack.c.h.b16 %v6037
        %v6476 = vunpack.c.l.b16 %v6038
        %v6477 = vunpack.c.h.b16 %v6038
        %v6478 = vunpack.c.l.b16 %v6039
        %v6479 = vunpack.c.h.b16 %v6039
        %v6480 = vunpack.c.l.b16 %v6040
        %v6481 = vunpack.c.h.b16 %v6040
        %v6482 = vunpack.c.l.b16 %v6041
        %v6483 = vunpack.c.h.b16 %v6041
        %v6484 = vunpack.c.l.b16 %v6042
        %v6485 = vunpack.c.h.b16 %v6042
        %v6486 = vunpack.c.l.b16 %v6043
        %v6487 = vunpack.c.h.b16 %v6043
        %v6488 = vunpack.c.l.b16 %v6044
        %v6489 = vunpack.c.h.b16 %v6044
        %v6490 = vunpack.c.l.b16 %v6045
        %v6491 = vunpack.c.h.b16 %v6045
        %v6492 = vunpack.c.l.b16 %v6046
        %v6493 = vunpack.c.h.b16 %v6046
        %v6494 = vunpack.c.l.b16 %v6047
        %v6495 = vunpack.c.h.b16 %v6047
        %v6496 = vunpack.c.l.b16 %v6048
        %v6497 = vunpack.c.h.b16 %v6048
        %v6498 = vunpack.c.l.b16 %v6049
        %v6499 = vunpack.c.h.b16 %v6049
        %v6500 = vunpack.c.l.b16 %v6050
        %v6501 = vunpack.c.h.b16 %v6050
        %v6502 = vunpack.c.l.b16 %v6051
        %v6503 = vunpack.c.h.b16 %v6051
        %v6504 = vunpack.c.l.b16 %v6052
        %v6505 = vunpack.c.h.b16 %v6052
        %v6506 = vunpack.c.l.b16 %v6053
        %v6507 = vunpack.c.h.b16 %v6053
        %v6508 = vunpack.c.l.b16 %v6054
        %v6509 = vunpack.c.h.b16 %v6054
        %v6510 = vunpack.c.l.b16 %v6055
        %v6511 = vunpack.c.h.b16 %v6055
        %v6512 = vunpack.c.l.b16 %v6056
        %v6513 = vunpack.c.h.b16 %v6056
        %v6514 = vunpack.c.l.b16 %v6057
        %v6515 = vunpack.c.h.b16 %v6057
        %v6516 = vunpack.c.l.b16 %v6058
        %v6517 = vunpack.c.h.b16 %v6058
        %v6518 = vunpack.c.l.b16 %v6059
        %v6519 = vunpack.c.h.b16 %v6059
        %v6520 = vunpack.c.l.b16 %v6060
        %v6521 = vunpack.c.h.b16 %v6060
        %v6522 = vunpack.c.l.b16 %v6061
        %v6523 = vunpack.c.h.b16 %v6061
        %v6524 = vunpack.c.l.b16 %v6062
        %v6525 = vunpack.c.h.b16 %v6062
        %v6526 = vunpack.c.l.b16 %v6063
        %v6527 = vunpack.c.h.b16 %v6063
        %v6528 = vunpack.c.l.b16 %v6064
        %v6529 = vunpack.c.h.b16 %v6064
        %v6530 = vunpack.c.l.b16 %v6065
        %v6531 = vunpack.c.h.b16 %v6065
        %v6532 = vunpack.c.l.b16 %v6066
        %v6533 = vunpack.c.h.b16 %v6066
        %v6534 = vunpack.c.l.b16 %v6067
        %v6535 = vunpack.c.h.b16 %v6067
        %v6536 = vunpack.c.l.b16 %v6068
        %v6537 = vunpack.c.h.b16 %v6068
        %v6538 = vpack.c.b16 %v6298, %v6282
        %v6539 = vpack.c.b16 %v6299, %v6283
        %v6540 = vpack.c.b16 %v6300, %v6284
        %v6541 = vpack.c.b16 %v6301, %v6285
        %v6542 = vpack.c.b16 %v6302, %v6286
        %v6543 = vpack.c.b16 %v6303, %v6287
        %v6544 = vpack.c.b16 %v6304, %v6288
        %v6545 = vpack.c.b16 %v6305, %v6289
        %v6546 = vpack.c.b16 %v6306, %v6290
        %v6547 = vpack.c.b16 %v6307, %v6291
        %v6548 = vpack.c.b16 %v6308, %v6292
        %v6549 = vpack.c.b16 %v6309, %v6293
        %v6550 = vpack.c.b16 %v6310, %v6294
        %v6551 = vpack.c.b16 %v6311, %v6295
        %v6552 = vpack.c.b16 %v6312, %v6296
        %v6553 = vpack.c.b16 %v6313, %v6297
        %v6554 = vpack.c.b16 %v6330, %v6314
        %v6555 = vpack.c.b16 %v6331, %v6315
        %v6556 = vpack.c.b16 %v6332, %v6316
        %v6557 = vpack.c.b16 %v6333, %v6317
        %v6558 = vpack.c.b16 %v6334, %v6318
        %v6559 = vpack.c.b16 %v6335, %v6319
        %v6560 = vpack.c.b16 %v6336, %v6320
        %v6561 = vpack.c.b16 %v6337, %v6321
        %v6562 = vpack.c.b16 %v6338, %v6322
        %v6563 = vpack.c.b16 %v6339, %v6323
        %v6564 = vpack.c.b16 %v6340, %v6324
        %v6565 = vpack.c.b16 %v6341, %v6325
        %v6566 = vpack.c.b16 %v6342, %v6326
        %v6567 = vpack.c.b16 %v6343, %v6327
        %v6568 = vpack.c.b16 %v6344, %v6328
        %v6569 = vpack.c.b16 %v6345, %v6329
        %v6570 = vpack.c.b16 %v6362, %v6346
        %v6571 = vpack.c.b16 %v6363, %v6347
        %v6572 = vpack.c.b16 %v6364, %v6348
        %v6573 = vpack.c.b16 %v6365, %v6349
        %v6574 = vpack.c.b16 %v6366, %v6350
        %v6575 = vpack.c.b16 %v6367, %v6351
        %v6576 = vpack.c.b16 %v6368, %v6352
        %v6577 = vpack.c.b16 %v6369, %v6353
        %v6578 = vpack.c.b16 %v6370, %v6354
        %v6579 = vpack.c.b16 %v6371, %v6355
        %v6580 = vpack.c.b16 %v6372, %v6356
        %v6581 = vpack.c.b16 %v6373, %v6357
        %v6582 = vpack.c.b16 %v6374, %v6358
        %v6583 = vpack.c.b16 %v6375, %v6359
        %v6584 = vpack.c.b16 %v6376, %v6360
        %v6585 = vpack.c.b16 %v6377, %v6361
        %v6586 = vpack.c.b16 %v6394, %v6378
        %v6587 = vpack.c.b16 %v6395, %v6379
        %v6588 = vpack.c.b16 %v6396, %v6380
        %v6589 = vpack.c.b16 %v6397, %v6381
        %v6590 = vpack.c.b16 %v6398, %v6382
        %v6591 = vpack.c.b16 %v6399, %v6383
        %v6592 = vpack.c.b16 %v6400, %v6384
        %v6593 = vpack.c.b16 %v6401, %v6385
        %v6594 = vpack.c.b16 %v6402, %v6386
        %v6595 = vpack.c.b16 %v6403, %v6387
        %v6596 = vpack.c.b16 %v6404, %v6388
        %v6597 = vpack.c.b16 %v6405, %v6389
        %v6598 = vpack.c.b16 %v6406, %v6390
        %v6599 = vpack.c.b16 %v6407, %v6391
        %v6600 = vpack.c.b16 %v6408, %v6392
        %v6601 = vpack.c.b16 %v6409, %v6393
        %v6602 = vpack.c.b16 %v6426, %v6410
        %v6603 = vpack.c.b16 %v6427, %v6411
        %v6604 = vpack.c.b16 %v6428, %v6412
        %v6605 = vpack.c.b16 %v6429, %v6413
        %v6606 = vpack.c.b16 %v6430, %v6414
        %v6607 = vpack.c.b16 %v6431, %v6415
        %v6608 = vpack.c.b16 %v6432, %v6416
        %v6609 = vpack.c.b16 %v6433, %v6417
        %v6610 = vpack.c.b16 %v6434, %v6418
        %v6611 = vpack.c.b16 %v6435, %v6419
        %v6612 = vpack.c.b16 %v6436, %v6420
        %v6613 = vpack.c.b16 %v6437, %v6421
        %v6614 = vpack.c.b16 %v6438, %v6422
        %v6615 = vpack.c.b16 %v6439, %v6423
        %v6616 = vpack.c.b16 %v6440, %v6424
        %v6617 = vpack.c.b16 %v6441, %v6425
        %v6618 = vpack.c.b16 %v6458, %v6442
        %v6619 = vpack.c.b16 %v6459, %v6443
        %v6620 = vpack.c.b16 %v6460, %v6444
        %v6621 = vpack.c.b16 %v6461, %v6445
        %v6622 = vpack.c.b16 %v6462, %v6446
        %v6623 = vpack.c.b16 %v6463, %v6447
        %v6624 = vpack.c.b16 %v6464, %v6448
        %v6625 = vpack.c.b16 %v6465, %v6449
        %v6626 = vpack.c.b16 %v6466, %v6450
        %v6627 = vpack.c.b16 %v6467, %v6451
        %v6628 = vpack.c.b16 %v6468, %v6452
        %v6629 = vpack.c.b16 %v6469, %v6453
        %v6630 = vpack.c.b16 %v6470, %v6454
        %v6631 = vpack.c.b16 %v6471, %v6455
        %v6632 = vpack.c.b16 %v6472, %v6456
        %v6633 = vpack.c.b16 %v6473, %v6457
        %v6634 = vpack.c.b16 %v6490, %v6474
        %v6635 = vpack.c.b16 %v6491, %v6475
        %v6636 = vpack.c.b16 %v6492, %v6476
        %v6637 = vpack.c.b16 %v6493, %v6477
        %v6638 = vpack.c.b16 %v6494, %v6478
        %v6639 = vpack.c.b16 %v6495, %v6479
        %v6640 = vpack.c.b16 %v6496, %v6480
        %v6641 = vpack.c.b16 %v6497, %v6481
        %v6642 = vpack.c.b16 %v6498, %v6482
        %v6643 = vpack.c.b16 %v6499, %v6483
        %v6644 = vpack.c.b16 %v6500, %v6484
        %v6645 = vpack.c.b16 %v6501, %v6485
        %v6646 = vpack.c.b16 %v6502, %v6486
        %v6647 = vpack.c.b16 %v6503, %v6487
        %v6648 = vpack.c.b16 %v6504, %v6488
        %v6649 = vpack.c.b16 %v6505, %v6489
        %v6650 = vpack.c.b16 %v6522, %v6506
        %v6651 = vpack.c.b16 %v6523, %v6507
        %v6652 = vpack.c.b16 %v6524, %v6508
        %v6653 = vpack.c.b16 %v6525, %v6509
        %v6654 = vpack.c.b16 %v6526, %v6510
        %v6655 = vpack.c.b16 %v6527, %v6511
        %v6656 = vpack.c.b16 %v6528, %v6512
        %v6657 = vpack.c.b16 %v6529, %v6513
        %v6658 = vpack.c.b16 %v6530, %v6514
        %v6659 = vpack.c.b16 %v6531, %v6515
        %v6660 = vpack.c.b16 %v6532, %v6516
        %v6661 = vpack.c.b16 %v6533, %v6517
        %v6662 = vpack.c.b16 %v6534, %v6518
        %v6663 = vpack.c.b16 %v6535, %v6519
        %v6664 = vpack.c.b16 %v6536, %v6520
        %v6665 = vpack.c.b16 %v6537, %v6521
        %6794 = vmatprep.subr.bf16.mxu0 %v6539
        %6795 = vmatpush1.bf16.msra.mxu0 %v6538
        %6796 = vmatprep.subr.bf16.mxu0 %v6555
        %6797 = vmatpush1.bf16.msra.mxu0 %v6554
        %6798 = vmatprep.subr.bf16.mxu0 %v6571
        %6799 = vmatpush1.bf16.msra.mxu0 %v6570
        %6800 = vmatprep.subr.bf16.mxu0 %v6587
        %6801 = vmatpush1.bf16.msra.mxu0 %v6586
        %6802 = vmatprep.subr.bf16.mxu0 %v6603
        %6803 = vmatpush1.bf16.msra.mxu0 %v6602
        %6804 = vmatprep.subr.bf16.mxu0 %v6619
        %6805 = vmatpush1.bf16.msra.mxu0 %v6618
        %6806 = vmatprep.subr.bf16.mxu0 %v6635
        %6807 = vmatpush1.bf16.msra.mxu0 %v6634
        %6808 = vmatprep.subr.bf16.mxu0 %v6651
        %6809 = vmatpush1.bf16.msra.mxu0 %v6650
        %6810 = vmatprep.subr.bf16.mxu0 0
        %6811 = vmatpush1.bf16.msra.mxu0 0
        %6812 = vmatprep.subr.bf16.mxu0 0
        %6813 = vmatpush1.bf16.msra.mxu0 0
        %6814 = vmatprep.subr.bf16.mxu0 0
        %6815 = vmatpush1.bf16.msra.mxu0 0
        %6816 = vmatprep.subr.bf16.mxu0 0
        %6817 = vmatpush1.bf16.msra.mxu0 0
        %6818 = vmatprep.subr.bf16.mxu0 0
        %6819 = vmatpush1.bf16.msra.mxu0 0
        %6820 = vmatprep.subr.bf16.mxu0 0
        %6821 = vmatpush1.bf16.msra.mxu0 0
        %6822 = vmatprep.subr.bf16.mxu0 0
        %6823 = vmatpush1.bf16.msra.mxu0 0
        %6824 = vmatprep.subr.bf16.mxu0 0
        %6825 = vmatpush1.bf16.msra.mxu0 0
        %6826 = vmatprep.mubr.bf16.mxu0 0
        %6827 = vmatmul.mubr.bf16.gmra.mrb[0].mxu0 %v5932
        %v6828 = vpop.f32.mrb[0].mxu0
        %v6829 = vadd.f32 %v6077, %v6828
        %v6830 = vpop.f32.mrb[0].mxu0
        %v6831 = vadd.f32 %v6081, %v6830
        %v6832 = vpop.f32.mrb[0].mxu0
        %v6833 = vadd.f32 %v6077, %v6832
        %v6834 = vpop.f32.mrb[0].mxu0
        %v6835 = vadd.f32 %v6081, %v6834
        %6836 = vmatprep.mubr.bf16.mxu0 0
        %6837 = vmatmul.mubr.bf16.gmra.mrb[0].mxu0 %v5933
        %v6838 = vpop.f32.mrb[0].mxu0
        %v6839 = vadd.f32 %v6077, %v6838
        %v6840 = vpop.f32.mrb[0].mxu0
        %v6841 = vadd.f32 %v6081, %v6840
        %v6842 = vpop.f32.mrb[0].mxu0
        %v6843 = vadd.f32 %v6077, %v6842
        %v6844 = vpop.f32.mrb[0].mxu0
        %v6845 = vadd.f32 %v6081, %v6844
        %6846 = vmatprep.mubr.bf16.mxu0 0
        %6847 = vmatmul.mubr.bf16.gmra.mrb[0].mxu0 %v5934
        %v6848 = vpop.f32.mrb[0].mxu0
        %v6849 = vadd.f32 %v6077, %v6848
        %v6850 = vpop.f32.mrb[0].mxu0
        %v6851 = vadd.f32 %v6081, %v6850
        %v6852 = vpop.f32.mrb[0].mxu0
        %v6853 = vadd.f32 %v6077, %v6852
        %v6854 = vpop.f32.mrb[0].mxu0
        %v6855 = vadd.f32 %v6081, %v6854
        %6856 = vmatprep.mubr.bf16.mxu0 0
        %6857 = vmatmul.mubr.bf16.gmra.mrb[0].mxu0 %v5935
        %v6858 = vpop.f32.mrb[0].mxu0
        %v6859 = vadd.f32 %v6077, %v6858
        %v6860 = vpop.f32.mrb[0].mxu0
        %v6861 = vadd.f32 %v6081, %v6860
        %v6862 = vpop.f32.mrb[0].mxu0
        %v6863 = vadd.f32 %v6077, %v6862
        %v6864 = vpop.f32.mrb[0].mxu0
        %v6865 = vadd.f32 %v6081, %v6864
        %6866 = vmatprep.mubr.bf16.mxu0 0
        %6867 = vmatmul.mubr.bf16.gmra.mrb[0].mxu0 %v5936
        %v6868 = vpop.f32.mrb[0].mxu0
        %v6869 = vadd.f32 %v6077, %v6868
        %v6870 = vpop.f32.mrb[0].mxu0
        %v6871 = vadd.f32 %v6081, %v6870
        %v6872 = vpop.f32.mrb[0].mxu0
        %v6873 = vadd.f32 %v6077, %v6872
        %v6874 = vpop.f32.mrb[0].mxu0
        %v6875 = vadd.f32 %v6081, %v6874
        %6876 = vmatprep.mubr.bf16.mxu0 0
        %6877 = vmatmul.mubr.bf16.gmra.mrb[0].mxu0 %v5937
        %v6878 = vpop.f32.mrb[0].mxu0
        %v6879 = vadd.f32 %v6077, %v6878
        %v6880 = vpop.f32.mrb[0].mxu0
        %v6881 = vadd.f32 %v6081, %v6880
        %v6882 = vpop.f32.mrb[0].mxu0
        %v6883 = vadd.f32 %v6077, %v6882
        %v6884 = vpop.f32.mrb[0].mxu0
        %v6885 = vadd.f32 %v6081, %v6884
        %6886 = vmatprep.mubr.bf16.mxu0 0
        %6887 = vmatmul.mubr.bf16.gmra.mrb[0].mxu0 %v5938
        %v6888 = vpop.f32.mrb[0].mxu0
        %v6889 = vadd.f32 %v6077, %v6888
        %v6890 = vpop.f32.mrb[0].mxu0
        %v6891 = vadd.f32 %v6081, %v6890
        %v6892 = vpop.f32.mrb[0].mxu0
        %v6893 = vadd.f32 %v6077, %v6892
        %v6894 = vpop.f32.mrb[0].mxu0
        %v6895 = vadd.f32 %v6081, %v6894
        %6896 = vmatprep.mubr.bf16.mxu0 0
        %6897 = vmatmul.mubr.bf16.gmra.mrb[0].mxu0 %v5939
        %v6898 = vpop.f32.mrb[0].mxu0
        %v6899 = vadd.f32 %v6077, %v6898
        %v6900 = vpop.f32.mrb[0].mxu0
        %v6901 = vadd.f32 %v6081, %v6900
        %v6902 = vpop.f32.mrb[0].mxu0
        %v6903 = vadd.f32 %v6077, %v6902
        %v6904 = vpop.f32.mrb[0].mxu0
        %v6905 = vadd.f32 %v6081, %v6904
        %6906 = vdwg.mxu0
        %6907 = vmatprep.subr.bf16.mxu0 %v6541
        %6908 = vmatpush1.bf16.msra.mxu0 %v6540
        %6909 = vmatprep.subr.bf16.mxu0 %v6557
        %6910 = vmatpush1.bf16.msra.mxu0 %v6556
        %6911 = vmatprep.subr.bf16.mxu0 %v6573
        %6912 = vmatpush1.bf16.msra.mxu0 %v6572
        %6913 = vmatprep.subr.bf16.mxu0 %v6589
        %6914 = vmatpush1.bf16.msra.mxu0 %v6588
        %6915 = vmatprep.subr.bf16.mxu0 %v6605
        %6916 = vmatpush1.bf16.msra.mxu0 %v6604
        %6917 = vmatprep.subr.bf16.mxu0 %v6621
        %6918 = vmatpush1.bf16.msra.mxu0 %v6620
        %6919 = vmatprep.subr.bf16.mxu0 %v6637
        %6920 = vmatpush1.bf16.msra.mxu0 %v6636
        %6921 = vmatprep.subr.bf16.mxu0 %v6653
        %6922 = vmatpush1.bf16.msra.mxu0 %v6652
        %6923 = vmatprep.subr.bf16.mxu0 0
        %6924 = vmatpush1.bf16.msra.mxu0 0
        %6925 = vmatprep.subr.bf16.mxu0 0
        %6926 = vmatpush1.bf16.msra.mxu0 0
        %6927 = vmatprep.subr.bf16.mxu0 0
        %6928 = vmatpush1.bf16.msra.mxu0 0
        %6929 = vmatprep.subr.bf16.mxu0 0
        %6930 = vmatpush1.bf16.msra.mxu0 0
        %6931 = vmatprep.subr.bf16.mxu0 0
        %6932 = vmatpush1.bf16.msra.mxu0 0
        %6933 = vmatprep.subr.bf16.mxu0 0
        %6934 = vmatpush1.bf16.msra.mxu0 0
        %6935 = vmatprep.subr.bf16.mxu0 0
        %6936 = vmatpush1.bf16.msra.mxu0 0
        %6937 = vmatprep.subr.bf16.mxu0 0
        %6938 = vmatpush1.bf16.msra.mxu0 0
        %6939 = vmatprep.mubr.bf16.mxu0 0
        %6940 = vmatmul.mubr.bf16.gmra.mrb[0].mxu0 %v5932
        %v6941 = vpop.f32.mrb[0].mxu0
        %v6942 = vadd.f32 %v6085, %v6941
        %v6943 = vpop.f32.mrb[0].mxu0
        %v6944 = vadd.f32 %v6089, %v6943
        %v6945 = vpop.f32.mrb[0].mxu0
        %v6946 = vadd.f32 %v6085, %v6945
        %v6947 = vpop.f32.mrb[0].mxu0
        %v6948 = vadd.f32 %v6089, %v6947
        %6949 = vmatprep.mubr.bf16.mxu0 0
        %6950 = vmatmul.mubr.bf16.gmra.mrb[0].mxu0 %v5933
        %v6951 = vpop.f32.mrb[0].mxu0
        %v6952 = vadd.f32 %v6085, %v6951
        %v6953 = vpop.f32.mrb[0].mxu0
        %v6954 = vadd.f32 %v6089, %v6953
        %v6955 = vpop.f32.mrb[0].mxu0
        %v6956 = vadd.f32 %v6085, %v6955
        %v6957 = vpop.f32.mrb[0].mxu0
        %v6958 = vadd.f32 %v6089, %v6957
        %6959 = vmatprep.mubr.bf16.mxu0 0
        %6960 = vmatmul.mubr.bf16.gmra.mrb[0].mxu0 %v5934
        %v6961 = vpop.f32.mrb[0].mxu0
        %v6962 = vadd.f32 %v6085, %v6961
        %v6963 = vpop.f32.mrb[0].mxu0
        %v6964 = vadd.f32 %v6089, %v6963
        %v6965 = vpop.f32.mrb[0].mxu0
        %v6966 = vadd.f32 %v6085, %v6965
        %v6967 = vpop.f32.mrb[0].mxu0
        %v6968 = vadd.f32 %v6089, %v6967
        %6969 = vmatprep.mubr.bf16.mxu0 0
        %6970 = vmatmul.mubr.bf16.gmra.mrb[0].mxu0 %v5935
        %v6971 = vpop.f32.mrb[0].mxu0
        %v6972 = vadd.f32 %v6085, %v6971
        %v6973 = vpop.f32.mrb[0].mxu0
        %v6974 = vadd.f32 %v6089, %v6973
        %v6975 = vpop.f32.mrb[0].mxu0
        %v6976 = vadd.f32 %v6085, %v6975
        %v6977 = vpop.f32.mrb[0].mxu0
        %v6978 = vadd.f32 %v6089, %v6977
        %6979 = vmatprep.mubr.bf16.mxu0 0
        %6980 = vmatmul.mubr.bf16.gmra.mrb[0].mxu0 %v5936
        %v6981 = vpop.f32.mrb[0].mxu0
        %v6982 = vadd.f32 %v6085, %v6981
        %v6983 = vpop.f32.mrb[0].mxu0
        %v6984 = vadd.f32 %v6089, %v6983
        %v6985 = vpop.f32.mrb[0].mxu0
        %v6986 = vadd.f32 %v6085, %v6985
        %v6987 = vpop.f32.mrb[0].mxu0
        %v6988 = vadd.f32 %v6089, %v6987
        %6989 = vmatprep.mubr.bf16.mxu0 0
        %6990 = vmatmul.mubr.bf16.gmra.mrb[0].mxu0 %v5937
        %v6991 = vpop.f32.mrb[0].mxu0
        %v6992 = vadd.f32 %v6085, %v6991
        %v6993 = vpop.f32.mrb[0].mxu0
        %v6994 = vadd.f32 %v6089, %v6993
        %v6995 = vpop.f32.mrb[0].mxu0
        %v6996 = vadd.f32 %v6085, %v6995
        %v6997 = vpop.f32.mrb[0].mxu0
        %v6998 = vadd.f32 %v6089, %v6997
        %6999 = vmatprep.mubr.bf16.mxu0 0
        %7000 = vmatmul.mubr.bf16.gmra.mrb[0].mxu0 %v5938
        %v7001 = vpop.f32.mrb[0].mxu0
        %v7002 = vadd.f32 %v6085, %v7001
        %v7003 = vpop.f32.mrb[0].mxu0
        %v7004 = vadd.f32 %v6089, %v7003
        %v7005 = vpop.f32.mrb[0].mxu0
        %v7006 = vadd.f32 %v6085, %v7005
        %v7007 = vpop.f32.mrb[0].mxu0
        %v7008 = vadd.f32 %v6089, %v7007
        %7009 = vmatprep.mubr.bf16.mxu0 0
        %7010 = vmatmul.mubr.bf16.gmra.mrb[0].mxu0 %v5939
        %v7011 = vpop.f32.mrb[0].mxu0
        %v7012 = vadd.f32 %v6085, %v7011
        %v7013 = vpop.f32.mrb[0].mxu0
        %v7014 = vadd.f32 %v6089, %v7013
        %v7015 = vpop.f32.mrb[0].mxu0
        %v7016 = vadd.f32 %v6085, %v7015
        %v7017 = vpop.f32.mrb[0].mxu0
        %v7018 = vadd.f32 %v6089, %v7017
        %7019 = vdwg.mxu0
        %7020 = vmatprep.subr.bf16.mxu0 %v6543
        %7021 = vmatpush1.bf16.msra.mxu0 %v6542
        %7022 = vmatprep.subr.bf16.mxu0 %v6559
        %7023 = vmatpush1.bf16.msra.mxu0 %v6558
        %7024 = vmatprep.subr.bf16.mxu0 %v6575
        %7025 = vmatpush1.bf16.msra.mxu0 %v6574
        %7026 = vmatprep.subr.bf16.mxu0 %v6591
        %7027 = vmatpush1.bf16.msra.mxu0 %v6590
        %7028 = vmatprep.subr.bf16.mxu0 %v6607
        %7029 = vmatpush1.bf16.msra.mxu0 %v6606
        %7030 = vmatprep.subr.bf16.mxu0 %v6623
        %7031 = vmatpush1.bf16.msra.mxu0 %v6622
        %7032 = vmatprep.subr.bf16.mxu0 %v6639
        %7033 = vmatpush1.bf16.msra.mxu0 %v6638
        %7034 = vmatprep.subr.bf16.mxu0 %v6655
        %7035 = vmatpush1.bf16.msra.mxu0 %v6654
        %7036 = vmatprep.subr.bf16.mxu0 0
        %7037 = vmatpush1.bf16.msra.mxu0 0
        %7038 = vmatprep.subr.bf16.mxu0 0
        %7039 = vmatpush1.bf16.msra.mxu0 0
        %7040 = vmatprep.subr.bf16.mxu0 0
        %7041 = vmatpush1.bf16.msra.mxu0 0
        %7042 = vmatprep.subr.bf16.mxu0 0
        %7043 = vmatpush1.bf16.msra.mxu0 0
        %7044 = vmatprep.subr.bf16.mxu0 0
        %7045 = vmatpush1.bf16.msra.mxu0 0
        %7046 = vmatprep.subr.bf16.mxu0 0
        %7047 = vmatpush1.bf16.msra.mxu0 0
        %7048 = vmatprep.subr.bf16.mxu0 0
        %7049 = vmatpush1.bf16.msra.mxu0 0
        %7050 = vmatprep.subr.bf16.mxu0 0
        %7051 = vmatpush1.bf16.msra.mxu0 0
        %7052 = vmatprep.mubr.bf16.mxu0 0
        %7053 = vmatmul.mubr.bf16.gmra.mrb[0].mxu0 %v5932
        %v7054 = vpop.f32.mrb[0].mxu0
        %v7055 = vadd.f32 %v6093, %v7054
        %v7056 = vpop.f32.mrb[0].mxu0
        %v7057 = vadd.f32 %v6097, %v7056
        %v7058 = vpop.f32.mrb[0].mxu0
        %v7059 = vadd.f32 %v6093, %v7058
        %v7060 = vpop.f32.mrb[0].mxu0
        %v7061 = vadd.f32 %v6097, %v7060
        %7062 = vmatprep.mubr.bf16.mxu0 0
        %7063 = vmatmul.mubr.bf16.gmra.mrb[0].mxu0 %v5933
        %v7064 = vpop.f32.mrb[0].mxu0
        %v7065 = vadd.f32 %v6093, %v7064
        %v7066 = vpop.f32.mrb[0].mxu0
        %v7067 = vadd.f32 %v6097, %v7066
        %v7068 = vpop.f32.mrb[0].mxu0
        %v7069 = vadd.f32 %v6093, %v7068
        %v7070 = vpop.f32.mrb[0].mxu0
        %v7071 = vadd.f32 %v6097, %v7070
        %7072 = vmatprep.mubr.bf16.mxu0 0
        %7073 = vmatmul.mubr.bf16.gmra.mrb[0].mxu0 %v5934
        %v7074 = vpop.f32.mrb[0].mxu0
        %v7075 = vadd.f32 %v6093, %v7074
        %v7076 = vpop.f32.mrb[0].mxu0
        %v7077 = vadd.f32 %v6097, %v7076
        %v7078 = vpop.f32.mrb[0].mxu0
        %v7079 = vadd.f32 %v6093, %v7078
        %v7080 = vpop.f32.mrb[0].mxu0
        %v7081 = vadd.f32 %v6097, %v7080
        %7082 = vmatprep.mubr.bf16.mxu0 0
        %7083 = vmatmul.mubr.bf16.gmra.mrb[0].mxu0 %v5935
        %v7084 = vpop.f32.mrb[0].mxu0
        %v7085 = vadd.f32 %v6093, %v7084
        %v7086 = vpop.f32.mrb[0].mxu0
        %v7087 = vadd.f32 %v6097, %v7086
        %v7088 = vpop.f32.mrb[0].mxu0
        %v7089 = vadd.f32 %v6093, %v7088
        %v7090 = vpop.f32.mrb[0].mxu0
        %v7091 = vadd.f32 %v6097, %v7090
        %7092 = vmatprep.mubr.bf16.mxu0 0
        %7093 = vmatmul.mubr.bf16.gmra.mrb[0].mxu0 %v5936
        %v7094 = vpop.f32.mrb[0].mxu0
        %v7095 = vadd.f32 %v6093, %v7094
        %v7096 = vpop.f32.mrb[0].mxu0
        %v7097 = vadd.f32 %v6097, %v7096
        %v7098 = vpop.f32.mrb[0].mxu0
        %v7099 = vadd.f32 %v6093, %v7098
        %v7100 = vpop.f32.mrb[0].mxu0
        %v7101 = vadd.f32 %v6097, %v7100
        %7102 = vmatprep.mubr.bf16.mxu0 0
        %7103 = vmatmul.mubr.bf16.gmra.mrb[0].mxu0 %v5937
        %v7104 = vpop.f32.mrb[0].mxu0
        %v7105 = vadd.f32 %v6093, %v7104
        %v7106 = vpop.f32.mrb[0].mxu0
        %v7107 = vadd.f32 %v6097, %v7106
        %v7108 = vpop.f32.mrb[0].mxu0
        %v7109 = vadd.f32 %v6093, %v7108
        %v7110 = vpop.f32.mrb[0].mxu0
        %v7111 = vadd.f32 %v6097, %v7110
        %7112 = vmatprep.mubr.bf16.mxu0 0
        %7113 = vmatmul.mubr.bf16.gmra.mrb[0].mxu0 %v5938
        %v7114 = vpop.f32.mrb[0].mxu0
        %v7115 = vadd.f32 %v6093, %v7114
        %v7116 = vpop.f32.mrb[0].mxu0
        %v7117 = vadd.f32 %v6097, %v7116
        %v7118 = vpop.f32.mrb[0].mxu0
        %v7119 = vadd.f32 %v6093, %v7118
        %v7120 = vpop.f32.mrb[0].mxu0
        %v7121 = vadd.f32 %v6097, %v7120
        %7122 = vmatprep.mubr.bf16.mxu0 0
        %7123 = vmatmul.mubr.bf16.gmra.mrb[0].mxu0 %v5939
        %v7124 = vpop.f32.mrb[0].mxu0
        %v7125 = vadd.f32 %v6093, %v7124
        %v7126 = vpop.f32.mrb[0].mxu0
        %v7127 = vadd.f32 %v6097, %v7126
        %v7128 = vpop.f32.mrb[0].mxu0
        %v7129 = vadd.f32 %v6093, %v7128
        %v7130 = vpop.f32.mrb[0].mxu0
        %v7131 = vadd.f32 %v6097, %v7130
        %7132 = vdwg.mxu0
        %7133 = vmatprep.subr.bf16.mxu0 %v6545
        %7134 = vmatpush1.bf16.msra.mxu0 %v6544
        %7135 = vmatprep.subr.bf16.mxu0 %v6561
        %7136 = vmatpush1.bf16.msra.mxu0 %v6560
        %7137 = vmatprep.subr.bf16.mxu0 %v6577
        %7138 = vmatpush1.bf16.msra.mxu0 %v6576
        %7139 = vmatprep.subr.bf16.mxu0 %v6593
        %7140 = vmatpush1.bf16.msra.mxu0 %v6592
        %7141 = vmatprep.subr.bf16.mxu0 %v6609
        %7142 = vmatpush1.bf16.msra.mxu0 %v6608
        %7143 = vmatprep.subr.bf16.mxu0 %v6625
        %7144 = vmatpush1.bf16.msra.mxu0 %v6624
        %7145 = vmatprep.subr.bf16.mxu0 %v6641
        %7146 = vmatpush1.bf16.msra.mxu0 %v6640
        %7147 = vmatprep.subr.bf16.mxu0 %v6657
        %7148 = vmatpush1.bf16.msra.mxu0 %v6656
        %7149 = vmatprep.subr.bf16.mxu0 0
        %7150 = vmatpush1.bf16.msra.mxu0 0
        %7151 = vmatprep.subr.bf16.mxu0 0
        %7152 = vmatpush1.bf16.msra.mxu0 0
        %7153 = vmatprep.subr.bf16.mxu0 0
        %7154 = vmatpush1.bf16.msra.mxu0 0
        %7155 = vmatprep.subr.bf16.mxu0 0
        %7156 = vmatpush1.bf16.msra.mxu0 0
        %7157 = vmatprep.subr.bf16.mxu0 0
        %7158 = vmatpush1.bf16.msra.mxu0 0
        %7159 = vmatprep.subr.bf16.mxu0 0
        %7160 = vmatpush1.bf16.msra.mxu0 0
        %7161 = vmatprep.subr.bf16.mxu0 0
        %7162 = vmatpush1.bf16.msra.mxu0 0
        %7163 = vmatprep.subr.bf16.mxu0 0
        %7164 = vmatpush1.bf16.msra.mxu0 0
        %7165 = vmatprep.mubr.bf16.mxu0 0
        %7166 = vmatmul.mubr.bf16.gmra.mrb[0].mxu0 %v5932
        %v7167 = vpop.f32.mrb[0].mxu0
        %v7168 = vadd.f32 %v6101, %v7167
        %v7169 = vpop.f32.mrb[0].mxu0
        %v7170 = vadd.f32 %v6105, %v7169
        %v7171 = vpop.f32.mrb[0].mxu0
        %v7172 = vadd.f32 %v6101, %v7171
        %v7173 = vpop.f32.mrb[0].mxu0
        %v7174 = vadd.f32 %v6105, %v7173
        %7175 = vmatprep.mubr.bf16.mxu0 0
        %7176 = vmatmul.mubr.bf16.gmra.mrb[0].mxu0 %v5933
        %v7177 = vpop.f32.mrb[0].mxu0
        %v7178 = vadd.f32 %v6101, %v7177
        %v7179 = vpop.f32.mrb[0].mxu0
        %v7180 = vadd.f32 %v6105, %v7179
        %v7181 = vpop.f32.mrb[0].mxu0
        %v7182 = vadd.f32 %v6101, %v7181
        %v7183 = vpop.f32.mrb[0].mxu0
        %v7184 = vadd.f32 %v6105, %v7183
        %7185 = vmatprep.mubr.bf16.mxu0 0
        %7186 = vmatmul.mubr.bf16.gmra.mrb[0].mxu0 %v5934
        %v7187 = vpop.f32.mrb[0].mxu0
        %v7188 = vadd.f32 %v6101, %v7187
        %v7189 = vpop.f32.mrb[0].mxu0
        %v7190 = vadd.f32 %v6105, %v7189
        %v7191 = vpop.f32.mrb[0].mxu0
        %v7192 = vadd.f32 %v6101, %v7191
        %v7193 = vpop.f32.mrb[0].mxu0
        %v7194 = vadd.f32 %v6105, %v7193
        %7195 = vmatprep.mubr.bf16.mxu0 0
        %7196 = vmatmul.mubr.bf16.gmra.mrb[0].mxu0 %v5935
        %v7197 = vpop.f32.mrb[0].mxu0
        %v7198 = vadd.f32 %v6101, %v7197
        %v7199 = vpop.f32.mrb[0].mxu0
        %v7200 = vadd.f32 %v6105, %v7199
        %v7201 = vpop.f32.mrb[0].mxu0
        %v7202 = vadd.f32 %v6101, %v7201
        %v7203 = vpop.f32.mrb[0].mxu0
        %v7204 = vadd.f32 %v6105, %v7203
        %7205 = vmatprep.mubr.bf16.mxu0 0
        %7206 = vmatmul.mubr.bf16.gmra.mrb[0].mxu0 %v5936
        %v7207 = vpop.f32.mrb[0].mxu0
        %v7208 = vadd.f32 %v6101, %v7207
        %v7209 = vpop.f32.mrb[0].mxu0
        %v7210 = vadd.f32 %v6105, %v7209
        %v7211 = vpop.f32.mrb[0].mxu0
        %v7212 = vadd.f32 %v6101, %v7211
        %v7213 = vpop.f32.mrb[0].mxu0
        %v7214 = vadd.f32 %v6105, %v7213
        %7215 = vmatprep.mubr.bf16.mxu0 0
        %7216 = vmatmul.mubr.bf16.gmra.mrb[0].mxu0 %v5937
        %v7217 = vpop.f32.mrb[0].mxu0
        %v7218 = vadd.f32 %v6101, %v7217
        %v7219 = vpop.f32.mrb[0].mxu0
        %v7220 = vadd.f32 %v6105, %v7219
        %v7221 = vpop.f32.mrb[0].mxu0
        %v7222 = vadd.f32 %v6101, %v7221
        %v7223 = vpop.f32.mrb[0].mxu0
        %v7224 = vadd.f32 %v6105, %v7223
        %7225 = vmatprep.mubr.bf16.mxu0 0
        %7226 = vmatmul.mubr.bf16.gmra.mrb[0].mxu0 %v5938
        %v7227 = vpop.f32.mrb[0].mxu0
        %v7228 = vadd.f32 %v6101, %v7227
        %v7229 = vpop.f32.mrb[0].mxu0
        %v7230 = vadd.f32 %v6105, %v7229
        %v7231 = vpop.f32.mrb[0].mxu0
        %v7232 = vadd.f32 %v6101, %v7231
        %v7233 = vpop.f32.mrb[0].mxu0
        %v7234 = vadd.f32 %v6105, %v7233
        %7235 = vmatprep.mubr.bf16.mxu0 0
        %7236 = vmatmul.mubr.bf16.gmra.mrb[0].mxu0 %v5939
        %v7237 = vpop.f32.mrb[0].mxu0
        %v7238 = vadd.f32 %v6101, %v7237
        %v7239 = vpop.f32.mrb[0].mxu0
        %v7240 = vadd.f32 %v6105, %v7239
        %v7241 = vpop.f32.mrb[0].mxu0
        %v7242 = vadd.f32 %v6101, %v7241
        %v7243 = vpop.f32.mrb[0].mxu0
        %v7244 = vadd.f32 %v6105, %v7243
        %7245 = vdwg.mxu0
        %7246 = vmatprep.subr.bf16.mxu0 %v6547
        %7247 = vmatpush1.bf16.msra.mxu0 %v6546
        %7248 = vmatprep.subr.bf16.mxu0 %v6563
        %7249 = vmatpush1.bf16.msra.mxu0 %v6562
        %7250 = vmatprep.subr.bf16.mxu0 %v6579
        %7251 = vmatpush1.bf16.msra.mxu0 %v6578
        %7252 = vmatprep.subr.bf16.mxu0 %v6595
        %7253 = vmatpush1.bf16.msra.mxu0 %v6594
        %7254 = vmatprep.subr.bf16.mxu0 %v6611
        %7255 = vmatpush1.bf16.msra.mxu0 %v6610
        %7256 = vmatprep.subr.bf16.mxu0 %v6627
        %7257 = vmatpush1.bf16.msra.mxu0 %v6626
        %7258 = vmatprep.subr.bf16.mxu0 %v6643
        %7259 = vmatpush1.bf16.msra.mxu0 %v6642
        %7260 = vmatprep.subr.bf16.mxu0 %v6659
        %7261 = vmatpush1.bf16.msra.mxu0 %v6658
        %7262 = vmatprep.subr.bf16.mxu0 0
        %7263 = vmatpush1.bf16.msra.mxu0 0
        %7264 = vmatprep.subr.bf16.mxu0 0
        %7265 = vmatpush1.bf16.msra.mxu0 0
        %7266 = vmatprep.subr.bf16.mxu0 0
        %7267 = vmatpush1.bf16.msra.mxu0 0
        %7268 = vmatprep.subr.bf16.mxu0 0
        %7269 = vmatpush1.bf16.msra.mxu0 0
        %7270 = vmatprep.subr.bf16.mxu0 0
        %7271 = vmatpush1.bf16.msra.mxu0 0
        %7272 = vmatprep.subr.bf16.mxu0 0
        %7273 = vmatpush1.bf16.msra.mxu0 0
        %7274 = vmatprep.subr.bf16.mxu0 0
        %7275 = vmatpush1.bf16.msra.mxu0 0
        %7276 = vmatprep.subr.bf16.mxu0 0
        %7277 = vmatpush1.bf16.msra.mxu0 0
        %7278 = vmatprep.mubr.bf16.mxu0 0
        %7279 = vmatmul.mubr.bf16.gmra.mrb[0].mxu0 %v5932
        %v7280 = vpop.f32.mrb[0].mxu0
        %v7281 = vadd.f32 %v6109, %v7280
        %v7282 = vpop.f32.mrb[0].mxu0
        %v7283 = vadd.f32 %v6113, %v7282
        %v7284 = vpop.f32.mrb[0].mxu0
        %v7285 = vadd.f32 %v6109, %v7284
        %v7286 = vpop.f32.mrb[0].mxu0
        %v7287 = vadd.f32 %v6113, %v7286
        %7288 = vmatprep.mubr.bf16.mxu0 0
        %7289 = vmatmul.mubr.bf16.gmra.mrb[0].mxu0 %v5933
        %v7290 = vpop.f32.mrb[0].mxu0
        %v7291 = vadd.f32 %v6109, %v7290
        %v7292 = vpop.f32.mrb[0].mxu0
        %v7293 = vadd.f32 %v6113, %v7292
        %v7294 = vpop.f32.mrb[0].mxu0
        %v7295 = vadd.f32 %v6109, %v7294
        %v7296 = vpop.f32.mrb[0].mxu0
        %v7297 = vadd.f32 %v6113, %v7296
        %7298 = vmatprep.mubr.bf16.mxu0 0
        %7299 = vmatmul.mubr.bf16.gmra.mrb[0].mxu0 %v5934
        %v7300 = vpop.f32.mrb[0].mxu0
        %v7301 = vadd.f32 %v6109, %v7300
        %v7302 = vpop.f32.mrb[0].mxu0
        %v7303 = vadd.f32 %v6113, %v7302
        %v7304 = vpop.f32.mrb[0].mxu0
        %v7305 = vadd.f32 %v6109, %v7304
        %v7306 = vpop.f32.mrb[0].mxu0
        %v7307 = vadd.f32 %v6113, %v7306
        %7308 = vmatprep.mubr.bf16.mxu0 0
        %7309 = vmatmul.mubr.bf16.gmra.mrb[0].mxu0 %v5935
        %v7310 = vpop.f32.mrb[0].mxu0
        %v7311 = vadd.f32 %v6109, %v7310
        %v7312 = vpop.f32.mrb[0].mxu0
        %v7313 = vadd.f32 %v6113, %v7312
        %v7314 = vpop.f32.mrb[0].mxu0
        %v7315 = vadd.f32 %v6109, %v7314
        %v7316 = vpop.f32.mrb[0].mxu0
        %v7317 = vadd.f32 %v6113, %v7316
        %7318 = vmatprep.mubr.bf16.mxu0 0
        %7319 = vmatmul.mubr.bf16.gmra.mrb[0].mxu0 %v5936
        %v7320 = vpop.f32.mrb[0].mxu0
        %v7321 = vadd.f32 %v6109, %v7320
        %v7322 = vpop.f32.mrb[0].mxu0
        %v7323 = vadd.f32 %v6113, %v7322
        %v7324 = vpop.f32.mrb[0].mxu0
        %v7325 = vadd.f32 %v6109, %v7324
        %v7326 = vpop.f32.mrb[0].mxu0
        %v7327 = vadd.f32 %v6113, %v7326
        %7328 = vmatprep.mubr.bf16.mxu0 0
        %7329 = vmatmul.mubr.bf16.gmra.mrb[0].mxu0 %v5937
        %v7330 = vpop.f32.mrb[0].mxu0
        %v7331 = vadd.f32 %v6109, %v7330
        %v7332 = vpop.f32.mrb[0].mxu0
        %v7333 = vadd.f32 %v6113, %v7332
        %v7334 = vpop.f32.mrb[0].mxu0
        %v7335 = vadd.f32 %v6109, %v7334
        %v7336 = vpop.f32.mrb[0].mxu0
        %v7337 = vadd.f32 %v6113, %v7336
        %7338 = vmatprep.mubr.bf16.mxu0 0
        %7339 = vmatmul.mubr.bf16.gmra.mrb[0].mxu0 %v5938
        %v7340 = vpop.f32.mrb[0].mxu0
        %v7341 = vadd.f32 %v6109, %v7340
        %v7342 = vpop.f32.mrb[0].mxu0
        %v7343 = vadd.f32 %v6113, %v7342
        %v7344 = vpop.f32.mrb[0].mxu0
        %v7345 = vadd.f32 %v6109, %v7344
        %v7346 = vpop.f32.mrb[0].mxu0
        %v7347 = vadd.f32 %v6113, %v7346
        %7348 = vmatprep.mubr.bf16.mxu0 0
        %7349 = vmatmul.mubr.bf16.gmra.mrb[0].mxu0 %v5939
        %v7350 = vpop.f32.mrb[0].mxu0
        %v7351 = vadd.f32 %v6109, %v7350
        %v7352 = vpop.f32.mrb[0].mxu0
        %v7353 = vadd.f32 %v6113, %v7352
        %v7354 = vpop.f32.mrb[0].mxu0
        %v7355 = vadd.f32 %v6109, %v7354
        %v7356 = vpop.f32.mrb[0].mxu0
        %v7357 = vadd.f32 %v6113, %v7356
        %7358 = vdwg.mxu0
        %7359 = vmatprep.subr.bf16.mxu0 %v6549
        %7360 = vmatpush1.bf16.msra.mxu0 %v6548
        %7361 = vmatprep.subr.bf16.mxu0 %v6565
        %7362 = vmatpush1.bf16.msra.mxu0 %v6564
        %7363 = vmatprep.subr.bf16.mxu0 %v6581
        %7364 = vmatpush1.bf16.msra.mxu0 %v6580
        %7365 = vmatprep.subr.bf16.mxu0 %v6597
        %7366 = vmatpush1.bf16.msra.mxu0 %v6596
        %7367 = vmatprep.subr.bf16.mxu0 %v6613
        %7368 = vmatpush1.bf16.msra.mxu0 %v6612
        %7369 = vmatprep.subr.bf16.mxu0 %v6629
        %7370 = vmatpush1.bf16.msra.mxu0 %v6628
        %7371 = vmatprep.subr.bf16.mxu0 %v6645
        %7372 = vmatpush1.bf16.msra.mxu0 %v6644
        %7373 = vmatprep.subr.bf16.mxu0 %v6661
        %7374 = vmatpush1.bf16.msra.mxu0 %v6660
        %7375 = vmatprep.subr.bf16.mxu0 0
        %7376 = vmatpush1.bf16.msra.mxu0 0
        %7377 = vmatprep.subr.bf16.mxu0 0
        %7378 = vmatpush1.bf16.msra.mxu0 0
        %7379 = vmatprep.subr.bf16.mxu0 0
        %7380 = vmatpush1.bf16.msra.mxu0 0
        %7381 = vmatprep.subr.bf16.mxu0 0
        %7382 = vmatpush1.bf16.msra.mxu0 0
        %7383 = vmatprep.subr.bf16.mxu0 0
        %7384 = vmatpush1.bf16.msra.mxu0 0
        %7385 = vmatprep.subr.bf16.mxu0 0
        %7386 = vmatpush1.bf16.msra.mxu0 0
        %7387 = vmatprep.subr.bf16.mxu0 0
        %7388 = vmatpush1.bf16.msra.mxu0 0
        %7389 = vmatprep.subr.bf16.mxu0 0
        %7390 = vmatpush1.bf16.msra.mxu0 0
        %7391 = vmatprep.mubr.bf16.mxu0 0
        %7392 = vmatmul.mubr.bf16.gmra.mrb[0].mxu0 %v5932
        %v7393 = vpop.f32.mrb[0].mxu0
        %v7394 = vadd.f32 %v6117, %v7393
        %v7395 = vpop.f32.mrb[0].mxu0
        %v7396 = vadd.f32 %v6121, %v7395
        %v7397 = vpop.f32.mrb[0].mxu0
        %v7398 = vadd.f32 %v6117, %v7397
        %v7399 = vpop.f32.mrb[0].mxu0
        %v7400 = vadd.f32 %v6121, %v7399
        %7401 = vmatprep.mubr.bf16.mxu0 0
        %7402 = vmatmul.mubr.bf16.gmra.mrb[0].mxu0 %v5933
        %v7403 = vpop.f32.mrb[0].mxu0
        %v7404 = vadd.f32 %v6117, %v7403
        %v7405 = vpop.f32.mrb[0].mxu0
        %v7406 = vadd.f32 %v6121, %v7405
        %v7407 = vpop.f32.mrb[0].mxu0
        %v7408 = vadd.f32 %v6117, %v7407
        %v7409 = vpop.f32.mrb[0].mxu0
        %v7410 = vadd.f32 %v6121, %v7409
        %7411 = vmatprep.mubr.bf16.mxu0 0
        %7412 = vmatmul.mubr.bf16.gmra.mrb[0].mxu0 %v5934
        %v7413 = vpop.f32.mrb[0].mxu0
        %v7414 = vadd.f32 %v6117, %v7413
        %v7415 = vpop.f32.mrb[0].mxu0
        %v7416 = vadd.f32 %v6121, %v7415
        %v7417 = vpop.f32.mrb[0].mxu0
        %v7418 = vadd.f32 %v6117, %v7417
        %v7419 = vpop.f32.mrb[0].mxu0
        %v7420 = vadd.f32 %v6121, %v7419
        %7421 = vmatprep.mubr.bf16.mxu0 0
        %7422 = vmatmul.mubr.bf16.gmra.mrb[0].mxu0 %v5935
        %v7423 = vpop.f32.mrb[0].mxu0
        %v7424 = vadd.f32 %v6117, %v7423
        %v7425 = vpop.f32.mrb[0].mxu0
        %v7426 = vadd.f32 %v6121, %v7425
        %v7427 = vpop.f32.mrb[0].mxu0
        %v7428 = vadd.f32 %v6117, %v7427
        %v7429 = vpop.f32.mrb[0].mxu0
        %v7430 = vadd.f32 %v6121, %v7429
        %7431 = vmatprep.mubr.bf16.mxu0 0
        %7432 = vmatmul.mubr.bf16.gmra.mrb[0].mxu0 %v5936
        %v7433 = vpop.f32.mrb[0].mxu0
        %v7434 = vadd.f32 %v6117, %v7433
        %v7435 = vpop.f32.mrb[0].mxu0
        %v7436 = vadd.f32 %v6121, %v7435
        %v7437 = vpop.f32.mrb[0].mxu0
        %v7438 = vadd.f32 %v6117, %v7437
        %v7439 = vpop.f32.mrb[0].mxu0
        %v7440 = vadd.f32 %v6121, %v7439
        %7441 = vmatprep.mubr.bf16.mxu0 0
        %7442 = vmatmul.mubr.bf16.gmra.mrb[0].mxu0 %v5937
        %v7443 = vpop.f32.mrb[0].mxu0
        %v7444 = vadd.f32 %v6117, %v7443
        %v7445 = vpop.f32.mrb[0].mxu0
        %v7446 = vadd.f32 %v6121, %v7445
        %v7447 = vpop.f32.mrb[0].mxu0
        %v7448 = vadd.f32 %v6117, %v7447
        %v7449 = vpop.f32.mrb[0].mxu0
        %v7450 = vadd.f32 %v6121, %v7449
        %7451 = vmatprep.mubr.bf16.mxu0 0
        %7452 = vmatmul.mubr.bf16.gmra.mrb[0].mxu0 %v5938
        %v7453 = vpop.f32.mrb[0].mxu0
        %v7454 = vadd.f32 %v6117, %v7453
        %v7455 = vpop.f32.mrb[0].mxu0
        %v7456 = vadd.f32 %v6121, %v7455
        %v7457 = vpop.f32.mrb[0].mxu0
        %v7458 = vadd.f32 %v6117, %v7457
        %v7459 = vpop.f32.mrb[0].mxu0
        %v7460 = vadd.f32 %v6121, %v7459
        %7461 = vmatprep.mubr.bf16.mxu0 0
        %7462 = vmatmul.mubr.bf16.gmra.mrb[0].mxu0 %v5939
        %v7463 = vpop.f32.mrb[0].mxu0
        %v7464 = vadd.f32 %v6117, %v7463
        %v7465 = vpop.f32.mrb[0].mxu0
        %v7466 = vadd.f32 %v6121, %v7465
        %v7467 = vpop.f32.mrb[0].mxu0
        %v7468 = vadd.f32 %v6117, %v7467
        %v7469 = vpop.f32.mrb[0].mxu0
        %v7470 = vadd.f32 %v6121, %v7469
        %7471 = vdwg.mxu0
        %7472 = vmatprep.subr.bf16.mxu0 %v6551
        %7473 = vmatpush1.bf16.msra.mxu0 %v6550
        %7474 = vmatprep.subr.bf16.mxu0 %v6567
        %7475 = vmatpush1.bf16.msra.mxu0 %v6566
        %7476 = vmatprep.subr.bf16.mxu0 %v6583
        %7477 = vmatpush1.bf16.msra.mxu0 %v6582
        %7478 = vmatprep.subr.bf16.mxu0 %v6599
        %7479 = vmatpush1.bf16.msra.mxu0 %v6598
        %7480 = vmatprep.subr.bf16.mxu0 %v6615
        %7481 = vmatpush1.bf16.msra.mxu0 %v6614
        %7482 = vmatprep.subr.bf16.mxu0 %v6631
        %7483 = vmatpush1.bf16.msra.mxu0 %v6630
        %7484 = vmatprep.subr.bf16.mxu0 %v6647
        %7485 = vmatpush1.bf16.msra.mxu0 %v6646
        %7486 = vmatprep.subr.bf16.mxu0 %v6663
        %7487 = vmatpush1.bf16.msra.mxu0 %v6662
        %7488 = vmatprep.subr.bf16.mxu0 0
        %7489 = vmatpush1.bf16.msra.mxu0 0
        %7490 = vmatprep.subr.bf16.mxu0 0
        %7491 = vmatpush1.bf16.msra.mxu0 0
        %7492 = vmatprep.subr.bf16.mxu0 0
        %7493 = vmatpush1.bf16.msra.mxu0 0
        %7494 = vmatprep.subr.bf16.mxu0 0
        %7495 = vmatpush1.bf16.msra.mxu0 0
        %7496 = vmatprep.subr.bf16.mxu0 0
        %7497 = vmatpush1.bf16.msra.mxu0 0
        %7498 = vmatprep.subr.bf16.mxu0 0
        %7499 = vmatpush1.bf16.msra.mxu0 0
        %7500 = vmatprep.subr.bf16.mxu0 0
        %7501 = vmatpush1.bf16.msra.mxu0 0
        %7502 = vmatprep.subr.bf16.mxu0 0
        %7503 = vmatpush1.bf16.msra.mxu0 0
        %7504 = vmatprep.mubr.bf16.mxu0 0
        %7505 = vmatmul.mubr.bf16.gmra.mrb[0].mxu0 %v5932
        %v7506 = vpop.f32.mrb[0].mxu0
        %v7507 = vadd.f32 %v6125, %v7506
        %v7508 = vpop.f32.mrb[0].mxu0
        %v7509 = vadd.f32 %v6129, %v7508
        %v7510 = vpop.f32.mrb[0].mxu0
        %v7511 = vadd.f32 %v6125, %v7510
        %v7512 = vpop.f32.mrb[0].mxu0
        %v7513 = vadd.f32 %v6129, %v7512
        %7514 = vmatprep.mubr.bf16.mxu0 0
        %7515 = vmatmul.mubr.bf16.gmra.mrb[0].mxu0 %v5933
        %v7516 = vpop.f32.mrb[0].mxu0
        %v7517 = vadd.f32 %v6125, %v7516
        %v7518 = vpop.f32.mrb[0].mxu0
        %v7519 = vadd.f32 %v6129, %v7518
        %v7520 = vpop.f32.mrb[0].mxu0
        %v7521 = vadd.f32 %v6125, %v7520
        %v7522 = vpop.f32.mrb[0].mxu0
        %v7523 = vadd.f32 %v6129, %v7522
        %7524 = vmatprep.mubr.bf16.mxu0 0
        %7525 = vmatmul.mubr.bf16.gmra.mrb[0].mxu0 %v5934
        %v7526 = vpop.f32.mrb[0].mxu0
        %v7527 = vadd.f32 %v6125, %v7526
        %v7528 = vpop.f32.mrb[0].mxu0
        %v7529 = vadd.f32 %v6129, %v7528
        %v7530 = vpop.f32.mrb[0].mxu0
        %v7531 = vadd.f32 %v6125, %v7530
        %v7532 = vpop.f32.mrb[0].mxu0
        %v7533 = vadd.f32 %v6129, %v7532
        %7534 = vmatprep.mubr.bf16.mxu0 0
        %7535 = vmatmul.mubr.bf16.gmra.mrb[0].mxu0 %v5935
        %v7536 = vpop.f32.mrb[0].mxu0
        %v7537 = vadd.f32 %v6125, %v7536
        %v7538 = vpop.f32.mrb[0].mxu0
        %v7539 = vadd.f32 %v6129, %v7538
        %v7540 = vpop.f32.mrb[0].mxu0
        %v7541 = vadd.f32 %v6125, %v7540
        %v7542 = vpop.f32.mrb[0].mxu0
        %v7543 = vadd.f32 %v6129, %v7542
        %7544 = vmatprep.mubr.bf16.mxu0 0
        %7545 = vmatmul.mubr.bf16.gmra.mrb[0].mxu0 %v5936
        %v7546 = vpop.f32.mrb[0].mxu0
        %v7547 = vadd.f32 %v6125, %v7546
        %v7548 = vpop.f32.mrb[0].mxu0
        %v7549 = vadd.f32 %v6129, %v7548
        %v7550 = vpop.f32.mrb[0].mxu0
        %v7551 = vadd.f32 %v6125, %v7550
        %v7552 = vpop.f32.mrb[0].mxu0
        %v7553 = vadd.f32 %v6129, %v7552
        %7554 = vmatprep.mubr.bf16.mxu0 0
        %7555 = vmatmul.mubr.bf16.gmra.mrb[0].mxu0 %v5937
        %v7556 = vpop.f32.mrb[0].mxu0
        %v7557 = vadd.f32 %v6125, %v7556
        %v7558 = vpop.f32.mrb[0].mxu0
        %v7559 = vadd.f32 %v6129, %v7558
        %v7560 = vpop.f32.mrb[0].mxu0
        %v7561 = vadd.f32 %v6125, %v7560
        %v7562 = vpop.f32.mrb[0].mxu0
        %v7563 = vadd.f32 %v6129, %v7562
        %7564 = vmatprep.mubr.bf16.mxu0 0
        %7565 = vmatmul.mubr.bf16.gmra.mrb[0].mxu0 %v5938
        %v7566 = vpop.f32.mrb[0].mxu0
        %v7567 = vadd.f32 %v6125, %v7566
        %v7568 = vpop.f32.mrb[0].mxu0
        %v7569 = vadd.f32 %v6129, %v7568
        %v7570 = vpop.f32.mrb[0].mxu0
        %v7571 = vadd.f32 %v6125, %v7570
        %v7572 = vpop.f32.mrb[0].mxu0
        %v7573 = vadd.f32 %v6129, %v7572
        %7574 = vmatprep.mubr.bf16.mxu0 0
        %7575 = vmatmul.mubr.bf16.gmra.mrb[0].mxu0 %v5939
        %v7576 = vpop.f32.mrb[0].mxu0
        %v7577 = vadd.f32 %v6125, %v7576
        %v7578 = vpop.f32.mrb[0].mxu0
        %v7579 = vadd.f32 %v6129, %v7578
        %v7580 = vpop.f32.mrb[0].mxu0
        %v7581 = vadd.f32 %v6125, %v7580
        %v7582 = vpop.f32.mrb[0].mxu0
        %v7583 = vadd.f32 %v6129, %v7582
        %7584 = vdwg.mxu0
        %7585 = vmatprep.subr.bf16.mxu0 %v6553
        %7586 = vmatpush1.bf16.msra.mxu0 %v6552
        %7587 = vmatprep.subr.bf16.mxu0 %v6569
        %7588 = vmatpush1.bf16.msra.mxu0 %v6568
        %7589 = vmatprep.subr.bf16.mxu0 %v6585
        %7590 = vmatpush1.bf16.msra.mxu0 %v6584
        %7591 = vmatprep.subr.bf16.mxu0 %v6601
        %7592 = vmatpush1.bf16.msra.mxu0 %v6600
        %7593 = vmatprep.subr.bf16.mxu0 %v6617
        %7594 = vmatpush1.bf16.msra.mxu0 %v6616
        %7595 = vmatprep.subr.bf16.mxu0 %v6633
        %7596 = vmatpush1.bf16.msra.mxu0 %v6632
        %7597 = vmatprep.subr.bf16.mxu0 %v6649
        %7598 = vmatpush1.bf16.msra.mxu0 %v6648
        %7599 = vmatprep.subr.bf16.mxu0 %v6665
        %7600 = vmatpush1.bf16.msra.mxu0 %v6664
        %7601 = vmatprep.subr.bf16.mxu0 0
        %7602 = vmatpush1.bf16.msra.mxu0 0
        %7603 = vmatprep.subr.bf16.mxu0 0
        %7604 = vmatpush1.bf16.msra.mxu0 0
        %7605 = vmatprep.subr.bf16.mxu0 0
        %7606 = vmatpush1.bf16.msra.mxu0 0
        %7607 = vmatprep.subr.bf16.mxu0 0
        %7608 = vmatpush1.bf16.msra.mxu0 0
        %7609 = vmatprep.subr.bf16.mxu0 0
        %7610 = vmatpush1.bf16.msra.mxu0 0
        %7611 = vmatprep.subr.bf16.mxu0 0
        %7612 = vmatpush1.bf16.msra.mxu0 0
        %7613 = vmatprep.subr.bf16.mxu0 0
        %7614 = vmatpush1.bf16.msra.mxu0 0
        %7615 = vmatprep.subr.bf16.mxu0 0
        %7616 = vmatpush1.bf16.msra.mxu0 0
        %7617 = vmatprep.mubr.bf16.mxu0 0
        %7618 = vmatmul.mubr.bf16.gmra.mrb[0].mxu0 %v5932
        %v7619 = vpop.f32.mrb[0].mxu0
        %v7620 = vadd.f32 %v6133, %v7619
        %v7621 = vpop.f32.mrb[0].mxu0
        %v7622 = vadd.f32 %v6137, %v7621
        %v7623 = vpop.f32.mrb[0].mxu0
        %v7624 = vadd.f32 %v6133, %v7623
        %v7625 = vpop.f32.mrb[0].mxu0
        %v7626 = vadd.f32 %v6137, %v7625
        %7627 = vmatprep.mubr.bf16.mxu0 0
        %7628 = vmatmul.mubr.bf16.gmra.mrb[0].mxu0 %v5933
        %v7629 = vpop.f32.mrb[0].mxu0
        %v7630 = vadd.f32 %v6133, %v7629
        %v7631 = vpop.f32.mrb[0].mxu0
        %v7632 = vadd.f32 %v6137, %v7631
        %v7633 = vpop.f32.mrb[0].mxu0
        %v7634 = vadd.f32 %v6133, %v7633
        %v7635 = vpop.f32.mrb[0].mxu0
        %v7636 = vadd.f32 %v6137, %v7635
        %7637 = vmatprep.mubr.bf16.mxu0 0
        %7638 = vmatmul.mubr.bf16.gmra.mrb[0].mxu0 %v5934
        %v7639 = vpop.f32.mrb[0].mxu0
        %v7640 = vadd.f32 %v6133, %v7639
        %v7641 = vpop.f32.mrb[0].mxu0
        %v7642 = vadd.f32 %v6137, %v7641
        %v7643 = vpop.f32.mrb[0].mxu0
        %v7644 = vadd.f32 %v6133, %v7643
        %v7645 = vpop.f32.mrb[0].mxu0
        %v7646 = vadd.f32 %v6137, %v7645
        %7647 = vmatprep.mubr.bf16.mxu0 0
        %7648 = vmatmul.mubr.bf16.gmra.mrb[0].mxu0 %v5935
        %v7649 = vpop.f32.mrb[0].mxu0
        %v7650 = vadd.f32 %v6133, %v7649
        %v7651 = vpop.f32.mrb[0].mxu0
        %v7652 = vadd.f32 %v6137, %v7651
        %v7653 = vpop.f32.mrb[0].mxu0
        %v7654 = vadd.f32 %v6133, %v7653
        %v7655 = vpop.f32.mrb[0].mxu0
        %v7656 = vadd.f32 %v6137, %v7655
        %7657 = vmatprep.mubr.bf16.mxu0 0
        %7658 = vmatmul.mubr.bf16.gmra.mrb[0].mxu0 %v5936
        %v7659 = vpop.f32.mrb[0].mxu0
        %v7660 = vadd.f32 %v6133, %v7659
        %v7661 = vpop.f32.mrb[0].mxu0
        %v7662 = vadd.f32 %v6137, %v7661
        %v7663 = vpop.f32.mrb[0].mxu0
        %v7664 = vadd.f32 %v6133, %v7663
        %v7665 = vpop.f32.mrb[0].mxu0
        %v7666 = vadd.f32 %v6137, %v7665
        %7667 = vmatprep.mubr.bf16.mxu0 0
        %7668 = vmatmul.mubr.bf16.gmra.mrb[0].mxu0 %v5937
        %v7669 = vpop.f32.mrb[0].mxu0
        %v7670 = vadd.f32 %v6133, %v7669
        %v7671 = vpop.f32.mrb[0].mxu0
        %v7672 = vadd.f32 %v6137, %v7671
        %v7673 = vpop.f32.mrb[0].mxu0
        %v7674 = vadd.f32 %v6133, %v7673
        %v7675 = vpop.f32.mrb[0].mxu0
        %v7676 = vadd.f32 %v6137, %v7675
        %7677 = vmatprep.mubr.bf16.mxu0 0
        %7678 = vmatmul.mubr.bf16.gmra.mrb[0].mxu0 %v5938
        %v7679 = vpop.f32.mrb[0].mxu0
        %v7680 = vadd.f32 %v6133, %v7679
        %v7681 = vpop.f32.mrb[0].mxu0
        %v7682 = vadd.f32 %v6137, %v7681
        %v7683 = vpop.f32.mrb[0].mxu0
        %v7684 = vadd.f32 %v6133, %v7683
        %v7685 = vpop.f32.mrb[0].mxu0
        %v7686 = vadd.f32 %v6137, %v7685
        %7687 = vmatprep.mubr.bf16.mxu0 0
        %7688 = vmatmul.mubr.bf16.gmra.mrb[0].mxu0 %v5939
        %v7689 = vpop.f32.mrb[0].mxu0
        %v7690 = vadd.f32 %v6133, %v7689
        %v7691 = vpop.f32.mrb[0].mxu0
        %v7692 = vadd.f32 %v6137, %v7691
        %v7693 = vpop.f32.mrb[0].mxu0
        %v7694 = vadd.f32 %v6133, %v7693
        %v7695 = vpop.f32.mrb[0].mxu0
        %v7696 = vadd.f32 %v6137, %v7695
        %7697 = vdwg.mxu0
        %v7698 = vmax.f32 %v6829, 0.0
        %v7699 = vmax.f32 %v6831, 0.0
        %v7700 = vmax.f32 %v6942, 0.0
        %v7701 = vmax.f32 %v6944, 0.0
        %v7702 = vmax.f32 %v7055, 0.0
        %v7703 = vmax.f32 %v7057, 0.0
        %v7704 = vmax.f32 %v7168, 0.0
        %v7705 = vmax.f32 %v7170, 0.0
        %v7706 = vmax.f32 %v7281, 0.0
        %v7707 = vmax.f32 %v7283, 0.0
        %v7708 = vmax.f32 %v7394, 0.0
        %v7709 = vmax.f32 %v7396, 0.0
        %v7710 = vmax.f32 %v7507, 0.0
        %v7711 = vmax.f32 %v7509, 0.0
        %v7712 = vmax.f32 %v7620, 0.0
        %v7713 = vmax.f32 %v7622, 0.0
        %v7714 = vmax.f32 %v6833, 0.0
        %v7715 = vmax.f32 %v6835, 0.0
        %v7716 = vmax.f32 %v6946, 0.0
        %v7717 = vmax.f32 %v6948, 0.0
        %v7718 = vmax.f32 %v7059, 0.0
        %v7719 = vmax.f32 %v7061, 0.0
        %v7720 = vmax.f32 %v7172, 0.0
        %v7721 = vmax.f32 %v7174, 0.0
        %v7722 = vmax.f32 %v7285, 0.0
        %v7723 = vmax.f32 %v7287, 0.0
        %v7724 = vmax.f32 %v7398, 0.0
        %v7725 = vmax.f32 %v7400, 0.0
        %v7726 = vmax.f32 %v7511, 0.0
        %v7727 = vmax.f32 %v7513, 0.0
        %v7728 = vmax.f32 %v7624, 0.0
        %v7729 = vmax.f32 %v7626, 0.0
        %v7730 = vmax.f32 %v6839, 0.0
        %v7731 = vmax.f32 %v6841, 0.0
        %v7732 = vmax.f32 %v6952, 0.0
        %v7733 = vmax.f32 %v6954, 0.0
        %v7734 = vmax.f32 %v7065, 0.0
        %v7735 = vmax.f32 %v7067, 0.0
        %v7736 = vmax.f32 %v7178, 0.0
        %v7737 = vmax.f32 %v7180, 0.0
        %v7738 = vmax.f32 %v7291, 0.0
        %v7739 = vmax.f32 %v7293, 0.0
        %v7740 = vmax.f32 %v7404, 0.0
        %v7741 = vmax.f32 %v7406, 0.0
        %v7742 = vmax.f32 %v7517, 0.0
        %v7743 = vmax.f32 %v7519, 0.0
        %v7744 = vmax.f32 %v7630, 0.0
        %v7745 = vmax.f32 %v7632, 0.0
        %v7746 = vmax.f32 %v6843, 0.0
        %v7747 = vmax.f32 %v6845, 0.0
        %v7748 = vmax.f32 %v6956, 0.0
        %v7749 = vmax.f32 %v6958, 0.0
        %v7750 = vmax.f32 %v7069, 0.0
        %v7751 = vmax.f32 %v7071, 0.0
        %v7752 = vmax.f32 %v7182, 0.0
        %v7753 = vmax.f32 %v7184, 0.0
        %v7754 = vmax.f32 %v7295, 0.0
        %v7755 = vmax.f32 %v7297, 0.0
        %v7756 = vmax.f32 %v7408, 0.0
        %v7757 = vmax.f32 %v7410, 0.0
        %v7758 = vmax.f32 %v7521, 0.0
        %v7759 = vmax.f32 %v7523, 0.0
        %v7760 = vmax.f32 %v7634, 0.0
        %v7761 = vmax.f32 %v7636, 0.0
        %v7762 = vmax.f32 %v6849, 0.0
        %v7763 = vmax.f32 %v6851, 0.0
        %v7764 = vmax.f32 %v6962, 0.0
        %v7765 = vmax.f32 %v6964, 0.0
        %v7766 = vmax.f32 %v7075, 0.0
        %v7767 = vmax.f32 %v7077, 0.0
        %v7768 = vmax.f32 %v7188, 0.0
        %v7769 = vmax.f32 %v7190, 0.0
        %v7770 = vmax.f32 %v7301, 0.0
        %v7771 = vmax.f32 %v7303, 0.0
        %v7772 = vmax.f32 %v7414, 0.0
        %v7773 = vmax.f32 %v7416, 0.0
        %v7774 = vmax.f32 %v7527, 0.0
        %v7775 = vmax.f32 %v7529, 0.0
        %v7776 = vmax.f32 %v7640, 0.0
        %v7777 = vmax.f32 %v7642, 0.0
        %v7778 = vmax.f32 %v6853, 0.0
        %v7779 = vmax.f32 %v6855, 0.0
        %v7780 = vmax.f32 %v6966, 0.0
        %v7781 = vmax.f32 %v6968, 0.0
        %v7782 = vmax.f32 %v7079, 0.0
        %v7783 = vmax.f32 %v7081, 0.0
        %v7784 = vmax.f32 %v7192, 0.0
        %v7785 = vmax.f32 %v7194, 0.0
        %v7786 = vmax.f32 %v7305, 0.0
        %v7787 = vmax.f32 %v7307, 0.0
        %v7788 = vmax.f32 %v7418, 0.0
        %v7789 = vmax.f32 %v7420, 0.0
        %v7790 = vmax.f32 %v7531, 0.0
        %v7791 = vmax.f32 %v7533, 0.0
        %v7792 = vmax.f32 %v7644, 0.0
        %v7793 = vmax.f32 %v7646, 0.0
        %v7794 = vmax.f32 %v6859, 0.0
        %v7795 = vmax.f32 %v6861, 0.0
        %v7796 = vmax.f32 %v6972, 0.0
        %v7797 = vmax.f32 %v6974, 0.0
        %v7798 = vmax.f32 %v7085, 0.0
        %v7799 = vmax.f32 %v7087, 0.0
        %v7800 = vmax.f32 %v7198, 0.0
        %v7801 = vmax.f32 %v7200, 0.0
        %v7802 = vmax.f32 %v7311, 0.0
        %v7803 = vmax.f32 %v7313, 0.0
        %v7804 = vmax.f32 %v7424, 0.0
        %v7805 = vmax.f32 %v7426, 0.0
        %v7806 = vmax.f32 %v7537, 0.0
        %v7807 = vmax.f32 %v7539, 0.0
        %v7808 = vmax.f32 %v7650, 0.0
        %v7809 = vmax.f32 %v7652, 0.0
        %v7810 = vmax.f32 %v6863, 0.0
        %v7811 = vmax.f32 %v6865, 0.0
        %v7812 = vmax.f32 %v6976, 0.0
        %v7813 = vmax.f32 %v6978, 0.0
        %v7814 = vmax.f32 %v7089, 0.0
        %v7815 = vmax.f32 %v7091, 0.0
        %v7816 = vmax.f32 %v7202, 0.0
        %v7817 = vmax.f32 %v7204, 0.0
        %v7818 = vmax.f32 %v7315, 0.0
        %v7819 = vmax.f32 %v7317, 0.0
        %v7820 = vmax.f32 %v7428, 0.0
        %v7821 = vmax.f32 %v7430, 0.0
        %v7822 = vmax.f32 %v7541, 0.0
        %v7823 = vmax.f32 %v7543, 0.0
        %v7824 = vmax.f32 %v7654, 0.0
        %v7825 = vmax.f32 %v7656, 0.0
        %v7826 = vmax.f32 %v6869, 0.0
        %v7827 = vmax.f32 %v6871, 0.0
        %v7828 = vmax.f32 %v6982, 0.0
        %v7829 = vmax.f32 %v6984, 0.0
        %v7830 = vmax.f32 %v7095, 0.0
        %v7831 = vmax.f32 %v7097, 0.0
        %v7832 = vmax.f32 %v7208, 0.0
        %v7833 = vmax.f32 %v7210, 0.0
        %v7834 = vmax.f32 %v7321, 0.0
        %v7835 = vmax.f32 %v7323, 0.0
        %v7836 = vmax.f32 %v7434, 0.0
        %v7837 = vmax.f32 %v7436, 0.0
        %v7838 = vmax.f32 %v7547, 0.0
        %v7839 = vmax.f32 %v7549, 0.0
        %v7840 = vmax.f32 %v7660, 0.0
        %v7841 = vmax.f32 %v7662, 0.0
        %v7842 = vmax.f32 %v6873, 0.0
        %v7843 = vmax.f32 %v6875, 0.0
        %v7844 = vmax.f32 %v6986, 0.0
        %v7845 = vmax.f32 %v6988, 0.0
        %v7846 = vmax.f32 %v7099, 0.0
        %v7847 = vmax.f32 %v7101, 0.0
        %v7848 = vmax.f32 %v7212, 0.0
        %v7849 = vmax.f32 %v7214, 0.0
        %v7850 = vmax.f32 %v7325, 0.0
        %v7851 = vmax.f32 %v7327, 0.0
        %v7852 = vmax.f32 %v7438, 0.0
        %v7853 = vmax.f32 %v7440, 0.0
        %v7854 = vmax.f32 %v7551, 0.0
        %v7855 = vmax.f32 %v7553, 0.0
        %v7856 = vmax.f32 %v7664, 0.0
        %v7857 = vmax.f32 %v7666, 0.0
        %v7858 = vmax.f32 %v6879, 0.0
        %v7859 = vmax.f32 %v6881, 0.0
        %v7860 = vmax.f32 %v6992, 0.0
        %v7861 = vmax.f32 %v6994, 0.0
        %v7862 = vmax.f32 %v7105, 0.0
        %v7863 = vmax.f32 %v7107, 0.0
        %v7864 = vmax.f32 %v7218, 0.0
        %v7865 = vmax.f32 %v7220, 0.0
        %v7866 = vmax.f32 %v7331, 0.0
        %v7867 = vmax.f32 %v7333, 0.0
        %v7868 = vmax.f32 %v7444, 0.0
        %v7869 = vmax.f32 %v7446, 0.0
        %v7870 = vmax.f32 %v7557, 0.0
        %v7871 = vmax.f32 %v7559, 0.0
        %v7872 = vmax.f32 %v7670, 0.0
        %v7873 = vmax.f32 %v7672, 0.0
        %v7874 = vmax.f32 %v6883, 0.0
        %v7875 = vmax.f32 %v6885, 0.0
        %v7876 = vmax.f32 %v6996, 0.0
        %v7877 = vmax.f32 %v6998, 0.0
        %v7878 = vmax.f32 %v7109, 0.0
        %v7879 = vmax.f32 %v7111, 0.0
        %v7880 = vmax.f32 %v7222, 0.0
        %v7881 = vmax.f32 %v7224, 0.0
        %v7882 = vmax.f32 %v7335, 0.0
        %v7883 = vmax.f32 %v7337, 0.0
        %v7884 = vmax.f32 %v7448, 0.0
        %v7885 = vmax.f32 %v7450, 0.0
        %v7886 = vmax.f32 %v7561, 0.0
        %v7887 = vmax.f32 %v7563, 0.0
        %v7888 = vmax.f32 %v7674, 0.0
        %v7889 = vmax.f32 %v7676, 0.0
        %v7890 = vmax.f32 %v6889, 0.0
        %v7891 = vmax.f32 %v6891, 0.0
        %v7892 = vmax.f32 %v7002, 0.0
        %v7893 = vmax.f32 %v7004, 0.0
        %v7894 = vmax.f32 %v7115, 0.0
        %v7895 = vmax.f32 %v7117, 0.0
        %v7896 = vmax.f32 %v7228, 0.0
        %v7897 = vmax.f32 %v7230, 0.0
        %v7898 = vmax.f32 %v7341, 0.0
        %v7899 = vmax.f32 %v7343, 0.0
        %v7900 = vmax.f32 %v7454, 0.0
        %v7901 = vmax.f32 %v7456, 0.0
        %v7902 = vmax.f32 %v7567, 0.0
        %v7903 = vmax.f32 %v7569, 0.0
        %v7904 = vmax.f32 %v7680, 0.0
        %v7905 = vmax.f32 %v7682, 0.0
        %v7906 = vmax.f32 %v6893, 0.0
        %v7907 = vmax.f32 %v6895, 0.0
        %v7908 = vmax.f32 %v7006, 0.0
        %v7909 = vmax.f32 %v7008, 0.0
        %v7910 = vmax.f32 %v7119, 0.0
        %v7911 = vmax.f32 %v7121, 0.0
        %v7912 = vmax.f32 %v7232, 0.0
        %v7913 = vmax.f32 %v7234, 0.0
        %v7914 = vmax.f32 %v7345, 0.0
        %v7915 = vmax.f32 %v7347, 0.0
        %v7916 = vmax.f32 %v7458, 0.0
        %v7917 = vmax.f32 %v7460, 0.0
        %v7918 = vmax.f32 %v7571, 0.0
        %v7919 = vmax.f32 %v7573, 0.0
        %v7920 = vmax.f32 %v7684, 0.0
        %v7921 = vmax.f32 %v7686, 0.0
        %v7922 = vmax.f32 %v6899, 0.0
        %v7923 = vmax.f32 %v6901, 0.0
        %v7924 = vmax.f32 %v7012, 0.0
        %v7925 = vmax.f32 %v7014, 0.0
        %v7926 = vmax.f32 %v7125, 0.0
        %v7927 = vmax.f32 %v7127, 0.0
        %v7928 = vmax.f32 %v7238, 0.0
        %v7929 = vmax.f32 %v7240, 0.0
        %v7930 = vmax.f32 %v7351, 0.0
        %v7931 = vmax.f32 %v7353, 0.0
        %v7932 = vmax.f32 %v7464, 0.0
        %v7933 = vmax.f32 %v7466, 0.0
        %v7934 = vmax.f32 %v7577, 0.0
        %v7935 = vmax.f32 %v7579, 0.0
        %v7936 = vmax.f32 %v7690, 0.0
        %v7937 = vmax.f32 %v7692, 0.0
        %v7938 = vmax.f32 %v6903, 0.0
        %v7939 = vmax.f32 %v6905, 0.0
        %v7940 = vmax.f32 %v7016, 0.0
        %v7941 = vmax.f32 %v7018, 0.0
        %v7942 = vmax.f32 %v7129, 0.0
        %v7943 = vmax.f32 %v7131, 0.0
        %v7944 = vmax.f32 %v7242, 0.0
        %v7945 = vmax.f32 %v7244, 0.0
        %v7946 = vmax.f32 %v7355, 0.0
        %v7947 = vmax.f32 %v7357, 0.0
        %v7948 = vmax.f32 %v7468, 0.0
        %v7949 = vmax.f32 %v7470, 0.0
        %v7950 = vmax.f32 %v7581, 0.0
        %v7951 = vmax.f32 %v7583, 0.0
        %v7952 = vmax.f32 %v7694, 0.0
        %v7953 = vmax.f32 %v7696, 0.0
        %v7954 = vpack.c.bf16 %v7714, %v7698
        %v7955 = vpack.c.bf16 %v7715, %v7699
        %v7956 = vpack.c.bf16 %v7716, %v7700
        %v7957 = vpack.c.bf16 %v7717, %v7701
        %v7958 = vpack.c.bf16 %v7718, %v7702
        %v7959 = vpack.c.bf16 %v7719, %v7703
        %v7960 = vpack.c.bf16 %v7720, %v7704
        %v7961 = vpack.c.bf16 %v7721, %v7705
        %v7962 = vpack.c.bf16 %v7722, %v7706
        %v7963 = vpack.c.bf16 %v7723, %v7707
        %v7964 = vpack.c.bf16 %v7724, %v7708
        %v7965 = vpack.c.bf16 %v7725, %v7709
        %v7966 = vpack.c.bf16 %v7726, %v7710
        %v7967 = vpack.c.bf16 %v7727, %v7711
        %v7968 = vpack.c.bf16 %v7728, %v7712
        %v7969 = vpack.c.bf16 %v7729, %v7713
        %v7970 = vpack.c.bf16 %v7746, %v7730
        %v7971 = vpack.c.bf16 %v7747, %v7731
        %v7972 = vpack.c.bf16 %v7748, %v7732
        %v7973 = vpack.c.bf16 %v7749, %v7733
        %v7974 = vpack.c.bf16 %v7750, %v7734
        %v7975 = vpack.c.bf16 %v7751, %v7735
        %v7976 = vpack.c.bf16 %v7752, %v7736
        %v7977 = vpack.c.bf16 %v7753, %v7737
        %v7978 = vpack.c.bf16 %v7754, %v7738
        %v7979 = vpack.c.bf16 %v7755, %v7739
        %v7980 = vpack.c.bf16 %v7756, %v7740
        %v7981 = vpack.c.bf16 %v7757, %v7741
        %v7982 = vpack.c.bf16 %v7758, %v7742
        %v7983 = vpack.c.bf16 %v7759, %v7743
        %v7984 = vpack.c.bf16 %v7760, %v7744
        %v7985 = vpack.c.bf16 %v7761, %v7745
        %v7986 = vpack.c.bf16 %v7778, %v7762
        %v7987 = vpack.c.bf16 %v7779, %v7763
        %v7988 = vpack.c.bf16 %v7780, %v7764
        %v7989 = vpack.c.bf16 %v7781, %v7765
        %v7990 = vpack.c.bf16 %v7782, %v7766
        %v7991 = vpack.c.bf16 %v7783, %v7767
        %v7992 = vpack.c.bf16 %v7784, %v7768
        %v7993 = vpack.c.bf16 %v7785, %v7769
        %v7994 = vpack.c.bf16 %v7786, %v7770
        %v7995 = vpack.c.bf16 %v7787, %v7771
        %v7996 = vpack.c.bf16 %v7788, %v7772
        %v7997 = vpack.c.bf16 %v7789, %v7773
        %v7998 = vpack.c.bf16 %v7790, %v7774
        %v7999 = vpack.c.bf16 %v7791, %v7775
        %v8000 = vpack.c.bf16 %v7792, %v7776
        %v8001 = vpack.c.bf16 %v7793, %v7777
        %v8002 = vpack.c.bf16 %v7810, %v7794
        %v8003 = vpack.c.bf16 %v7811, %v7795
        %v8004 = vpack.c.bf16 %v7812, %v7796
        %v8005 = vpack.c.bf16 %v7813, %v7797
        %v8006 = vpack.c.bf16 %v7814, %v7798
        %v8007 = vpack.c.bf16 %v7815, %v7799
        %v8008 = vpack.c.bf16 %v7816, %v7800
        %v8009 = vpack.c.bf16 %v7817, %v7801
        %v8010 = vpack.c.bf16 %v7818, %v7802
        %v8011 = vpack.c.bf16 %v7819, %v7803
        %v8012 = vpack.c.bf16 %v7820, %v7804
        %v8013 = vpack.c.bf16 %v7821, %v7805
        %v8014 = vpack.c.bf16 %v7822, %v7806
        %v8015 = vpack.c.bf16 %v7823, %v7807
        %v8016 = vpack.c.bf16 %v7824, %v7808
        %v8017 = vpack.c.bf16 %v7825, %v7809
        %v8018 = vpack.c.bf16 %v7842, %v7826
        %v8019 = vpack.c.bf16 %v7843, %v7827
        %v8020 = vpack.c.bf16 %v7844, %v7828
        %v8021 = vpack.c.bf16 %v7845, %v7829
        %v8022 = vpack.c.bf16 %v7846, %v7830
        %v8023 = vpack.c.bf16 %v7847, %v7831
        %v8024 = vpack.c.bf16 %v7848, %v7832
        %v8025 = vpack.c.bf16 %v7849, %v7833
        %v8026 = vpack.c.bf16 %v7850, %v7834
        %v8027 = vpack.c.bf16 %v7851, %v7835
        %v8028 = vpack.c.bf16 %v7852, %v7836
        %v8029 = vpack.c.bf16 %v7853, %v7837
        %v8030 = vpack.c.bf16 %v7854, %v7838
        %v8031 = vpack.c.bf16 %v7855, %v7839
        %v8032 = vpack.c.bf16 %v7856, %v7840
        %v8033 = vpack.c.bf16 %v7857, %v7841
        %v8034 = vpack.c.bf16 %v7874, %v7858
        %v8035 = vpack.c.bf16 %v7875, %v7859
        %v8036 = vpack.c.bf16 %v7876, %v7860
        %v8037 = vpack.c.bf16 %v7877, %v7861
        %v8038 = vpack.c.bf16 %v7878, %v7862
        %v8039 = vpack.c.bf16 %v7879, %v7863
        %v8040 = vpack.c.bf16 %v7880, %v7864
        %v8041 = vpack.c.bf16 %v7881, %v7865
        %v8042 = vpack.c.bf16 %v7882, %v7866
        %v8043 = vpack.c.bf16 %v7883, %v7867
        %v8044 = vpack.c.bf16 %v7884, %v7868
        %v8045 = vpack.c.bf16 %v7885, %v7869
        %v8046 = vpack.c.bf16 %v7886, %v7870
        %v8047 = vpack.c.bf16 %v7887, %v7871
        %v8048 = vpack.c.bf16 %v7888, %v7872
        %v8049 = vpack.c.bf16 %v7889, %v7873
        %v8050 = vpack.c.bf16 %v7906, %v7890
        %v8051 = vpack.c.bf16 %v7907, %v7891
        %v8052 = vpack.c.bf16 %v7908, %v7892
        %v8053 = vpack.c.bf16 %v7909, %v7893
        %v8054 = vpack.c.bf16 %v7910, %v7894
        %v8055 = vpack.c.bf16 %v7911, %v7895
        %v8056 = vpack.c.bf16 %v7912, %v7896
        %v8057 = vpack.c.bf16 %v7913, %v7897
        %v8058 = vpack.c.bf16 %v7914, %v7898
        %v8059 = vpack.c.bf16 %v7915, %v7899
        %v8060 = vpack.c.bf16 %v7916, %v7900
        %v8061 = vpack.c.bf16 %v7917, %v7901
        %v8062 = vpack.c.bf16 %v7918, %v7902
        %v8063 = vpack.c.bf16 %v7919, %v7903
        %v8064 = vpack.c.bf16 %v7920, %v7904
        %v8065 = vpack.c.bf16 %v7921, %v7905
        %v8066 = vpack.c.bf16 %v7938, %v7922
        %v8067 = vpack.c.bf16 %v7939, %v7923
        %v8068 = vpack.c.bf16 %v7940, %v7924
        %v8069 = vpack.c.bf16 %v7941, %v7925
        %v8070 = vpack.c.bf16 %v7942, %v7926
        %v8071 = vpack.c.bf16 %v7943, %v7927
        %v8072 = vpack.c.bf16 %v7944, %v7928
        %v8073 = vpack.c.bf16 %v7945, %v7929
        %v8074 = vpack.c.bf16 %v7946, %v7930
        %v8075 = vpack.c.bf16 %v7947, %v7931
        %v8076 = vpack.c.bf16 %v7948, %v7932
        %v8077 = vpack.c.bf16 %v7949, %v7933
        %v8078 = vpack.c.bf16 %v7950, %v7934
        %v8079 = vpack.c.bf16 %v7951, %v7935
        %v8080 = vpack.c.bf16 %v7952, %v7936
        %v8081 = vpack.c.bf16 %v7953, %v7937
        %s8082 = scalar_lea.vmem [#allocation14], 1024
        %v8083 = vld [vmem:[%s8082] sm:$0xf]
        %v8084 = vld [vmem:[%s8082 + $0x4] sm:$0xf]
        %v8085 = vld [vmem:[%s8082 + $0x8] sm:$0xf]
        %v8086 = vld [vmem:[%s8082 + $0xc] sm:$0xf]
        %v8087 = vld [vmem:[%s8082 + $0x10] sm:$0xf]
        %v8088 = vld [vmem:[%s8082 + $0x14] sm:$0xf]
        %v8089 = vld [vmem:[%s8082 + $0x18] sm:$0xf]
        %v8090 = vld [vmem:[%s8082 + $0x1c] sm:$0xf]
        %v8091 = vld [vmem:[%s8082 + $0x20] sm:$0xf]
        %v8092 = vld [vmem:[%s8082 + $0x24] sm:$0xf]
        %v8093 = vld [vmem:[%s8082 + $0x28] sm:$0xf]
        %v8094 = vld [vmem:[%s8082 + $0x2c] sm:$0xf]
        %v8095 = vld [vmem:[%s8082 + $0x30] sm:$0xf]
        %v8096 = vld [vmem:[%s8082 + $0x34] sm:$0xf]
        %v8097 = vld [vmem:[%s8082 + $0x38] sm:$0xf]
        %v8098 = vld [vmem:[%s8082 + $0x3c] sm:$0xf]
        %v8099 = vld [vmem:[%s8082 + $0x40] sm:$0xf]
        %v8100 = vld [vmem:[%s8082 + $0x44] sm:$0xf]
        %v8101 = vld [vmem:[%s8082 + $0x48] sm:$0xf]
        %v8102 = vld [vmem:[%s8082 + $0x4c] sm:$0xf]
        %v8103 = vld [vmem:[%s8082 + $0x50] sm:$0xf]
        %v8104 = vld [vmem:[%s8082 + $0x54] sm:$0xf]
        %v8105 = vld [vmem:[%s8082 + $0x58] sm:$0xf]
        %v8106 = vld [vmem:[%s8082 + $0x5c] sm:$0xf]
        %v8107 = vld [vmem:[%s8082 + $0x60] sm:$0xf]
        %v8108 = vld [vmem:[%s8082 + $0x64] sm:$0xf]
        %v8109 = vld [vmem:[%s8082 + $0x68] sm:$0xf]
        %v8110 = vld [vmem:[%s8082 + $0x6c] sm:$0xf]
        %v8111 = vld [vmem:[%s8082 + $0x70] sm:$0xf]
        %v8112 = vld [vmem:[%s8082 + $0x74] sm:$0xf]
        %v8113 = vld [vmem:[%s8082 + $0x78] sm:$0xf]
        %v8114 = vld [vmem:[%s8082 + $0x7c] sm:$0xf]
        %v8115 = vld [vmem:[%s8082 + $0x80] sm:$0xf]
        %v8116 = vld [vmem:[%s8082 + $0x84] sm:$0xf]
        %v8117 = vld [vmem:[%s8082 + $0x88] sm:$0xf]
        %v8118 = vld [vmem:[%s8082 + $0x8c] sm:$0xf]
        %v8119 = vld [vmem:[%s8082 + $0x90] sm:$0xf]
        %v8120 = vld [vmem:[%s8082 + $0x94] sm:$0xf]
        %v8121 = vld [vmem:[%s8082 + $0x98] sm:$0xf]
        %v8122 = vld [vmem:[%s8082 + $0x9c] sm:$0xf]
        %v8123 = vld [vmem:[%s8082 + $0xa0] sm:$0xf]
        %v8124 = vld [vmem:[%s8082 + $0xa4] sm:$0xf]
        %v8125 = vld [vmem:[%s8082 + $0xa8] sm:$0xf]
        %v8126 = vld [vmem:[%s8082 + $0xac] sm:$0xf]
        %v8127 = vld [vmem:[%s8082 + $0xb0] sm:$0xf]
        %v8128 = vld [vmem:[%s8082 + $0xb4] sm:$0xf]
        %v8129 = vld [vmem:[%s8082 + $0xb8] sm:$0xf]
        %v8130 = vld [vmem:[%s8082 + $0xbc] sm:$0xf]
        %v8131 = vld [vmem:[%s8082 + $0xc0] sm:$0xf]
        %v8132 = vld [vmem:[%s8082 + $0xc4] sm:$0xf]
        %v8133 = vld [vmem:[%s8082 + $0xc8] sm:$0xf]
        %v8134 = vld [vmem:[%s8082 + $0xcc] sm:$0xf]
        %v8135 = vld [vmem:[%s8082 + $0xd0] sm:$0xf]
        %v8136 = vld [vmem:[%s8082 + $0xd4] sm:$0xf]
        %v8137 = vld [vmem:[%s8082 + $0xd8] sm:$0xf]
        %v8138 = vld [vmem:[%s8082 + $0xdc] sm:$0xf]
        %v8139 = vld [vmem:[%s8082 + $0xe0] sm:$0xf]
        %v8140 = vld [vmem:[%s8082 + $0xe4] sm:$0xf]
        %v8141 = vld [vmem:[%s8082 + $0xe8] sm:$0xf]
        %v8142 = vld [vmem:[%s8082 + $0xec] sm:$0xf]
        %v8143 = vld [vmem:[%s8082 + $0xf0] sm:$0xf]
        %v8144 = vld [vmem:[%s8082 + $0xf4] sm:$0xf]
        %v8145 = vld [vmem:[%s8082 + $0xf8] sm:$0xf]
        %v8146 = vld [vmem:[%s8082 + $0xfc] sm:$0xf]
        %v8147 = vld [vmem:[%s8082 + $0x100] sm:$0xf]
        %v8148 = vld [vmem:[%s8082 + $0x104] sm:$0xf]
        %v8149 = vld [vmem:[%s8082 + $0x108] sm:$0xf]
        %v8150 = vld [vmem:[%s8082 + $0x10c] sm:$0xf]
        %v8151 = vld [vmem:[%s8082 + $0x110] sm:$0xf]
        %v8152 = vld [vmem:[%s8082 + $0x114] sm:$0xf]
        %v8153 = vld [vmem:[%s8082 + $0x118] sm:$0xf]
        %v8154 = vld [vmem:[%s8082 + $0x11c] sm:$0xf]
        %v8155 = vld [vmem:[%s8082 + $0x120] sm:$0xf]
        %v8156 = vld [vmem:[%s8082 + $0x124] sm:$0xf]
        %v8157 = vld [vmem:[%s8082 + $0x128] sm:$0xf]
        %v8158 = vld [vmem:[%s8082 + $0x12c] sm:$0xf]
        %v8159 = vld [vmem:[%s8082 + $0x130] sm:$0xf]
        %v8160 = vld [vmem:[%s8082 + $0x134] sm:$0xf]
        %v8161 = vld [vmem:[%s8082 + $0x138] sm:$0xf]
        %v8162 = vld [vmem:[%s8082 + $0x13c] sm:$0xf]
        %v8163 = vld [vmem:[%s8082 + $0x140] sm:$0xf]
        %v8164 = vld [vmem:[%s8082 + $0x144] sm:$0xf]
        %v8165 = vld [vmem:[%s8082 + $0x148] sm:$0xf]
        %v8166 = vld [vmem:[%s8082 + $0x14c] sm:$0xf]
        %v8167 = vld [vmem:[%s8082 + $0x150] sm:$0xf]
        %v8168 = vld [vmem:[%s8082 + $0x154] sm:$0xf]
        %v8169 = vld [vmem:[%s8082 + $0x158] sm:$0xf]
        %v8170 = vld [vmem:[%s8082 + $0x15c] sm:$0xf]
        %v8171 = vld [vmem:[%s8082 + $0x160] sm:$0xf]
        %v8172 = vld [vmem:[%s8082 + $0x164] sm:$0xf]
        %v8173 = vld [vmem:[%s8082 + $0x168] sm:$0xf]
        %v8174 = vld [vmem:[%s8082 + $0x16c] sm:$0xf]
        %v8175 = vld [vmem:[%s8082 + $0x170] sm:$0xf]
        %v8176 = vld [vmem:[%s8082 + $0x174] sm:$0xf]
        %v8177 = vld [vmem:[%s8082 + $0x178] sm:$0xf]
        %v8178 = vld [vmem:[%s8082 + $0x17c] sm:$0xf]
        %v8179 = vld [vmem:[%s8082 + $0x180] sm:$0xf]
        %v8180 = vld [vmem:[%s8082 + $0x184] sm:$0xf]
        %v8181 = vld [vmem:[%s8082 + $0x188] sm:$0xf]
        %v8182 = vld [vmem:[%s8082 + $0x18c] sm:$0xf]
        %v8183 = vld [vmem:[%s8082 + $0x190] sm:$0xf]
        %v8184 = vld [vmem:[%s8082 + $0x194] sm:$0xf]
        %v8185 = vld [vmem:[%s8082 + $0x198] sm:$0xf]
        %v8186 = vld [vmem:[%s8082 + $0x19c] sm:$0xf]
        %v8187 = vld [vmem:[%s8082 + $0x1a0] sm:$0xf]
        %v8188 = vld [vmem:[%s8082 + $0x1a4] sm:$0xf]
        %v8189 = vld [vmem:[%s8082 + $0x1a8] sm:$0xf]
        %v8190 = vld [vmem:[%s8082 + $0x1ac] sm:$0xf]
        %v8191 = vld [vmem:[%s8082 + $0x1b0] sm:$0xf]
        %v8192 = vld [vmem:[%s8082 + $0x1b4] sm:$0xf]
        %v8193 = vld [vmem:[%s8082 + $0x1b8] sm:$0xf]
        %v8194 = vld [vmem:[%s8082 + $0x1bc] sm:$0xf]
        %v8195 = vld [vmem:[%s8082 + $0x1c0] sm:$0xf]
        %v8196 = vld [vmem:[%s8082 + $0x1c4] sm:$0xf]
        %v8197 = vld [vmem:[%s8082 + $0x1c8] sm:$0xf]
        %v8198 = vld [vmem:[%s8082 + $0x1cc] sm:$0xf]
        %v8199 = vld [vmem:[%s8082 + $0x1d0] sm:$0xf]
        %v8200 = vld [vmem:[%s8082 + $0x1d4] sm:$0xf]
        %v8201 = vld [vmem:[%s8082 + $0x1d8] sm:$0xf]
        %v8202 = vld [vmem:[%s8082 + $0x1dc] sm:$0xf]
        %v8203 = vld [vmem:[%s8082 + $0x1e0] sm:$0xf]
        %v8204 = vld [vmem:[%s8082 + $0x1e4] sm:$0xf]
        %v8205 = vld [vmem:[%s8082 + $0x1e8] sm:$0xf]
        %v8206 = vld [vmem:[%s8082 + $0x1ec] sm:$0xf]
        %v8207 = vld [vmem:[%s8082 + $0x1f0] sm:$0xf]
        %v8208 = vld [vmem:[%s8082 + $0x1f4] sm:$0xf]
        %v8209 = vld [vmem:[%s8082 + $0x1f8] sm:$0xf]
        %v8210 = vld [vmem:[%s8082 + $0x1fc] sm:$0xf]
        %v8211 = vld [vmem:[%s8082 + $0x200] sm:$0xf]
        %v8212 = vld [vmem:[%s8082 + $0x204] sm:$0xf]
        %v8213 = vld [vmem:[%s8082 + $0x208] sm:$0xf]
        %v8214 = vld [vmem:[%s8082 + $0x20c] sm:$0xf]
        %v8215 = vld [vmem:[%s8082 + $0x210] sm:$0xf]
        %v8216 = vld [vmem:[%s8082 + $0x214] sm:$0xf]
        %v8217 = vld [vmem:[%s8082 + $0x218] sm:$0xf]
        %v8218 = vld [vmem:[%s8082 + $0x21c] sm:$0xf]
        %v8219 = vld [vmem:[%s8082 + $0x220] sm:$0xf]
        %v8220 = vld [vmem:[%s8082 + $0x224] sm:$0xf]
        %v8221 = vld [vmem:[%s8082 + $0x228] sm:$0xf]
        %v8222 = vld [vmem:[%s8082 + $0x22c] sm:$0xf]
        %v8223 = vld [vmem:[%s8082 + $0x230] sm:$0xf]
        %v8224 = vld [vmem:[%s8082 + $0x234] sm:$0xf]
        %v8225 = vld [vmem:[%s8082 + $0x238] sm:$0xf]
        %v8226 = vld [vmem:[%s8082 + $0x23c] sm:$0xf]
        %v8227 = vld [vmem:[%s8082 + $0x240] sm:$0xf]
        %v8228 = vld [vmem:[%s8082 + $0x244] sm:$0xf]
        %v8229 = vld [vmem:[%s8082 + $0x248] sm:$0xf]
        %v8230 = vld [vmem:[%s8082 + $0x24c] sm:$0xf]
        %v8231 = vld [vmem:[%s8082 + $0x250] sm:$0xf]
        %v8232 = vld [vmem:[%s8082 + $0x254] sm:$0xf]
        %v8233 = vld [vmem:[%s8082 + $0x258] sm:$0xf]
        %v8234 = vld [vmem:[%s8082 + $0x25c] sm:$0xf]
        %v8235 = vld [vmem:[%s8082 + $0x260] sm:$0xf]
        %v8236 = vld [vmem:[%s8082 + $0x264] sm:$0xf]
        %v8237 = vld [vmem:[%s8082 + $0x268] sm:$0xf]
        %v8238 = vld [vmem:[%s8082 + $0x26c] sm:$0xf]
        %v8239 = vld [vmem:[%s8082 + $0x270] sm:$0xf]
        %v8240 = vld [vmem:[%s8082 + $0x274] sm:$0xf]
        %v8241 = vld [vmem:[%s8082 + $0x278] sm:$0xf]
        %v8242 = vld [vmem:[%s8082 + $0x27c] sm:$0xf]
        %v8243 = vld [vmem:[%s8082 + $0x280] sm:$0xf]
        %v8244 = vld [vmem:[%s8082 + $0x284] sm:$0xf]
        %v8245 = vld [vmem:[%s8082 + $0x288] sm:$0xf]
        %v8246 = vld [vmem:[%s8082 + $0x28c] sm:$0xf]
        %v8247 = vld [vmem:[%s8082 + $0x290] sm:$0xf]
        %v8248 = vld [vmem:[%s8082 + $0x294] sm:$0xf]
        %v8249 = vld [vmem:[%s8082 + $0x298] sm:$0xf]
        %v8250 = vld [vmem:[%s8082 + $0x29c] sm:$0xf]
        %v8251 = vld [vmem:[%s8082 + $0x2a0] sm:$0xf]
        %v8252 = vld [vmem:[%s8082 + $0x2a4] sm:$0xf]
        %v8253 = vld [vmem:[%s8082 + $0x2a8] sm:$0xf]
        %v8254 = vld [vmem:[%s8082 + $0x2ac] sm:$0xf]
        %v8255 = vld [vmem:[%s8082 + $0x2b0] sm:$0xf]
        %v8256 = vld [vmem:[%s8082 + $0x2b4] sm:$0xf]
        %v8257 = vld [vmem:[%s8082 + $0x2b8] sm:$0xf]
        %v8258 = vld [vmem:[%s8082 + $0x2bc] sm:$0xf]
        %v8259 = vld [vmem:[%s8082 + $0x2c0] sm:$0xf]
        %v8260 = vld [vmem:[%s8082 + $0x2c4] sm:$0xf]
        %v8261 = vld [vmem:[%s8082 + $0x2c8] sm:$0xf]
        %v8262 = vld [vmem:[%s8082 + $0x2cc] sm:$0xf]
        %v8263 = vld [vmem:[%s8082 + $0x2d0] sm:$0xf]
        %v8264 = vld [vmem:[%s8082 + $0x2d4] sm:$0xf]
        %v8265 = vld [vmem:[%s8082 + $0x2d8] sm:$0xf]
        %v8266 = vld [vmem:[%s8082 + $0x2dc] sm:$0xf]
        %v8267 = vld [vmem:[%s8082 + $0x2e0] sm:$0xf]
        %v8268 = vld [vmem:[%s8082 + $0x2e4] sm:$0xf]
        %v8269 = vld [vmem:[%s8082 + $0x2e8] sm:$0xf]
        %v8270 = vld [vmem:[%s8082 + $0x2ec] sm:$0xf]
        %v8271 = vld [vmem:[%s8082 + $0x2f0] sm:$0xf]
        %v8272 = vld [vmem:[%s8082 + $0x2f4] sm:$0xf]
        %v8273 = vld [vmem:[%s8082 + $0x2f8] sm:$0xf]
        %v8274 = vld [vmem:[%s8082 + $0x2fc] sm:$0xf]
        %v8275 = vld [vmem:[%s8082 + $0x300] sm:$0xf]
        %v8276 = vld [vmem:[%s8082 + $0x304] sm:$0xf]
        %v8277 = vld [vmem:[%s8082 + $0x308] sm:$0xf]
        %v8278 = vld [vmem:[%s8082 + $0x30c] sm:$0xf]
        %v8279 = vld [vmem:[%s8082 + $0x310] sm:$0xf]
        %v8280 = vld [vmem:[%s8082 + $0x314] sm:$0xf]
        %v8281 = vld [vmem:[%s8082 + $0x318] sm:$0xf]
        %v8282 = vld [vmem:[%s8082 + $0x31c] sm:$0xf]
        %v8283 = vld [vmem:[%s8082 + $0x320] sm:$0xf]
        %v8284 = vld [vmem:[%s8082 + $0x324] sm:$0xf]
        %v8285 = vld [vmem:[%s8082 + $0x328] sm:$0xf]
        %v8286 = vld [vmem:[%s8082 + $0x32c] sm:$0xf]
        %v8287 = vld [vmem:[%s8082 + $0x330] sm:$0xf]
        %v8288 = vld [vmem:[%s8082 + $0x334] sm:$0xf]
        %v8289 = vld [vmem:[%s8082 + $0x338] sm:$0xf]
        %v8290 = vld [vmem:[%s8082 + $0x33c] sm:$0xf]
        %v8291 = vld [vmem:[%s8082 + $0x340] sm:$0xf]
        %v8292 = vld [vmem:[%s8082 + $0x344] sm:$0xf]
        %v8293 = vld [vmem:[%s8082 + $0x348] sm:$0xf]
        %v8294 = vld [vmem:[%s8082 + $0x34c] sm:$0xf]
        %v8295 = vld [vmem:[%s8082 + $0x350] sm:$0xf]
        %v8296 = vld [vmem:[%s8082 + $0x354] sm:$0xf]
        %v8297 = vld [vmem:[%s8082 + $0x358] sm:$0xf]
        %v8298 = vld [vmem:[%s8082 + $0x35c] sm:$0xf]
        %v8299 = vld [vmem:[%s8082 + $0x360] sm:$0xf]
        %v8300 = vld [vmem:[%s8082 + $0x364] sm:$0xf]
        %v8301 = vld [vmem:[%s8082 + $0x368] sm:$0xf]
        %v8302 = vld [vmem:[%s8082 + $0x36c] sm:$0xf]
        %v8303 = vld [vmem:[%s8082 + $0x370] sm:$0xf]
        %v8304 = vld [vmem:[%s8082 + $0x374] sm:$0xf]
        %v8305 = vld [vmem:[%s8082 + $0x378] sm:$0xf]
        %v8306 = vld [vmem:[%s8082 + $0x37c] sm:$0xf]
        %v8307 = vld [vmem:[%s8082 + $0x380] sm:$0xf]
        %v8308 = vld [vmem:[%s8082 + $0x384] sm:$0xf]
        %v8309 = vld [vmem:[%s8082 + $0x388] sm:$0xf]
        %v8310 = vld [vmem:[%s8082 + $0x38c] sm:$0xf]
        %v8311 = vld [vmem:[%s8082 + $0x390] sm:$0xf]
        %v8312 = vld [vmem:[%s8082 + $0x394] sm:$0xf]
        %v8313 = vld [vmem:[%s8082 + $0x398] sm:$0xf]
        %v8314 = vld [vmem:[%s8082 + $0x39c] sm:$0xf]
        %v8315 = vld [vmem:[%s8082 + $0x3a0] sm:$0xf]
        %v8316 = vld [vmem:[%s8082 + $0x3a4] sm:$0xf]
        %v8317 = vld [vmem:[%s8082 + $0x3a8] sm:$0xf]
        %v8318 = vld [vmem:[%s8082 + $0x3ac] sm:$0xf]
        %v8319 = vld [vmem:[%s8082 + $0x3b0] sm:$0xf]
        %v8320 = vld [vmem:[%s8082 + $0x3b4] sm:$0xf]
        %v8321 = vld [vmem:[%s8082 + $0x3b8] sm:$0xf]
        %v8322 = vld [vmem:[%s8082 + $0x3bc] sm:$0xf]
        %v8323 = vld [vmem:[%s8082 + $0x3c0] sm:$0xf]
        %v8324 = vld [vmem:[%s8082 + $0x3c4] sm:$0xf]
        %v8325 = vld [vmem:[%s8082 + $0x3c8] sm:$0xf]
        %v8326 = vld [vmem:[%s8082 + $0x3cc] sm:$0xf]
        %v8327 = vld [vmem:[%s8082 + $0x3d0] sm:$0xf]
        %v8328 = vld [vmem:[%s8082 + $0x3d4] sm:$0xf]
        %v8329 = vld [vmem:[%s8082 + $0x3d8] sm:$0xf]
        %v8330 = vld [vmem:[%s8082 + $0x3dc] sm:$0xf]
        %v8331 = vld [vmem:[%s8082 + $0x3e0] sm:$0xf]
        %v8332 = vld [vmem:[%s8082 + $0x3e4] sm:$0xf]
        %v8333 = vld [vmem:[%s8082 + $0x3e8] sm:$0xf]
        %v8334 = vld [vmem:[%s8082 + $0x3ec] sm:$0xf]
        %v8335 = vld [vmem:[%s8082 + $0x3f0] sm:$0xf]
        %v8336 = vld [vmem:[%s8082 + $0x3f4] sm:$0xf]
        %v8337 = vld [vmem:[%s8082 + $0x3f8] sm:$0xf]
        %v8338 = vld [vmem:[%s8082 + $0x3fc] sm:$0xf]
        %s8339 = scalar_lea.vmem %s10, 1
        %v8340 = vld [vmem:[%s8339] sm:$0x1]
        %v8342 = vlaneseq
        %v8343 = vshrl.u32 %v8342, 7
        %v8344 = vsub.s32 0, %v8343
        %v8345 = vrot.slane %v8340, %v8344
        %v8603 = vunpack.c.l.b16 %v8083
        %v8604 = vunpack.c.l.b16 %v8084
        %v8605 = vunpack.c.l.b16 %v8085
        %v8606 = vunpack.c.l.b16 %v8086
        %v8607 = vunpack.c.l.b16 %v8087
        %v8608 = vunpack.c.l.b16 %v8088
        %v8609 = vunpack.c.l.b16 %v8089
        %v8610 = vunpack.c.l.b16 %v8090
        %v8611 = vunpack.c.l.b16 %v8091
        %v8612 = vunpack.c.l.b16 %v8092
        %v8613 = vunpack.c.l.b16 %v8093
        %v8614 = vunpack.c.l.b16 %v8094
        %v8615 = vunpack.c.l.b16 %v8095
        %v8616 = vunpack.c.l.b16 %v8096
        %v8617 = vunpack.c.l.b16 %v8097
        %v8618 = vunpack.c.l.b16 %v8098
        %v8619 = vunpack.c.l.b16 %v8099
        %v8620 = vunpack.c.l.b16 %v8100
        %v8621 = vunpack.c.l.b16 %v8101
        %v8622 = vunpack.c.l.b16 %v8102
        %v8623 = vunpack.c.l.b16 %v8103
        %v8624 = vunpack.c.l.b16 %v8104
        %v8625 = vunpack.c.l.b16 %v8105
        %v8626 = vunpack.c.l.b16 %v8106
        %v8627 = vunpack.c.l.b16 %v8107
        %v8628 = vunpack.c.l.b16 %v8108
        %v8629 = vunpack.c.l.b16 %v8109
        %v8630 = vunpack.c.l.b16 %v8110
        %v8631 = vunpack.c.l.b16 %v8111
        %v8632 = vunpack.c.l.b16 %v8112
        %v8633 = vunpack.c.l.b16 %v8113
        %v8634 = vunpack.c.l.b16 %v8114
        %v8635 = vunpack.c.l.b16 %v8115
        %v8636 = vunpack.c.l.b16 %v8116
        %v8637 = vunpack.c.l.b16 %v8117
        %v8638 = vunpack.c.l.b16 %v8118
        %v8639 = vunpack.c.l.b16 %v8119
        %v8640 = vunpack.c.l.b16 %v8120
        %v8641 = vunpack.c.l.b16 %v8121
        %v8642 = vunpack.c.l.b16 %v8122
        %v8643 = vunpack.c.l.b16 %v8123
        %v8644 = vunpack.c.l.b16 %v8124
        %v8645 = vunpack.c.l.b16 %v8125
        %v8646 = vunpack.c.l.b16 %v8126
        %v8647 = vunpack.c.l.b16 %v8127
        %v8648 = vunpack.c.l.b16 %v8128
        %v8649 = vunpack.c.l.b16 %v8129
        %v8650 = vunpack.c.l.b16 %v8130
        %v8651 = vunpack.c.l.b16 %v8131
        %v8652 = vunpack.c.l.b16 %v8132
        %v8653 = vunpack.c.l.b16 %v8133
        %v8654 = vunpack.c.l.b16 %v8134
        %v8655 = vunpack.c.l.b16 %v8135
        %v8656 = vunpack.c.l.b16 %v8136
        %v8657 = vunpack.c.l.b16 %v8137
        %v8658 = vunpack.c.l.b16 %v8138
        %v8659 = vunpack.c.l.b16 %v8139
        %v8660 = vunpack.c.l.b16 %v8140
        %v8661 = vunpack.c.l.b16 %v8141
        %v8662 = vunpack.c.l.b16 %v8142
        %v8663 = vunpack.c.l.b16 %v8143
        %v8664 = vunpack.c.l.b16 %v8144
        %v8665 = vunpack.c.l.b16 %v8145
        %v8666 = vunpack.c.l.b16 %v8146
        %v8667 = vunpack.c.l.b16 %v8147
        %v8668 = vunpack.c.l.b16 %v8148
        %v8669 = vunpack.c.l.b16 %v8149
        %v8670 = vunpack.c.l.b16 %v8150
        %v8671 = vunpack.c.l.b16 %v8151
        %v8672 = vunpack.c.l.b16 %v8152
        %v8673 = vunpack.c.l.b16 %v8153
        %v8674 = vunpack.c.l.b16 %v8154
        %v8675 = vunpack.c.l.b16 %v8155
        %v8676 = vunpack.c.l.b16 %v8156
        %v8677 = vunpack.c.l.b16 %v8157
        %v8678 = vunpack.c.l.b16 %v8158
        %v8679 = vunpack.c.l.b16 %v8159
        %v8680 = vunpack.c.l.b16 %v8160
        %v8681 = vunpack.c.l.b16 %v8161
        %v8682 = vunpack.c.l.b16 %v8162
        %v8683 = vunpack.c.l.b16 %v8163
        %v8684 = vunpack.c.l.b16 %v8164
        %v8685 = vunpack.c.l.b16 %v8165
        %v8686 = vunpack.c.l.b16 %v8166
        %v8687 = vunpack.c.l.b16 %v8167
        %v8688 = vunpack.c.l.b16 %v8168
        %v8689 = vunpack.c.l.b16 %v8169
        %v8690 = vunpack.c.l.b16 %v8170
        %v8691 = vunpack.c.l.b16 %v8171
        %v8692 = vunpack.c.l.b16 %v8172
        %v8693 = vunpack.c.l.b16 %v8173
        %v8694 = vunpack.c.l.b16 %v8174
        %v8695 = vunpack.c.l.b16 %v8175
        %v8696 = vunpack.c.l.b16 %v8176
        %v8697 = vunpack.c.l.b16 %v8177
        %v8698 = vunpack.c.l.b16 %v8178
        %v8699 = vunpack.c.l.b16 %v8179
        %v8700 = vunpack.c.l.b16 %v8180
        %v8701 = vunpack.c.l.b16 %v8181
        %v8702 = vunpack.c.l.b16 %v8182
        %v8703 = vunpack.c.l.b16 %v8183
        %v8704 = vunpack.c.l.b16 %v8184
        %v8705 = vunpack.c.l.b16 %v8185
        %v8706 = vunpack.c.l.b16 %v8186
        %v8707 = vunpack.c.l.b16 %v8187
        %v8708 = vunpack.c.l.b16 %v8188
        %v8709 = vunpack.c.l.b16 %v8189
        %v8710 = vunpack.c.l.b16 %v8190
        %v8711 = vunpack.c.l.b16 %v8191
        %v8712 = vunpack.c.l.b16 %v8192
        %v8713 = vunpack.c.l.b16 %v8193
        %v8714 = vunpack.c.l.b16 %v8194
        %v8715 = vunpack.c.l.b16 %v8195
        %v8716 = vunpack.c.l.b16 %v8196
        %v8717 = vunpack.c.l.b16 %v8197
        %v8718 = vunpack.c.l.b16 %v8198
        %v8719 = vunpack.c.l.b16 %v8199
        %v8720 = vunpack.c.l.b16 %v8200
        %v8721 = vunpack.c.l.b16 %v8201
        %v8722 = vunpack.c.l.b16 %v8202
        %v8723 = vunpack.c.l.b16 %v8203
        %v8724 = vunpack.c.l.b16 %v8204
        %v8725 = vunpack.c.l.b16 %v8205
        %v8726 = vunpack.c.l.b16 %v8206
        %v8727 = vunpack.c.l.b16 %v8207
        %v8728 = vunpack.c.l.b16 %v8208
        %v8729 = vunpack.c.l.b16 %v8209
        %v8730 = vunpack.c.l.b16 %v8210
        %v8731 = vunpack.c.l.b16 %v8211
        %v8732 = vunpack.c.l.b16 %v8212
        %v8733 = vunpack.c.l.b16 %v8213
        %v8734 = vunpack.c.l.b16 %v8214
        %v8735 = vunpack.c.l.b16 %v8215
        %v8736 = vunpack.c.l.b16 %v8216
        %v8737 = vunpack.c.l.b16 %v8217
        %v8738 = vunpack.c.l.b16 %v8218
        %v8739 = vunpack.c.l.b16 %v8219
        %v8740 = vunpack.c.l.b16 %v8220
        %v8741 = vunpack.c.l.b16 %v8221
        %v8742 = vunpack.c.l.b16 %v8222
        %v8743 = vunpack.c.l.b16 %v8223
        %v8744 = vunpack.c.l.b16 %v8224
        %v8745 = vunpack.c.l.b16 %v8225
        %v8746 = vunpack.c.l.b16 %v8226
        %v8747 = vunpack.c.l.b16 %v8227
        %v8748 = vunpack.c.l.b16 %v8228
        %v8749 = vunpack.c.l.b16 %v8229
        %v8750 = vunpack.c.l.b16 %v8230
        %v8751 = vunpack.c.l.b16 %v8231
        %v8752 = vunpack.c.l.b16 %v8232
        %v8753 = vunpack.c.l.b16 %v8233
        %v8754 = vunpack.c.l.b16 %v8234
        %v8755 = vunpack.c.l.b16 %v8235
        %v8756 = vunpack.c.l.b16 %v8236
        %v8757 = vunpack.c.l.b16 %v8237
        %v8758 = vunpack.c.l.b16 %v8238
        %v8759 = vunpack.c.l.b16 %v8239
        %v8760 = vunpack.c.l.b16 %v8240
        %v8761 = vunpack.c.l.b16 %v8241
        %v8762 = vunpack.c.l.b16 %v8242
        %v8763 = vunpack.c.l.b16 %v8243
        %v8764 = vunpack.c.l.b16 %v8244
        %v8765 = vunpack.c.l.b16 %v8245
        %v8766 = vunpack.c.l.b16 %v8246
        %v8767 = vunpack.c.l.b16 %v8247
        %v8768 = vunpack.c.l.b16 %v8248
        %v8769 = vunpack.c.l.b16 %v8249
        %v8770 = vunpack.c.l.b16 %v8250
        %v8771 = vunpack.c.l.b16 %v8251
        %v8772 = vunpack.c.l.b16 %v8252
        %v8773 = vunpack.c.l.b16 %v8253
        %v8774 = vunpack.c.l.b16 %v8254
        %v8775 = vunpack.c.l.b16 %v8255
        %v8776 = vunpack.c.l.b16 %v8256
        %v8777 = vunpack.c.l.b16 %v8257
        %v8778 = vunpack.c.l.b16 %v8258
        %v8779 = vunpack.c.l.b16 %v8259
        %v8780 = vunpack.c.l.b16 %v8260
        %v8781 = vunpack.c.l.b16 %v8261
        %v8782 = vunpack.c.l.b16 %v8262
        %v8783 = vunpack.c.l.b16 %v8263
        %v8784 = vunpack.c.l.b16 %v8264
        %v8785 = vunpack.c.l.b16 %v8265
        %v8786 = vunpack.c.l.b16 %v8266
        %v8787 = vunpack.c.l.b16 %v8267
        %v8788 = vunpack.c.l.b16 %v8268
        %v8789 = vunpack.c.l.b16 %v8269
        %v8790 = vunpack.c.l.b16 %v8270
        %v8791 = vunpack.c.l.b16 %v8271
        %v8792 = vunpack.c.l.b16 %v8272
        %v8793 = vunpack.c.l.b16 %v8273
        %v8794 = vunpack.c.l.b16 %v8274
        %v8795 = vunpack.c.l.b16 %v8275
        %v8796 = vunpack.c.l.b16 %v8276
        %v8797 = vunpack.c.l.b16 %v8277
        %v8798 = vunpack.c.l.b16 %v8278
        %v8799 = vunpack.c.l.b16 %v8279
        %v8800 = vunpack.c.l.b16 %v8280
        %v8801 = vunpack.c.l.b16 %v8281
        %v8802 = vunpack.c.l.b16 %v8282
        %v8803 = vunpack.c.l.b16 %v8283
        %v8804 = vunpack.c.l.b16 %v8284
        %v8805 = vunpack.c.l.b16 %v8285
        %v8806 = vunpack.c.l.b16 %v8286
        %v8807 = vunpack.c.l.b16 %v8287
        %v8808 = vunpack.c.l.b16 %v8288
        %v8809 = vunpack.c.l.b16 %v8289
        %v8810 = vunpack.c.l.b16 %v8290
        %v8811 = vunpack.c.l.b16 %v8291
        %v8812 = vunpack.c.l.b16 %v8292
        %v8813 = vunpack.c.l.b16 %v8293
        %v8814 = vunpack.c.l.b16 %v8294
        %v8815 = vunpack.c.l.b16 %v8295
        %v8816 = vunpack.c.l.b16 %v8296
        %v8817 = vunpack.c.l.b16 %v8297
        %v8818 = vunpack.c.l.b16 %v8298
        %v8819 = vunpack.c.l.b16 %v8299
        %v8820 = vunpack.c.l.b16 %v8300
        %v8821 = vunpack.c.l.b16 %v8301
        %v8822 = vunpack.c.l.b16 %v8302
        %v8823 = vunpack.c.l.b16 %v8303
        %v8824 = vunpack.c.l.b16 %v8304
        %v8825 = vunpack.c.l.b16 %v8305
        %v8826 = vunpack.c.l.b16 %v8306
        %v8827 = vunpack.c.l.b16 %v8307
        %v8828 = vunpack.c.l.b16 %v8308
        %v8829 = vunpack.c.l.b16 %v8309
        %v8830 = vunpack.c.l.b16 %v8310
        %v8831 = vunpack.c.l.b16 %v8311
        %v8832 = vunpack.c.l.b16 %v8312
        %v8833 = vunpack.c.l.b16 %v8313
        %v8834 = vunpack.c.l.b16 %v8314
        %v8835 = vunpack.c.l.b16 %v8315
        %v8836 = vunpack.c.l.b16 %v8316
        %v8837 = vunpack.c.l.b16 %v8317
        %v8838 = vunpack.c.l.b16 %v8318
        %v8839 = vunpack.c.l.b16 %v8319
        %v8840 = vunpack.c.l.b16 %v8320
        %v8841 = vunpack.c.l.b16 %v8321
        %v8842 = vunpack.c.l.b16 %v8322
        %v8843 = vunpack.c.l.b16 %v8323
        %v8844 = vunpack.c.l.b16 %v8324
        %v8845 = vunpack.c.l.b16 %v8325
        %v8846 = vunpack.c.l.b16 %v8326
        %v8847 = vunpack.c.l.b16 %v8327
        %v8848 = vunpack.c.l.b16 %v8328
        %v8849 = vunpack.c.l.b16 %v8329
        %v8850 = vunpack.c.l.b16 %v8330
        %v8851 = vunpack.c.l.b16 %v8331
        %v8852 = vunpack.c.l.b16 %v8332
        %v8853 = vunpack.c.l.b16 %v8333
        %v8854 = vunpack.c.l.b16 %v8334
        %v8855 = vunpack.c.l.b16 %v8335
        %v8856 = vunpack.c.l.b16 %v8336
        %v8857 = vunpack.c.l.b16 %v8337
        %v8858 = vunpack.c.l.b16 %v8338
        %v8859 = vpack.c.b16 %v8604, %v8603
        %v8860 = vpack.c.b16 %v8606, %v8605
        %v8861 = vpack.c.b16 %v8608, %v8607
        %v8862 = vpack.c.b16 %v8610, %v8609
        %v8863 = vpack.c.b16 %v8612, %v8611
        %v8864 = vpack.c.b16 %v8614, %v8613
        %v8865 = vpack.c.b16 %v8616, %v8615
        %v8866 = vpack.c.b16 %v8618, %v8617
        %v8867 = vpack.c.b16 %v8620, %v8619
        %v8868 = vpack.c.b16 %v8622, %v8621
        %v8869 = vpack.c.b16 %v8624, %v8623
        %v8870 = vpack.c.b16 %v8626, %v8625
        %v8871 = vpack.c.b16 %v8628, %v8627
        %v8872 = vpack.c.b16 %v8630, %v8629
        %v8873 = vpack.c.b16 %v8632, %v8631
        %v8874 = vpack.c.b16 %v8634, %v8633
        %v8875 = vpack.c.b16 %v8636, %v8635
        %v8876 = vpack.c.b16 %v8638, %v8637
        %v8877 = vpack.c.b16 %v8640, %v8639
        %v8878 = vpack.c.b16 %v8642, %v8641
        %v8879 = vpack.c.b16 %v8644, %v8643
        %v8880 = vpack.c.b16 %v8646, %v8645
        %v8881 = vpack.c.b16 %v8648, %v8647
        %v8882 = vpack.c.b16 %v8650, %v8649
        %v8883 = vpack.c.b16 %v8652, %v8651
        %v8884 = vpack.c.b16 %v8654, %v8653
        %v8885 = vpack.c.b16 %v8656, %v8655
        %v8886 = vpack.c.b16 %v8658, %v8657
        %v8887 = vpack.c.b16 %v8660, %v8659
        %v8888 = vpack.c.b16 %v8662, %v8661
        %v8889 = vpack.c.b16 %v8664, %v8663
        %v8890 = vpack.c.b16 %v8666, %v8665
        %v8891 = vpack.c.b16 %v8668, %v8667
        %v8892 = vpack.c.b16 %v8670, %v8669
        %v8893 = vpack.c.b16 %v8672, %v8671
        %v8894 = vpack.c.b16 %v8674, %v8673
        %v8895 = vpack.c.b16 %v8676, %v8675
        %v8896 = vpack.c.b16 %v8678, %v8677
        %v8897 = vpack.c.b16 %v8680, %v8679
        %v8898 = vpack.c.b16 %v8682, %v8681
        %v8899 = vpack.c.b16 %v8684, %v8683
        %v8900 = vpack.c.b16 %v8686, %v8685
        %v8901 = vpack.c.b16 %v8688, %v8687
        %v8902 = vpack.c.b16 %v8690, %v8689
        %v8903 = vpack.c.b16 %v8692, %v8691
        %v8904 = vpack.c.b16 %v8694, %v8693
        %v8905 = vpack.c.b16 %v8696, %v8695
        %v8906 = vpack.c.b16 %v8698, %v8697
        %v8907 = vpack.c.b16 %v8700, %v8699
        %v8908 = vpack.c.b16 %v8702, %v8701
        %v8909 = vpack.c.b16 %v8704, %v8703
        %v8910 = vpack.c.b16 %v8706, %v8705
        %v8911 = vpack.c.b16 %v8708, %v8707
        %v8912 = vpack.c.b16 %v8710, %v8709
        %v8913 = vpack.c.b16 %v8712, %v8711
        %v8914 = vpack.c.b16 %v8714, %v8713
        %v8915 = vpack.c.b16 %v8716, %v8715
        %v8916 = vpack.c.b16 %v8718, %v8717
        %v8917 = vpack.c.b16 %v8720, %v8719
        %v8918 = vpack.c.b16 %v8722, %v8721
        %v8919 = vpack.c.b16 %v8724, %v8723
        %v8920 = vpack.c.b16 %v8726, %v8725
        %v8921 = vpack.c.b16 %v8728, %v8727
        %v8922 = vpack.c.b16 %v8730, %v8729
        %v8923 = vpack.c.b16 %v8732, %v8731
        %v8924 = vpack.c.b16 %v8734, %v8733
        %v8925 = vpack.c.b16 %v8736, %v8735
        %v8926 = vpack.c.b16 %v8738, %v8737
        %v8927 = vpack.c.b16 %v8740, %v8739
        %v8928 = vpack.c.b16 %v8742, %v8741
        %v8929 = vpack.c.b16 %v8744, %v8743
        %v8930 = vpack.c.b16 %v8746, %v8745
        %v8931 = vpack.c.b16 %v8748, %v8747
        %v8932 = vpack.c.b16 %v8750, %v8749
        %v8933 = vpack.c.b16 %v8752, %v8751
        %v8934 = vpack.c.b16 %v8754, %v8753
        %v8935 = vpack.c.b16 %v8756, %v8755
        %v8936 = vpack.c.b16 %v8758, %v8757
        %v8937 = vpack.c.b16 %v8760, %v8759
        %v8938 = vpack.c.b16 %v8762, %v8761
        %v8939 = vpack.c.b16 %v8764, %v8763
        %v8940 = vpack.c.b16 %v8766, %v8765
        %v8941 = vpack.c.b16 %v8768, %v8767
        %v8942 = vpack.c.b16 %v8770, %v8769
        %v8943 = vpack.c.b16 %v8772, %v8771
        %v8944 = vpack.c.b16 %v8774, %v8773
        %v8945 = vpack.c.b16 %v8776, %v8775
        %v8946 = vpack.c.b16 %v8778, %v8777
        %v8947 = vpack.c.b16 %v8780, %v8779
        %v8948 = vpack.c.b16 %v8782, %v8781
        %v8949 = vpack.c.b16 %v8784, %v8783
        %v8950 = vpack.c.b16 %v8786, %v8785
        %v8951 = vpack.c.b16 %v8788, %v8787
        %v8952 = vpack.c.b16 %v8790, %v8789
        %v8953 = vpack.c.b16 %v8792, %v8791
        %v8954 = vpack.c.b16 %v8794, %v8793
        %v8955 = vpack.c.b16 %v8796, %v8795
        %v8956 = vpack.c.b16 %v8798, %v8797
        %v8957 = vpack.c.b16 %v8800, %v8799
        %v8958 = vpack.c.b16 %v8802, %v8801
        %v8959 = vpack.c.b16 %v8804, %v8803
        %v8960 = vpack.c.b16 %v8806, %v8805
        %v8961 = vpack.c.b16 %v8808, %v8807
        %v8962 = vpack.c.b16 %v8810, %v8809
        %v8963 = vpack.c.b16 %v8812, %v8811
        %v8964 = vpack.c.b16 %v8814, %v8813
        %v8965 = vpack.c.b16 %v8816, %v8815
        %v8966 = vpack.c.b16 %v8818, %v8817
        %v8967 = vpack.c.b16 %v8820, %v8819
        %v8968 = vpack.c.b16 %v8822, %v8821
        %v8969 = vpack.c.b16 %v8824, %v8823
        %v8970 = vpack.c.b16 %v8826, %v8825
        %v8971 = vpack.c.b16 %v8828, %v8827
        %v8972 = vpack.c.b16 %v8830, %v8829
        %v8973 = vpack.c.b16 %v8832, %v8831
        %v8974 = vpack.c.b16 %v8834, %v8833
        %v8975 = vpack.c.b16 %v8836, %v8835
        %v8976 = vpack.c.b16 %v8838, %v8837
        %v8977 = vpack.c.b16 %v8840, %v8839
        %v8978 = vpack.c.b16 %v8842, %v8841
        %v8979 = vpack.c.b16 %v8844, %v8843
        %v8980 = vpack.c.b16 %v8846, %v8845
        %v8981 = vpack.c.b16 %v8848, %v8847
        %v8982 = vpack.c.b16 %v8850, %v8849
        %v8983 = vpack.c.b16 %v8852, %v8851
        %v8984 = vpack.c.b16 %v8854, %v8853
        %v8985 = vpack.c.b16 %v8856, %v8855
        %v8986 = vpack.c.b16 %v8858, %v8857
        %9115 = vmatprep.subr.bf16.mxu0 0
        %9116 = vmatpush1.bf16.msra.mxu0 %v8859
        %9117 = vmatprep.subr.bf16.mxu0 0
        %9118 = vmatpush1.bf16.msra.mxu0 %v8860
        %9119 = vmatprep.subr.bf16.mxu0 0
        %9120 = vmatpush1.bf16.msra.mxu0 %v8861
        %9121 = vmatprep.subr.bf16.mxu0 0
        %9122 = vmatpush1.bf16.msra.mxu0 %v8862
        %9123 = vmatprep.subr.bf16.mxu0 0
        %9124 = vmatpush1.bf16.msra.mxu0 %v8863
        %9125 = vmatprep.subr.bf16.mxu0 0
        %9126 = vmatpush1.bf16.msra.mxu0 %v8864
        %9127 = vmatprep.subr.bf16.mxu0 0
        %9128 = vmatpush1.bf16.msra.mxu0 %v8865
        %9129 = vmatprep.subr.bf16.mxu0 0
        %9130 = vmatpush1.bf16.msra.mxu0 %v8866
        %9131 = vmatprep.subr.bf16.mxu0 0
        %9132 = vmatpush1.bf16.msra.mxu0 %v8867
        %9133 = vmatprep.subr.bf16.mxu0 0
        %9134 = vmatpush1.bf16.msra.mxu0 %v8868
        %9135 = vmatprep.subr.bf16.mxu0 0
        %9136 = vmatpush1.bf16.msra.mxu0 %v8869
        %9137 = vmatprep.subr.bf16.mxu0 0
        %9138 = vmatpush1.bf16.msra.mxu0 %v8870
        %9139 = vmatprep.subr.bf16.mxu0 0
        %9140 = vmatpush1.bf16.msra.mxu0 %v8871
        %9141 = vmatprep.subr.bf16.mxu0 0
        %9142 = vmatpush1.bf16.msra.mxu0 %v8872
        %9143 = vmatprep.subr.bf16.mxu0 0
        %9144 = vmatpush1.bf16.msra.mxu0 %v8873
        %9145 = vmatprep.subr.bf16.mxu0 0
        %9146 = vmatpush1.bf16.msra.mxu0 %v8874
        %9147 = vmatprep.mubr.bf16.mxu0 %v7955
        %9148 = vmatmul.mubr.bf16.gmra.mrb[0].mxu0 %v7954
        %v9149 = vpop.f32.mrb[0].mxu0
        %v9150 = vadd.f32 %v8345, %v9149
        %v9151 = vpop.f32.mrb[0].mxu0
        %v9152 = vpop.f32.mrb[0].mxu0
        %v9153 = vadd.f32 %v8345, %v9152
        %v9154 = vpop.f32.mrb[0].mxu0
        %9155 = vmatprep.mubr.bf16.mxu0 %v7971
        %9156 = vmatmul.mubr.bf16.gmra.mrb[0].mxu0 %v7970
        %v9157 = vpop.f32.mrb[0].mxu0
        %v9158 = vadd.f32 %v8345, %v9157
        %v9159 = vpop.f32.mrb[0].mxu0
        %v9160 = vpop.f32.mrb[0].mxu0
        %v9161 = vadd.f32 %v8345, %v9160
        %v9162 = vpop.f32.mrb[0].mxu0
        %9163 = vmatprep.mubr.bf16.mxu0 %v7987
        %9164 = vmatmul.mubr.bf16.gmra.mrb[0].mxu0 %v7986
        %v9165 = vpop.f32.mrb[0].mxu0
        %v9166 = vadd.f32 %v8345, %v9165
        %v9167 = vpop.f32.mrb[0].mxu0
        %v9168 = vpop.f32.mrb[0].mxu0
        %v9169 = vadd.f32 %v8345, %v9168
        %v9170 = vpop.f32.mrb[0].mxu0
        %9171 = vmatprep.mubr.bf16.mxu0 %v8003
        %9172 = vmatmul.mubr.bf16.gmra.mrb[0].mxu0 %v8002
        %v9173 = vpop.f32.mrb[0].mxu0
        %v9174 = vadd.f32 %v8345, %v9173
        %v9175 = vpop.f32.mrb[0].mxu0
        %v9176 = vpop.f32.mrb[0].mxu0
        %v9177 = vadd.f32 %v8345, %v9176
        %v9178 = vpop.f32.mrb[0].mxu0
        %9179 = vmatprep.mubr.bf16.mxu0 %v8019
        %9180 = vmatmul.mubr.bf16.gmra.mrb[0].mxu0 %v8018
        %v9181 = vpop.f32.mrb[0].mxu0
        %v9182 = vadd.f32 %v8345, %v9181
        %v9183 = vpop.f32.mrb[0].mxu0
        %v9184 = vpop.f32.mrb[0].mxu0
        %v9185 = vadd.f32 %v8345, %v9184
        %v9186 = vpop.f32.mrb[0].mxu0
        %9187 = vmatprep.mubr.bf16.mxu0 %v8035
        %9188 = vmatmul.mubr.bf16.gmra.mrb[0].mxu0 %v8034
        %v9189 = vpop.f32.mrb[0].mxu0
        %v9190 = vadd.f32 %v8345, %v9189
        %v9191 = vpop.f32.mrb[0].mxu0
        %v9192 = vpop.f32.mrb[0].mxu0
        %v9193 = vadd.f32 %v8345, %v9192
        %v9194 = vpop.f32.mrb[0].mxu0
        %9195 = vmatprep.mubr.bf16.mxu0 %v8051
        %9196 = vmatmul.mubr.bf16.gmra.mrb[0].mxu0 %v8050
        %v9197 = vpop.f32.mrb[0].mxu0
        %v9198 = vadd.f32 %v8345, %v9197
        %v9199 = vpop.f32.mrb[0].mxu0
        %v9200 = vpop.f32.mrb[0].mxu0
        %v9201 = vadd.f32 %v8345, %v9200
        %v9202 = vpop.f32.mrb[0].mxu0
        %9203 = vmatprep.mubr.bf16.mxu0 %v8067
        %9204 = vmatmul.mubr.bf16.gmra.mrb[0].mxu0 %v8066
        %v9205 = vpop.f32.mrb[0].mxu0
        %v9206 = vadd.f32 %v8345, %v9205
        %v9207 = vpop.f32.mrb[0].mxu0
        %v9208 = vpop.f32.mrb[0].mxu0
        %v9209 = vadd.f32 %v8345, %v9208
        %v9210 = vpop.f32.mrb[0].mxu0
        %9211 = vdwg.mxu0
        %9212 = vmatprep.subr.bf16.mxu0 0
        %9213 = vmatpush1.bf16.msra.mxu0 %v8875
        %9214 = vmatprep.subr.bf16.mxu0 0
        %9215 = vmatpush1.bf16.msra.mxu0 %v8876
        %9216 = vmatprep.subr.bf16.mxu0 0
        %9217 = vmatpush1.bf16.msra.mxu0 %v8877
        %9218 = vmatprep.subr.bf16.mxu0 0
        %9219 = vmatpush1.bf16.msra.mxu0 %v8878
        %9220 = vmatprep.subr.bf16.mxu0 0
        %9221 = vmatpush1.bf16.msra.mxu0 %v8879
        %9222 = vmatprep.subr.bf16.mxu0 0
        %9223 = vmatpush1.bf16.msra.mxu0 %v8880
        %9224 = vmatprep.subr.bf16.mxu0 0
        %9225 = vmatpush1.bf16.msra.mxu0 %v8881
        %9226 = vmatprep.subr.bf16.mxu0 0
        %9227 = vmatpush1.bf16.msra.mxu0 %v8882
        %9228 = vmatprep.subr.bf16.mxu0 0
        %9229 = vmatpush1.bf16.msra.mxu0 %v8883
        %9230 = vmatprep.subr.bf16.mxu0 0
        %9231 = vmatpush1.bf16.msra.mxu0 %v8884
        %9232 = vmatprep.subr.bf16.mxu0 0
        %9233 = vmatpush1.bf16.msra.mxu0 %v8885
        %9234 = vmatprep.subr.bf16.mxu0 0
        %9235 = vmatpush1.bf16.msra.mxu0 %v8886
        %9236 = vmatprep.subr.bf16.mxu0 0
        %9237 = vmatpush1.bf16.msra.mxu0 %v8887
        %9238 = vmatprep.subr.bf16.mxu0 0
        %9239 = vmatpush1.bf16.msra.mxu0 %v8888
        %9240 = vmatprep.subr.bf16.mxu0 0
        %9241 = vmatpush1.bf16.msra.mxu0 %v8889
        %9242 = vmatprep.subr.bf16.mxu0 0
        %9243 = vmatpush1.bf16.msra.mxu0 %v8890
        %9244 = vmatprep.mubr.bf16.mxu0 %v7957
        %9245 = vmatmul.mubr.bf16.gmra.mrb[0].mxu0 %v7956
        %v9246 = vpop.f32.mrb[0].mxu0
        %v9247 = vadd.f32 %v9150, %v9246
        %v9248 = vpop.f32.mrb[0].mxu0
        %v9249 = vpop.f32.mrb[0].mxu0
        %v9250 = vadd.f32 %v9153, %v9249
        %v9251 = vpop.f32.mrb[0].mxu0
        %9252 = vmatprep.mubr.bf16.mxu0 %v7973
        %9253 = vmatmul.mubr.bf16.gmra.mrb[0].mxu0 %v7972
        %v9254 = vpop.f32.mrb[0].mxu0
        %v9255 = vadd.f32 %v9158, %v9254
        %v9256 = vpop.f32.mrb[0].mxu0
        %v9257 = vpop.f32.mrb[0].mxu0
        %v9258 = vadd.f32 %v9161, %v9257
        %v9259 = vpop.f32.mrb[0].mxu0
        %9260 = vmatprep.mubr.bf16.mxu0 %v7989
        %9261 = vmatmul.mubr.bf16.gmra.mrb[0].mxu0 %v7988
        %v9262 = vpop.f32.mrb[0].mxu0
        %v9263 = vadd.f32 %v9166, %v9262
        %v9264 = vpop.f32.mrb[0].mxu0
        %v9265 = vpop.f32.mrb[0].mxu0
        %v9266 = vadd.f32 %v9169, %v9265
        %v9267 = vpop.f32.mrb[0].mxu0
        %9268 = vmatprep.mubr.bf16.mxu0 %v8005
        %9269 = vmatmul.mubr.bf16.gmra.mrb[0].mxu0 %v8004
        %v9270 = vpop.f32.mrb[0].mxu0
        %v9271 = vadd.f32 %v9174, %v9270
        %v9272 = vpop.f32.mrb[0].mxu0
        %v9273 = vpop.f32.mrb[0].mxu0
        %v9274 = vadd.f32 %v9177, %v9273
        %v9275 = vpop.f32.mrb[0].mxu0
        %9276 = vmatprep.mubr.bf16.mxu0 %v8021
        %9277 = vmatmul.mubr.bf16.gmra.mrb[0].mxu0 %v8020
        %v9278 = vpop.f32.mrb[0].mxu0
        %v9279 = vadd.f32 %v9182, %v9278
        %v9280 = vpop.f32.mrb[0].mxu0
        %v9281 = vpop.f32.mrb[0].mxu0
        %v9282 = vadd.f32 %v9185, %v9281
        %v9283 = vpop.f32.mrb[0].mxu0
        %9284 = vmatprep.mubr.bf16.mxu0 %v8037
        %9285 = vmatmul.mubr.bf16.gmra.mrb[0].mxu0 %v8036
        %v9286 = vpop.f32.mrb[0].mxu0
        %v9287 = vadd.f32 %v9190, %v9286
        %v9288 = vpop.f32.mrb[0].mxu0
        %v9289 = vpop.f32.mrb[0].mxu0
        %v9290 = vadd.f32 %v9193, %v9289
        %v9291 = vpop.f32.mrb[0].mxu0
        %9292 = vmatprep.mubr.bf16.mxu0 %v8053
        %9293 = vmatmul.mubr.bf16.gmra.mrb[0].mxu0 %v8052
        %v9294 = vpop.f32.mrb[0].mxu0
        %v9295 = vadd.f32 %v9198, %v9294
        %v9296 = vpop.f32.mrb[0].mxu0
        %v9297 = vpop.f32.mrb[0].mxu0
        %v9298 = vadd.f32 %v9201, %v9297
        %v9299 = vpop.f32.mrb[0].mxu0
        %9300 = vmatprep.mubr.bf16.mxu0 %v8069
        %9301 = vmatmul.mubr.bf16.gmra.mrb[0].mxu0 %v8068
        %v9302 = vpop.f32.mrb[0].mxu0
        %v9303 = vadd.f32 %v9206, %v9302
        %v9304 = vpop.f32.mrb[0].mxu0
        %v9305 = vpop.f32.mrb[0].mxu0
        %v9306 = vadd.f32 %v9209, %v9305
        %v9307 = vpop.f32.mrb[0].mxu0
        %9308 = vdwg.mxu0
        %9309 = vmatprep.subr.bf16.mxu0 0
        %9310 = vmatpush1.bf16.msra.mxu0 %v8891
        %9311 = vmatprep.subr.bf16.mxu0 0
        %9312 = vmatpush1.bf16.msra.mxu0 %v8892
        %9313 = vmatprep.subr.bf16.mxu0 0
        %9314 = vmatpush1.bf16.msra.mxu0 %v8893
        %9315 = vmatprep.subr.bf16.mxu0 0
        %9316 = vmatpush1.bf16.msra.mxu0 %v8894
        %9317 = vmatprep.subr.bf16.mxu0 0
        %9318 = vmatpush1.bf16.msra.mxu0 %v8895
        %9319 = vmatprep.subr.bf16.mxu0 0
        %9320 = vmatpush1.bf16.msra.mxu0 %v8896
        %9321 = vmatprep.subr.bf16.mxu0 0
        %9322 = vmatpush1.bf16.msra.mxu0 %v8897
        %9323 = vmatprep.subr.bf16.mxu0 0
        %9324 = vmatpush1.bf16.msra.mxu0 %v8898
        %9325 = vmatprep.subr.bf16.mxu0 0
        %9326 = vmatpush1.bf16.msra.mxu0 %v8899
        %9327 = vmatprep.subr.bf16.mxu0 0
        %9328 = vmatpush1.bf16.msra.mxu0 %v8900
        %9329 = vmatprep.subr.bf16.mxu0 0
        %9330 = vmatpush1.bf16.msra.mxu0 %v8901
        %9331 = vmatprep.subr.bf16.mxu0 0
        %9332 = vmatpush1.bf16.msra.mxu0 %v8902
        %9333 = vmatprep.subr.bf16.mxu0 0
        %9334 = vmatpush1.bf16.msra.mxu0 %v8903
        %9335 = vmatprep.subr.bf16.mxu0 0
        %9336 = vmatpush1.bf16.msra.mxu0 %v8904
        %9337 = vmatprep.subr.bf16.mxu0 0
        %9338 = vmatpush1.bf16.msra.mxu0 %v8905
        %9339 = vmatprep.subr.bf16.mxu0 0
        %9340 = vmatpush1.bf16.msra.mxu0 %v8906
        %9341 = vmatprep.mubr.bf16.mxu0 %v7959
        %9342 = vmatmul.mubr.bf16.gmra.mrb[0].mxu0 %v7958
        %v9343 = vpop.f32.mrb[0].mxu0
        %v9344 = vadd.f32 %v9247, %v9343
        %v9345 = vpop.f32.mrb[0].mxu0
        %v9346 = vpop.f32.mrb[0].mxu0
        %v9347 = vadd.f32 %v9250, %v9346
        %v9348 = vpop.f32.mrb[0].mxu0
        %9349 = vmatprep.mubr.bf16.mxu0 %v7975
        %9350 = vmatmul.mubr.bf16.gmra.mrb[0].mxu0 %v7974
        %v9351 = vpop.f32.mrb[0].mxu0
        %v9352 = vadd.f32 %v9255, %v9351
        %v9353 = vpop.f32.mrb[0].mxu0
        %v9354 = vpop.f32.mrb[0].mxu0
        %v9355 = vadd.f32 %v9258, %v9354
        %v9356 = vpop.f32.mrb[0].mxu0
        %9357 = vmatprep.mubr.bf16.mxu0 %v7991
        %9358 = vmatmul.mubr.bf16.gmra.mrb[0].mxu0 %v7990
        %v9359 = vpop.f32.mrb[0].mxu0
        %v9360 = vadd.f32 %v9263, %v9359
        %v9361 = vpop.f32.mrb[0].mxu0
        %v9362 = vpop.f32.mrb[0].mxu0
        %v9363 = vadd.f32 %v9266, %v9362
        %v9364 = vpop.f32.mrb[0].mxu0
        %9365 = vmatprep.mubr.bf16.mxu0 %v8007
        %9366 = vmatmul.mubr.bf16.gmra.mrb[0].mxu0 %v8006
        %v9367 = vpop.f32.mrb[0].mxu0
        %v9368 = vadd.f32 %v9271, %v9367
        %v9369 = vpop.f32.mrb[0].mxu0
        %v9370 = vpop.f32.mrb[0].mxu0
        %v9371 = vadd.f32 %v9274, %v9370
        %v9372 = vpop.f32.mrb[0].mxu0
        %9373 = vmatprep.mubr.bf16.mxu0 %v8023
        %9374 = vmatmul.mubr.bf16.gmra.mrb[0].mxu0 %v8022
        %v9375 = vpop.f32.mrb[0].mxu0
        %v9376 = vadd.f32 %v9279, %v9375
        %v9377 = vpop.f32.mrb[0].mxu0
        %v9378 = vpop.f32.mrb[0].mxu0
        %v9379 = vadd.f32 %v9282, %v9378
        %v9380 = vpop.f32.mrb[0].mxu0
        %9381 = vmatprep.mubr.bf16.mxu0 %v8039
        %9382 = vmatmul.mubr.bf16.gmra.mrb[0].mxu0 %v8038
        %v9383 = vpop.f32.mrb[0].mxu0
        %v9384 = vadd.f32 %v9287, %v9383
        %v9385 = vpop.f32.mrb[0].mxu0
        %v9386 = vpop.f32.mrb[0].mxu0
        %v9387 = vadd.f32 %v9290, %v9386
        %v9388 = vpop.f32.mrb[0].mxu0
        %9389 = vmatprep.mubr.bf16.mxu0 %v8055
        %9390 = vmatmul.mubr.bf16.gmra.mrb[0].mxu0 %v8054
        %v9391 = vpop.f32.mrb[0].mxu0
        %v9392 = vadd.f32 %v9295, %v9391
        %v9393 = vpop.f32.mrb[0].mxu0
        %v9394 = vpop.f32.mrb[0].mxu0
        %v9395 = vadd.f32 %v9298, %v9394
        %v9396 = vpop.f32.mrb[0].mxu0
        %9397 = vmatprep.mubr.bf16.mxu0 %v8071
        %9398 = vmatmul.mubr.bf16.gmra.mrb[0].mxu0 %v8070
        %v9399 = vpop.f32.mrb[0].mxu0
        %v9400 = vadd.f32 %v9303, %v9399
        %v9401 = vpop.f32.mrb[0].mxu0
        %v9402 = vpop.f32.mrb[0].mxu0
        %v9403 = vadd.f32 %v9306, %v9402
        %v9404 = vpop.f32.mrb[0].mxu0
        %9405 = vdwg.mxu0
        %9406 = vmatprep.subr.bf16.mxu0 0
        %9407 = vmatpush1.bf16.msra.mxu0 %v8907
        %9408 = vmatprep.subr.bf16.mxu0 0
        %9409 = vmatpush1.bf16.msra.mxu0 %v8908
        %9410 = vmatprep.subr.bf16.mxu0 0
        %9411 = vmatpush1.bf16.msra.mxu0 %v8909
        %9412 = vmatprep.subr.bf16.mxu0 0
        %9413 = vmatpush1.bf16.msra.mxu0 %v8910
        %9414 = vmatprep.subr.bf16.mxu0 0
        %9415 = vmatpush1.bf16.msra.mxu0 %v8911
        %9416 = vmatprep.subr.bf16.mxu0 0
        %9417 = vmatpush1.bf16.msra.mxu0 %v8912
        %9418 = vmatprep.subr.bf16.mxu0 0
        %9419 = vmatpush1.bf16.msra.mxu0 %v8913
        %9420 = vmatprep.subr.bf16.mxu0 0
        %9421 = vmatpush1.bf16.msra.mxu0 %v8914
        %9422 = vmatprep.subr.bf16.mxu0 0
        %9423 = vmatpush1.bf16.msra.mxu0 %v8915
        %9424 = vmatprep.subr.bf16.mxu0 0
        %9425 = vmatpush1.bf16.msra.mxu0 %v8916
        %9426 = vmatprep.subr.bf16.mxu0 0
        %9427 = vmatpush1.bf16.msra.mxu0 %v8917
        %9428 = vmatprep.subr.bf16.mxu0 0
        %9429 = vmatpush1.bf16.msra.mxu0 %v8918
        %9430 = vmatprep.subr.bf16.mxu0 0
        %9431 = vmatpush1.bf16.msra.mxu0 %v8919
        %9432 = vmatprep.subr.bf16.mxu0 0
        %9433 = vmatpush1.bf16.msra.mxu0 %v8920
        %9434 = vmatprep.subr.bf16.mxu0 0
        %9435 = vmatpush1.bf16.msra.mxu0 %v8921
        %9436 = vmatprep.subr.bf16.mxu0 0
        %9437 = vmatpush1.bf16.msra.mxu0 %v8922
        %9438 = vmatprep.mubr.bf16.mxu0 %v7961
        %9439 = vmatmul.mubr.bf16.gmra.mrb[0].mxu0 %v7960
        %v9440 = vpop.f32.mrb[0].mxu0
        %v9441 = vadd.f32 %v9344, %v9440
        %v9442 = vpop.f32.mrb[0].mxu0
        %v9443 = vpop.f32.mrb[0].mxu0
        %v9444 = vadd.f32 %v9347, %v9443
        %v9445 = vpop.f32.mrb[0].mxu0
        %9446 = vmatprep.mubr.bf16.mxu0 %v7977
        %9447 = vmatmul.mubr.bf16.gmra.mrb[0].mxu0 %v7976
        %v9448 = vpop.f32.mrb[0].mxu0
        %v9449 = vadd.f32 %v9352, %v9448
        %v9450 = vpop.f32.mrb[0].mxu0
        %v9451 = vpop.f32.mrb[0].mxu0
        %v9452 = vadd.f32 %v9355, %v9451
        %v9453 = vpop.f32.mrb[0].mxu0
        %9454 = vmatprep.mubr.bf16.mxu0 %v7993
        %9455 = vmatmul.mubr.bf16.gmra.mrb[0].mxu0 %v7992
        %v9456 = vpop.f32.mrb[0].mxu0
        %v9457 = vadd.f32 %v9360, %v9456
        %v9458 = vpop.f32.mrb[0].mxu0
        %v9459 = vpop.f32.mrb[0].mxu0
        %v9460 = vadd.f32 %v9363, %v9459
        %v9461 = vpop.f32.mrb[0].mxu0
        %9462 = vmatprep.mubr.bf16.mxu0 %v8009
        %9463 = vmatmul.mubr.bf16.gmra.mrb[0].mxu0 %v8008
        %v9464 = vpop.f32.mrb[0].mxu0
        %v9465 = vadd.f32 %v9368, %v9464
        %v9466 = vpop.f32.mrb[0].mxu0
        %v9467 = vpop.f32.mrb[0].mxu0
        %v9468 = vadd.f32 %v9371, %v9467
        %v9469 = vpop.f32.mrb[0].mxu0
        %9470 = vmatprep.mubr.bf16.mxu0 %v8025
        %9471 = vmatmul.mubr.bf16.gmra.mrb[0].mxu0 %v8024
        %v9472 = vpop.f32.mrb[0].mxu0
        %v9473 = vadd.f32 %v9376, %v9472
        %v9474 = vpop.f32.mrb[0].mxu0
        %v9475 = vpop.f32.mrb[0].mxu0
        %v9476 = vadd.f32 %v9379, %v9475
        %v9477 = vpop.f32.mrb[0].mxu0
        %9478 = vmatprep.mubr.bf16.mxu0 %v8041
        %9479 = vmatmul.mubr.bf16.gmra.mrb[0].mxu0 %v8040
        %v9480 = vpop.f32.mrb[0].mxu0
        %v9481 = vadd.f32 %v9384, %v9480
        %v9482 = vpop.f32.mrb[0].mxu0
        %v9483 = vpop.f32.mrb[0].mxu0
        %v9484 = vadd.f32 %v9387, %v9483
        %v9485 = vpop.f32.mrb[0].mxu0
        %9486 = vmatprep.mubr.bf16.mxu0 %v8057
        %9487 = vmatmul.mubr.bf16.gmra.mrb[0].mxu0 %v8056
        %v9488 = vpop.f32.mrb[0].mxu0
        %v9489 = vadd.f32 %v9392, %v9488
        %v9490 = vpop.f32.mrb[0].mxu0
        %v9491 = vpop.f32.mrb[0].mxu0
        %v9492 = vadd.f32 %v9395, %v9491
        %v9493 = vpop.f32.mrb[0].mxu0
        %9494 = vmatprep.mubr.bf16.mxu0 %v8073
        %9495 = vmatmul.mubr.bf16.gmra.mrb[0].mxu0 %v8072
        %v9496 = vpop.f32.mrb[0].mxu0
        %v9497 = vadd.f32 %v9400, %v9496
        %v9498 = vpop.f32.mrb[0].mxu0
        %v9499 = vpop.f32.mrb[0].mxu0
        %v9500 = vadd.f32 %v9403, %v9499
        %v9501 = vpop.f32.mrb[0].mxu0
        %9502 = vdwg.mxu0
        %9503 = vmatprep.subr.bf16.mxu0 0
        %9504 = vmatpush1.bf16.msra.mxu0 %v8923
        %9505 = vmatprep.subr.bf16.mxu0 0
        %9506 = vmatpush1.bf16.msra.mxu0 %v8924
        %9507 = vmatprep.subr.bf16.mxu0 0
        %9508 = vmatpush1.bf16.msra.mxu0 %v8925
        %9509 = vmatprep.subr.bf16.mxu0 0
        %9510 = vmatpush1.bf16.msra.mxu0 %v8926
        %9511 = vmatprep.subr.bf16.mxu0 0
        %9512 = vmatpush1.bf16.msra.mxu0 %v8927
        %9513 = vmatprep.subr.bf16.mxu0 0
        %9514 = vmatpush1.bf16.msra.mxu0 %v8928
        %9515 = vmatprep.subr.bf16.mxu0 0
        %9516 = vmatpush1.bf16.msra.mxu0 %v8929
        %9517 = vmatprep.subr.bf16.mxu0 0
        %9518 = vmatpush1.bf16.msra.mxu0 %v8930
        %9519 = vmatprep.subr.bf16.mxu0 0
        %9520 = vmatpush1.bf16.msra.mxu0 %v8931
        %9521 = vmatprep.subr.bf16.mxu0 0
        %9522 = vmatpush1.bf16.msra.mxu0 %v8932
        %9523 = vmatprep.subr.bf16.mxu0 0
        %9524 = vmatpush1.bf16.msra.mxu0 %v8933
        %9525 = vmatprep.subr.bf16.mxu0 0
        %9526 = vmatpush1.bf16.msra.mxu0 %v8934
        %9527 = vmatprep.subr.bf16.mxu0 0
        %9528 = vmatpush1.bf16.msra.mxu0 %v8935
        %9529 = vmatprep.subr.bf16.mxu0 0
        %9530 = vmatpush1.bf16.msra.mxu0 %v8936
        %9531 = vmatprep.subr.bf16.mxu0 0
        %9532 = vmatpush1.bf16.msra.mxu0 %v8937
        %9533 = vmatprep.subr.bf16.mxu0 0
        %9534 = vmatpush1.bf16.msra.mxu0 %v8938
        %9535 = vmatprep.mubr.bf16.mxu0 %v7963
        %9536 = vmatmul.mubr.bf16.gmra.mrb[0].mxu0 %v7962
        %v9537 = vpop.f32.mrb[0].mxu0
        %v9538 = vadd.f32 %v9441, %v9537
        %v9539 = vpop.f32.mrb[0].mxu0
        %v9540 = vpop.f32.mrb[0].mxu0
        %v9541 = vadd.f32 %v9444, %v9540
        %v9542 = vpop.f32.mrb[0].mxu0
        %9543 = vmatprep.mubr.bf16.mxu0 %v7979
        %9544 = vmatmul.mubr.bf16.gmra.mrb[0].mxu0 %v7978
        %v9545 = vpop.f32.mrb[0].mxu0
        %v9546 = vadd.f32 %v9449, %v9545
        %v9547 = vpop.f32.mrb[0].mxu0
        %v9548 = vpop.f32.mrb[0].mxu0
        %v9549 = vadd.f32 %v9452, %v9548
        %v9550 = vpop.f32.mrb[0].mxu0
        %9551 = vmatprep.mubr.bf16.mxu0 %v7995
        %9552 = vmatmul.mubr.bf16.gmra.mrb[0].mxu0 %v7994
        %v9553 = vpop.f32.mrb[0].mxu0
        %v9554 = vadd.f32 %v9457, %v9553
        %v9555 = vpop.f32.mrb[0].mxu0
        %v9556 = vpop.f32.mrb[0].mxu0
        %v9557 = vadd.f32 %v9460, %v9556
        %v9558 = vpop.f32.mrb[0].mxu0
        %9559 = vmatprep.mubr.bf16.mxu0 %v8011
        %9560 = vmatmul.mubr.bf16.gmra.mrb[0].mxu0 %v8010
        %v9561 = vpop.f32.mrb[0].mxu0
        %v9562 = vadd.f32 %v9465, %v9561
        %v9563 = vpop.f32.mrb[0].mxu0
        %v9564 = vpop.f32.mrb[0].mxu0
        %v9565 = vadd.f32 %v9468, %v9564
        %v9566 = vpop.f32.mrb[0].mxu0
        %9567 = vmatprep.mubr.bf16.mxu0 %v8027
        %9568 = vmatmul.mubr.bf16.gmra.mrb[0].mxu0 %v8026
        %v9569 = vpop.f32.mrb[0].mxu0
        %v9570 = vadd.f32 %v9473, %v9569
        %v9571 = vpop.f32.mrb[0].mxu0
        %v9572 = vpop.f32.mrb[0].mxu0
        %v9573 = vadd.f32 %v9476, %v9572
        %v9574 = vpop.f32.mrb[0].mxu0
        %9575 = vmatprep.mubr.bf16.mxu0 %v8043
        %9576 = vmatmul.mubr.bf16.gmra.mrb[0].mxu0 %v8042
        %v9577 = vpop.f32.mrb[0].mxu0
        %v9578 = vadd.f32 %v9481, %v9577
        %v9579 = vpop.f32.mrb[0].mxu0
        %v9580 = vpop.f32.mrb[0].mxu0
        %v9581 = vadd.f32 %v9484, %v9580
        %v9582 = vpop.f32.mrb[0].mxu0
        %9583 = vmatprep.mubr.bf16.mxu0 %v8059
        %9584 = vmatmul.mubr.bf16.gmra.mrb[0].mxu0 %v8058
        %v9585 = vpop.f32.mrb[0].mxu0
        %v9586 = vadd.f32 %v9489, %v9585
        %v9587 = vpop.f32.mrb[0].mxu0
        %v9588 = vpop.f32.mrb[0].mxu0
        %v9589 = vadd.f32 %v9492, %v9588
        %v9590 = vpop.f32.mrb[0].mxu0
        %9591 = vmatprep.mubr.bf16.mxu0 %v8075
        %9592 = vmatmul.mubr.bf16.gmra.mrb[0].mxu0 %v8074
        %v9593 = vpop.f32.mrb[0].mxu0
        %v9594 = vadd.f32 %v9497, %v9593
        %v9595 = vpop.f32.mrb[0].mxu0
        %v9596 = vpop.f32.mrb[0].mxu0
        %v9597 = vadd.f32 %v9500, %v9596
        %v9598 = vpop.f32.mrb[0].mxu0
        %9599 = vdwg.mxu0
        %9600 = vmatprep.subr.bf16.mxu0 0
        %9601 = vmatpush1.bf16.msra.mxu0 %v8939
        %9602 = vmatprep.subr.bf16.mxu0 0
        %9603 = vmatpush1.bf16.msra.mxu0 %v8940
        %9604 = vmatprep.subr.bf16.mxu0 0
        %9605 = vmatpush1.bf16.msra.mxu0 %v8941
        %9606 = vmatprep.subr.bf16.mxu0 0
        %9607 = vmatpush1.bf16.msra.mxu0 %v8942
        %9608 = vmatprep.subr.bf16.mxu0 0
        %9609 = vmatpush1.bf16.msra.mxu0 %v8943
        %9610 = vmatprep.subr.bf16.mxu0 0
        %9611 = vmatpush1.bf16.msra.mxu0 %v8944
        %9612 = vmatprep.subr.bf16.mxu0 0
        %9613 = vmatpush1.bf16.msra.mxu0 %v8945
        %9614 = vmatprep.subr.bf16.mxu0 0
        %9615 = vmatpush1.bf16.msra.mxu0 %v8946
        %9616 = vmatprep.subr.bf16.mxu0 0
        %9617 = vmatpush1.bf16.msra.mxu0 %v8947
        %9618 = vmatprep.subr.bf16.mxu0 0
        %9619 = vmatpush1.bf16.msra.mxu0 %v8948
        %9620 = vmatprep.subr.bf16.mxu0 0
        %9621 = vmatpush1.bf16.msra.mxu0 %v8949
        %9622 = vmatprep.subr.bf16.mxu0 0
        %9623 = vmatpush1.bf16.msra.mxu0 %v8950
        %9624 = vmatprep.subr.bf16.mxu0 0
        %9625 = vmatpush1.bf16.msra.mxu0 %v8951
        %9626 = vmatprep.subr.bf16.mxu0 0
        %9627 = vmatpush1.bf16.msra.mxu0 %v8952
        %9628 = vmatprep.subr.bf16.mxu0 0
        %9629 = vmatpush1.bf16.msra.mxu0 %v8953
        %9630 = vmatprep.subr.bf16.mxu0 0
        %9631 = vmatpush1.bf16.msra.mxu0 %v8954
        %9632 = vmatprep.mubr.bf16.mxu0 %v7965
        %9633 = vmatmul.mubr.bf16.gmra.mrb[0].mxu0 %v7964
        %v9634 = vpop.f32.mrb[0].mxu0
        %v9635 = vadd.f32 %v9538, %v9634
        %v9636 = vpop.f32.mrb[0].mxu0
        %v9637 = vpop.f32.mrb[0].mxu0
        %v9638 = vadd.f32 %v9541, %v9637
        %v9639 = vpop.f32.mrb[0].mxu0
        %9640 = vmatprep.mubr.bf16.mxu0 %v7981
        %9641 = vmatmul.mubr.bf16.gmra.mrb[0].mxu0 %v7980
        %v9642 = vpop.f32.mrb[0].mxu0
        %v9643 = vadd.f32 %v9546, %v9642
        %v9644 = vpop.f32.mrb[0].mxu0
        %v9645 = vpop.f32.mrb[0].mxu0
        %v9646 = vadd.f32 %v9549, %v9645
        %v9647 = vpop.f32.mrb[0].mxu0
        %9648 = vmatprep.mubr.bf16.mxu0 %v7997
        %9649 = vmatmul.mubr.bf16.gmra.mrb[0].mxu0 %v7996
        %v9650 = vpop.f32.mrb[0].mxu0
        %v9651 = vadd.f32 %v9554, %v9650
        %v9652 = vpop.f32.mrb[0].mxu0
        %v9653 = vpop.f32.mrb[0].mxu0
        %v9654 = vadd.f32 %v9557, %v9653
        %v9655 = vpop.f32.mrb[0].mxu0
        %9656 = vmatprep.mubr.bf16.mxu0 %v8013
        %9657 = vmatmul.mubr.bf16.gmra.mrb[0].mxu0 %v8012
        %v9658 = vpop.f32.mrb[0].mxu0
        %v9659 = vadd.f32 %v9562, %v9658
        %v9660 = vpop.f32.mrb[0].mxu0
        %v9661 = vpop.f32.mrb[0].mxu0
        %v9662 = vadd.f32 %v9565, %v9661
        %v9663 = vpop.f32.mrb[0].mxu0
        %9664 = vmatprep.mubr.bf16.mxu0 %v8029
        %9665 = vmatmul.mubr.bf16.gmra.mrb[0].mxu0 %v8028
        %v9666 = vpop.f32.mrb[0].mxu0
        %v9667 = vadd.f32 %v9570, %v9666
        %v9668 = vpop.f32.mrb[0].mxu0
        %v9669 = vpop.f32.mrb[0].mxu0
        %v9670 = vadd.f32 %v9573, %v9669
        %v9671 = vpop.f32.mrb[0].mxu0
        %9672 = vmatprep.mubr.bf16.mxu0 %v8045
        %9673 = vmatmul.mubr.bf16.gmra.mrb[0].mxu0 %v8044
        %v9674 = vpop.f32.mrb[0].mxu0
        %v9675 = vadd.f32 %v9578, %v9674
        %v9676 = vpop.f32.mrb[0].mxu0
        %v9677 = vpop.f32.mrb[0].mxu0
        %v9678 = vadd.f32 %v9581, %v9677
        %v9679 = vpop.f32.mrb[0].mxu0
        %9680 = vmatprep.mubr.bf16.mxu0 %v8061
        %9681 = vmatmul.mubr.bf16.gmra.mrb[0].mxu0 %v8060
        %v9682 = vpop.f32.mrb[0].mxu0
        %v9683 = vadd.f32 %v9586, %v9682
        %v9684 = vpop.f32.mrb[0].mxu0
        %v9685 = vpop.f32.mrb[0].mxu0
        %v9686 = vadd.f32 %v9589, %v9685
        %v9687 = vpop.f32.mrb[0].mxu0
        %9688 = vmatprep.mubr.bf16.mxu0 %v8077
        %9689 = vmatmul.mubr.bf16.gmra.mrb[0].mxu0 %v8076
        %v9690 = vpop.f32.mrb[0].mxu0
        %v9691 = vadd.f32 %v9594, %v9690
        %v9692 = vpop.f32.mrb[0].mxu0
        %v9693 = vpop.f32.mrb[0].mxu0
        %v9694 = vadd.f32 %v9597, %v9693
        %v9695 = vpop.f32.mrb[0].mxu0
        %9696 = vdwg.mxu0
        %9697 = vmatprep.subr.bf16.mxu0 0
        %9698 = vmatpush1.bf16.msra.mxu0 %v8955
        %9699 = vmatprep.subr.bf16.mxu0 0
        %9700 = vmatpush1.bf16.msra.mxu0 %v8956
        %9701 = vmatprep.subr.bf16.mxu0 0
        %9702 = vmatpush1.bf16.msra.mxu0 %v8957
        %9703 = vmatprep.subr.bf16.mxu0 0
        %9704 = vmatpush1.bf16.msra.mxu0 %v8958
        %9705 = vmatprep.subr.bf16.mxu0 0
        %9706 = vmatpush1.bf16.msra.mxu0 %v8959
        %9707 = vmatprep.subr.bf16.mxu0 0
        %9708 = vmatpush1.bf16.msra.mxu0 %v8960
        %9709 = vmatprep.subr.bf16.mxu0 0
        %9710 = vmatpush1.bf16.msra.mxu0 %v8961
        %9711 = vmatprep.subr.bf16.mxu0 0
        %9712 = vmatpush1.bf16.msra.mxu0 %v8962
        %9713 = vmatprep.subr.bf16.mxu0 0
        %9714 = vmatpush1.bf16.msra.mxu0 %v8963
        %9715 = vmatprep.subr.bf16.mxu0 0
        %9716 = vmatpush1.bf16.msra.mxu0 %v8964
        %9717 = vmatprep.subr.bf16.mxu0 0
        %9718 = vmatpush1.bf16.msra.mxu0 %v8965
        %9719 = vmatprep.subr.bf16.mxu0 0
        %9720 = vmatpush1.bf16.msra.mxu0 %v8966
        %9721 = vmatprep.subr.bf16.mxu0 0
        %9722 = vmatpush1.bf16.msra.mxu0 %v8967
        %9723 = vmatprep.subr.bf16.mxu0 0
        %9724 = vmatpush1.bf16.msra.mxu0 %v8968
        %9725 = vmatprep.subr.bf16.mxu0 0
        %9726 = vmatpush1.bf16.msra.mxu0 %v8969
        %9727 = vmatprep.subr.bf16.mxu0 0
        %9728 = vmatpush1.bf16.msra.mxu0 %v8970
        %9729 = vmatprep.mubr.bf16.mxu0 %v7967
        %9730 = vmatmul.mubr.bf16.gmra.mrb[0].mxu0 %v7966
        %v9731 = vpop.f32.mrb[0].mxu0
        %v9732 = vadd.f32 %v9635, %v9731
        %v9733 = vpop.f32.mrb[0].mxu0
        %v9734 = vpop.f32.mrb[0].mxu0
        %v9735 = vadd.f32 %v9638, %v9734
        %v9736 = vpop.f32.mrb[0].mxu0
        %9737 = vmatprep.mubr.bf16.mxu0 %v7983
        %9738 = vmatmul.mubr.bf16.gmra.mrb[0].mxu0 %v7982
        %v9739 = vpop.f32.mrb[0].mxu0
        %v9740 = vadd.f32 %v9643, %v9739
        %v9741 = vpop.f32.mrb[0].mxu0
        %v9742 = vpop.f32.mrb[0].mxu0
        %v9743 = vadd.f32 %v9646, %v9742
        %v9744 = vpop.f32.mrb[0].mxu0
        %9745 = vmatprep.mubr.bf16.mxu0 %v7999
        %9746 = vmatmul.mubr.bf16.gmra.mrb[0].mxu0 %v7998
        %v9747 = vpop.f32.mrb[0].mxu0
        %v9748 = vadd.f32 %v9651, %v9747
        %v9749 = vpop.f32.mrb[0].mxu0
        %v9750 = vpop.f32.mrb[0].mxu0
        %v9751 = vadd.f32 %v9654, %v9750
        %v9752 = vpop.f32.mrb[0].mxu0
        %9753 = vmatprep.mubr.bf16.mxu0 %v8015
        %9754 = vmatmul.mubr.bf16.gmra.mrb[0].mxu0 %v8014
        %v9755 = vpop.f32.mrb[0].mxu0
        %v9756 = vadd.f32 %v9659, %v9755
        %v9757 = vpop.f32.mrb[0].mxu0
        %v9758 = vpop.f32.mrb[0].mxu0
        %v9759 = vadd.f32 %v9662, %v9758
        %v9760 = vpop.f32.mrb[0].mxu0
        %9761 = vmatprep.mubr.bf16.mxu0 %v8031
        %9762 = vmatmul.mubr.bf16.gmra.mrb[0].mxu0 %v8030
        %v9763 = vpop.f32.mrb[0].mxu0
        %v9764 = vadd.f32 %v9667, %v9763
        %v9765 = vpop.f32.mrb[0].mxu0
        %v9766 = vpop.f32.mrb[0].mxu0
        %v9767 = vadd.f32 %v9670, %v9766
        %v9768 = vpop.f32.mrb[0].mxu0
        %9769 = vmatprep.mubr.bf16.mxu0 %v8047
        %9770 = vmatmul.mubr.bf16.gmra.mrb[0].mxu0 %v8046
        %v9771 = vpop.f32.mrb[0].mxu0
        %v9772 = vadd.f32 %v9675, %v9771
        %v9773 = vpop.f32.mrb[0].mxu0
        %v9774 = vpop.f32.mrb[0].mxu0
        %v9775 = vadd.f32 %v9678, %v9774
        %v9776 = vpop.f32.mrb[0].mxu0
        %9777 = vmatprep.mubr.bf16.mxu0 %v8063
        %9778 = vmatmul.mubr.bf16.gmra.mrb[0].mxu0 %v8062
        %v9779 = vpop.f32.mrb[0].mxu0
        %v9780 = vadd.f32 %v9683, %v9779
        %v9781 = vpop.f32.mrb[0].mxu0
        %v9782 = vpop.f32.mrb[0].mxu0
        %v9783 = vadd.f32 %v9686, %v9782
        %v9784 = vpop.f32.mrb[0].mxu0
        %9785 = vmatprep.mubr.bf16.mxu0 %v8079
        %9786 = vmatmul.mubr.bf16.gmra.mrb[0].mxu0 %v8078
        %v9787 = vpop.f32.mrb[0].mxu0
        %v9788 = vadd.f32 %v9691, %v9787
        %v9789 = vpop.f32.mrb[0].mxu0
        %v9790 = vpop.f32.mrb[0].mxu0
        %v9791 = vadd.f32 %v9694, %v9790
        %v9792 = vpop.f32.mrb[0].mxu0
        %9793 = vdwg.mxu0
        %9794 = vmatprep.subr.bf16.mxu0 0
        %9795 = vmatpush1.bf16.msra.mxu0 %v8971
        %9796 = vmatprep.subr.bf16.mxu0 0
        %9797 = vmatpush1.bf16.msra.mxu0 %v8972
        %9798 = vmatprep.subr.bf16.mxu0 0
        %9799 = vmatpush1.bf16.msra.mxu0 %v8973
        %9800 = vmatprep.subr.bf16.mxu0 0
        %9801 = vmatpush1.bf16.msra.mxu0 %v8974
        %9802 = vmatprep.subr.bf16.mxu0 0
        %9803 = vmatpush1.bf16.msra.mxu0 %v8975
        %9804 = vmatprep.subr.bf16.mxu0 0
        %9805 = vmatpush1.bf16.msra.mxu0 %v8976
        %9806 = vmatprep.subr.bf16.mxu0 0
        %9807 = vmatpush1.bf16.msra.mxu0 %v8977
        %9808 = vmatprep.subr.bf16.mxu0 0
        %9809 = vmatpush1.bf16.msra.mxu0 %v8978
        %9810 = vmatprep.subr.bf16.mxu0 0
        %9811 = vmatpush1.bf16.msra.mxu0 %v8979
        %9812 = vmatprep.subr.bf16.mxu0 0
        %9813 = vmatpush1.bf16.msra.mxu0 %v8980
        %9814 = vmatprep.subr.bf16.mxu0 0
        %9815 = vmatpush1.bf16.msra.mxu0 %v8981
        %9816 = vmatprep.subr.bf16.mxu0 0
        %9817 = vmatpush1.bf16.msra.mxu0 %v8982
        %9818 = vmatprep.subr.bf16.mxu0 0
        %9819 = vmatpush1.bf16.msra.mxu0 %v8983
        %9820 = vmatprep.subr.bf16.mxu0 0
        %9821 = vmatpush1.bf16.msra.mxu0 %v8984
        %9822 = vmatprep.subr.bf16.mxu0 0
        %9823 = vmatpush1.bf16.msra.mxu0 %v8985
        %9824 = vmatprep.subr.bf16.mxu0 0
        %9825 = vmatpush1.bf16.msra.mxu0 %v8986
        %9826 = vmatprep.mubr.bf16.mxu0 %v7969
        %9827 = vmatmul.mubr.bf16.gmra.mrb[0].mxu0 %v7968
        %v9828 = vpop.f32.mrb[0].mxu0
        %v9829 = vadd.f32 %v9732, %v9828
        %v9830 = vpop.f32.mrb[0].mxu0
        %v9831 = vpop.f32.mrb[0].mxu0
        %v9832 = vadd.f32 %v9735, %v9831
        %v9833 = vpop.f32.mrb[0].mxu0
        %9834 = vmatprep.mubr.bf16.mxu0 %v7985
        %9835 = vmatmul.mubr.bf16.gmra.mrb[0].mxu0 %v7984
        %v9836 = vpop.f32.mrb[0].mxu0
        %v9837 = vadd.f32 %v9740, %v9836
        %v9838 = vpop.f32.mrb[0].mxu0
        %v9839 = vpop.f32.mrb[0].mxu0
        %v9840 = vadd.f32 %v9743, %v9839
        %v9841 = vpop.f32.mrb[0].mxu0
        %9842 = vmatprep.mubr.bf16.mxu0 %v8001
        %9843 = vmatmul.mubr.bf16.gmra.mrb[0].mxu0 %v8000
        %v9844 = vpop.f32.mrb[0].mxu0
        %v9845 = vadd.f32 %v9748, %v9844
        %v9846 = vpop.f32.mrb[0].mxu0
        %v9847 = vpop.f32.mrb[0].mxu0
        %v9848 = vadd.f32 %v9751, %v9847
        %v9849 = vpop.f32.mrb[0].mxu0
        %9850 = vmatprep.mubr.bf16.mxu0 %v8017
        %9851 = vmatmul.mubr.bf16.gmra.mrb[0].mxu0 %v8016
        %v9852 = vpop.f32.mrb[0].mxu0
        %v9853 = vadd.f32 %v9756, %v9852
        %v9854 = vpop.f32.mrb[0].mxu0
        %v9855 = vpop.f32.mrb[0].mxu0
        %v9856 = vadd.f32 %v9759, %v9855
        %v9857 = vpop.f32.mrb[0].mxu0
        %9858 = vmatprep.mubr.bf16.mxu0 %v8033
        %9859 = vmatmul.mubr.bf16.gmra.mrb[0].mxu0 %v8032
        %v9860 = vpop.f32.mrb[0].mxu0
        %v9861 = vadd.f32 %v9764, %v9860
        %v9862 = vpop.f32.mrb[0].mxu0
        %v9863 = vpop.f32.mrb[0].mxu0
        %v9864 = vadd.f32 %v9767, %v9863
        %v9865 = vpop.f32.mrb[0].mxu0
        %9866 = vmatprep.mubr.bf16.mxu0 %v8049
        %9867 = vmatmul.mubr.bf16.gmra.mrb[0].mxu0 %v8048
        %v9868 = vpop.f32.mrb[0].mxu0
        %v9869 = vadd.f32 %v9772, %v9868
        %v9870 = vpop.f32.mrb[0].mxu0
        %v9871 = vpop.f32.mrb[0].mxu0
        %v9872 = vadd.f32 %v9775, %v9871
        %v9873 = vpop.f32.mrb[0].mxu0
        %9874 = vmatprep.mubr.bf16.mxu0 %v8065
        %9875 = vmatmul.mubr.bf16.gmra.mrb[0].mxu0 %v8064
        %v9876 = vpop.f32.mrb[0].mxu0
        %v9877 = vadd.f32 %v9780, %v9876
        %v9878 = vpop.f32.mrb[0].mxu0
        %v9879 = vpop.f32.mrb[0].mxu0
        %v9880 = vadd.f32 %v9783, %v9879
        %v9881 = vpop.f32.mrb[0].mxu0
        %9882 = vmatprep.mubr.bf16.mxu0 %v8081
        %9883 = vmatmul.mubr.bf16.gmra.mrb[0].mxu0 %v8080
        %v9884 = vpop.f32.mrb[0].mxu0
        %v9885 = vadd.f32 %v9788, %v9884
        %v9886 = vpop.f32.mrb[0].mxu0
        %v9887 = vpop.f32.mrb[0].mxu0
        %v9888 = vadd.f32 %v9791, %v9887
        %v9889 = vpop.f32.mrb[0].mxu0
        %9890 = vdwg.mxu0
        %v9891 = vadd.f32 %v5916, %v9829
        %v9892 = vadd.f32 %v5917, %v9832
        %v9893 = vadd.f32 %v5918, %v9837
        %v9894 = vadd.f32 %v5919, %v9840
        %v9895 = vadd.f32 %v5920, %v9845
        %v9896 = vadd.f32 %v5921, %v9848
        %v9897 = vadd.f32 %v5922, %v9853
        %v9898 = vadd.f32 %v5923, %v9856
        %v9899 = vadd.f32 %v5924, %v9861
        %v9900 = vadd.f32 %v5925, %v9864
        %v9901 = vadd.f32 %v5926, %v9869
        %v9902 = vadd.f32 %v5927, %v9872
        %v9903 = vadd.f32 %v5928, %v9877
        %v9904 = vadd.f32 %v5929, %v9880
        %v9905 = vadd.f32 %v5930, %v9885
        %v9906 = vadd.f32 %v5931, %v9888
        %s9907 = scalar_lea.vmem %s11, 1
        %v9908 = vld [vmem:[%s9907] sm:$0x1]
        %s9909 = scalar_lea.vmem %s12, 1
        %v9910 = vld [vmem:[%s9909] sm:$0x1]
        %9911 = vadd.xlane.f32.xlu0 %v9891
        %v9912 = vpop.xlane.xlu0 %9911
        %9913 = vadd.xlane.f32.xlu0 %v9892
        %v9914 = vpop.xlane.xlu0 %9913
        %9915 = vadd.xlane.f32.xlu0 %v9893
        %v9916 = vpop.xlane.xlu0 %9915
        %9917 = vadd.xlane.f32.xlu0 %v9894
        %v9918 = vpop.xlane.xlu0 %9917
        %9919 = vadd.xlane.f32.xlu0 %v9895
        %v9920 = vpop.xlane.xlu0 %9919
        %9921 = vadd.xlane.f32.xlu0 %v9896
        %v9922 = vpop.xlane.xlu0 %9921
        %9923 = vadd.xlane.f32.xlu0 %v9897
        %v9924 = vpop.xlane.xlu0 %9923
        %9925 = vadd.xlane.f32.xlu0 %v9898
        %v9926 = vpop.xlane.xlu0 %9925
        %9927 = vadd.xlane.f32.xlu0 %v9899
        %v9928 = vpop.xlane.xlu0 %9927
        %9929 = vadd.xlane.f32.xlu0 %v9900
        %v9930 = vpop.xlane.xlu0 %9929
        %9931 = vadd.xlane.f32.xlu0 %v9901
        %v9932 = vpop.xlane.xlu0 %9931
        %9933 = vadd.xlane.f32.xlu0 %v9902
        %v9934 = vpop.xlane.xlu0 %9933
        %9935 = vadd.xlane.f32.xlu0 %v9903
        %v9936 = vpop.xlane.xlu0 %9935
        %9937 = vadd.xlane.f32.xlu0 %v9904
        %v9938 = vpop.xlane.xlu0 %9937
        %9939 = vadd.xlane.f32.xlu0 %v9905
        %v9940 = vpop.xlane.xlu0 %9939
        %9941 = vadd.xlane.f32.xlu0 %v9906
        %v9942 = vpop.xlane.xlu0 %9941
        %v9943 = vmul.f32 %v9912, %v1132
        %v9944 = vmul.f32 %v9914, %v1132
        %v9945 = vmul.f32 %v9916, %v1132
        %v9946 = vmul.f32 %v9918, %v1132
        %v9947 = vmul.f32 %v9920, %v1132
        %v9948 = vmul.f32 %v9922, %v1132
        %v9949 = vmul.f32 %v9924, %v1132
        %v9950 = vmul.f32 %v9926, %v1132
        %v9951 = vmul.f32 %v9928, %v1132
        %v9952 = vmul.f32 %v9930, %v1132
        %v9953 = vmul.f32 %v9932, %v1132
        %v9954 = vmul.f32 %v9934, %v1132
        %v9955 = vmul.f32 %v9936, %v1132
        %v9956 = vmul.f32 %v9938, %v1132
        %v9957 = vmul.f32 %v9940, %v1132
        %v9958 = vmul.f32 %v9942, %v1132
        %v9959 = vsub.f32 %v9891, %v9943
        %v9960 = vsub.f32 %v9892, %v9944
        %v9961 = vsub.f32 %v9893, %v9945
        %v9962 = vsub.f32 %v9894, %v9946
        %v9963 = vsub.f32 %v9895, %v9947
        %v9964 = vsub.f32 %v9896, %v9948
        %v9965 = vsub.f32 %v9897, %v9949
        %v9966 = vsub.f32 %v9898, %v9950
        %v9967 = vsub.f32 %v9899, %v9951
        %v9968 = vsub.f32 %v9900, %v9952
        %v9969 = vsub.f32 %v9901, %v9953
        %v9970 = vsub.f32 %v9902, %v9954
        %v9971 = vsub.f32 %v9903, %v9955
        %v9972 = vsub.f32 %v9904, %v9956
        %v9973 = vsub.f32 %v9905, %v9957
        %v9974 = vsub.f32 %v9906, %v9958
        %v9975 = vmul.f32 %v9959, %v9959
        %v9976 = vmul.f32 %v9960, %v9960
        %v9977 = vmul.f32 %v9961, %v9961
        %v9978 = vmul.f32 %v9962, %v9962
        %v9979 = vmul.f32 %v9963, %v9963
        %v9980 = vmul.f32 %v9964, %v9964
        %v9981 = vmul.f32 %v9965, %v9965
        %v9982 = vmul.f32 %v9966, %v9966
        %v9983 = vmul.f32 %v9967, %v9967
        %v9984 = vmul.f32 %v9968, %v9968
        %v9985 = vmul.f32 %v9969, %v9969
        %v9986 = vmul.f32 %v9970, %v9970
        %v9987 = vmul.f32 %v9971, %v9971
        %v9988 = vmul.f32 %v9972, %v9972
        %v9989 = vmul.f32 %v9973, %v9973
        %v9990 = vmul.f32 %v9974, %v9974
        %9991 = vadd.xlane.f32.xlu0 %v9975
        %v9992 = vpop.xlane.xlu0 %9991
        %9993 = vadd.xlane.f32.xlu0 %v9976
        %v9994 = vpop.xlane.xlu0 %9993
        %9995 = vadd.xlane.f32.xlu0 %v9977
        %v9996 = vpop.xlane.xlu0 %9995
        %9997 = vadd.xlane.f32.xlu0 %v9978
        %v9998 = vpop.xlane.xlu0 %9997
        %9999 = vadd.xlane.f32.xlu0 %v9979
        %v10000 = vpop.xlane.xlu0 %9999
        %10001 = vadd.xlane.f32.xlu0 %v9980
        %v10002 = vpop.xlane.xlu0 %10001
        %10003 = vadd.xlane.f32.xlu0 %v9981
        %v10004 = vpop.xlane.xlu0 %10003
        %10005 = vadd.xlane.f32.xlu0 %v9982
        %v10006 = vpop.xlane.xlu0 %10005
        %10007 = vadd.xlane.f32.xlu0 %v9983
        %v10008 = vpop.xlane.xlu0 %10007
        %10009 = vadd.xlane.f32.xlu0 %v9984
        %v10010 = vpop.xlane.xlu0 %10009
        %10011 = vadd.xlane.f32.xlu0 %v9985
        %v10012 = vpop.xlane.xlu0 %10011
        %10013 = vadd.xlane.f32.xlu0 %v9986
        %v10014 = vpop.xlane.xlu0 %10013
        %10015 = vadd.xlane.f32.xlu0 %v9987
        %v10016 = vpop.xlane.xlu0 %10015
        %10017 = vadd.xlane.f32.xlu0 %v9988
        %v10018 = vpop.xlane.xlu0 %10017
        %10019 = vadd.xlane.f32.xlu0 %v9989
        %v10020 = vpop.xlane.xlu0 %10019
        %10021 = vadd.xlane.f32.xlu0 %v9990
        %v10022 = vpop.xlane.xlu0 %10021
        %v10023 = vmul.f32 %v9992, %v1132
        %v10024 = vmul.f32 %v9994, %v1132
        %v10025 = vmul.f32 %v9996, %v1132
        %v10026 = vmul.f32 %v9998, %v1132
        %v10027 = vmul.f32 %v10000, %v1132
        %v10028 = vmul.f32 %v10002, %v1132
        %v10029 = vmul.f32 %v10004, %v1132
        %v10030 = vmul.f32 %v10006, %v1132
        %v10031 = vmul.f32 %v10008, %v1132
        %v10032 = vmul.f32 %v10010, %v1132
        %v10033 = vmul.f32 %v10012, %v1132
        %v10034 = vmul.f32 %v10014, %v1132
        %v10035 = vmul.f32 %v10016, %v1132
        %v10036 = vmul.f32 %v10018, %v1132
        %v10037 = vmul.f32 %v10020, %v1132
        %v10038 = vmul.f32 %v10022, %v1132
        %v10039 = vadd.f32 %v10023, 1e-05
        %v10040 = vadd.f32 %v10024, 1e-05
        %v10041 = vadd.f32 %v10025, 1e-05
        %v10042 = vadd.f32 %v10026, 1e-05
        %v10043 = vadd.f32 %v10027, 1e-05
        %v10044 = vadd.f32 %v10028, 1e-05
        %v10045 = vadd.f32 %v10029, 1e-05
        %v10046 = vadd.f32 %v10030, 1e-05
        %v10047 = vadd.f32 %v10031, 1e-05
        %v10048 = vadd.f32 %v10032, 1e-05
        %v10049 = vadd.f32 %v10033, 1e-05
        %v10050 = vadd.f32 %v10034, 1e-05
        %v10051 = vadd.f32 %v10035, 1e-05
        %v10052 = vadd.f32 %v10036, 1e-05
        %v10053 = vadd.f32 %v10037, 1e-05
        %v10054 = vadd.f32 %v10038, 1e-05
        %v10055 = vrsqrt.pop %v10039
        %v10056 = vrsqrt.pop %v10040
        %v10057 = vrsqrt.pop %v10041
        %v10058 = vrsqrt.pop %v10042
        %v10059 = vrsqrt.pop %v10043
        %v10060 = vrsqrt.pop %v10044
        %v10061 = vrsqrt.pop %v10045
        %v10062 = vrsqrt.pop %v10046
        %v10063 = vrsqrt.pop %v10047
        %v10064 = vrsqrt.pop %v10048
        %v10065 = vrsqrt.pop %v10049
        %v10066 = vrsqrt.pop %v10050
        %v10067 = vrsqrt.pop %v10051
        %v10068 = vrsqrt.pop %v10052
        %v10069 = vrsqrt.pop %v10053
        %v10070 = vrsqrt.pop %v10054
        %v10071 = vmul.f32 %v9959, %v10055
        %v10072 = vmul.f32 %v9960, %v10056
        %v10073 = vmul.f32 %v9961, %v10057
        %v10074 = vmul.f32 %v9962, %v10058
        %v10075 = vmul.f32 %v9963, %v10059
        %v10076 = vmul.f32 %v9964, %v10060
        %v10077 = vmul.f32 %v9965, %v10061
        %v10078 = vmul.f32 %v9966, %v10062
        %v10079 = vmul.f32 %v9967, %v10063
        %v10080 = vmul.f32 %v9968, %v10064
        %v10081 = vmul.f32 %v9969, %v10065
        %v10082 = vmul.f32 %v9970, %v10066
        %v10083 = vmul.f32 %v9971, %v10067
        %v10084 = vmul.f32 %v9972, %v10068
        %v10085 = vmul.f32 %v9973, %v10069
        %v10086 = vmul.f32 %v9974, %v10070
        %v10088 = vlaneseq
        %v10089 = vshrl.u32 %v10088, 7
        %v10090 = vsub.s32 0, %v10089
        %v10091 = vrot.slane %v9908, %v10090
        %v10093 = vmul.f32 %v10071, %v10091
        %v10094 = vmul.f32 %v10072, %v10091
        %v10095 = vmul.f32 %v10073, %v10091
        %v10096 = vmul.f32 %v10074, %v10091
        %v10097 = vmul.f32 %v10075, %v10091
        %v10098 = vmul.f32 %v10076, %v10091
        %v10099 = vmul.f32 %v10077, %v10091
        %v10100 = vmul.f32 %v10078, %v10091
        %v10101 = vmul.f32 %v10079, %v10091
        %v10102 = vmul.f32 %v10080, %v10091
        %v10103 = vmul.f32 %v10081, %v10091
        %v10104 = vmul.f32 %v10082, %v10091
        %v10105 = vmul.f32 %v10083, %v10091
        %v10106 = vmul.f32 %v10084, %v10091
        %v10107 = vmul.f32 %v10085, %v10091
        %v10108 = vmul.f32 %v10086, %v10091
        %v10110 = vlaneseq
        %v10111 = vshrl.u32 %v10110, 7
        %v10112 = vsub.s32 0, %v10111
        %v10113 = vrot.slane %v9910, %v10112
        %v10115 = vadd.f32 %v10093, %v10113
        %v10116 = vadd.f32 %v10094, %v10113
        %v10117 = vadd.f32 %v10095, %v10113
        %v10118 = vadd.f32 %v10096, %v10113
        %v10119 = vadd.f32 %v10097, %v10113
        %v10120 = vadd.f32 %v10098, %v10113
        %v10121 = vadd.f32 %v10099, %v10113
        %v10122 = vadd.f32 %v10100, %v10113
        %v10123 = vadd.f32 %v10101, %v10113
        %v10124 = vadd.f32 %v10102, %v10113
        %v10125 = vadd.f32 %v10103, %v10113
        %v10126 = vadd.f32 %v10104, %v10113
        %v10127 = vadd.f32 %v10105, %v10113
        %v10128 = vadd.f32 %v10106, %v10113
        %v10129 = vadd.f32 %v10107, %v10113
        %v10130 = vadd.f32 %v10108, %v10113
        %v10131 = vld [vmem:[%s13] sm:$0x1]
        %v10132 = vld [vmem:[%s14] sm:$0x1]
        %10133 = vadd.xlane.f32.xlu0 %v10115
        %v10134 = vpop.xlane.xlu0 %10133
        %10135 = vadd.xlane.f32.xlu0 %v10116
        %v10136 = vpop.xlane.xlu0 %10135
        %10137 = vadd.xlane.f32.xlu0 %v10117
        %v10138 = vpop.xlane.xlu0 %10137
        %10139 = vadd.xlane.f32.xlu0 %v10118
        %v10140 = vpop.xlane.xlu0 %10139
        %10141 = vadd.xlane.f32.xlu0 %v10119
        %v10142 = vpop.xlane.xlu0 %10141
        %10143 = vadd.xlane.f32.xlu0 %v10120
        %v10144 = vpop.xlane.xlu0 %10143
        %10145 = vadd.xlane.f32.xlu0 %v10121
        %v10146 = vpop.xlane.xlu0 %10145
        %10147 = vadd.xlane.f32.xlu0 %v10122
        %v10148 = vpop.xlane.xlu0 %10147
        %10149 = vadd.xlane.f32.xlu0 %v10123
        %v10150 = vpop.xlane.xlu0 %10149
        %10151 = vadd.xlane.f32.xlu0 %v10124
        %v10152 = vpop.xlane.xlu0 %10151
        %10153 = vadd.xlane.f32.xlu0 %v10125
        %v10154 = vpop.xlane.xlu0 %10153
        %10155 = vadd.xlane.f32.xlu0 %v10126
        %v10156 = vpop.xlane.xlu0 %10155
        %10157 = vadd.xlane.f32.xlu0 %v10127
        %v10158 = vpop.xlane.xlu0 %10157
        %10159 = vadd.xlane.f32.xlu0 %v10128
        %v10160 = vpop.xlane.xlu0 %10159
        %10161 = vadd.xlane.f32.xlu0 %v10129
        %v10162 = vpop.xlane.xlu0 %10161
        %10163 = vadd.xlane.f32.xlu0 %v10130
        %v10164 = vpop.xlane.xlu0 %10163
        %v10165 = vmul.f32 %v10134, %v1132
        %v10166 = vmul.f32 %v10136, %v1132
        %v10167 = vmul.f32 %v10138, %v1132
        %v10168 = vmul.f32 %v10140, %v1132
        %v10169 = vmul.f32 %v10142, %v1132
        %v10170 = vmul.f32 %v10144, %v1132
        %v10171 = vmul.f32 %v10146, %v1132
        %v10172 = vmul.f32 %v10148, %v1132
        %v10173 = vmul.f32 %v10150, %v1132
        %v10174 = vmul.f32 %v10152, %v1132
        %v10175 = vmul.f32 %v10154, %v1132
        %v10176 = vmul.f32 %v10156, %v1132
        %v10177 = vmul.f32 %v10158, %v1132
        %v10178 = vmul.f32 %v10160, %v1132
        %v10179 = vmul.f32 %v10162, %v1132
        %v10180 = vmul.f32 %v10164, %v1132
        %v10181 = vsub.f32 %v10115, %v10165
        %v10182 = vsub.f32 %v10116, %v10166
        %v10183 = vsub.f32 %v10117, %v10167
        %v10184 = vsub.f32 %v10118, %v10168
        %v10185 = vsub.f32 %v10119, %v10169
        %v10186 = vsub.f32 %v10120, %v10170
        %v10187 = vsub.f32 %v10121, %v10171
        %v10188 = vsub.f32 %v10122, %v10172
        %v10189 = vsub.f32 %v10123, %v10173
        %v10190 = vsub.f32 %v10124, %v10174
        %v10191 = vsub.f32 %v10125, %v10175
        %v10192 = vsub.f32 %v10126, %v10176
        %v10193 = vsub.f32 %v10127, %v10177
        %v10194 = vsub.f32 %v10128, %v10178
        %v10195 = vsub.f32 %v10129, %v10179
        %v10196 = vsub.f32 %v10130, %v10180
        %v10197 = vmul.f32 %v10181, %v10181
        %v10198 = vmul.f32 %v10182, %v10182
        %v10199 = vmul.f32 %v10183, %v10183
        %v10200 = vmul.f32 %v10184, %v10184
        %v10201 = vmul.f32 %v10185, %v10185
        %v10202 = vmul.f32 %v10186, %v10186
        %v10203 = vmul.f32 %v10187, %v10187
        %v10204 = vmul.f32 %v10188, %v10188
        %v10205 = vmul.f32 %v10189, %v10189
        %v10206 = vmul.f32 %v10190, %v10190
        %v10207 = vmul.f32 %v10191, %v10191
        %v10208 = vmul.f32 %v10192, %v10192
        %v10209 = vmul.f32 %v10193, %v10193
        %v10210 = vmul.f32 %v10194, %v10194
        %v10211 = vmul.f32 %v10195, %v10195
        %v10212 = vmul.f32 %v10196, %v10196
        %10213 = vadd.xlane.f32.xlu0 %v10197
        %v10214 = vpop.xlane.xlu0 %10213
        %10215 = vadd.xlane.f32.xlu0 %v10198
        %v10216 = vpop.xlane.xlu0 %10215
        %10217 = vadd.xlane.f32.xlu0 %v10199
        %v10218 = vpop.xlane.xlu0 %10217
        %10219 = vadd.xlane.f32.xlu0 %v10200
        %v10220 = vpop.xlane.xlu0 %10219
        %10221 = vadd.xlane.f32.xlu0 %v10201
        %v10222 = vpop.xlane.xlu0 %10221
        %10223 = vadd.xlane.f32.xlu0 %v10202
        %v10224 = vpop.xlane.xlu0 %10223
        %10225 = vadd.xlane.f32.xlu0 %v10203
        %v10226 = vpop.xlane.xlu0 %10225
        %10227 = vadd.xlane.f32.xlu0 %v10204
        %v10228 = vpop.xlane.xlu0 %10227
        %10229 = vadd.xlane.f32.xlu0 %v10205
        %v10230 = vpop.xlane.xlu0 %10229
        %10231 = vadd.xlane.f32.xlu0 %v10206
        %v10232 = vpop.xlane.xlu0 %10231
        %10233 = vadd.xlane.f32.xlu0 %v10207
        %v10234 = vpop.xlane.xlu0 %10233
        %10235 = vadd.xlane.f32.xlu0 %v10208
        %v10236 = vpop.xlane.xlu0 %10235
        %10237 = vadd.xlane.f32.xlu0 %v10209
        %v10238 = vpop.xlane.xlu0 %10237
        %10239 = vadd.xlane.f32.xlu0 %v10210
        %v10240 = vpop.xlane.xlu0 %10239
        %10241 = vadd.xlane.f32.xlu0 %v10211
        %v10242 = vpop.xlane.xlu0 %10241
        %10243 = vadd.xlane.f32.xlu0 %v10212
        %v10244 = vpop.xlane.xlu0 %10243
        %v10245 = vmul.f32 %v10214, %v1132
        %v10246 = vmul.f32 %v10216, %v1132
        %v10247 = vmul.f32 %v10218, %v1132
        %v10248 = vmul.f32 %v10220, %v1132
        %v10249 = vmul.f32 %v10222, %v1132
        %v10250 = vmul.f32 %v10224, %v1132
        %v10251 = vmul.f32 %v10226, %v1132
        %v10252 = vmul.f32 %v10228, %v1132
        %v10253 = vmul.f32 %v10230, %v1132
        %v10254 = vmul.f32 %v10232, %v1132
        %v10255 = vmul.f32 %v10234, %v1132
        %v10256 = vmul.f32 %v10236, %v1132
        %v10257 = vmul.f32 %v10238, %v1132
        %v10258 = vmul.f32 %v10240, %v1132
        %v10259 = vmul.f32 %v10242, %v1132
        %v10260 = vmul.f32 %v10244, %v1132
        %v10261 = vadd.f32 %v10245, 1e-05
        %v10262 = vadd.f32 %v10246, 1e-05
        %v10263 = vadd.f32 %v10247, 1e-05
        %v10264 = vadd.f32 %v10248, 1e-05
        %v10265 = vadd.f32 %v10249, 1e-05
        %v10266 = vadd.f32 %v10250, 1e-05
        %v10267 = vadd.f32 %v10251, 1e-05
        %v10268 = vadd.f32 %v10252, 1e-05
        %v10269 = vadd.f32 %v10253, 1e-05
        %v10270 = vadd.f32 %v10254, 1e-05
        %v10271 = vadd.f32 %v10255, 1e-05
        %v10272 = vadd.f32 %v10256, 1e-05
        %v10273 = vadd.f32 %v10257, 1e-05
        %v10274 = vadd.f32 %v10258, 1e-05
        %v10275 = vadd.f32 %v10259, 1e-05
        %v10276 = vadd.f32 %v10260, 1e-05
        %v10277 = vrsqrt.pop %v10261
        %v10278 = vrsqrt.pop %v10262
        %v10279 = vrsqrt.pop %v10263
        %v10280 = vrsqrt.pop %v10264
        %v10281 = vrsqrt.pop %v10265
        %v10282 = vrsqrt.pop %v10266
        %v10283 = vrsqrt.pop %v10267
        %v10284 = vrsqrt.pop %v10268
        %v10285 = vrsqrt.pop %v10269
        %v10286 = vrsqrt.pop %v10270
        %v10287 = vrsqrt.pop %v10271
        %v10288 = vrsqrt.pop %v10272
        %v10289 = vrsqrt.pop %v10273
        %v10290 = vrsqrt.pop %v10274
        %v10291 = vrsqrt.pop %v10275
        %v10292 = vrsqrt.pop %v10276
        %v10293 = vmul.f32 %v10181, %v10277
        %v10294 = vmul.f32 %v10182, %v10278
        %v10295 = vmul.f32 %v10183, %v10279
        %v10296 = vmul.f32 %v10184, %v10280
        %v10297 = vmul.f32 %v10185, %v10281
        %v10298 = vmul.f32 %v10186, %v10282
        %v10299 = vmul.f32 %v10187, %v10283
        %v10300 = vmul.f32 %v10188, %v10284
        %v10301 = vmul.f32 %v10189, %v10285
        %v10302 = vmul.f32 %v10190, %v10286
        %v10303 = vmul.f32 %v10191, %v10287
        %v10304 = vmul.f32 %v10192, %v10288
        %v10305 = vmul.f32 %v10193, %v10289
        %v10306 = vmul.f32 %v10194, %v10290
        %v10307 = vmul.f32 %v10195, %v10291
        %v10308 = vmul.f32 %v10196, %v10292
        %v10310 = vlaneseq
        %v10311 = vshrl.u32 %v10310, 7
        %v10312 = vsub.s32 0, %v10311
        %v10313 = vrot.slane %v10131, %v10312
        %v10315 = vmul.f32 %v10293, %v10313
        %v10316 = vmul.f32 %v10294, %v10313
        %v10317 = vmul.f32 %v10295, %v10313
        %v10318 = vmul.f32 %v10296, %v10313
        %v10319 = vmul.f32 %v10297, %v10313
        %v10320 = vmul.f32 %v10298, %v10313
        %v10321 = vmul.f32 %v10299, %v10313
        %v10322 = vmul.f32 %v10300, %v10313
        %v10323 = vmul.f32 %v10301, %v10313
        %v10324 = vmul.f32 %v10302, %v10313
        %v10325 = vmul.f32 %v10303, %v10313
        %v10326 = vmul.f32 %v10304, %v10313
        %v10327 = vmul.f32 %v10305, %v10313
        %v10328 = vmul.f32 %v10306, %v10313
        %v10329 = vmul.f32 %v10307, %v10313
        %v10330 = vmul.f32 %v10308, %v10313
        %v10332 = vlaneseq
        %v10333 = vshrl.u32 %v10332, 7
        %v10334 = vsub.s32 0, %v10333
        %v10335 = vrot.slane %v10132, %v10334
        %v10337 = vadd.f32 %v10315, %v10335
        %v10338 = vadd.f32 %v10316, %v10335
        %v10339 = vadd.f32 %v10317, %v10335
        %v10340 = vadd.f32 %v10318, %v10335
        %v10341 = vadd.f32 %v10319, %v10335
        %v10342 = vadd.f32 %v10320, %v10335
        %v10343 = vadd.f32 %v10321, %v10335
        %v10344 = vadd.f32 %v10322, %v10335
        %v10345 = vadd.f32 %v10323, %v10335
        %v10346 = vadd.f32 %v10324, %v10335
        %v10347 = vadd.f32 %v10325, %v10335
        %v10348 = vadd.f32 %v10326, %v10335
        %v10349 = vadd.f32 %v10327, %v10335
        %v10350 = vadd.f32 %v10328, %v10335
        %v10351 = vadd.f32 %v10329, %v10335
        %v10352 = vadd.f32 %v10330, %v10335
        %v10353 = vld [vmem:[%s15] sm:$0x1]
        %v10355 = vlaneseq
        %v10356 = vshrl.u32 %v10355, 7
        %v10357 = vsub.s32 0, %v10356
        %v10358 = vrot.slane %v10353, %v10357
        %v10360 = vmul.f32 %v10337, %v10358
        %v10361 = vmul.f32 %v10338, %v10358
        %v10362 = vmul.f32 %v10339, %v10358
        %v10363 = vmul.f32 %v10340, %v10358
        %v10364 = vmul.f32 %v10341, %v10358
        %v10365 = vmul.f32 %v10342, %v10358
        %v10366 = vmul.f32 %v10343, %v10358
        %v10367 = vmul.f32 %v10344, %v10358
        %v10368 = vmul.f32 %v10345, %v10358
        %v10369 = vmul.f32 %v10346, %v10358
        %v10370 = vmul.f32 %v10347, %v10358
        %v10371 = vmul.f32 %v10348, %v10358
        %v10372 = vmul.f32 %v10349, %v10358
        %v10373 = vmul.f32 %v10350, %v10358
        %v10374 = vmul.f32 %v10351, %v10358
        %v10375 = vmul.f32 %v10352, %v10358
        %10376 = vadd.xlane.f32.xlu0 %v10360
        %v10377 = vpop.xlane.xlu0 %10376
        %10378 = vadd.xlane.f32.xlu0 %v10361
        %v10379 = vpop.xlane.xlu0 %10378
        %10380 = vadd.xlane.f32.xlu0 %v10362
        %v10381 = vpop.xlane.xlu0 %10380
        %10382 = vadd.xlane.f32.xlu0 %v10363
        %v10383 = vpop.xlane.xlu0 %10382
        %10384 = vadd.xlane.f32.xlu0 %v10364
        %v10385 = vpop.xlane.xlu0 %10384
        %10386 = vadd.xlane.f32.xlu0 %v10365
        %v10387 = vpop.xlane.xlu0 %10386
        %10388 = vadd.xlane.f32.xlu0 %v10366
        %v10389 = vpop.xlane.xlu0 %10388
        %10390 = vadd.xlane.f32.xlu0 %v10367
        %v10391 = vpop.xlane.xlu0 %10390
        %10392 = vadd.xlane.f32.xlu0 %v10368
        %v10393 = vpop.xlane.xlu0 %10392
        %10394 = vadd.xlane.f32.xlu0 %v10369
        %v10395 = vpop.xlane.xlu0 %10394
        %10396 = vadd.xlane.f32.xlu0 %v10370
        %v10397 = vpop.xlane.xlu0 %10396
        %10398 = vadd.xlane.f32.xlu0 %v10371
        %v10399 = vpop.xlane.xlu0 %10398
        %10400 = vadd.xlane.f32.xlu0 %v10372
        %v10401 = vpop.xlane.xlu0 %10400
        %10402 = vadd.xlane.f32.xlu0 %v10373
        %v10403 = vpop.xlane.xlu0 %10402
        %10404 = vadd.xlane.f32.xlu0 %v10374
        %v10405 = vpop.xlane.xlu0 %10404
        %10406 = vadd.xlane.f32.xlu0 %v10375
        %v10407 = vpop.xlane.xlu0 %10406
        %v10408 = vld [vmem:[#allocation2] sm:$0x1]
        %v10410 = vlaneseq
        %v10411 = vshrl.u32 %v10410, 7
        %v10412 = vsub.s32 0, %v10411
        %v10413 = vrot.slane %v10408, %v10412
        %v10415 = vadd.f32 %v10377, %v10413
        %v10416 = vadd.f32 %v10379, %v10413
        %v10417 = vadd.f32 %v10381, %v10413
        %v10418 = vadd.f32 %v10383, %v10413
        %v10419 = vadd.f32 %v10385, %v10413
        %v10420 = vadd.f32 %v10387, %v10413
        %v10421 = vadd.f32 %v10389, %v10413
        %v10422 = vadd.f32 %v10391, %v10413
        %v10423 = vadd.f32 %v10393, %v10413
        %v10424 = vadd.f32 %v10395, %v10413
        %v10425 = vadd.f32 %v10397, %v10413
        %v10426 = vadd.f32 %v10399, %v10413
        %v10427 = vadd.f32 %v10401, %v10413
        %v10428 = vadd.f32 %v10403, %v10413
        %v10429 = vadd.f32 %v10405, %v10413
        %v10430 = vadd.f32 %v10407, %v10413
        %vm10431 = vcmask 7168
        %10432 = vst.msk [vmem:[%s671] sm:$0xff] %vm10431, %v10415
        %10433 = vst.msk [vmem:[%s671 + $0x8] sm:$0xff] %vm10431, %v10416
        %10434 = vst.msk [vmem:[%s671 + $0x10] sm:$0xff] %vm10431, %v10417
        %10435 = vst.msk [vmem:[%s671 + $0x18] sm:$0xff] %vm10431, %v10418
        %10436 = vst.msk [vmem:[%s671 + $0x20] sm:$0xff] %vm10431, %v10419
        %10437 = vst.msk [vmem:[%s671 + $0x28] sm:$0xff] %vm10431, %v10420
        %10438 = vst.msk [vmem:[%s671 + $0x30] sm:$0xff] %vm10431, %v10421
        %10439 = vst.msk [vmem:[%s671 + $0x38] sm:$0xff] %vm10431, %v10422
        %10440 = vst.msk [vmem:[%s671 + $0x40] sm:$0xff] %vm10431, %v10423
        %10441 = vst.msk [vmem:[%s671 + $0x48] sm:$0xff] %vm10431, %v10424
        %10442 = vst.msk [vmem:[%s671 + $0x50] sm:$0xff] %vm10431, %v10425
        %10443 = vst.msk [vmem:[%s671 + $0x58] sm:$0xff] %vm10431, %v10426
        %10444 = vst.msk [vmem:[%s671 + $0x60] sm:$0xff] %vm10431, %v10427
        %10445 = vst.msk [vmem:[%s671 + $0x68] sm:$0xff] %vm10431, %v10428
        %10446 = vst.msk [vmem:[%s671 + $0x70] sm:$0xff] %vm10431, %v10429
        %10447 = vst.msk [vmem:[%s671 + $0x78] sm:$0xff] %vm10431, %v10430
        %s10448 = smul.u32 16, %s37
        %p10449 = scmp.lt.s32.totalorder %s10448, 31
        %s10450 = scalar_select %p10449, %s10448, 31
        %s10451 = smul.addr %s10450, 8
        %s10452 = scalar_lea.vmem %s17, %s10451
        // Predicated region
        $region121: #{tpu_custom_call.1} parent=87 // pred_check
          %p10453 = pneg %p417
        $region122: #{tpu_custom_call.1} parent=87 // pred_check_branch
          %10455 = sbr.rel (%p10453) target = $region124
        $region123: #{tpu_custom_call.1} parent=87 // pred_region
          %s10456 = smul.u32 16, %s37
        $region124: #{tpu_custom_call.1} parent=87 // pred_fallthru
          _
      $region88: #{tpu_custom_call.1} parent=5 // pred_fallthru
        _
      %p10457 = scmp.le.s32.totalorder 2, %s32
      // Predicated region
      $region125: #{tpu_custom_call.1} parent=5 // pred_check
        %p10458 = pneg %p10457
      $region126: #{tpu_custom_call.1} parent=5 // pred_check_branch
        %10460 = sbr.rel (%p10458) target = $region128
      $region127: #{tpu_custom_call.1} parent=5 // pred_region
        %s10461 = ssub.s32 %s32, 2
        // Predicated region
        $region129: #{tpu_custom_call.1} parent=127 // pred_check
          %p10462 = pneg %p423
        $region130: #{tpu_custom_call.1} parent=127 // pred_check_branch
          %10464 = sbr.rel (%p10462) target = $region132
        $region131: #{tpu_custom_call.1} parent=127 // pred_region
          %s10465 = smul.u32 16, %s38
          %p10466 = scmp.lt.s32.totalorder %s10465, 31
          %s10467 = scalar_select %p10466, %s10465, 31
          %s10468 = smul.addr %s10467, 8
          %s10469 = scalar_lea.vmem %s17, %s10468
        $region132: #{tpu_custom_call.1} parent=127 // pred_fallthru
          _
      $region128: #{tpu_custom_call.1} parent=5 // pred_fallthru
        _
    $region6: #{tpu_custom_call.1} parent=1 // loop_footer
      %s36 = sadd.s32 1, %s32
    $region7: #{tpu_custom_call.1} parent=1 // loop_footer_branch
      %31 = sbr.rel target = $region3
    $region8: #{tpu_custom_call.1} parent=1 // loop_exit
      _
    %10470 = vsyncpa [#allocation4], 1
    %s10471 = scalar_lea.sflag [#allocation4], 1
    %10472 = vsyncpa %s10471, 1
    %10473 = vsyncpa [#allocation6], 1
    %10474 = vsyncpa [#allocation9], 1
    %10475 = vsyncpa [#allocation12], 1
    %10476 = vsyncpa [#allocation15], 1

</llo_original>
